<compile_context>
chip_gen: v5e
topology: v5e:2x2
jax: 0.10.0
libtpu: 0.0.40
codegen_flags: <defaults>
</compile_context>

<pallas_src>
import functools

import numpy as np
import jax
import jax.numpy as jnp
from jax.experimental import pallas as pl
from jax.experimental.pallas import tpu as pltpu


# ----------------------------------------------------------------------------
# Static network description (4x4 block grid -> 16 rows for every layer)
# ----------------------------------------------------------------------------
_GRID = 4
_ROWS = _GRID * _GRID            # 16
_PAD = _GRID + 1                 # max |row shift| = 4*|dI| + |dJ| <= 5


def _tap_list(kind, stride):
    if kind == "conv":
        if stride == 1:
            return [(di, dj) for di in (-1, 0, 1) for dj in (-1, 0, 1)]
        return [(di, dj) for di in (-1, 0) for dj in (-1, 0)]
    return [(di, dj) for di in (0, 1) for dj in (0, 1)]   # transposed conv


def make_layer_specs(c_hid, num_in):
    # (name, kind, stride, cin, cout, bh_in, bh_out, act); bh_* = pixels per
    # block side at input/output resolution (block grid is always 4x4).
    c, c2 = c_hid, 2 * c_hid
    enc = [
        ("e1", "conv", 2, num_in, c, 8, 4, "gelu"),      # 32 -> 16
        ("e2", "conv", 1, c, c, 4, 4, "gelu"),           # 16
        ("e3", "conv", 2, c, c2, 4, 2, "gelu"),          # 16 -> 8
        ("e4", "conv", 1, c2, c2, 2, 2, "gelu"),         # 8
        ("e5", "conv", 2, c2, c2, 2, 1, "gelu"),         # 8 -> 4
    ]
    dec = [
        ("d_t1", "convt", 2, c2, c2, 1, 2, "gelu"),      # 4 -> 8
        ("d_c1", "conv", 1, c2, c2, 2, 2, "gelu"),       # 8
        ("d_t2", "convt", 2, c2, c, 2, 4, "gelu"),       # 8 -> 16
        ("d_c2", "conv", 1, c, c, 4, 4, "gelu"),         # 16
        ("d_t3", "convt", 2, c, num_in, 4, 8, "tanh"),   # 16 -> 32
    ]
    return enc, dec


# ----------------------------------------------------------------------------
# Activations
# ----------------------------------------------------------------------------
_SQRT_2_OVER_PI = 0.7978845608028654


def _gelu(x):
    # TODO(synk): PyTorch nn.GELU() default is the exact erf form; tanh
    # approximation used here (max abs dev ~1e-3).
    return 0.5 * x * (1.0 + jnp.tanh(_SQRT_2_OVER_PI * (x + 0.044715 * x * x * x)))


def _apply_act(x, act):
    if act == "gelu":
        return _gelu(x)
    if act == "tanh":
        return jnp.tanh(x)
    return x


# ----------------------------------------------------------------------------
# Fused kernel
# ----------------------------------------------------------------------------
def _autoencoder_kernel(*refs, enc_specs, dec_specs, c2):
    it = iter(refs)
    x_ref = next(it)
    enc_refs = [(next(it), next(it)) for _ in enc_specs]
    we_ref, be_ref = next(it), next(it)
    wd_ref, bd_ref = next(it), next(it)
    dec_refs = [(next(it), next(it)) for _ in dec_specs]
    xhat_ref = next(it)
    z_ref = next(it)
    pad_ref = next(it)            # [16 + 2*_PAD, max_lin] bf16, shared by all layers
    flat_ref = next(it)           # [1, 16*c2] bf16, latent flatten buffer

    pad_ref[...] = jnp.zeros_like(pad_ref)   # halo rows must read as zero

    # Block-column boundary masks (row index r = 4*I + J on the 4x4 grid).
    row_id = jax.lax.broadcasted_iota(jnp.int32, (_ROWS, 1), 0)
    col_id = row_id % _GRID
    lkeep = (col_id != 0).astype(jnp.bfloat16)           # taps that read block J-1
    rkeep = (col_id != _GRID - 1).astype(jnp.bfloat16)   # taps that read block J+1

    def conv_layer(act, w_ref, b_ref, spec):
        _, kind, stride, cin, cout, bh_in, bh_out, act_fn = spec
        lin = bh_in * bh_in * cin
        lout = bh_out * bh_out * cout
        taps = _tap_list(kind, stride)
        pad_ref[_PAD:_PAD + _ROWS, :lin] = act.astype(jnp.bfloat16)
        acc = jnp.zeros((_ROWS, lout), jnp.float32)
        for t, (di, dj) in enumerate(taps):
            shift = _GRID * di + dj
            sl = pad_ref[_PAD + shift:_PAD + shift + _ROWS, :lin]
            if dj == -1:
                sl = sl * lkeep
            elif dj == 1:
                sl = sl * rkeep
            acc = acc + jnp.dot(sl, w_ref[:, t * lout:(t + 1) * lout],
                                preferred_element_type=jnp.float32)
        return _apply_act(acc + b_ref[...], act_fn)

    # -------------------------- Encoder --------------------------
    act = x_ref[0]                                        # [16, 64*num_in] bf16
    for spec, (w_r, b_r) in zip(enc_specs, enc_refs):
        act = conv_layer(act, w_r, b_r, spec)

    # ------------------- Flatten -> Linear (z) -------------------
    for r in range(_ROWS):
        flat_ref[0:1, r * c2:(r + 1) * c2] = act[r:r + 1, :].astype(jnp.bfloat16)
    z = jnp.dot(flat_ref[...], we_ref[...], preferred_element_type=jnp.float32)
    z = z + be_ref[...]                                   # [1, latent] f32
    z_ref[0] = z

    # ----------------- Linear -> GELU -> un-flatten ----------------
    d = jnp.dot(z.astype(jnp.bfloat16), wd_ref[...],
                preferred_element_type=jnp.float32)
    d = _gelu(d + bd_ref[...])                            # [1, 16*c2] f32
    for r in range(_ROWS):
        pad_ref[_PAD + r:_PAD + r + 1, :c2] = d[:, r * c2:(r + 1) * c2].astype(jnp.bfloat16)
    act = pad_ref[_PAD:_PAD + _ROWS, :c2]                 # [16, c2] bf16

    # -------------------------- Decoder --------------------------
    for spec, (w_r, b_r) in zip(dec_specs, dec_refs):
        act = conv_layer(act, w_r, b_r, spec)

    xhat_ref[0] = act                                     # [16, 64*num_in] f32


# ----------------------------------------------------------------------------
# Host-side (one-time) weight packing: fold all spatial structure into matrices
# ----------------------------------------------------------------------------
def _pack_conv_blocked(w_pt, b_pt, bh_in, bh_out, stride, taps):
    # w_pt: [Cout, Cin, 3, 3]  (PyTorch Conv2d layout)
    cout, cin = w_pt.shape[0], w_pt.shape[1]
    lin, lout = bh_in * bh_in * cin, bh_out * bh_out * cout
    mats = {t: np.zeros((lin, lout), np.float32) for t in taps}
    for oy in range(bh_out):
        for ox in range(bh_out):
            for ky in range(3):
                for kx in range(3):
                    di, uy = divmod(stride * oy + ky - 1, bh_in)
                    dj, ux = divmod(stride * ox + kx - 1, bh_in)
                    r0 = (uy * bh_in + ux) * cin
                    c0 = (oy * bh_out + ox) * cout
                    mats[(di, dj)][r0:r0 + cin, c0:c0 + cout] += w_pt[:, :, ky, kx].T
    w = np.concatenate([mats[t] for t in taps], axis=1)
    b = np.tile(np.asarray(b_pt), bh_out * bh_out).reshape(1, lout)
    return w, b


def _pack_convt_blocked(w_pt, b_pt, bh_in, taps):
    # w_pt: [Cin, Cout, 3, 3]  (PyTorch ConvTranspose2d layout), k=3 s=2 p=1 op=1
    cin, cout = w_pt.shape[0], w_pt.shape[1]
    bh_out = 2 * bh_in
    lin, lout = bh_in * bh_in * cin, bh_out * bh_out * cout
    mats = {t: np.zeros((lin, lout), np.float32) for t in taps}
    for oy in range(bh_out):
        for ox in range(bh_out):
            for ky in range(3):
                for kx in range(3):
                    ny, nx = oy - ky + 1, ox - kx + 1
                    if ny % 2 or nx % 2 or ny < 0 or nx < 0:
                        continue
                    di, uy = divmod(ny // 2, bh_in)
                    dj, ux = divmod(nx // 2, bh_in)
                    r0 = (uy * bh_in + ux) * cin
                    c0 = (oy * bh_out + ox) * cout
                    mats[(di, dj)][r0:r0 + cin, c0:c0 + cout] += w_pt[:, :, ky, kx]
    w = np.concatenate([mats[t] for t in taps], axis=1)
    b = np.tile(np.asarray(b_pt), bh_out * bh_out).reshape(1, lout)
    return w, b


def _pack_e_lin(w_pt, b_pt, c2):
    # Fold nn.Flatten's NCHW (c,h,w) ordering into the rows so the kernel's
    # (h,w,c)-ordered flatten needs no runtime transpose.
    latent = w_pt.shape[0]
    wk = w_pt.reshape(latent, c2, 4, 4).transpose(2, 3, 1, 0).reshape(16 * c2, latent)
    return wk, np.asarray(b_pt).reshape(1, latent)


def _pack_d_lin(w_pt, b_pt, c2):
    # Fold the decoder's reshape-to-[B,2c,4,4] (NCHW) into the column ordering.
    latent = w_pt.shape[1]
    wk = w_pt.reshape(c2, 4, 4, latent).transpose(1, 2, 0, 3).reshape(16 * c2, latent).T
    bk = np.asarray(b_pt).reshape(c2, 4, 4).transpose(1, 2, 0).reshape(1, 16 * c2)
    return wk, bk


def pack_params(p, c_hid, latent, num_in):
    enc_specs, dec_specs = make_layer_specs(c_hid, num_in)
    c2 = 2 * c_hid
    packed = []

    def add(w, b):
        packed.append(jnp.asarray(w, jnp.bfloat16))
        packed.append(jnp.asarray(b, jnp.float32))

    def pack_layer(spec):
        name, kind, stride, _, _, bh_in, bh_out, _ = spec
        taps = _tap_list(kind, stride)
        if kind == "conv":
            w, b = _pack_conv_blocked(p[name + "_w"], p[name + "_b"],
                                      bh_in, bh_out, stride, taps)
        else:
            w, b = _pack_convt_blocked(p[name + "_w"], p[name + "_b"], bh_in, taps)
        add(w, b)

    for spec in enc_specs:
        pack_layer(spec)
    add(*_pack_e_lin(p["e_lin_w"], p["e_lin_b"], c2))
    add(*_pack_d_lin(p["d_lin_w"], p["d_lin_b"], c2))
    for spec in dec_specs:
        pack_layer(spec)
    return tuple(packed)


def init_torch_params(key, c_hid, latent_dim, num_in):
    """Synthetic PyTorch-shaped parameters (numpy, float32)."""
    c, c2 = c_hid, 2 * c_hid
    keys = iter(jax.random.split(key, 32))

    def _w(shape, fan_in):
        return np.asarray(jax.random.normal(next(keys), shape, jnp.float32)) / np.sqrt(float(fan_in))

    p = {}

    def conv(name, cout, cin):
        p[name + "_w"] = _w((cout, cin, 3, 3), cin * 9)
        p[name + "_b"] = _w((cout,), cin * 9) * 0.1

    def convt(name, cin, cout):
        p[name + "_w"] = _w((cin, cout, 3, 3), cin * 9)
        p[name + "_b"] = _w((cout,), cin * 9) * 0.1

    def lin(name, nout, nin):
        p[name + "_w"] = _w((nout, nin), nin)
        p[name + "_b"] = _w((nout,), nin) * 0.1

    conv("e1", c, num_in); conv("e2", c, c); conv("e3", c2, c)
    conv("e4", c2, c2); conv("e5", c2, c2)
    lin("e_lin", latent_dim, 16 * c2)
    lin("d_lin", 16 * c2, latent_dim)
    convt("d_t1", c2, c2); conv("d_c1", c2, c2)
    convt("d_t2", c2, c); conv("d_c2", c, c)
    convt("d_t3", c, num_in)
    return p


# ----------------------------------------------------------------------------
# Forward pass (matches Autoencoder.forward: returns (x_hat, z))
# ----------------------------------------------------------------------------
def autoencoder_forward(params, x_nchw, *, c_hid, latent, num_in):
    enc_specs, dec_specs = make_layer_specs(c_hid, num_in)
    c2 = 2 * c_hid
    B = x_nchw.shape[0]
    hw = 8 * _GRID
    assert x_nchw.shape == (B, num_in, hw, hw)
    io_lanes = 8 * 8 * num_in

    # NCHW -> block-packed [B, 16, 192] bf16 (one tiny XLA transpose).
    xb = x_nchw.reshape(B, num_in, _GRID, 8, _GRID, 8)
    xb = jnp.transpose(xb, (0, 2, 4, 3, 5, 1)).reshape(B, _ROWS, io_lanes)
    xb = xb.astype(jnp.bfloat16)

    max_lin = max(max(s[5] * s[5] * s[3] for s in enc_specs + dec_specs), c2)

    in_specs = [pl.BlockSpec((1, _ROWS, io_lanes), lambda b: (b, 0, 0))]
    for prm in params:
        in_specs.append(pl.BlockSpec(prm.shape, lambda b: (0, 0)))

    out_shape = (
        jax.ShapeDtypeStruct((B, _ROWS, io_lanes), jnp.float32),
        jax.ShapeDtypeStruct((B, 1, latent), jnp.float32),
    )
    out_specs = (
        pl.BlockSpec((1, _ROWS, io_lanes), lambda b: (b, 0, 0)),
        pl.BlockSpec((1, 1, latent), lambda b: (b, 0, 0)),
    )

    conv_ws = list(params[0:10:2]) + list(params[14::2])
    flops = 2 * B * _ROWS * sum(int(w.size) for w in conv_ws)
    flops += 2 * B * (int(params[10].size) + int(params[12].size))
    trans = B * (_ROWS * sum(s[6] * s[6] * s[4] for s in enc_specs + dec_specs)
                 + _ROWS * c2)
    bytes_acc = int(xb.size) * 2 + sum(int(prm.size) * prm.dtype.itemsize for prm in params)
    bytes_acc += B * _ROWS * io_lanes * 4 + B * latent * 4
    cost = pl.CostEstimate(flops=int(flops), transcendentals=int(trans),
                           bytes_accessed=int(bytes_acc))

    kernel = functools.partial(_autoencoder_kernel,
                               enc_specs=tuple(enc_specs),
                               dec_specs=tuple(dec_specs),
                               c2=c2)

    yb, zb = pl.pallas_call(
        kernel,
        grid=(B,),
        in_specs=in_specs,
        out_specs=out_specs,
        out_shape=out_shape,
        scratch_shapes=[
            pltpu.VMEM((_ROWS + 2 * _PAD, max_lin), jnp.bfloat16),
            pltpu.VMEM((1, _ROWS * c2), jnp.bfloat16),
        ],
        compiler_params=pltpu.CompilerParams(
            dimension_semantics=("parallel",),
            vmem_limit_bytes=16 * 1024 * 1024,   # actual footprint ~3 MiB
        ),
        cost_estimate=cost,
    )(xb, *params)

    # Block-packed -> NCHW (one tiny XLA transpose on the 24 KB output).
    y = yb.reshape(B, _GRID, _GRID, 8, 8, num_in)
    x_hat = jnp.transpose(y, (0, 5, 1, 3, 2, 4)).reshape(B, num_in, hw, hw)
    z = zb.reshape(B, latent)
    return x_hat, z


if __name__ == "__main__":
    B, C_IN, HW = 2, 3, 32          # spatial 32x32 implied by the 2*16*c_hid flatten
    C_HID, LATENT = 8, 32

    x = jax.random.normal(jax.random.PRNGKey(0), (B, C_IN, HW, HW), jnp.float32)
    torch_params = init_torch_params(jax.random.PRNGKey(1), C_HID, LATENT, C_IN)
    kernel_params = pack_params(torch_params, C_HID, LATENT, C_IN)  # one-time packing

    fwd = jax.jit(functools.partial(autoencoder_forward,
                                    c_hid=C_HID, latent=LATENT, num_in=C_IN))
    x_hat, z = fwd(kernel_params, x)
    jax.block_until_ready((x_hat, z))

    assert x_hat.shape == (B, C_IN, HW, HW), x_hat.shape
    assert z.shape == (B, LATENT), z.shape
    assert bool(jnp.all(jnp.isfinite(x_hat))) and bool(jnp.all(jnp.isfinite(z)))
    print("KERNEL_OK")
</pallas_src>

<mosaic_0001>
module attributes {stable_mosaic.version = 11 : i64} {
  func.func @_autoencoder_kernel(%arg0: i32, %arg1: memref<1x16x192xbf16, #tpu.memory_space<vmem>>, %arg2: memref<192x512xbf16, #tpu.memory_space<vmem>>, %arg3: memref<1x128xf32, #tpu.memory_space<vmem>>, %arg4: memref<128x1152xbf16, #tpu.memory_space<vmem>>, %arg5: memref<1x128xf32, #tpu.memory_space<vmem>>, %arg6: memref<128x256xbf16, #tpu.memory_space<vmem>>, %arg7: memref<1x64xf32, #tpu.memory_space<vmem>>, %arg8: memref<64x576xbf16, #tpu.memory_space<vmem>>, %arg9: memref<1x64xf32, #tpu.memory_space<vmem>>, %arg10: memref<64x64xbf16, #tpu.memory_space<vmem>>, %arg11: memref<1x16xf32, #tpu.memory_space<vmem>>, %arg12: memref<256x32xbf16, #tpu.memory_space<vmem>>, %arg13: memref<1x32xf32, #tpu.memory_space<vmem>>, %arg14: memref<32x256xbf16, #tpu.memory_space<vmem>>, %arg15: memref<1x256xf32, #tpu.memory_space<vmem>>, %arg16: memref<16x256xbf16, #tpu.memory_space<vmem>>, %arg17: memref<1x64xf32, #tpu.memory_space<vmem>>, %arg18: memref<64x576xbf16, #tpu.memory_space<vmem>>, %arg19: memref<1x64xf32, #tpu.memory_space<vmem>>, %arg20: memref<64x512xbf16, #tpu.memory_space<vmem>>, %arg21: memref<1x128xf32, #tpu.memory_space<vmem>>, %arg22: memref<128x1152xbf16, #tpu.memory_space<vmem>>, %arg23: memref<1x128xf32, #tpu.memory_space<vmem>>, %arg24: memref<128x768xbf16, #tpu.memory_space<vmem>>, %arg25: memref<1x192xf32, #tpu.memory_space<vmem>>, %arg26: memref<1x16x192xf32, #tpu.memory_space<vmem>>, %arg27: memref<1x1x32xf32, #tpu.memory_space<vmem>>, %arg28: memref<26x192xbf16, #tpu.memory_space<vmem>>, %arg29: memref<1x256xbf16, #tpu.memory_space<vmem>>) attributes {dimension_semantics = [#tpu.dimension_semantics<parallel>], iteration_bounds = array<i64: 2>, scalar_prefetch = 0 : i64, scratch_operands = 2 : i64, tpu.core_type = #tpu.core_type<tc>, window_params = [{transform_indices = @transform_0, window_bounds = array<i64: 1, 16, 192>}, {pipeline_mode = #tpu.pipeline_mode<synchronous>, transform_indices = @transform_1, window_bounds = array<i64: 192, 512>}, {pipeline_mode = #tpu.pipeline_mode<synchronous>, transform_indices = @transform_2, window_bounds = array<i64: 1, 128>}, {pipeline_mode = #tpu.pipeline_mode<synchronous>, transform_indices = @transform_3, window_bounds = array<i64: 128, 1152>}, {pipeline_mode = #tpu.pipeline_mode<synchronous>, transform_indices = @transform_4, window_bounds = array<i64: 1, 128>}, {pipeline_mode = #tpu.pipeline_mode<synchronous>, transform_indices = @transform_5, window_bounds = array<i64: 128, 256>}, {pipeline_mode = #tpu.pipeline_mode<synchronous>, transform_indices = @transform_6, window_bounds = array<i64: 1, 64>}, {pipeline_mode = #tpu.pipeline_mode<synchronous>, transform_indices = @transform_7, window_bounds = array<i64: 64, 576>}, {pipeline_mode = #tpu.pipeline_mode<synchronous>, transform_indices = @transform_8, window_bounds = array<i64: 1, 64>}, {pipeline_mode = #tpu.pipeline_mode<synchronous>, transform_indices = @transform_9, window_bounds = array<i64: 64, 64>}, {pipeline_mode = #tpu.pipeline_mode<synchronous>, transform_indices = @transform_10, window_bounds = array<i64: 1, 16>}, {pipeline_mode = #tpu.pipeline_mode<synchronous>, transform_indices = @transform_11, window_bounds = array<i64: 256, 32>}, {pipeline_mode = #tpu.pipeline_mode<synchronous>, transform_indices = @transform_12, window_bounds = array<i64: 1, 32>}, {pipeline_mode = #tpu.pipeline_mode<synchronous>, transform_indices = @transform_13, window_bounds = array<i64: 32, 256>}, {pipeline_mode = #tpu.pipeline_mode<synchronous>, transform_indices = @transform_14, window_bounds = array<i64: 1, 256>}, {pipeline_mode = #tpu.pipeline_mode<synchronous>, transform_indices = @transform_15, window_bounds = array<i64: 16, 256>}, {pipeline_mode = #tpu.pipeline_mode<synchronous>, transform_indices = @transform_16, window_bounds = array<i64: 1, 64>}, {pipeline_mode = #tpu.pipeline_mode<synchronous>, transform_indices = @transform_17, window_bounds = array<i64: 64, 576>}, {pipeline_mode = #tpu.pipeline_mode<synchronous>, transform_indices = @transform_18, window_bounds = array<i64: 1, 64>}, {pipeline_mode = #tpu.pipeline_mode<synchronous>, transform_indices = @transform_19, window_bounds = array<i64: 64, 512>}, {pipeline_mode = #tpu.pipeline_mode<synchronous>, transform_indices = @transform_20, window_bounds = array<i64: 1, 128>}, {pipeline_mode = #tpu.pipeline_mode<synchronous>, transform_indices = @transform_21, window_bounds = array<i64: 128, 1152>}, {pipeline_mode = #tpu.pipeline_mode<synchronous>, transform_indices = @transform_22, window_bounds = array<i64: 1, 128>}, {pipeline_mode = #tpu.pipeline_mode<synchronous>, transform_indices = @transform_23, window_bounds = array<i64: 128, 768>}, {pipeline_mode = #tpu.pipeline_mode<synchronous>, transform_indices = @transform_24, window_bounds = array<i64: 1, 192>}, {transform_indices = @transform_25, window_bounds = array<i64: 1, 16, 192>}, {transform_indices = @transform_26, window_bounds = array<i64: 1, 1, 32>}]} {
    %cst = arith.constant 0.000000e+00 : bf16
    %0 = vector.broadcast %cst : bf16 to vector<26x192xbf16>
    %c0 = arith.constant 0 : index
    %c0_0 = arith.constant 0 : index
    %1 = vector.load %arg28[%c0, %c0_0] : memref<26x192xbf16, #tpu.memory_space<vmem>>, vector<26x192xbf16>
    tpu.vector_store %arg28[%c0, %c0_0], %0 {strides = array<i32>} : memref<26x192xbf16, #tpu.memory_space<vmem>>, vector<26x192xbf16>,
    %2 = tpu.iota {dimensions = array<i32: 0>} : vector<16x1xi32>
    %c4_i32 = arith.constant 4 : i32
    %c0_i32 = arith.constant 0 : i32
    %3 = arith.cmpi eq, %c4_i32, %c0_i32 : i32
    %c1_i32 = arith.constant 1 : i32
    %4 = arith.select %3, %c1_i32, %c4_i32 : i32
    %5 = vector.broadcast %4 : i32 to vector<16x1xi32>
    %6 = arith.remsi %2, %5 : vector<16x1xi32>
    %c0_i32_1 = arith.constant 0 : i32
    %7 = vector.broadcast %c0_i32_1 : i32 to vector<16x1xi32>
    %8 = arith.cmpi ne, %6, %7 : vector<16x1xi32>
    %c0_i32_2 = arith.constant 0 : i32
    %9 = vector.broadcast %c0_i32_2 : i32 to vector<16x1xi32>
    %10 = arith.cmpi slt, %6, %9 : vector<16x1xi32>
    %c0_i32_3 = arith.constant 0 : i32
    %11 = arith.cmpi slt, %4, %c0_i32_3 : i32
    %12 = vector.broadcast %11 : i1 to vector<16x1xi1>
    %13 = vector.broadcast %12 : vector<16x1xi1> to vector<16x1xi1>
    %14 = arith.xori %10, %13 : vector<16x1xi1>
    %15 = arith.andi %14, %8 : vector<16x1xi1>
    %16 = vector.broadcast %4 : i32 to vector<16x1xi32>
    %17 = arith.addi %6, %16 : vector<16x1xi32>
    %18 = arith.select %15, %17, %6 : vector<16x1xi1>, vector<16x1xi32>
    %c0_i32_4 = arith.constant 0 : i32
    %19 = vector.broadcast %c0_i32_4 : i32 to vector<16x1xi32>
    %20 = arith.cmpi ne, %18, %19 : vector<16x1xi32>
    %21 = arith.extui %20 : vector<16x1xi1> to vector<16x1xi32>
    %22 = arith.sitofp %21 : vector<16x1xi32> to vector<16x1xf32>
    %23 = arith.truncf %22 : vector<16x1xf32> to vector<16x1xbf16>
    %c3_i32 = arith.constant 3 : i32
    %24 = vector.broadcast %c3_i32 : i32 to vector<16x1xi32>
    %25 = arith.cmpi ne, %18, %24 : vector<16x1xi32>
    %26 = arith.extui %25 : vector<16x1xi1> to vector<16x1xi32>
    %27 = arith.sitofp %26 : vector<16x1xi32> to vector<16x1xf32>
    %28 = arith.truncf %27 : vector<16x1xf32> to vector<16x1xbf16>
    %c0_5 = arith.constant 0 : index
    %c0_6 = arith.constant 0 : index
    %c0_7 = arith.constant 0 : index
    %29 = vector.load %arg1[%c0_5, %c0_6, %c0_7] : memref<1x16x192xbf16, #tpu.memory_space<vmem>>, vector<1x16x192xbf16>
    %30 = vector.shape_cast %29 : vector<1x16x192xbf16> to vector<16x192xbf16>
    %c5 = arith.constant 5 : index
    %c0_8 = arith.constant 0 : index
    %31 = vector.load %arg28[%c5, %c0_8] : memref<26x192xbf16, #tpu.memory_space<vmem>>, vector<16x192xbf16>
    tpu.vector_store %arg28[%c5, %c0_8], %30 {strides = array<i32>} : memref<26x192xbf16, #tpu.memory_space<vmem>>, vector<16x192xbf16>,
    %cst_9 = arith.constant 0.000000e+00 : f32
    %32 = vector.broadcast %cst_9 : f32 to vector<16x128xf32>
    %c0_10 = arith.constant 0 : index
    %c0_11 = arith.constant 0 : index
    %33 = vector.load %arg28[%c0_10, %c0_11] : memref<26x192xbf16, #tpu.memory_space<vmem>>, vector<16x192xbf16>
    %34 = vector.broadcast %23 : vector<16x1xbf16> to vector<16x192xbf16>
    %35 = arith.mulf %33, %34 : vector<16x192xbf16>
    %c0_12 = arith.constant 0 : index
    %c0_13 = arith.constant 0 : index
    %36 = vector.load %arg2[%c0_12, %c0_13] : memref<192x512xbf16, #tpu.memory_space<vmem>>, vector<192x128xbf16>
    %cst_14 = arith.constant dense<0.000000e+00> : vector<16x128xf32>
    %37 = tpu.matmul %35, %36, %cst_14 {dimension_numbers = #tpu.dot_dimension_numbers<[1], [0], [0], [1], [0, 0, 1, 1], [], []>} : vector<16x192xbf16>, vector<192x128xbf16>, vector<16x128xf32> -> vector<16x128xf32>
    %38 = arith.addf %32, %37 : vector<16x128xf32>
    %c1 = arith.constant 1 : index
    %c0_15 = arith.constant 0 : index
    %39 = vector.load %arg28[%c1, %c0_15] : memref<26x192xbf16, #tpu.memory_space<vmem>>, vector<16x192xbf16>
    %c0_16 = arith.constant 0 : index
    %c128 = arith.constant 128 : index
    %40 = vector.load %arg2[%c0_16, %c128] : memref<192x512xbf16, #tpu.memory_space<vmem>>, vector<192x128xbf16>
    %cst_17 = arith.constant dense<0.000000e+00> : vector<16x128xf32>
    %41 = tpu.matmul %39, %40, %cst_17 {dimension_numbers = #tpu.dot_dimension_numbers<[1], [0], [0], [1], [0, 0, 1, 1], [], []>} : vector<16x192xbf16>, vector<192x128xbf16>, vector<16x128xf32> -> vector<16x128xf32>
    %42 = arith.addf %38, %41 : vector<16x128xf32>
    %c4 = arith.constant 4 : index
    %c0_18 = arith.constant 0 : index
    %43 = vector.load %arg28[%c4, %c0_18] : memref<26x192xbf16, #tpu.memory_space<vmem>>, vector<16x192xbf16>
    %44 = vector.broadcast %23 : vector<16x1xbf16> to vector<16x192xbf16>
    %45 = arith.mulf %43, %44 : vector<16x192xbf16>
    %c0_19 = arith.constant 0 : index
    %c256 = arith.constant 256 : index
    %46 = vector.load %arg2[%c0_19, %c256] : memref<192x512xbf16, #tpu.memory_space<vmem>>, vector<192x128xbf16>
    %cst_20 = arith.constant dense<0.000000e+00> : vector<16x128xf32>
    %47 = tpu.matmul %45, %46, %cst_20 {dimension_numbers = #tpu.dot_dimension_numbers<[1], [0], [0], [1], [0, 0, 1, 1], [], []>} : vector<16x192xbf16>, vector<192x128xbf16>, vector<16x128xf32> -> vector<16x128xf32>
    %48 = arith.addf %42, %47 : vector<16x128xf32>
    %c5_21 = arith.constant 5 : index
    %c0_22 = arith.constant 0 : index
    %49 = vector.load %arg28[%c5_21, %c0_22] : memref<26x192xbf16, #tpu.memory_space<vmem>>, vector<16x192xbf16>
    %c0_23 = arith.constant 0 : index
    %c384 = arith.constant 384 : index
    %50 = vector.load %arg2[%c0_23, %c384] : memref<192x512xbf16, #tpu.memory_space<vmem>>, vector<192x128xbf16>
    %cst_24 = arith.constant dense<0.000000e+00> : vector<16x128xf32>
    %51 = tpu.matmul %49, %50, %cst_24 {dimension_numbers = #tpu.dot_dimension_numbers<[1], [0], [0], [1], [0, 0, 1, 1], [], []>} : vector<16x192xbf16>, vector<192x128xbf16>, vector<16x128xf32> -> vector<16x128xf32>
    %52 = arith.addf %48, %51 : vector<16x128xf32>
    %c0_25 = arith.constant 0 : index
    %c0_26 = arith.constant 0 : index
    %53 = vector.load %arg3[%c0_25, %c0_26] : memref<1x128xf32, #tpu.memory_space<vmem>>, vector<1x128xf32>
    %54 = vector.broadcast %53 : vector<1x128xf32> to vector<16x128xf32>
    %55 = arith.addf %52, %54 : vector<16x128xf32>
    %cst_27 = arith.constant 5.000000e-01 : f32
    %56 = vector.broadcast %cst_27 : f32 to vector<16x128xf32>
    %57 = arith.mulf %56, %55 : vector<16x128xf32>
    %cst_28 = arith.constant 4.471500e-02 : f32
    %58 = vector.broadcast %cst_28 : f32 to vector<16x128xf32>
    %59 = arith.mulf %58, %55 : vector<16x128xf32>
    %60 = arith.mulf %59, %55 : vector<16x128xf32>
    %61 = arith.mulf %60, %55 : vector<16x128xf32>
    %62 = arith.addf %55, %61 : vector<16x128xf32>
    %cst_29 = arith.constant 0.797884583 : f32
    %63 = vector.broadcast %cst_29 : f32 to vector<16x128xf32>
    %64 = arith.mulf %63, %62 : vector<16x128xf32>
    %65 = math.tanh %64 : vector<16x128xf32>
    %cst_30 = arith.constant 1.000000e+00 : f32
    %66 = vector.broadcast %cst_30 : f32 to vector<16x128xf32>
    %67 = arith.addf %66, %65 : vector<16x128xf32>
    %68 = arith.mulf %57, %67 : vector<16x128xf32>
    %69 = arith.truncf %68 : vector<16x128xf32> to vector<16x128xbf16>
    %c5_31 = arith.constant 5 : index
    %c0_32 = arith.constant 0 : index
    %70 = vector.load %arg28[%c5_31, %c0_32] : memref<26x192xbf16, #tpu.memory_space<vmem>>, vector<16x128xbf16>
    tpu.vector_store %arg28[%c5_31, %c0_32], %69 {strides = array<i32>} : memref<26x192xbf16, #tpu.memory_space<vmem>>, vector<16x128xbf16>,
    %cst_33 = arith.constant 0.000000e+00 : f32
    %71 = vector.broadcast %cst_33 : f32 to vector<16x128xf32>
    %c0_34 = arith.constant 0 : index
    %c0_35 = arith.constant 0 : index
    %72 = vector.load %arg28[%c0_34, %c0_35] : memref<26x192xbf16, #tpu.memory_space<vmem>>, vector<16x128xbf16>
    %73 = vector.broadcast %23 : vector<16x1xbf16> to vector<16x128xbf16>
    %74 = arith.mulf %72, %73 : vector<16x128xbf16>
    %c0_36 = arith.constant 0 : index
    %c0_37 = arith.constant 0 : index
    %75 = vector.load %arg4[%c0_36, %c0_37] : memref<128x1152xbf16, #tpu.memory_space<vmem>>, vector<128x128xbf16>
    %cst_38 = arith.constant dense<0.000000e+00> : vector<16x128xf32>
    %76 = tpu.matmul %74, %75, %cst_38 {dimension_numbers = #tpu.dot_dimension_numbers<[1], [0], [0], [1], [0, 0, 1, 1], [], []>} : vector<16x128xbf16>, vector<128x128xbf16>, vector<16x128xf32> -> vector<16x128xf32>
    %77 = arith.addf %71, %76 : vector<16x128xf32>
    %c1_39 = arith.constant 1 : index
    %c0_40 = arith.constant 0 : index
    %78 = vector.load %arg28[%c1_39, %c0_40] : memref<26x192xbf16, #tpu.memory_space<vmem>>, vector<16x128xbf16>
    %c0_41 = arith.constant 0 : index
    %c128_42 = arith.constant 128 : index
    %79 = vector.load %arg4[%c0_41, %c128_42] : memref<128x1152xbf16, #tpu.memory_space<vmem>>, vector<128x128xbf16>
    %cst_43 = arith.constant dense<0.000000e+00> : vector<16x128xf32>
    %80 = tpu.matmul %78, %79, %cst_43 {dimension_numbers = #tpu.dot_dimension_numbers<[1], [0], [0], [1], [0, 0, 1, 1], [], []>} : vector<16x128xbf16>, vector<128x128xbf16>, vector<16x128xf32> -> vector<16x128xf32>
    %81 = arith.addf %77, %80 : vector<16x128xf32>
    %c2 = arith.constant 2 : index
    %c0_44 = arith.constant 0 : index
    %82 = vector.load %arg28[%c2, %c0_44] : memref<26x192xbf16, #tpu.memory_space<vmem>>, vector<16x128xbf16>
    %83 = vector.broadcast %28 : vector<16x1xbf16> to vector<16x128xbf16>
    %84 = arith.mulf %82, %83 : vector<16x128xbf16>
    %c0_45 = arith.constant 0 : index
    %c256_46 = arith.constant 256 : index
    %85 = vector.load %arg4[%c0_45, %c256_46] : memref<128x1152xbf16, #tpu.memory_space<vmem>>, vector<128x128xbf16>
    %cst_47 = arith.constant dense<0.000000e+00> : vector<16x128xf32>
    %86 = tpu.matmul %84, %85, %cst_47 {dimension_numbers = #tpu.dot_dimension_numbers<[1], [0], [0], [1], [0, 0, 1, 1], [], []>} : vector<16x128xbf16>, vector<128x128xbf16>, vector<16x128xf32> -> vector<16x128xf32>
    %87 = arith.addf %81, %86 : vector<16x128xf32>
    %c4_48 = arith.constant 4 : index
    %c0_49 = arith.constant 0 : index
    %88 = vector.load %arg28[%c4_48, %c0_49] : memref<26x192xbf16, #tpu.memory_space<vmem>>, vector<16x128xbf16>
    %89 = vector.broadcast %23 : vector<16x1xbf16> to vector<16x128xbf16>
    %90 = arith.mulf %88, %89 : vector<16x128xbf16>
    %c0_50 = arith.constant 0 : index
    %c384_51 = arith.constant 384 : index
    %91 = vector.load %arg4[%c0_50, %c384_51] : memref<128x1152xbf16, #tpu.memory_space<vmem>>, vector<128x128xbf16>
    %cst_52 = arith.constant dense<0.000000e+00> : vector<16x128xf32>
    %92 = tpu.matmul %90, %91, %cst_52 {dimension_numbers = #tpu.dot_dimension_numbers<[1], [0], [0], [1], [0, 0, 1, 1], [], []>} : vector<16x128xbf16>, vector<128x128xbf16>, vector<16x128xf32> -> vector<16x128xf32>
    %93 = arith.addf %87, %92 : vector<16x128xf32>
    %c5_53 = arith.constant 5 : index
    %c0_54 = arith.constant 0 : index
    %94 = vector.load %arg28[%c5_53, %c0_54] : memref<26x192xbf16, #tpu.memory_space<vmem>>, vector<16x128xbf16>
    %c0_55 = arith.constant 0 : index
    %c512 = arith.constant 512 : index
    %95 = vector.load %arg4[%c0_55, %c512] : memref<128x1152xbf16, #tpu.memory_space<vmem>>, vector<128x128xbf16>
    %cst_56 = arith.constant dense<0.000000e+00> : vector<16x128xf32>
    %96 = tpu.matmul %94, %95, %cst_56 {dimension_numbers = #tpu.dot_dimension_numbers<[1], [0], [0], [1], [0, 0, 1, 1], [], []>} : vector<16x128xbf16>, vector<128x128xbf16>, vector<16x128xf32> -> vector<16x128xf32>
    %97 = arith.addf %93, %96 : vector<16x128xf32>
    %c6 = arith.constant 6 : index
    %c0_57 = arith.constant 0 : index
    %98 = vector.load %arg28[%c6, %c0_57] : memref<26x192xbf16, #tpu.memory_space<vmem>>, vector<16x128xbf16>
    %99 = vector.broadcast %28 : vector<16x1xbf16> to vector<16x128xbf16>
    %100 = arith.mulf %98, %99 : vector<16x128xbf16>
    %c0_58 = arith.constant 0 : index
    %c640 = arith.constant 640 : index
    %101 = vector.load %arg4[%c0_58, %c640] : memref<128x1152xbf16, #tpu.memory_space<vmem>>, vector<128x128xbf16>
    %cst_59 = arith.constant dense<0.000000e+00> : vector<16x128xf32>
    %102 = tpu.matmul %100, %101, %cst_59 {dimension_numbers = #tpu.dot_dimension_numbers<[1], [0], [0], [1], [0, 0, 1, 1], [], []>} : vector<16x128xbf16>, vector<128x128xbf16>, vector<16x128xf32> -> vector<16x128xf32>
    %103 = arith.addf %97, %102 : vector<16x128xf32>
    %c8 = arith.constant 8 : index
    %c0_60 = arith.constant 0 : index
    %104 = vector.load %arg28[%c8, %c0_60] : memref<26x192xbf16, #tpu.memory_space<vmem>>, vector<16x128xbf16>
    %105 = vector.broadcast %23 : vector<16x1xbf16> to vector<16x128xbf16>
    %106 = arith.mulf %104, %105 : vector<16x128xbf16>
    %c0_61 = arith.constant 0 : index
    %c768 = arith.constant 768 : index
    %107 = vector.load %arg4[%c0_61, %c768] : memref<128x1152xbf16, #tpu.memory_space<vmem>>, vector<128x128xbf16>
    %cst_62 = arith.constant dense<0.000000e+00> : vector<16x128xf32>
    %108 = tpu.matmul %106, %107, %cst_62 {dimension_numbers = #tpu.dot_dimension_numbers<[1], [0], [0], [1], [0, 0, 1, 1], [], []>} : vector<16x128xbf16>, vector<128x128xbf16>, vector<16x128xf32> -> vector<16x128xf32>
    %109 = arith.addf %103, %108 : vector<16x128xf32>
    %c9 = arith.constant 9 : index
    %c0_63 = arith.constant 0 : index
    %110 = vector.load %arg28[%c9, %c0_63] : memref<26x192xbf16, #tpu.memory_space<vmem>>, vector<16x128xbf16>
    %c0_64 = arith.constant 0 : index
    %c896 = arith.constant 896 : index
    %111 = vector.load %arg4[%c0_64, %c896] : memref<128x1152xbf16, #tpu.memory_space<vmem>>, vector<128x128xbf16>
    %cst_65 = arith.constant dense<0.000000e+00> : vector<16x128xf32>
    %112 = tpu.matmul %110, %111, %cst_65 {dimension_numbers = #tpu.dot_dimension_numbers<[1], [0], [0], [1], [0, 0, 1, 1], [], []>} : vector<16x128xbf16>, vector<128x128xbf16>, vector<16x128xf32> -> vector<16x128xf32>
    %113 = arith.addf %109, %112 : vector<16x128xf32>
    %c10 = arith.constant 10 : index
    %c0_66 = arith.constant 0 : index
    %114 = vector.load %arg28[%c10, %c0_66] : memref<26x192xbf16, #tpu.memory_space<vmem>>, vector<16x128xbf16>
    %115 = vector.broadcast %28 : vector<16x1xbf16> to vector<16x128xbf16>
    %116 = arith.mulf %114, %115 : vector<16x128xbf16>
    %c0_67 = arith.constant 0 : index
    %c1024 = arith.constant 1024 : index
    %117 = vector.load %arg4[%c0_67, %c1024] : memref<128x1152xbf16, #tpu.memory_space<vmem>>, vector<128x128xbf16>
    %cst_68 = arith.constant dense<0.000000e+00> : vector<16x128xf32>
    %118 = tpu.matmul %116, %117, %cst_68 {dimension_numbers = #tpu.dot_dimension_numbers<[1], [0], [0], [1], [0, 0, 1, 1], [], []>} : vector<16x128xbf16>, vector<128x128xbf16>, vector<16x128xf32> -> vector<16x128xf32>
    %119 = arith.addf %113, %118 : vector<16x128xf32>
    %c0_69 = arith.constant 0 : index
    %c0_70 = arith.constant 0 : index
    %120 = vector.load %arg5[%c0_69, %c0_70] : memref<1x128xf32, #tpu.memory_space<vmem>>, vector<1x128xf32>
    %121 = vector.broadcast %120 : vector<1x128xf32> to vector<16x128xf32>
    %122 = arith.addf %119, %121 : vector<16x128xf32>
    %cst_71 = arith.constant 5.000000e-01 : f32
    %123 = vector.broadcast %cst_71 : f32 to vector<16x128xf32>
    %124 = arith.mulf %123, %122 : vector<16x128xf32>
    %cst_72 = arith.constant 4.471500e-02 : f32
    %125 = vector.broadcast %cst_72 : f32 to vector<16x128xf32>
    %126 = arith.mulf %125, %122 : vector<16x128xf32>
    %127 = arith.mulf %126, %122 : vector<16x128xf32>
    %128 = arith.mulf %127, %122 : vector<16x128xf32>
    %129 = arith.addf %122, %128 : vector<16x128xf32>
    %cst_73 = arith.constant 0.797884583 : f32
    %130 = vector.broadcast %cst_73 : f32 to vector<16x128xf32>
    %131 = arith.mulf %130, %129 : vector<16x128xf32>
    %132 = math.tanh %131 : vector<16x128xf32>
    %cst_74 = arith.constant 1.000000e+00 : f32
    %133 = vector.broadcast %cst_74 : f32 to vector<16x128xf32>
    %134 = arith.addf %133, %132 : vector<16x128xf32>
    %135 = arith.mulf %124, %134 : vector<16x128xf32>
    %136 = arith.truncf %135 : vector<16x128xf32> to vector<16x128xbf16>
    %c5_75 = arith.constant 5 : index
    %c0_76 = arith.constant 0 : index
    %137 = vector.load %arg28[%c5_75, %c0_76] : memref<26x192xbf16, #tpu.memory_space<vmem>>, vector<16x128xbf16>
    tpu.vector_store %arg28[%c5_75, %c0_76], %136 {strides = array<i32>} : memref<26x192xbf16, #tpu.memory_space<vmem>>, vector<16x128xbf16>,
    %cst_77 = arith.constant 0.000000e+00 : f32
    %138 = vector.broadcast %cst_77 : f32 to vector<16x64xf32>
    %c0_78 = arith.constant 0 : index
    %c0_79 = arith.constant 0 : index
    %139 = vector.load %arg28[%c0_78, %c0_79] : memref<26x192xbf16, #tpu.memory_space<vmem>>, vector<16x128xbf16>
    %140 = vector.broadcast %23 : vector<16x1xbf16> to vector<16x128xbf16>
    %141 = arith.mulf %139, %140 : vector<16x128xbf16>
    %c0_80 = arith.constant 0 : index
    %c0_81 = arith.constant 0 : index
    %142 = vector.load %arg6[%c0_80, %c0_81] : memref<128x256xbf16, #tpu.memory_space<vmem>>, vector<128x64xbf16>
    %cst_82 = arith.constant dense<0.000000e+00> : vector<16x64xf32>
    %143 = tpu.matmul %141, %142, %cst_82 {dimension_numbers = #tpu.dot_dimension_numbers<[1], [0], [0], [1], [0, 0, 1, 1], [], []>} : vector<16x128xbf16>, vector<128x64xbf16>, vector<16x64xf32> -> vector<16x64xf32>
    %144 = arith.addf %138, %143 : vector<16x64xf32>
    %c1_83 = arith.constant 1 : index
    %c0_84 = arith.constant 0 : index
    %145 = vector.load %arg28[%c1_83, %c0_84] : memref<26x192xbf16, #tpu.memory_space<vmem>>, vector<16x128xbf16>
    %c0_85 = arith.constant 0 : index
    %c64 = arith.constant 64 : index
    %146 = vector.load %arg6[%c0_85, %c64] : memref<128x256xbf16, #tpu.memory_space<vmem>>, vector<128x64xbf16>
    %cst_86 = arith.constant dense<0.000000e+00> : vector<16x64xf32>
    %147 = tpu.matmul %145, %146, %cst_86 {dimension_numbers = #tpu.dot_dimension_numbers<[1], [0], [0], [1], [0, 0, 1, 1], [], []>} : vector<16x128xbf16>, vector<128x64xbf16>, vector<16x64xf32> -> vector<16x64xf32>
    %148 = arith.addf %144, %147 : vector<16x64xf32>
    %c4_87 = arith.constant 4 : index
    %c0_88 = arith.constant 0 : index
    %149 = vector.load %arg28[%c4_87, %c0_88] : memref<26x192xbf16, #tpu.memory_space<vmem>>, vector<16x128xbf16>
    %150 = vector.broadcast %23 : vector<16x1xbf16> to vector<16x128xbf16>
    %151 = arith.mulf %149, %150 : vector<16x128xbf16>
    %c0_89 = arith.constant 0 : index
    %c128_90 = arith.constant 128 : index
    %152 = vector.load %arg6[%c0_89, %c128_90] : memref<128x256xbf16, #tpu.memory_space<vmem>>, vector<128x64xbf16>
    %cst_91 = arith.constant dense<0.000000e+00> : vector<16x64xf32>
    %153 = tpu.matmul %151, %152, %cst_91 {dimension_numbers = #tpu.dot_dimension_numbers<[1], [0], [0], [1], [0, 0, 1, 1], [], []>} : vector<16x128xbf16>, vector<128x64xbf16>, vector<16x64xf32> -> vector<16x64xf32>
    %154 = arith.addf %148, %153 : vector<16x64xf32>
    %c5_92 = arith.constant 5 : index
    %c0_93 = arith.constant 0 : index
    %155 = vector.load %arg28[%c5_92, %c0_93] : memref<26x192xbf16, #tpu.memory_space<vmem>>, vector<16x128xbf16>
    %c0_94 = arith.constant 0 : index
    %c192 = arith.constant 192 : index
    %156 = vector.load %arg6[%c0_94, %c192] : memref<128x256xbf16, #tpu.memory_space<vmem>>, vector<128x64xbf16>
    %cst_95 = arith.constant dense<0.000000e+00> : vector<16x64xf32>
    %157 = tpu.matmul %155, %156, %cst_95 {dimension_numbers = #tpu.dot_dimension_numbers<[1], [0], [0], [1], [0, 0, 1, 1], [], []>} : vector<16x128xbf16>, vector<128x64xbf16>, vector<16x64xf32> -> vector<16x64xf32>
    %158 = arith.addf %154, %157 : vector<16x64xf32>
    %c0_96 = arith.constant 0 : index
    %c0_97 = arith.constant 0 : index
    %159 = vector.load %arg7[%c0_96, %c0_97] : memref<1x64xf32, #tpu.memory_space<vmem>>, vector<1x64xf32>
    %160 = vector.broadcast %159 : vector<1x64xf32> to vector<16x64xf32>
    %161 = arith.addf %158, %160 : vector<16x64xf32>
    %cst_98 = arith.constant 5.000000e-01 : f32
    %162 = vector.broadcast %cst_98 : f32 to vector<16x64xf32>
    %163 = arith.mulf %162, %161 : vector<16x64xf32>
    %cst_99 = arith.constant 4.471500e-02 : f32
    %164 = vector.broadcast %cst_99 : f32 to vector<16x64xf32>
    %165 = arith.mulf %164, %161 : vector<16x64xf32>
    %166 = arith.mulf %165, %161 : vector<16x64xf32>
    %167 = arith.mulf %166, %161 : vector<16x64xf32>
    %168 = arith.addf %161, %167 : vector<16x64xf32>
    %cst_100 = arith.constant 0.797884583 : f32
    %169 = vector.broadcast %cst_100 : f32 to vector<16x64xf32>
    %170 = arith.mulf %169, %168 : vector<16x64xf32>
    %171 = math.tanh %170 : vector<16x64xf32>
    %cst_101 = arith.constant 1.000000e+00 : f32
    %172 = vector.broadcast %cst_101 : f32 to vector<16x64xf32>
    %173 = arith.addf %172, %171 : vector<16x64xf32>
    %174 = arith.mulf %163, %173 : vector<16x64xf32>
    %175 = arith.truncf %174 : vector<16x64xf32> to vector<16x64xbf16>
    %c5_102 = arith.constant 5 : index
    %c0_103 = arith.constant 0 : index
    %176 = vector.load %arg28[%c5_102, %c0_103] : memref<26x192xbf16, #tpu.memory_space<vmem>>, vector<16x64xbf16>
    tpu.vector_store %arg28[%c5_102, %c0_103], %175 {strides = array<i32>} : memref<26x192xbf16, #tpu.memory_space<vmem>>, vector<16x64xbf16>,
    %cst_104 = arith.constant 0.000000e+00 : f32
    %177 = vector.broadcast %cst_104 : f32 to vector<16x64xf32>
    %c0_105 = arith.constant 0 : index
    %c0_106 = arith.constant 0 : index
    %178 = vector.load %arg28[%c0_105, %c0_106] : memref<26x192xbf16, #tpu.memory_space<vmem>>, vector<16x64xbf16>
    %179 = vector.broadcast %23 : vector<16x1xbf16> to vector<16x64xbf16>
    %180 = arith.mulf %178, %179 : vector<16x64xbf16>
    %c0_107 = arith.constant 0 : index
    %c0_108 = arith.constant 0 : index
    %181 = vector.load %arg8[%c0_107, %c0_108] : memref<64x576xbf16, #tpu.memory_space<vmem>>, vector<64x64xbf16>
    %cst_109 = arith.constant dense<0.000000e+00> : vector<16x64xf32>
    %182 = tpu.matmul %180, %181, %cst_109 {dimension_numbers = #tpu.dot_dimension_numbers<[1], [0], [0], [1], [0, 0, 1, 1], [], []>} : vector<16x64xbf16>, vector<64x64xbf16>, vector<16x64xf32> -> vector<16x64xf32>
    %183 = arith.addf %177, %182 : vector<16x64xf32>
    %c1_110 = arith.constant 1 : index
    %c0_111 = arith.constant 0 : index
    %184 = vector.load %arg28[%c1_110, %c0_111] : memref<26x192xbf16, #tpu.memory_space<vmem>>, vector<16x64xbf16>
    %c0_112 = arith.constant 0 : index
    %c64_113 = arith.constant 64 : index
    %185 = vector.load %arg8[%c0_112, %c64_113] : memref<64x576xbf16, #tpu.memory_space<vmem>>, vector<64x64xbf16>
    %cst_114 = arith.constant dense<0.000000e+00> : vector<16x64xf32>
    %186 = tpu.matmul %184, %185, %cst_114 {dimension_numbers = #tpu.dot_dimension_numbers<[1], [0], [0], [1], [0, 0, 1, 1], [], []>} : vector<16x64xbf16>, vector<64x64xbf16>, vector<16x64xf32> -> vector<16x64xf32>
    %187 = arith.addf %183, %186 : vector<16x64xf32>
    %c2_115 = arith.constant 2 : index
    %c0_116 = arith.constant 0 : index
    %188 = vector.load %arg28[%c2_115, %c0_116] : memref<26x192xbf16, #tpu.memory_space<vmem>>, vector<16x64xbf16>
    %189 = vector.broadcast %28 : vector<16x1xbf16> to vector<16x64xbf16>
    %190 = arith.mulf %188, %189 : vector<16x64xbf16>
    %c0_117 = arith.constant 0 : index
    %c128_118 = arith.constant 128 : index
    %191 = vector.load %arg8[%c0_117, %c128_118] : memref<64x576xbf16, #tpu.memory_space<vmem>>, vector<64x64xbf16>
    %cst_119 = arith.constant dense<0.000000e+00> : vector<16x64xf32>
    %192 = tpu.matmul %190, %191, %cst_119 {dimension_numbers = #tpu.dot_dimension_numbers<[1], [0], [0], [1], [0, 0, 1, 1], [], []>} : vector<16x64xbf16>, vector<64x64xbf16>, vector<16x64xf32> -> vector<16x64xf32>
    %193 = arith.addf %187, %192 : vector<16x64xf32>
    %c4_120 = arith.constant 4 : index
    %c0_121 = arith.constant 0 : index
    %194 = vector.load %arg28[%c4_120, %c0_121] : memref<26x192xbf16, #tpu.memory_space<vmem>>, vector<16x64xbf16>
    %195 = vector.broadcast %23 : vector<16x1xbf16> to vector<16x64xbf16>
    %196 = arith.mulf %194, %195 : vector<16x64xbf16>
    %c0_122 = arith.constant 0 : index
    %c192_123 = arith.constant 192 : index
    %197 = vector.load %arg8[%c0_122, %c192_123] : memref<64x576xbf16, #tpu.memory_space<vmem>>, vector<64x64xbf16>
    %cst_124 = arith.constant dense<0.000000e+00> : vector<16x64xf32>
    %198 = tpu.matmul %196, %197, %cst_124 {dimension_numbers = #tpu.dot_dimension_numbers<[1], [0], [0], [1], [0, 0, 1, 1], [], []>} : vector<16x64xbf16>, vector<64x64xbf16>, vector<16x64xf32> -> vector<16x64xf32>
    %199 = arith.addf %193, %198 : vector<16x64xf32>
    %c5_125 = arith.constant 5 : index
    %c0_126 = arith.constant 0 : index
    %200 = vector.load %arg28[%c5_125, %c0_126] : memref<26x192xbf16, #tpu.memory_space<vmem>>, vector<16x64xbf16>
    %c0_127 = arith.constant 0 : index
    %c256_128 = arith.constant 256 : index
    %201 = vector.load %arg8[%c0_127, %c256_128] : memref<64x576xbf16, #tpu.memory_space<vmem>>, vector<64x64xbf16>
    %cst_129 = arith.constant dense<0.000000e+00> : vector<16x64xf32>
    %202 = tpu.matmul %200, %201, %cst_129 {dimension_numbers = #tpu.dot_dimension_numbers<[1], [0], [0], [1], [0, 0, 1, 1], [], []>} : vector<16x64xbf16>, vector<64x64xbf16>, vector<16x64xf32> -> vector<16x64xf32>
    %203 = arith.addf %199, %202 : vector<16x64xf32>
    %c6_130 = arith.constant 6 : index
    %c0_131 = arith.constant 0 : index
    %204 = vector.load %arg28[%c6_130, %c0_131] : memref<26x192xbf16, #tpu.memory_space<vmem>>, vector<16x64xbf16>
    %205 = vector.broadcast %28 : vector<16x1xbf16> to vector<16x64xbf16>
    %206 = arith.mulf %204, %205 : vector<16x64xbf16>
    %c0_132 = arith.constant 0 : index
    %c320 = arith.constant 320 : index
    %207 = vector.load %arg8[%c0_132, %c320] : memref<64x576xbf16, #tpu.memory_space<vmem>>, vector<64x64xbf16>
    %cst_133 = arith.constant dense<0.000000e+00> : vector<16x64xf32>
    %208 = tpu.matmul %206, %207, %cst_133 {dimension_numbers = #tpu.dot_dimension_numbers<[1], [0], [0], [1], [0, 0, 1, 1], [], []>} : vector<16x64xbf16>, vector<64x64xbf16>, vector<16x64xf32> -> vector<16x64xf32>
    %209 = arith.addf %203, %208 : vector<16x64xf32>
    %c8_134 = arith.constant 8 : index
    %c0_135 = arith.constant 0 : index
    %210 = vector.load %arg28[%c8_134, %c0_135] : memref<26x192xbf16, #tpu.memory_space<vmem>>, vector<16x64xbf16>
    %211 = vector.broadcast %23 : vector<16x1xbf16> to vector<16x64xbf16>
    %212 = arith.mulf %210, %211 : vector<16x64xbf16>
    %c0_136 = arith.constant 0 : index
    %c384_137 = arith.constant 384 : index
    %213 = vector.load %arg8[%c0_136, %c384_137] : memref<64x576xbf16, #tpu.memory_space<vmem>>, vector<64x64xbf16>
    %cst_138 = arith.constant dense<0.000000e+00> : vector<16x64xf32>
    %214 = tpu.matmul %212, %213, %cst_138 {dimension_numbers = #tpu.dot_dimension_numbers<[1], [0], [0], [1], [0, 0, 1, 1], [], []>} : vector<16x64xbf16>, vector<64x64xbf16>, vector<16x64xf32> -> vector<16x64xf32>
    %215 = arith.addf %209, %214 : vector<16x64xf32>
    %c9_139 = arith.constant 9 : index
    %c0_140 = arith.constant 0 : index
    %216 = vector.load %arg28[%c9_139, %c0_140] : memref<26x192xbf16, #tpu.memory_space<vmem>>, vector<16x64xbf16>
    %c0_141 = arith.constant 0 : index
    %c448 = arith.constant 448 : index
    %217 = vector.load %arg8[%c0_141, %c448] : memref<64x576xbf16, #tpu.memory_space<vmem>>, vector<64x64xbf16>
    %cst_142 = arith.constant dense<0.000000e+00> : vector<16x64xf32>
    %218 = tpu.matmul %216, %217, %cst_142 {dimension_numbers = #tpu.dot_dimension_numbers<[1], [0], [0], [1], [0, 0, 1, 1], [], []>} : vector<16x64xbf16>, vector<64x64xbf16>, vector<16x64xf32> -> vector<16x64xf32>
    %219 = arith.addf %215, %218 : vector<16x64xf32>
    %c10_143 = arith.constant 10 : index
    %c0_144 = arith.constant 0 : index
    %220 = vector.load %arg28[%c10_143, %c0_144] : memref<26x192xbf16, #tpu.memory_space<vmem>>, vector<16x64xbf16>
    %221 = vector.broadcast %28 : vector<16x1xbf16> to vector<16x64xbf16>
    %222 = arith.mulf %220, %221 : vector<16x64xbf16>
    %c0_145 = arith.constant 0 : index
    %c512_146 = arith.constant 512 : index
    %223 = vector.load %arg8[%c0_145, %c512_146] : memref<64x576xbf16, #tpu.memory_space<vmem>>, vector<64x64xbf16>
    %cst_147 = arith.constant dense<0.000000e+00> : vector<16x64xf32>
    %224 = tpu.matmul %222, %223, %cst_147 {dimension_numbers = #tpu.dot_dimension_numbers<[1], [0], [0], [1], [0, 0, 1, 1], [], []>} : vector<16x64xbf16>, vector<64x64xbf16>, vector<16x64xf32> -> vector<16x64xf32>
    %225 = arith.addf %219, %224 : vector<16x64xf32>
    %c0_148 = arith.constant 0 : index
    %c0_149 = arith.constant 0 : index
    %226 = vector.load %arg9[%c0_148, %c0_149] : memref<1x64xf32, #tpu.memory_space<vmem>>, vector<1x64xf32>
    %227 = vector.broadcast %226 : vector<1x64xf32> to vector<16x64xf32>
    %228 = arith.addf %225, %227 : vector<16x64xf32>
    %cst_150 = arith.constant 5.000000e-01 : f32
    %229 = vector.broadcast %cst_150 : f32 to vector<16x64xf32>
    %230 = arith.mulf %229, %228 : vector<16x64xf32>
    %cst_151 = arith.constant 4.471500e-02 : f32
    %231 = vector.broadcast %cst_151 : f32 to vector<16x64xf32>
    %232 = arith.mulf %231, %228 : vector<16x64xf32>
    %233 = arith.mulf %232, %228 : vector<16x64xf32>
    %234 = arith.mulf %233, %228 : vector<16x64xf32>
    %235 = arith.addf %228, %234 : vector<16x64xf32>
    %cst_152 = arith.constant 0.797884583 : f32
    %236 = vector.broadcast %cst_152 : f32 to vector<16x64xf32>
    %237 = arith.mulf %236, %235 : vector<16x64xf32>
    %238 = math.tanh %237 : vector<16x64xf32>
    %cst_153 = arith.constant 1.000000e+00 : f32
    %239 = vector.broadcast %cst_153 : f32 to vector<16x64xf32>
    %240 = arith.addf %239, %238 : vector<16x64xf32>
    %241 = arith.mulf %230, %240 : vector<16x64xf32>
    %242 = arith.truncf %241 : vector<16x64xf32> to vector<16x64xbf16>
    %c5_154 = arith.constant 5 : index
    %c0_155 = arith.constant 0 : index
    %243 = vector.load %arg28[%c5_154, %c0_155] : memref<26x192xbf16, #tpu.memory_space<vmem>>, vector<16x64xbf16>
    tpu.vector_store %arg28[%c5_154, %c0_155], %242 {strides = array<i32>} : memref<26x192xbf16, #tpu.memory_space<vmem>>, vector<16x64xbf16>,
    %cst_156 = arith.constant 0.000000e+00 : f32
    %244 = vector.broadcast %cst_156 : f32 to vector<16x16xf32>
    %c0_157 = arith.constant 0 : index
    %c0_158 = arith.constant 0 : index
    %245 = vector.load %arg28[%c0_157, %c0_158] : memref<26x192xbf16, #tpu.memory_space<vmem>>, vector<16x64xbf16>
    %246 = vector.broadcast %23 : vector<16x1xbf16> to vector<16x64xbf16>
    %247 = arith.mulf %245, %246 : vector<16x64xbf16>
    %c0_159 = arith.constant 0 : index
    %c0_160 = arith.constant 0 : index
    %248 = vector.load %arg10[%c0_159, %c0_160] : memref<64x64xbf16, #tpu.memory_space<vmem>>, vector<64x16xbf16>
    %cst_161 = arith.constant dense<0.000000e+00> : vector<16x16xf32>
    %249 = tpu.matmul %247, %248, %cst_161 {dimension_numbers = #tpu.dot_dimension_numbers<[1], [0], [0], [1], [0, 0, 1, 1], [], []>} : vector<16x64xbf16>, vector<64x16xbf16>, vector<16x16xf32> -> vector<16x16xf32>
    %250 = arith.addf %244, %249 : vector<16x16xf32>
    %c1_162 = arith.constant 1 : index
    %c0_163 = arith.constant 0 : index
    %251 = vector.load %arg28[%c1_162, %c0_163] : memref<26x192xbf16, #tpu.memory_space<vmem>>, vector<16x64xbf16>
    %c0_164 = arith.constant 0 : index
    %c16 = arith.constant 16 : index
    %252 = vector.load %arg10[%c0_164, %c16] : memref<64x64xbf16, #tpu.memory_space<vmem>>, vector<64x16xbf16>
    %cst_165 = arith.constant dense<0.000000e+00> : vector<16x16xf32>
    %253 = tpu.matmul %251, %252, %cst_165 {dimension_numbers = #tpu.dot_dimension_numbers<[1], [0], [0], [1], [0, 0, 1, 1], [], []>} : vector<16x64xbf16>, vector<64x16xbf16>, vector<16x16xf32> -> vector<16x16xf32>
    %254 = arith.addf %250, %253 : vector<16x16xf32>
    %c4_166 = arith.constant 4 : index
    %c0_167 = arith.constant 0 : index
    %255 = vector.load %arg28[%c4_166, %c0_167] : memref<26x192xbf16, #tpu.memory_space<vmem>>, vector<16x64xbf16>
    %256 = vector.broadcast %23 : vector<16x1xbf16> to vector<16x64xbf16>
    %257 = arith.mulf %255, %256 : vector<16x64xbf16>
    %c0_168 = arith.constant 0 : index
    %c32 = arith.constant 32 : index
    %258 = vector.load %arg10[%c0_168, %c32] : memref<64x64xbf16, #tpu.memory_space<vmem>>, vector<64x16xbf16>
    %cst_169 = arith.constant dense<0.000000e+00> : vector<16x16xf32>
    %259 = tpu.matmul %257, %258, %cst_169 {dimension_numbers = #tpu.dot_dimension_numbers<[1], [0], [0], [1], [0, 0, 1, 1], [], []>} : vector<16x64xbf16>, vector<64x16xbf16>, vector<16x16xf32> -> vector<16x16xf32>
    %260 = arith.addf %254, %259 : vector<16x16xf32>
    %c5_170 = arith.constant 5 : index
    %c0_171 = arith.constant 0 : index
    %261 = vector.load %arg28[%c5_170, %c0_171] : memref<26x192xbf16, #tpu.memory_space<vmem>>, vector<16x64xbf16>
    %c0_172 = arith.constant 0 : index
    %c48 = arith.constant 48 : index
    %262 = vector.load %arg10[%c0_172, %c48] : memref<64x64xbf16, #tpu.memory_space<vmem>>, vector<64x16xbf16>
    %cst_173 = arith.constant dense<0.000000e+00> : vector<16x16xf32>
    %263 = tpu.matmul %261, %262, %cst_173 {dimension_numbers = #tpu.dot_dimension_numbers<[1], [0], [0], [1], [0, 0, 1, 1], [], []>} : vector<16x64xbf16>, vector<64x16xbf16>, vector<16x16xf32> -> vector<16x16xf32>
    %264 = arith.addf %260, %263 : vector<16x16xf32>
    %c0_174 = arith.constant 0 : index
    %c0_175 = arith.constant 0 : index
    %265 = vector.load %arg11[%c0_174, %c0_175] : memref<1x16xf32, #tpu.memory_space<vmem>>, vector<1x16xf32>
    %266 = vector.broadcast %265 : vector<1x16xf32> to vector<16x16xf32>
    %267 = arith.addf %264, %266 : vector<16x16xf32>
    %cst_176 = arith.constant 5.000000e-01 : f32
    %268 = vector.broadcast %cst_176 : f32 to vector<16x16xf32>
    %269 = arith.mulf %268, %267 : vector<16x16xf32>
    %cst_177 = arith.constant 4.471500e-02 : f32
    %270 = vector.broadcast %cst_177 : f32 to vector<16x16xf32>
    %271 = arith.mulf %270, %267 : vector<16x16xf32>
    %272 = arith.mulf %271, %267 : vector<16x16xf32>
    %273 = arith.mulf %272, %267 : vector<16x16xf32>
    %274 = arith.addf %267, %273 : vector<16x16xf32>
    %cst_178 = arith.constant 0.797884583 : f32
    %275 = vector.broadcast %cst_178 : f32 to vector<16x16xf32>
    %276 = arith.mulf %275, %274 : vector<16x16xf32>
    %277 = math.tanh %276 : vector<16x16xf32>
    %cst_179 = arith.constant 1.000000e+00 : f32
    %278 = vector.broadcast %cst_179 : f32 to vector<16x16xf32>
    %279 = arith.addf %278, %277 : vector<16x16xf32>
    %280 = arith.mulf %269, %279 : vector<16x16xf32>
    %281 = vector.extract_strided_slice %280 {offsets = [0, 0], sizes = [1, 16], strides = [1, 1]} : vector<16x16xf32> to vector<1x16xf32>
    %282 = arith.truncf %281 : vector<1x16xf32> to vector<1x16xbf16>
    %c0_180 = arith.constant 0 : index
    %c0_181 = arith.constant 0 : index
    %283 = vector.load %arg29[%c0_180, %c0_181] : memref<1x256xbf16, #tpu.memory_space<vmem>>, vector<1x16xbf16>
    tpu.vector_store %arg29[%c0_180, %c0_181], %282 {strides = array<i32>} : memref<1x256xbf16, #tpu.memory_space<vmem>>, vector<1x16xbf16>,
    %284 = vector.extract_strided_slice %280 {offsets = [1, 0], sizes = [1, 16], strides = [1, 1]} : vector<16x16xf32> to vector<1x16xf32>
    %285 = arith.truncf %284 : vector<1x16xf32> to vector<1x16xbf16>
    %c0_182 = arith.constant 0 : index
    %c16_183 = arith.constant 16 : index
    %286 = vector.load %arg29[%c0_182, %c16_183] : memref<1x256xbf16, #tpu.memory_space<vmem>>, vector<1x16xbf16>
    tpu.vector_store %arg29[%c0_182, %c16_183], %285 {strides = array<i32>} : memref<1x256xbf16, #tpu.memory_space<vmem>>, vector<1x16xbf16>,
    %287 = vector.extract_strided_slice %280 {offsets = [2, 0], sizes = [1, 16], strides = [1, 1]} : vector<16x16xf32> to vector<1x16xf32>
    %288 = arith.truncf %287 : vector<1x16xf32> to vector<1x16xbf16>
    %c0_184 = arith.constant 0 : index
    %c32_185 = arith.constant 32 : index
    %289 = vector.load %arg29[%c0_184, %c32_185] : memref<1x256xbf16, #tpu.memory_space<vmem>>, vector<1x16xbf16>
    tpu.vector_store %arg29[%c0_184, %c32_185], %288 {strides = array<i32>} : memref<1x256xbf16, #tpu.memory_space<vmem>>, vector<1x16xbf16>,
    %290 = vector.extract_strided_slice %280 {offsets = [3, 0], sizes = [1, 16], strides = [1, 1]} : vector<16x16xf32> to vector<1x16xf32>
    %291 = arith.truncf %290 : vector<1x16xf32> to vector<1x16xbf16>
    %c0_186 = arith.constant 0 : index
    %c48_187 = arith.constant 48 : index
    %292 = vector.load %arg29[%c0_186, %c48_187] : memref<1x256xbf16, #tpu.memory_space<vmem>>, vector<1x16xbf16>
    tpu.vector_store %arg29[%c0_186, %c48_187], %291 {strides = array<i32>} : memref<1x256xbf16, #tpu.memory_space<vmem>>, vector<1x16xbf16>,
    %293 = vector.extract_strided_slice %280 {offsets = [4, 0], sizes = [1, 16], strides = [1, 1]} : vector<16x16xf32> to vector<1x16xf32>
    %294 = arith.truncf %293 : vector<1x16xf32> to vector<1x16xbf16>
    %c0_188 = arith.constant 0 : index
    %c64_189 = arith.constant 64 : index
    %295 = vector.load %arg29[%c0_188, %c64_189] : memref<1x256xbf16, #tpu.memory_space<vmem>>, vector<1x16xbf16>
    tpu.vector_store %arg29[%c0_188, %c64_189], %294 {strides = array<i32>} : memref<1x256xbf16, #tpu.memory_space<vmem>>, vector<1x16xbf16>,
    %296 = vector.extract_strided_slice %280 {offsets = [5, 0], sizes = [1, 16], strides = [1, 1]} : vector<16x16xf32> to vector<1x16xf32>
    %297 = arith.truncf %296 : vector<1x16xf32> to vector<1x16xbf16>
    %c0_190 = arith.constant 0 : index
    %c80 = arith.constant 80 : index
    %298 = vector.load %arg29[%c0_190, %c80] : memref<1x256xbf16, #tpu.memory_space<vmem>>, vector<1x16xbf16>
    tpu.vector_store %arg29[%c0_190, %c80], %297 {strides = array<i32>} : memref<1x256xbf16, #tpu.memory_space<vmem>>, vector<1x16xbf16>,
    %299 = vector.extract_strided_slice %280 {offsets = [6, 0], sizes = [1, 16], strides = [1, 1]} : vector<16x16xf32> to vector<1x16xf32>
    %300 = arith.truncf %299 : vector<1x16xf32> to vector<1x16xbf16>
    %c0_191 = arith.constant 0 : index
    %c96 = arith.constant 96 : index
    %301 = vector.load %arg29[%c0_191, %c96] : memref<1x256xbf16, #tpu.memory_space<vmem>>, vector<1x16xbf16>
    tpu.vector_store %arg29[%c0_191, %c96], %300 {strides = array<i32>} : memref<1x256xbf16, #tpu.memory_space<vmem>>, vector<1x16xbf16>,
    %302 = vector.extract_strided_slice %280 {offsets = [7, 0], sizes = [1, 16], strides = [1, 1]} : vector<16x16xf32> to vector<1x16xf32>
    %303 = arith.truncf %302 : vector<1x16xf32> to vector<1x16xbf16>
    %c0_192 = arith.constant 0 : index
    %c112 = arith.constant 112 : index
    %304 = vector.load %arg29[%c0_192, %c112] : memref<1x256xbf16, #tpu.memory_space<vmem>>, vector<1x16xbf16>
    tpu.vector_store %arg29[%c0_192, %c112], %303 {strides = array<i32>} : memref<1x256xbf16, #tpu.memory_space<vmem>>, vector<1x16xbf16>,
    %305 = vector.extract_strided_slice %280 {offsets = [8, 0], sizes = [1, 16], strides = [1, 1]} : vector<16x16xf32> to vector<1x16xf32>
    %306 = arith.truncf %305 : vector<1x16xf32> to vector<1x16xbf16>
    %c0_193 = arith.constant 0 : index
    %c128_194 = arith.constant 128 : index
    %307 = vector.load %arg29[%c0_193, %c128_194] : memref<1x256xbf16, #tpu.memory_space<vmem>>, vector<1x16xbf16>
    tpu.vector_store %arg29[%c0_193, %c128_194], %306 {strides = array<i32>} : memref<1x256xbf16, #tpu.memory_space<vmem>>, vector<1x16xbf16>,
    %308 = vector.extract_strided_slice %280 {offsets = [9, 0], sizes = [1, 16], strides = [1, 1]} : vector<16x16xf32> to vector<1x16xf32>
    %309 = arith.truncf %308 : vector<1x16xf32> to vector<1x16xbf16>
    %c0_195 = arith.constant 0 : index
    %c144 = arith.constant 144 : index
    %310 = vector.load %arg29[%c0_195, %c144] : memref<1x256xbf16, #tpu.memory_space<vmem>>, vector<1x16xbf16>
    tpu.vector_store %arg29[%c0_195, %c144], %309 {strides = array<i32>} : memref<1x256xbf16, #tpu.memory_space<vmem>>, vector<1x16xbf16>,
    %311 = vector.extract_strided_slice %280 {offsets = [10, 0], sizes = [1, 16], strides = [1, 1]} : vector<16x16xf32> to vector<1x16xf32>
    %312 = arith.truncf %311 : vector<1x16xf32> to vector<1x16xbf16>
    %c0_196 = arith.constant 0 : index
    %c160 = arith.constant 160 : index
    %313 = vector.load %arg29[%c0_196, %c160] : memref<1x256xbf16, #tpu.memory_space<vmem>>, vector<1x16xbf16>
    tpu.vector_store %arg29[%c0_196, %c160], %312 {strides = array<i32>} : memref<1x256xbf16, #tpu.memory_space<vmem>>, vector<1x16xbf16>,
    %314 = vector.extract_strided_slice %280 {offsets = [11, 0], sizes = [1, 16], strides = [1, 1]} : vector<16x16xf32> to vector<1x16xf32>
    %315 = arith.truncf %314 : vector<1x16xf32> to vector<1x16xbf16>
    %c0_197 = arith.constant 0 : index
    %c176 = arith.constant 176 : index
    %316 = vector.load %arg29[%c0_197, %c176] : memref<1x256xbf16, #tpu.memory_space<vmem>>, vector<1x16xbf16>
    tpu.vector_store %arg29[%c0_197, %c176], %315 {strides = array<i32>} : memref<1x256xbf16, #tpu.memory_space<vmem>>, vector<1x16xbf16>,
    %317 = vector.extract_strided_slice %280 {offsets = [12, 0], sizes = [1, 16], strides = [1, 1]} : vector<16x16xf32> to vector<1x16xf32>
    %318 = arith.truncf %317 : vector<1x16xf32> to vector<1x16xbf16>
    %c0_198 = arith.constant 0 : index
    %c192_199 = arith.constant 192 : index
    %319 = vector.load %arg29[%c0_198, %c192_199] : memref<1x256xbf16, #tpu.memory_space<vmem>>, vector<1x16xbf16>
    tpu.vector_store %arg29[%c0_198, %c192_199], %318 {strides = array<i32>} : memref<1x256xbf16, #tpu.memory_space<vmem>>, vector<1x16xbf16>,
    %320 = vector.extract_strided_slice %280 {offsets = [13, 0], sizes = [1, 16], strides = [1, 1]} : vector<16x16xf32> to vector<1x16xf32>
    %321 = arith.truncf %320 : vector<1x16xf32> to vector<1x16xbf16>
    %c0_200 = arith.constant 0 : index
    %c208 = arith.constant 208 : index
    %322 = vector.load %arg29[%c0_200, %c208] : memref<1x256xbf16, #tpu.memory_space<vmem>>, vector<1x16xbf16>
    tpu.vector_store %arg29[%c0_200, %c208], %321 {strides = array<i32>} : memref<1x256xbf16, #tpu.memory_space<vmem>>, vector<1x16xbf16>,
    %323 = vector.extract_strided_slice %280 {offsets = [14, 0], sizes = [1, 16], strides = [1, 1]} : vector<16x16xf32> to vector<1x16xf32>
    %324 = arith.truncf %323 : vector<1x16xf32> to vector<1x16xbf16>
    %c0_201 = arith.constant 0 : index
    %c224 = arith.constant 224 : index
    %325 = vector.load %arg29[%c0_201, %c224] : memref<1x256xbf16, #tpu.memory_space<vmem>>, vector<1x16xbf16>
    tpu.vector_store %arg29[%c0_201, %c224], %324 {strides = array<i32>} : memref<1x256xbf16, #tpu.memory_space<vmem>>, vector<1x16xbf16>,
    %326 = vector.extract_strided_slice %280 {offsets = [15, 0], sizes = [1, 16], strides = [1, 1]} : vector<16x16xf32> to vector<1x16xf32>
    %327 = arith.truncf %326 : vector<1x16xf32> to vector<1x16xbf16>
    %c0_202 = arith.constant 0 : index
    %c240 = arith.constant 240 : index
    %328 = vector.load %arg29[%c0_202, %c240] : memref<1x256xbf16, #tpu.memory_space<vmem>>, vector<1x16xbf16>
    tpu.vector_store %arg29[%c0_202, %c240], %327 {strides = array<i32>} : memref<1x256xbf16, #tpu.memory_space<vmem>>, vector<1x16xbf16>,
    %c0_203 = arith.constant 0 : index
    %c0_204 = arith.constant 0 : index
    %329 = vector.load %arg29[%c0_203, %c0_204] : memref<1x256xbf16, #tpu.memory_space<vmem>>, vector<1x256xbf16>
    %c0_205 = arith.constant 0 : index
    %c0_206 = arith.constant 0 : index
    %330 = vector.load %arg12[%c0_205, %c0_206] : memref<256x32xbf16, #tpu.memory_space<vmem>>, vector<256x32xbf16>
    %cst_207 = arith.constant dense<0.000000e+00> : vector<1x32xf32>
    %331 = tpu.matmul %329, %330, %cst_207 {dimension_numbers = #tpu.dot_dimension_numbers<[1], [0], [0], [1], [0, 0, 1, 1], [], []>} : vector<1x256xbf16>, vector<256x32xbf16>, vector<1x32xf32> -> vector<1x32xf32>
    %c0_208 = arith.constant 0 : index
    %c0_209 = arith.constant 0 : index
    %332 = vector.load %arg13[%c0_208, %c0_209] : memref<1x32xf32, #tpu.memory_space<vmem>>, vector<1x32xf32>
    %333 = arith.addf %331, %332 : vector<1x32xf32>
    %c0_210 = arith.constant 0 : index
    %c0_211 = arith.constant 0 : index
    %c0_212 = arith.constant 0 : index
    %334 = vector.load %arg27[%c0_210, %c0_211, %c0_212] : memref<1x1x32xf32, #tpu.memory_space<vmem>>, vector<1x1x32xf32>
    %335 = vector.shape_cast %334 : vector<1x1x32xf32> to vector<1x32xf32>
    %336 = vector.shape_cast %333 : vector<1x32xf32> to vector<1x1x32xf32>
    tpu.vector_store %arg27[%c0_210, %c0_211, %c0_212], %336 {strides = array<i32>} : memref<1x1x32xf32, #tpu.memory_space<vmem>>, vector<1x1x32xf32>,
    %337 = arith.truncf %333 : vector<1x32xf32> to vector<1x32xbf16>
    %c0_213 = arith.constant 0 : index
    %c0_214 = arith.constant 0 : index
    %338 = vector.load %arg14[%c0_213, %c0_214] : memref<32x256xbf16, #tpu.memory_space<vmem>>, vector<32x256xbf16>
    %cst_215 = arith.constant dense<0.000000e+00> : vector<1x256xf32>
    %339 = tpu.matmul %337, %338, %cst_215 {dimension_numbers = #tpu.dot_dimension_numbers<[1], [0], [0], [1], [0, 0, 1, 1], [], []>} : vector<1x32xbf16>, vector<32x256xbf16>, vector<1x256xf32> -> vector<1x256xf32>
    %c0_216 = arith.constant 0 : index
    %c0_217 = arith.constant 0 : index
    %340 = vector.load %arg15[%c0_216, %c0_217] : memref<1x256xf32, #tpu.memory_space<vmem>>, vector<1x256xf32>
    %341 = arith.addf %339, %340 : vector<1x256xf32>
    %cst_218 = arith.constant 5.000000e-01 : f32
    %342 = vector.broadcast %cst_218 : f32 to vector<1x256xf32>
    %343 = arith.mulf %342, %341 : vector<1x256xf32>
    %cst_219 = arith.constant 4.471500e-02 : f32
    %344 = vector.broadcast %cst_219 : f32 to vector<1x256xf32>
    %345 = arith.mulf %344, %341 : vector<1x256xf32>
    %346 = arith.mulf %345, %341 : vector<1x256xf32>
    %347 = arith.mulf %346, %341 : vector<1x256xf32>
    %348 = arith.addf %341, %347 : vector<1x256xf32>
    %cst_220 = arith.constant 0.797884583 : f32
    %349 = vector.broadcast %cst_220 : f32 to vector<1x256xf32>
    %350 = arith.mulf %349, %348 : vector<1x256xf32>
    %351 = math.tanh %350 : vector<1x256xf32>
    %cst_221 = arith.constant 1.000000e+00 : f32
    %352 = vector.broadcast %cst_221 : f32 to vector<1x256xf32>
    %353 = arith.addf %352, %351 : vector<1x256xf32>
    %354 = arith.mulf %343, %353 : vector<1x256xf32>
    %355 = vector.extract_strided_slice %354 {offsets = [0, 0], sizes = [1, 16], strides = [1, 1]} : vector<1x256xf32> to vector<1x16xf32>
    %356 = arith.truncf %355 : vector<1x16xf32> to vector<1x16xbf16>
    %c5_222 = arith.constant 5 : index
    %c0_223 = arith.constant 0 : index
    %357 = vector.load %arg28[%c5_222, %c0_223] : memref<26x192xbf16, #tpu.memory_space<vmem>>, vector<1x16xbf16>
    tpu.vector_store %arg28[%c5_222, %c0_223], %356 {strides = array<i32>} : memref<26x192xbf16, #tpu.memory_space<vmem>>, vector<1x16xbf16>,
    %358 = vector.extract_strided_slice %354 {offsets = [0, 16], sizes = [1, 16], strides = [1, 1]} : vector<1x256xf32> to vector<1x16xf32>
    %359 = arith.truncf %358 : vector<1x16xf32> to vector<1x16xbf16>
    %c6_224 = arith.constant 6 : index
    %c0_225 = arith.constant 0 : index
    %360 = vector.load %arg28[%c6_224, %c0_225] : memref<26x192xbf16, #tpu.memory_space<vmem>>, vector<1x16xbf16>
    tpu.vector_store %arg28[%c6_224, %c0_225], %359 {strides = array<i32>} : memref<26x192xbf16, #tpu.memory_space<vmem>>, vector<1x16xbf16>,
    %361 = vector.extract_strided_slice %354 {offsets = [0, 32], sizes = [1, 16], strides = [1, 1]} : vector<1x256xf32> to vector<1x16xf32>
    %362 = arith.truncf %361 : vector<1x16xf32> to vector<1x16xbf16>
    %c7 = arith.constant 7 : index
    %c0_226 = arith.constant 0 : index
    %363 = vector.load %arg28[%c7, %c0_226] : memref<26x192xbf16, #tpu.memory_space<vmem>>, vector<1x16xbf16>
    tpu.vector_store %arg28[%c7, %c0_226], %362 {strides = array<i32>} : memref<26x192xbf16, #tpu.memory_space<vmem>>, vector<1x16xbf16>,
    %364 = vector.extract_strided_slice %354 {offsets = [0, 48], sizes = [1, 16], strides = [1, 1]} : vector<1x256xf32> to vector<1x16xf32>
    %365 = arith.truncf %364 : vector<1x16xf32> to vector<1x16xbf16>
    %c8_227 = arith.constant 8 : index
    %c0_228 = arith.constant 0 : index
    %366 = vector.load %arg28[%c8_227, %c0_228] : memref<26x192xbf16, #tpu.memory_space<vmem>>, vector<1x16xbf16>
    tpu.vector_store %arg28[%c8_227, %c0_228], %365 {strides = array<i32>} : memref<26x192xbf16, #tpu.memory_space<vmem>>, vector<1x16xbf16>,
    %367 = vector.extract_strided_slice %354 {offsets = [0, 64], sizes = [1, 16], strides = [1, 1]} : vector<1x256xf32> to vector<1x16xf32>
    %368 = arith.truncf %367 : vector<1x16xf32> to vector<1x16xbf16>
    %c9_229 = arith.constant 9 : index
    %c0_230 = arith.constant 0 : index
    %369 = vector.load %arg28[%c9_229, %c0_230] : memref<26x192xbf16, #tpu.memory_space<vmem>>, vector<1x16xbf16>
    tpu.vector_store %arg28[%c9_229, %c0_230], %368 {strides = array<i32>} : memref<26x192xbf16, #tpu.memory_space<vmem>>, vector<1x16xbf16>,
    %370 = vector.extract_strided_slice %354 {offsets = [0, 80], sizes = [1, 16], strides = [1, 1]} : vector<1x256xf32> to vector<1x16xf32>
    %371 = arith.truncf %370 : vector<1x16xf32> to vector<1x16xbf16>
    %c10_231 = arith.constant 10 : index
    %c0_232 = arith.constant 0 : index
    %372 = vector.load %arg28[%c10_231, %c0_232] : memref<26x192xbf16, #tpu.memory_space<vmem>>, vector<1x16xbf16>
    tpu.vector_store %arg28[%c10_231, %c0_232], %371 {strides = array<i32>} : memref<26x192xbf16, #tpu.memory_space<vmem>>, vector<1x16xbf16>,
    %373 = vector.extract_strided_slice %354 {offsets = [0, 96], sizes = [1, 16], strides = [1, 1]} : vector<1x256xf32> to vector<1x16xf32>
    %374 = arith.truncf %373 : vector<1x16xf32> to vector<1x16xbf16>
    %c11 = arith.constant 11 : index
    %c0_233 = arith.constant 0 : index
    %375 = vector.load %arg28[%c11, %c0_233] : memref<26x192xbf16, #tpu.memory_space<vmem>>, vector<1x16xbf16>
    tpu.vector_store %arg28[%c11, %c0_233], %374 {strides = array<i32>} : memref<26x192xbf16, #tpu.memory_space<vmem>>, vector<1x16xbf16>,
    %376 = vector.extract_strided_slice %354 {offsets = [0, 112], sizes = [1, 16], strides = [1, 1]} : vector<1x256xf32> to vector<1x16xf32>
    %377 = arith.truncf %376 : vector<1x16xf32> to vector<1x16xbf16>
    %c12 = arith.constant 12 : index
    %c0_234 = arith.constant 0 : index
    %378 = vector.load %arg28[%c12, %c0_234] : memref<26x192xbf16, #tpu.memory_space<vmem>>, vector<1x16xbf16>
    tpu.vector_store %arg28[%c12, %c0_234], %377 {strides = array<i32>} : memref<26x192xbf16, #tpu.memory_space<vmem>>, vector<1x16xbf16>,
    %379 = vector.extract_strided_slice %354 {offsets = [0, 128], sizes = [1, 16], strides = [1, 1]} : vector<1x256xf32> to vector<1x16xf32>
    %380 = arith.truncf %379 : vector<1x16xf32> to vector<1x16xbf16>
    %c13 = arith.constant 13 : index
    %c0_235 = arith.constant 0 : index
    %381 = vector.load %arg28[%c13, %c0_235] : memref<26x192xbf16, #tpu.memory_space<vmem>>, vector<1x16xbf16>
    tpu.vector_store %arg28[%c13, %c0_235], %380 {strides = array<i32>} : memref<26x192xbf16, #tpu.memory_space<vmem>>, vector<1x16xbf16>,
    %382 = vector.extract_strided_slice %354 {offsets = [0, 144], sizes = [1, 16], strides = [1, 1]} : vector<1x256xf32> to vector<1x16xf32>
    %383 = arith.truncf %382 : vector<1x16xf32> to vector<1x16xbf16>
    %c14 = arith.constant 14 : index
    %c0_236 = arith.constant 0 : index
    %384 = vector.load %arg28[%c14, %c0_236] : memref<26x192xbf16, #tpu.memory_space<vmem>>, vector<1x16xbf16>
    tpu.vector_store %arg28[%c14, %c0_236], %383 {strides = array<i32>} : memref<26x192xbf16, #tpu.memory_space<vmem>>, vector<1x16xbf16>,
    %385 = vector.extract_strided_slice %354 {offsets = [0, 160], sizes = [1, 16], strides = [1, 1]} : vector<1x256xf32> to vector<1x16xf32>
    %386 = arith.truncf %385 : vector<1x16xf32> to vector<1x16xbf16>
    %c15 = arith.constant 15 : index
    %c0_237 = arith.constant 0 : index
    %387 = vector.load %arg28[%c15, %c0_237] : memref<26x192xbf16, #tpu.memory_space<vmem>>, vector<1x16xbf16>
    tpu.vector_store %arg28[%c15, %c0_237], %386 {strides = array<i32>} : memref<26x192xbf16, #tpu.memory_space<vmem>>, vector<1x16xbf16>,
    %388 = vector.extract_strided_slice %354 {offsets = [0, 176], sizes = [1, 16], strides = [1, 1]} : vector<1x256xf32> to vector<1x16xf32>
    %389 = arith.truncf %388 : vector<1x16xf32> to vector<1x16xbf16>
    %c16_238 = arith.constant 16 : index
    %c0_239 = arith.constant 0 : index
    %390 = vector.load %arg28[%c16_238, %c0_239] : memref<26x192xbf16, #tpu.memory_space<vmem>>, vector<1x16xbf16>
    tpu.vector_store %arg28[%c16_238, %c0_239], %389 {strides = array<i32>} : memref<26x192xbf16, #tpu.memory_space<vmem>>, vector<1x16xbf16>,
    %391 = vector.extract_strided_slice %354 {offsets = [0, 192], sizes = [1, 16], strides = [1, 1]} : vector<1x256xf32> to vector<1x16xf32>
    %392 = arith.truncf %391 : vector<1x16xf32> to vector<1x16xbf16>
    %c17 = arith.constant 17 : index
    %c0_240 = arith.constant 0 : index
    %393 = vector.load %arg28[%c17, %c0_240] : memref<26x192xbf16, #tpu.memory_space<vmem>>, vector<1x16xbf16>
    tpu.vector_store %arg28[%c17, %c0_240], %392 {strides = array<i32>} : memref<26x192xbf16, #tpu.memory_space<vmem>>, vector<1x16xbf16>,
    %394 = vector.extract_strided_slice %354 {offsets = [0, 208], sizes = [1, 16], strides = [1, 1]} : vector<1x256xf32> to vector<1x16xf32>
    %395 = arith.truncf %394 : vector<1x16xf32> to vector<1x16xbf16>
    %c18 = arith.constant 18 : index
    %c0_241 = arith.constant 0 : index
    %396 = vector.load %arg28[%c18, %c0_241] : memref<26x192xbf16, #tpu.memory_space<vmem>>, vector<1x16xbf16>
    tpu.vector_store %arg28[%c18, %c0_241], %395 {strides = array<i32>} : memref<26x192xbf16, #tpu.memory_space<vmem>>, vector<1x16xbf16>,
    %397 = vector.extract_strided_slice %354 {offsets = [0, 224], sizes = [1, 16], strides = [1, 1]} : vector<1x256xf32> to vector<1x16xf32>
    %398 = arith.truncf %397 : vector<1x16xf32> to vector<1x16xbf16>
    %c19 = arith.constant 19 : index
    %c0_242 = arith.constant 0 : index
    %399 = vector.load %arg28[%c19, %c0_242] : memref<26x192xbf16, #tpu.memory_space<vmem>>, vector<1x16xbf16>
    tpu.vector_store %arg28[%c19, %c0_242], %398 {strides = array<i32>} : memref<26x192xbf16, #tpu.memory_space<vmem>>, vector<1x16xbf16>,
    %400 = vector.extract_strided_slice %354 {offsets = [0, 240], sizes = [1, 16], strides = [1, 1]} : vector<1x256xf32> to vector<1x16xf32>
    %401 = arith.truncf %400 : vector<1x16xf32> to vector<1x16xbf16>
    %c20 = arith.constant 20 : index
    %c0_243 = arith.constant 0 : index
    %402 = vector.load %arg28[%c20, %c0_243] : memref<26x192xbf16, #tpu.memory_space<vmem>>, vector<1x16xbf16>
    tpu.vector_store %arg28[%c20, %c0_243], %401 {strides = array<i32>} : memref<26x192xbf16, #tpu.memory_space<vmem>>, vector<1x16xbf16>,
    %c5_244 = arith.constant 5 : index
    %c0_245 = arith.constant 0 : index
    %403 = vector.load %arg28[%c5_244, %c0_245] : memref<26x192xbf16, #tpu.memory_space<vmem>>, vector<16x16xbf16>
    %c5_246 = arith.constant 5 : index
    %c0_247 = arith.constant 0 : index
    %404 = vector.load %arg28[%c5_246, %c0_247] : memref<26x192xbf16, #tpu.memory_space<vmem>>, vector<16x16xbf16>
    tpu.vector_store %arg28[%c5_246, %c0_247], %403 {strides = array<i32>} : memref<26x192xbf16, #tpu.memory_space<vmem>>, vector<16x16xbf16>,
    %cst_248 = arith.constant 0.000000e+00 : f32
    %405 = vector.broadcast %cst_248 : f32 to vector<16x64xf32>
    %c5_249 = arith.constant 5 : index
    %c0_250 = arith.constant 0 : index
    %406 = vector.load %arg28[%c5_249, %c0_250] : memref<26x192xbf16, #tpu.memory_space<vmem>>, vector<16x16xbf16>
    %c0_251 = arith.constant 0 : index
    %c0_252 = arith.constant 0 : index
    %407 = vector.load %arg16[%c0_251, %c0_252] : memref<16x256xbf16, #tpu.memory_space<vmem>>, vector<16x64xbf16>
    %cst_253 = arith.constant dense<0.000000e+00> : vector<16x64xf32>
    %408 = tpu.matmul %406, %407, %cst_253 {dimension_numbers = #tpu.dot_dimension_numbers<[1], [0], [0], [1], [0, 0, 1, 1], [], []>} : vector<16x16xbf16>, vector<16x64xbf16>, vector<16x64xf32> -> vector<16x64xf32>
    %409 = arith.addf %405, %408 : vector<16x64xf32>
    %c6_254 = arith.constant 6 : index
    %c0_255 = arith.constant 0 : index
    %410 = vector.load %arg28[%c6_254, %c0_255] : memref<26x192xbf16, #tpu.memory_space<vmem>>, vector<16x16xbf16>
    %411 = vector.broadcast %28 : vector<16x1xbf16> to vector<16x16xbf16>
    %412 = arith.mulf %410, %411 : vector<16x16xbf16>
    %c0_256 = arith.constant 0 : index
    %c64_257 = arith.constant 64 : index
    %413 = vector.load %arg16[%c0_256, %c64_257] : memref<16x256xbf16, #tpu.memory_space<vmem>>, vector<16x64xbf16>
    %cst_258 = arith.constant dense<0.000000e+00> : vector<16x64xf32>
    %414 = tpu.matmul %412, %413, %cst_258 {dimension_numbers = #tpu.dot_dimension_numbers<[1], [0], [0], [1], [0, 0, 1, 1], [], []>} : vector<16x16xbf16>, vector<16x64xbf16>, vector<16x64xf32> -> vector<16x64xf32>
    %415 = arith.addf %409, %414 : vector<16x64xf32>
    %c9_259 = arith.constant 9 : index
    %c0_260 = arith.constant 0 : index
    %416 = vector.load %arg28[%c9_259, %c0_260] : memref<26x192xbf16, #tpu.memory_space<vmem>>, vector<16x16xbf16>
    %c0_261 = arith.constant 0 : index
    %c128_262 = arith.constant 128 : index
    %417 = vector.load %arg16[%c0_261, %c128_262] : memref<16x256xbf16, #tpu.memory_space<vmem>>, vector<16x64xbf16>
    %cst_263 = arith.constant dense<0.000000e+00> : vector<16x64xf32>
    %418 = tpu.matmul %416, %417, %cst_263 {dimension_numbers = #tpu.dot_dimension_numbers<[1], [0], [0], [1], [0, 0, 1, 1], [], []>} : vector<16x16xbf16>, vector<16x64xbf16>, vector<16x64xf32> -> vector<16x64xf32>
    %419 = arith.addf %415, %418 : vector<16x64xf32>
    %c10_264 = arith.constant 10 : index
    %c0_265 = arith.constant 0 : index
    %420 = vector.load %arg28[%c10_264, %c0_265] : memref<26x192xbf16, #tpu.memory_space<vmem>>, vector<16x16xbf16>
    %421 = vector.broadcast %28 : vector<16x1xbf16> to vector<16x16xbf16>
    %422 = arith.mulf %420, %421 : vector<16x16xbf16>
    %c0_266 = arith.constant 0 : index
    %c192_267 = arith.constant 192 : index
    %423 = vector.load %arg16[%c0_266, %c192_267] : memref<16x256xbf16, #tpu.memory_space<vmem>>, vector<16x64xbf16>
    %cst_268 = arith.constant dense<0.000000e+00> : vector<16x64xf32>
    %424 = tpu.matmul %422, %423, %cst_268 {dimension_numbers = #tpu.dot_dimension_numbers<[1], [0], [0], [1], [0, 0, 1, 1], [], []>} : vector<16x16xbf16>, vector<16x64xbf16>, vector<16x64xf32> -> vector<16x64xf32>
    %425 = arith.addf %419, %424 : vector<16x64xf32>
    %c0_269 = arith.constant 0 : index
    %c0_270 = arith.constant 0 : index
    %426 = vector.load %arg17[%c0_269, %c0_270] : memref<1x64xf32, #tpu.memory_space<vmem>>, vector<1x64xf32>
    %427 = vector.broadcast %426 : vector<1x64xf32> to vector<16x64xf32>
    %428 = arith.addf %425, %427 : vector<16x64xf32>
    %cst_271 = arith.constant 5.000000e-01 : f32
    %429 = vector.broadcast %cst_271 : f32 to vector<16x64xf32>
    %430 = arith.mulf %429, %428 : vector<16x64xf32>
    %cst_272 = arith.constant 4.471500e-02 : f32
    %431 = vector.broadcast %cst_272 : f32 to vector<16x64xf32>
    %432 = arith.mulf %431, %428 : vector<16x64xf32>
    %433 = arith.mulf %432, %428 : vector<16x64xf32>
    %434 = arith.mulf %433, %428 : vector<16x64xf32>
    %435 = arith.addf %428, %434 : vector<16x64xf32>
    %cst_273 = arith.constant 0.797884583 : f32
    %436 = vector.broadcast %cst_273 : f32 to vector<16x64xf32>
    %437 = arith.mulf %436, %435 : vector<16x64xf32>
    %438 = math.tanh %437 : vector<16x64xf32>
    %cst_274 = arith.constant 1.000000e+00 : f32
    %439 = vector.broadcast %cst_274 : f32 to vector<16x64xf32>
    %440 = arith.addf %439, %438 : vector<16x64xf32>
    %441 = arith.mulf %430, %440 : vector<16x64xf32>
    %442 = arith.truncf %441 : vector<16x64xf32> to vector<16x64xbf16>
    %c5_275 = arith.constant 5 : index
    %c0_276 = arith.constant 0 : index
    %443 = vector.load %arg28[%c5_275, %c0_276] : memref<26x192xbf16, #tpu.memory_space<vmem>>, vector<16x64xbf16>
    tpu.vector_store %arg28[%c5_275, %c0_276], %442 {strides = array<i32>} : memref<26x192xbf16, #tpu.memory_space<vmem>>, vector<16x64xbf16>,
    %cst_277 = arith.constant 0.000000e+00 : f32
    %444 = vector.broadcast %cst_277 : f32 to vector<16x64xf32>
    %c0_278 = arith.constant 0 : index
    %c0_279 = arith.constant 0 : index
    %445 = vector.load %arg28[%c0_278, %c0_279] : memref<26x192xbf16, #tpu.memory_space<vmem>>, vector<16x64xbf16>
    %446 = vector.broadcast %23 : vector<16x1xbf16> to vector<16x64xbf16>
    %447 = arith.mulf %445, %446 : vector<16x64xbf16>
    %c0_280 = arith.constant 0 : index
    %c0_281 = arith.constant 0 : index
    %448 = vector.load %arg18[%c0_280, %c0_281] : memref<64x576xbf16, #tpu.memory_space<vmem>>, vector<64x64xbf16>
    %cst_282 = arith.constant dense<0.000000e+00> : vector<16x64xf32>
    %449 = tpu.matmul %447, %448, %cst_282 {dimension_numbers = #tpu.dot_dimension_numbers<[1], [0], [0], [1], [0, 0, 1, 1], [], []>} : vector<16x64xbf16>, vector<64x64xbf16>, vector<16x64xf32> -> vector<16x64xf32>
    %450 = arith.addf %444, %449 : vector<16x64xf32>
    %c1_283 = arith.constant 1 : index
    %c0_284 = arith.constant 0 : index
    %451 = vector.load %arg28[%c1_283, %c0_284] : memref<26x192xbf16, #tpu.memory_space<vmem>>, vector<16x64xbf16>
    %c0_285 = arith.constant 0 : index
    %c64_286 = arith.constant 64 : index
    %452 = vector.load %arg18[%c0_285, %c64_286] : memref<64x576xbf16, #tpu.memory_space<vmem>>, vector<64x64xbf16>
    %cst_287 = arith.constant dense<0.000000e+00> : vector<16x64xf32>
    %453 = tpu.matmul %451, %452, %cst_287 {dimension_numbers = #tpu.dot_dimension_numbers<[1], [0], [0], [1], [0, 0, 1, 1], [], []>} : vector<16x64xbf16>, vector<64x64xbf16>, vector<16x64xf32> -> vector<16x64xf32>
    %454 = arith.addf %450, %453 : vector<16x64xf32>
    %c2_288 = arith.constant 2 : index
    %c0_289 = arith.constant 0 : index
    %455 = vector.load %arg28[%c2_288, %c0_289] : memref<26x192xbf16, #tpu.memory_space<vmem>>, vector<16x64xbf16>
    %456 = vector.broadcast %28 : vector<16x1xbf16> to vector<16x64xbf16>
    %457 = arith.mulf %455, %456 : vector<16x64xbf16>
    %c0_290 = arith.constant 0 : index
    %c128_291 = arith.constant 128 : index
    %458 = vector.load %arg18[%c0_290, %c128_291] : memref<64x576xbf16, #tpu.memory_space<vmem>>, vector<64x64xbf16>
    %cst_292 = arith.constant dense<0.000000e+00> : vector<16x64xf32>
    %459 = tpu.matmul %457, %458, %cst_292 {dimension_numbers = #tpu.dot_dimension_numbers<[1], [0], [0], [1], [0, 0, 1, 1], [], []>} : vector<16x64xbf16>, vector<64x64xbf16>, vector<16x64xf32> -> vector<16x64xf32>
    %460 = arith.addf %454, %459 : vector<16x64xf32>
    %c4_293 = arith.constant 4 : index
    %c0_294 = arith.constant 0 : index
    %461 = vector.load %arg28[%c4_293, %c0_294] : memref<26x192xbf16, #tpu.memory_space<vmem>>, vector<16x64xbf16>
    %462 = vector.broadcast %23 : vector<16x1xbf16> to vector<16x64xbf16>
    %463 = arith.mulf %461, %462 : vector<16x64xbf16>
    %c0_295 = arith.constant 0 : index
    %c192_296 = arith.constant 192 : index
    %464 = vector.load %arg18[%c0_295, %c192_296] : memref<64x576xbf16, #tpu.memory_space<vmem>>, vector<64x64xbf16>
    %cst_297 = arith.constant dense<0.000000e+00> : vector<16x64xf32>
    %465 = tpu.matmul %463, %464, %cst_297 {dimension_numbers = #tpu.dot_dimension_numbers<[1], [0], [0], [1], [0, 0, 1, 1], [], []>} : vector<16x64xbf16>, vector<64x64xbf16>, vector<16x64xf32> -> vector<16x64xf32>
    %466 = arith.addf %460, %465 : vector<16x64xf32>
    %c5_298 = arith.constant 5 : index
    %c0_299 = arith.constant 0 : index
    %467 = vector.load %arg28[%c5_298, %c0_299] : memref<26x192xbf16, #tpu.memory_space<vmem>>, vector<16x64xbf16>
    %c0_300 = arith.constant 0 : index
    %c256_301 = arith.constant 256 : index
    %468 = vector.load %arg18[%c0_300, %c256_301] : memref<64x576xbf16, #tpu.memory_space<vmem>>, vector<64x64xbf16>
    %cst_302 = arith.constant dense<0.000000e+00> : vector<16x64xf32>
    %469 = tpu.matmul %467, %468, %cst_302 {dimension_numbers = #tpu.dot_dimension_numbers<[1], [0], [0], [1], [0, 0, 1, 1], [], []>} : vector<16x64xbf16>, vector<64x64xbf16>, vector<16x64xf32> -> vector<16x64xf32>
    %470 = arith.addf %466, %469 : vector<16x64xf32>
    %c6_303 = arith.constant 6 : index
    %c0_304 = arith.constant 0 : index
    %471 = vector.load %arg28[%c6_303, %c0_304] : memref<26x192xbf16, #tpu.memory_space<vmem>>, vector<16x64xbf16>
    %472 = vector.broadcast %28 : vector<16x1xbf16> to vector<16x64xbf16>
    %473 = arith.mulf %471, %472 : vector<16x64xbf16>
    %c0_305 = arith.constant 0 : index
    %c320_306 = arith.constant 320 : index
    %474 = vector.load %arg18[%c0_305, %c320_306] : memref<64x576xbf16, #tpu.memory_space<vmem>>, vector<64x64xbf16>
    %cst_307 = arith.constant dense<0.000000e+00> : vector<16x64xf32>
    %475 = tpu.matmul %473, %474, %cst_307 {dimension_numbers = #tpu.dot_dimension_numbers<[1], [0], [0], [1], [0, 0, 1, 1], [], []>} : vector<16x64xbf16>, vector<64x64xbf16>, vector<16x64xf32> -> vector<16x64xf32>
    %476 = arith.addf %470, %475 : vector<16x64xf32>
    %c8_308 = arith.constant 8 : index
    %c0_309 = arith.constant 0 : index
    %477 = vector.load %arg28[%c8_308, %c0_309] : memref<26x192xbf16, #tpu.memory_space<vmem>>, vector<16x64xbf16>
    %478 = vector.broadcast %23 : vector<16x1xbf16> to vector<16x64xbf16>
    %479 = arith.mulf %477, %478 : vector<16x64xbf16>
    %c0_310 = arith.constant 0 : index
    %c384_311 = arith.constant 384 : index
    %480 = vector.load %arg18[%c0_310, %c384_311] : memref<64x576xbf16, #tpu.memory_space<vmem>>, vector<64x64xbf16>
    %cst_312 = arith.constant dense<0.000000e+00> : vector<16x64xf32>
    %481 = tpu.matmul %479, %480, %cst_312 {dimension_numbers = #tpu.dot_dimension_numbers<[1], [0], [0], [1], [0, 0, 1, 1], [], []>} : vector<16x64xbf16>, vector<64x64xbf16>, vector<16x64xf32> -> vector<16x64xf32>
    %482 = arith.addf %476, %481 : vector<16x64xf32>
    %c9_313 = arith.constant 9 : index
    %c0_314 = arith.constant 0 : index
    %483 = vector.load %arg28[%c9_313, %c0_314] : memref<26x192xbf16, #tpu.memory_space<vmem>>, vector<16x64xbf16>
    %c0_315 = arith.constant 0 : index
    %c448_316 = arith.constant 448 : index
    %484 = vector.load %arg18[%c0_315, %c448_316] : memref<64x576xbf16, #tpu.memory_space<vmem>>, vector<64x64xbf16>
    %cst_317 = arith.constant dense<0.000000e+00> : vector<16x64xf32>
    %485 = tpu.matmul %483, %484, %cst_317 {dimension_numbers = #tpu.dot_dimension_numbers<[1], [0], [0], [1], [0, 0, 1, 1], [], []>} : vector<16x64xbf16>, vector<64x64xbf16>, vector<16x64xf32> -> vector<16x64xf32>
    %486 = arith.addf %482, %485 : vector<16x64xf32>
    %c10_318 = arith.constant 10 : index
    %c0_319 = arith.constant 0 : index
    %487 = vector.load %arg28[%c10_318, %c0_319] : memref<26x192xbf16, #tpu.memory_space<vmem>>, vector<16x64xbf16>
    %488 = vector.broadcast %28 : vector<16x1xbf16> to vector<16x64xbf16>
    %489 = arith.mulf %487, %488 : vector<16x64xbf16>
    %c0_320 = arith.constant 0 : index
    %c512_321 = arith.constant 512 : index
    %490 = vector.load %arg18[%c0_320, %c512_321] : memref<64x576xbf16, #tpu.memory_space<vmem>>, vector<64x64xbf16>
    %cst_322 = arith.constant dense<0.000000e+00> : vector<16x64xf32>
    %491 = tpu.matmul %489, %490, %cst_322 {dimension_numbers = #tpu.dot_dimension_numbers<[1], [0], [0], [1], [0, 0, 1, 1], [], []>} : vector<16x64xbf16>, vector<64x64xbf16>, vector<16x64xf32> -> vector<16x64xf32>
    %492 = arith.addf %486, %491 : vector<16x64xf32>
    %c0_323 = arith.constant 0 : index
    %c0_324 = arith.constant 0 : index
    %493 = vector.load %arg19[%c0_323, %c0_324] : memref<1x64xf32, #tpu.memory_space<vmem>>, vector<1x64xf32>
    %494 = vector.broadcast %493 : vector<1x64xf32> to vector<16x64xf32>
    %495 = arith.addf %492, %494 : vector<16x64xf32>
    %cst_325 = arith.constant 5.000000e-01 : f32
    %496 = vector.broadcast %cst_325 : f32 to vector<16x64xf32>
    %497 = arith.mulf %496, %495 : vector<16x64xf32>
    %cst_326 = arith.constant 4.471500e-02 : f32
    %498 = vector.broadcast %cst_326 : f32 to vector<16x64xf32>
    %499 = arith.mulf %498, %495 : vector<16x64xf32>
    %500 = arith.mulf %499, %495 : vector<16x64xf32>
    %501 = arith.mulf %500, %495 : vector<16x64xf32>
    %502 = arith.addf %495, %501 : vector<16x64xf32>
    %cst_327 = arith.constant 0.797884583 : f32
    %503 = vector.broadcast %cst_327 : f32 to vector<16x64xf32>
    %504 = arith.mulf %503, %502 : vector<16x64xf32>
    %505 = math.tanh %504 : vector<16x64xf32>
    %cst_328 = arith.constant 1.000000e+00 : f32
    %506 = vector.broadcast %cst_328 : f32 to vector<16x64xf32>
    %507 = arith.addf %506, %505 : vector<16x64xf32>
    %508 = arith.mulf %497, %507 : vector<16x64xf32>
    %509 = arith.truncf %508 : vector<16x64xf32> to vector<16x64xbf16>
    %c5_329 = arith.constant 5 : index
    %c0_330 = arith.constant 0 : index
    %510 = vector.load %arg28[%c5_329, %c0_330] : memref<26x192xbf16, #tpu.memory_space<vmem>>, vector<16x64xbf16>
    tpu.vector_store %arg28[%c5_329, %c0_330], %509 {strides = array<i32>} : memref<26x192xbf16, #tpu.memory_space<vmem>>, vector<16x64xbf16>,
    %cst_331 = arith.constant 0.000000e+00 : f32
    %511 = vector.broadcast %cst_331 : f32 to vector<16x128xf32>
    %c5_332 = arith.constant 5 : index
    %c0_333 = arith.constant 0 : index
    %512 = vector.load %arg28[%c5_332, %c0_333] : memref<26x192xbf16, #tpu.memory_space<vmem>>, vector<16x64xbf16>
    %c0_334 = arith.constant 0 : index
    %c0_335 = arith.constant 0 : index
    %513 = vector.load %arg20[%c0_334, %c0_335] : memref<64x512xbf16, #tpu.memory_space<vmem>>, vector<64x128xbf16>
    %cst_336 = arith.constant dense<0.000000e+00> : vector<16x128xf32>
    %514 = tpu.matmul %512, %513, %cst_336 {dimension_numbers = #tpu.dot_dimension_numbers<[1], [0], [0], [1], [0, 0, 1, 1], [], []>} : vector<16x64xbf16>, vector<64x128xbf16>, vector<16x128xf32> -> vector<16x128xf32>
    %515 = arith.addf %511, %514 : vector<16x128xf32>
    %c6_337 = arith.constant 6 : index
    %c0_338 = arith.constant 0 : index
    %516 = vector.load %arg28[%c6_337, %c0_338] : memref<26x192xbf16, #tpu.memory_space<vmem>>, vector<16x64xbf16>
    %517 = vector.broadcast %28 : vector<16x1xbf16> to vector<16x64xbf16>
    %518 = arith.mulf %516, %517 : vector<16x64xbf16>
    %c0_339 = arith.constant 0 : index
    %c128_340 = arith.constant 128 : index
    %519 = vector.load %arg20[%c0_339, %c128_340] : memref<64x512xbf16, #tpu.memory_space<vmem>>, vector<64x128xbf16>
    %cst_341 = arith.constant dense<0.000000e+00> : vector<16x128xf32>
    %520 = tpu.matmul %518, %519, %cst_341 {dimension_numbers = #tpu.dot_dimension_numbers<[1], [0], [0], [1], [0, 0, 1, 1], [], []>} : vector<16x64xbf16>, vector<64x128xbf16>, vector<16x128xf32> -> vector<16x128xf32>
    %521 = arith.addf %515, %520 : vector<16x128xf32>
    %c9_342 = arith.constant 9 : index
    %c0_343 = arith.constant 0 : index
    %522 = vector.load %arg28[%c9_342, %c0_343] : memref<26x192xbf16, #tpu.memory_space<vmem>>, vector<16x64xbf16>
    %c0_344 = arith.constant 0 : index
    %c256_345 = arith.constant 256 : index
    %523 = vector.load %arg20[%c0_344, %c256_345] : memref<64x512xbf16, #tpu.memory_space<vmem>>, vector<64x128xbf16>
    %cst_346 = arith.constant dense<0.000000e+00> : vector<16x128xf32>
    %524 = tpu.matmul %522, %523, %cst_346 {dimension_numbers = #tpu.dot_dimension_numbers<[1], [0], [0], [1], [0, 0, 1, 1], [], []>} : vector<16x64xbf16>, vector<64x128xbf16>, vector<16x128xf32> -> vector<16x128xf32>
    %525 = arith.addf %521, %524 : vector<16x128xf32>
    %c10_347 = arith.constant 10 : index
    %c0_348 = arith.constant 0 : index
    %526 = vector.load %arg28[%c10_347, %c0_348] : memref<26x192xbf16, #tpu.memory_space<vmem>>, vector<16x64xbf16>
    %527 = vector.broadcast %28 : vector<16x1xbf16> to vector<16x64xbf16>
    %528 = arith.mulf %526, %527 : vector<16x64xbf16>
    %c0_349 = arith.constant 0 : index
    %c384_350 = arith.constant 384 : index
    %529 = vector.load %arg20[%c0_349, %c384_350] : memref<64x512xbf16, #tpu.memory_space<vmem>>, vector<64x128xbf16>
    %cst_351 = arith.constant dense<0.000000e+00> : vector<16x128xf32>
    %530 = tpu.matmul %528, %529, %cst_351 {dimension_numbers = #tpu.dot_dimension_numbers<[1], [0], [0], [1], [0, 0, 1, 1], [], []>} : vector<16x64xbf16>, vector<64x128xbf16>, vector<16x128xf32> -> vector<16x128xf32>
    %531 = arith.addf %525, %530 : vector<16x128xf32>
    %c0_352 = arith.constant 0 : index
    %c0_353 = arith.constant 0 : index
    %532 = vector.load %arg21[%c0_352, %c0_353] : memref<1x128xf32, #tpu.memory_space<vmem>>, vector<1x128xf32>
    %533 = vector.broadcast %532 : vector<1x128xf32> to vector<16x128xf32>
    %534 = arith.addf %531, %533 : vector<16x128xf32>
    %cst_354 = arith.constant 5.000000e-01 : f32
    %535 = vector.broadcast %cst_354 : f32 to vector<16x128xf32>
    %536 = arith.mulf %535, %534 : vector<16x128xf32>
    %cst_355 = arith.constant 4.471500e-02 : f32
    %537 = vector.broadcast %cst_355 : f32 to vector<16x128xf32>
    %538 = arith.mulf %537, %534 : vector<16x128xf32>
    %539 = arith.mulf %538, %534 : vector<16x128xf32>
    %540 = arith.mulf %539, %534 : vector<16x128xf32>
    %541 = arith.addf %534, %540 : vector<16x128xf32>
    %cst_356 = arith.constant 0.797884583 : f32
    %542 = vector.broadcast %cst_356 : f32 to vector<16x128xf32>
    %543 = arith.mulf %542, %541 : vector<16x128xf32>
    %544 = math.tanh %543 : vector<16x128xf32>
    %cst_357 = arith.constant 1.000000e+00 : f32
    %545 = vector.broadcast %cst_357 : f32 to vector<16x128xf32>
    %546 = arith.addf %545, %544 : vector<16x128xf32>
    %547 = arith.mulf %536, %546 : vector<16x128xf32>
    %548 = arith.truncf %547 : vector<16x128xf32> to vector<16x128xbf16>
    %c5_358 = arith.constant 5 : index
    %c0_359 = arith.constant 0 : index
    %549 = vector.load %arg28[%c5_358, %c0_359] : memref<26x192xbf16, #tpu.memory_space<vmem>>, vector<16x128xbf16>
    tpu.vector_store %arg28[%c5_358, %c0_359], %548 {strides = array<i32>} : memref<26x192xbf16, #tpu.memory_space<vmem>>, vector<16x128xbf16>,
    %cst_360 = arith.constant 0.000000e+00 : f32
    %550 = vector.broadcast %cst_360 : f32 to vector<16x128xf32>
    %c0_361 = arith.constant 0 : index
    %c0_362 = arith.constant 0 : index
    %551 = vector.load %arg28[%c0_361, %c0_362] : memref<26x192xbf16, #tpu.memory_space<vmem>>, vector<16x128xbf16>
    %552 = vector.broadcast %23 : vector<16x1xbf16> to vector<16x128xbf16>
    %553 = arith.mulf %551, %552 : vector<16x128xbf16>
    %c0_363 = arith.constant 0 : index
    %c0_364 = arith.constant 0 : index
    %554 = vector.load %arg22[%c0_363, %c0_364] : memref<128x1152xbf16, #tpu.memory_space<vmem>>, vector<128x128xbf16>
    %cst_365 = arith.constant dense<0.000000e+00> : vector<16x128xf32>
    %555 = tpu.matmul %553, %554, %cst_365 {dimension_numbers = #tpu.dot_dimension_numbers<[1], [0], [0], [1], [0, 0, 1, 1], [], []>} : vector<16x128xbf16>, vector<128x128xbf16>, vector<16x128xf32> -> vector<16x128xf32>
    %556 = arith.addf %550, %555 : vector<16x128xf32>
    %c1_366 = arith.constant 1 : index
    %c0_367 = arith.constant 0 : index
    %557 = vector.load %arg28[%c1_366, %c0_367] : memref<26x192xbf16, #tpu.memory_space<vmem>>, vector<16x128xbf16>
    %c0_368 = arith.constant 0 : index
    %c128_369 = arith.constant 128 : index
    %558 = vector.load %arg22[%c0_368, %c128_369] : memref<128x1152xbf16, #tpu.memory_space<vmem>>, vector<128x128xbf16>
    %cst_370 = arith.constant dense<0.000000e+00> : vector<16x128xf32>
    %559 = tpu.matmul %557, %558, %cst_370 {dimension_numbers = #tpu.dot_dimension_numbers<[1], [0], [0], [1], [0, 0, 1, 1], [], []>} : vector<16x128xbf16>, vector<128x128xbf16>, vector<16x128xf32> -> vector<16x128xf32>
    %560 = arith.addf %556, %559 : vector<16x128xf32>
    %c2_371 = arith.constant 2 : index
    %c0_372 = arith.constant 0 : index
    %561 = vector.load %arg28[%c2_371, %c0_372] : memref<26x192xbf16, #tpu.memory_space<vmem>>, vector<16x128xbf16>
    %562 = vector.broadcast %28 : vector<16x1xbf16> to vector<16x128xbf16>
    %563 = arith.mulf %561, %562 : vector<16x128xbf16>
    %c0_373 = arith.constant 0 : index
    %c256_374 = arith.constant 256 : index
    %564 = vector.load %arg22[%c0_373, %c256_374] : memref<128x1152xbf16, #tpu.memory_space<vmem>>, vector<128x128xbf16>
    %cst_375 = arith.constant dense<0.000000e+00> : vector<16x128xf32>
    %565 = tpu.matmul %563, %564, %cst_375 {dimension_numbers = #tpu.dot_dimension_numbers<[1], [0], [0], [1], [0, 0, 1, 1], [], []>} : vector<16x128xbf16>, vector<128x128xbf16>, vector<16x128xf32> -> vector<16x128xf32>
    %566 = arith.addf %560, %565 : vector<16x128xf32>
    %c4_376 = arith.constant 4 : index
    %c0_377 = arith.constant 0 : index
    %567 = vector.load %arg28[%c4_376, %c0_377] : memref<26x192xbf16, #tpu.memory_space<vmem>>, vector<16x128xbf16>
    %568 = vector.broadcast %23 : vector<16x1xbf16> to vector<16x128xbf16>
    %569 = arith.mulf %567, %568 : vector<16x128xbf16>
    %c0_378 = arith.constant 0 : index
    %c384_379 = arith.constant 384 : index
    %570 = vector.load %arg22[%c0_378, %c384_379] : memref<128x1152xbf16, #tpu.memory_space<vmem>>, vector<128x128xbf16>
    %cst_380 = arith.constant dense<0.000000e+00> : vector<16x128xf32>
    %571 = tpu.matmul %569, %570, %cst_380 {dimension_numbers = #tpu.dot_dimension_numbers<[1], [0], [0], [1], [0, 0, 1, 1], [], []>} : vector<16x128xbf16>, vector<128x128xbf16>, vector<16x128xf32> -> vector<16x128xf32>
    %572 = arith.addf %566, %571 : vector<16x128xf32>
    %c5_381 = arith.constant 5 : index
    %c0_382 = arith.constant 0 : index
    %573 = vector.load %arg28[%c5_381, %c0_382] : memref<26x192xbf16, #tpu.memory_space<vmem>>, vector<16x128xbf16>
    %c0_383 = arith.constant 0 : index
    %c512_384 = arith.constant 512 : index
    %574 = vector.load %arg22[%c0_383, %c512_384] : memref<128x1152xbf16, #tpu.memory_space<vmem>>, vector<128x128xbf16>
    %cst_385 = arith.constant dense<0.000000e+00> : vector<16x128xf32>
    %575 = tpu.matmul %573, %574, %cst_385 {dimension_numbers = #tpu.dot_dimension_numbers<[1], [0], [0], [1], [0, 0, 1, 1], [], []>} : vector<16x128xbf16>, vector<128x128xbf16>, vector<16x128xf32> -> vector<16x128xf32>
    %576 = arith.addf %572, %575 : vector<16x128xf32>
    %c6_386 = arith.constant 6 : index
    %c0_387 = arith.constant 0 : index
    %577 = vector.load %arg28[%c6_386, %c0_387] : memref<26x192xbf16, #tpu.memory_space<vmem>>, vector<16x128xbf16>
    %578 = vector.broadcast %28 : vector<16x1xbf16> to vector<16x128xbf16>
    %579 = arith.mulf %577, %578 : vector<16x128xbf16>
    %c0_388 = arith.constant 0 : index
    %c640_389 = arith.constant 640 : index
    %580 = vector.load %arg22[%c0_388, %c640_389] : memref<128x1152xbf16, #tpu.memory_space<vmem>>, vector<128x128xbf16>
    %cst_390 = arith.constant dense<0.000000e+00> : vector<16x128xf32>
    %581 = tpu.matmul %579, %580, %cst_390 {dimension_numbers = #tpu.dot_dimension_numbers<[1], [0], [0], [1], [0, 0, 1, 1], [], []>} : vector<16x128xbf16>, vector<128x128xbf16>, vector<16x128xf32> -> vector<16x128xf32>
    %582 = arith.addf %576, %581 : vector<16x128xf32>
    %c8_391 = arith.constant 8 : index
    %c0_392 = arith.constant 0 : index
    %583 = vector.load %arg28[%c8_391, %c0_392] : memref<26x192xbf16, #tpu.memory_space<vmem>>, vector<16x128xbf16>
    %584 = vector.broadcast %23 : vector<16x1xbf16> to vector<16x128xbf16>
    %585 = arith.mulf %583, %584 : vector<16x128xbf16>
    %c0_393 = arith.constant 0 : index
    %c768_394 = arith.constant 768 : index
    %586 = vector.load %arg22[%c0_393, %c768_394] : memref<128x1152xbf16, #tpu.memory_space<vmem>>, vector<128x128xbf16>
    %cst_395 = arith.constant dense<0.000000e+00> : vector<16x128xf32>
    %587 = tpu.matmul %585, %586, %cst_395 {dimension_numbers = #tpu.dot_dimension_numbers<[1], [0], [0], [1], [0, 0, 1, 1], [], []>} : vector<16x128xbf16>, vector<128x128xbf16>, vector<16x128xf32> -> vector<16x128xf32>
    %588 = arith.addf %582, %587 : vector<16x128xf32>
    %c9_396 = arith.constant 9 : index
    %c0_397 = arith.constant 0 : index
    %589 = vector.load %arg28[%c9_396, %c0_397] : memref<26x192xbf16, #tpu.memory_space<vmem>>, vector<16x128xbf16>
    %c0_398 = arith.constant 0 : index
    %c896_399 = arith.constant 896 : index
    %590 = vector.load %arg22[%c0_398, %c896_399] : memref<128x1152xbf16, #tpu.memory_space<vmem>>, vector<128x128xbf16>
    %cst_400 = arith.constant dense<0.000000e+00> : vector<16x128xf32>
    %591 = tpu.matmul %589, %590, %cst_400 {dimension_numbers = #tpu.dot_dimension_numbers<[1], [0], [0], [1], [0, 0, 1, 1], [], []>} : vector<16x128xbf16>, vector<128x128xbf16>, vector<16x128xf32> -> vector<16x128xf32>
    %592 = arith.addf %588, %591 : vector<16x128xf32>
    %c10_401 = arith.constant 10 : index
    %c0_402 = arith.constant 0 : index
    %593 = vector.load %arg28[%c10_401, %c0_402] : memref<26x192xbf16, #tpu.memory_space<vmem>>, vector<16x128xbf16>
    %594 = vector.broadcast %28 : vector<16x1xbf16> to vector<16x128xbf16>
    %595 = arith.mulf %593, %594 : vector<16x128xbf16>
    %c0_403 = arith.constant 0 : index
    %c1024_404 = arith.constant 1024 : index
    %596 = vector.load %arg22[%c0_403, %c1024_404] : memref<128x1152xbf16, #tpu.memory_space<vmem>>, vector<128x128xbf16>
    %cst_405 = arith.constant dense<0.000000e+00> : vector<16x128xf32>
    %597 = tpu.matmul %595, %596, %cst_405 {dimension_numbers = #tpu.dot_dimension_numbers<[1], [0], [0], [1], [0, 0, 1, 1], [], []>} : vector<16x128xbf16>, vector<128x128xbf16>, vector<16x128xf32> -> vector<16x128xf32>
    %598 = arith.addf %592, %597 : vector<16x128xf32>
    %c0_406 = arith.constant 0 : index
    %c0_407 = arith.constant 0 : index
    %599 = vector.load %arg23[%c0_406, %c0_407] : memref<1x128xf32, #tpu.memory_space<vmem>>, vector<1x128xf32>
    %600 = vector.broadcast %599 : vector<1x128xf32> to vector<16x128xf32>
    %601 = arith.addf %598, %600 : vector<16x128xf32>
    %cst_408 = arith.constant 5.000000e-01 : f32
    %602 = vector.broadcast %cst_408 : f32 to vector<16x128xf32>
    %603 = arith.mulf %602, %601 : vector<16x128xf32>
    %cst_409 = arith.constant 4.471500e-02 : f32
    %604 = vector.broadcast %cst_409 : f32 to vector<16x128xf32>
    %605 = arith.mulf %604, %601 : vector<16x128xf32>
    %606 = arith.mulf %605, %601 : vector<16x128xf32>
    %607 = arith.mulf %606, %601 : vector<16x128xf32>
    %608 = arith.addf %601, %607 : vector<16x128xf32>
    %cst_410 = arith.constant 0.797884583 : f32
    %609 = vector.broadcast %cst_410 : f32 to vector<16x128xf32>
    %610 = arith.mulf %609, %608 : vector<16x128xf32>
    %611 = math.tanh %610 : vector<16x128xf32>
    %cst_411 = arith.constant 1.000000e+00 : f32
    %612 = vector.broadcast %cst_411 : f32 to vector<16x128xf32>
    %613 = arith.addf %612, %611 : vector<16x128xf32>
    %614 = arith.mulf %603, %613 : vector<16x128xf32>
    %615 = arith.truncf %614 : vector<16x128xf32> to vector<16x128xbf16>
    %c5_412 = arith.constant 5 : index
    %c0_413 = arith.constant 0 : index
    %616 = vector.load %arg28[%c5_412, %c0_413] : memref<26x192xbf16, #tpu.memory_space<vmem>>, vector<16x128xbf16>
    tpu.vector_store %arg28[%c5_412, %c0_413], %615 {strides = array<i32>} : memref<26x192xbf16, #tpu.memory_space<vmem>>, vector<16x128xbf16>,
    %cst_414 = arith.constant 0.000000e+00 : f32
    %617 = vector.broadcast %cst_414 : f32 to vector<16x192xf32>
    %c5_415 = arith.constant 5 : index
    %c0_416 = arith.constant 0 : index
    %618 = vector.load %arg28[%c5_415, %c0_416] : memref<26x192xbf16, #tpu.memory_space<vmem>>, vector<16x128xbf16>
    %c0_417 = arith.constant 0 : index
    %c0_418 = arith.constant 0 : index
    %619 = vector.load %arg24[%c0_417, %c0_418] : memref<128x768xbf16, #tpu.memory_space<vmem>>, vector<128x192xbf16>
    %cst_419 = arith.constant dense<0.000000e+00> : vector<16x192xf32>
    %620 = tpu.matmul %618, %619, %cst_419 {dimension_numbers = #tpu.dot_dimension_numbers<[1], [0], [0], [1], [0, 0, 1, 1], [], []>} : vector<16x128xbf16>, vector<128x192xbf16>, vector<16x192xf32> -> vector<16x192xf32>
    %621 = arith.addf %617, %620 : vector<16x192xf32>
    %c6_420 = arith.constant 6 : index
    %c0_421 = arith.constant 0 : index
    %622 = vector.load %arg28[%c6_420, %c0_421] : memref<26x192xbf16, #tpu.memory_space<vmem>>, vector<16x128xbf16>
    %623 = vector.broadcast %28 : vector<16x1xbf16> to vector<16x128xbf16>
    %624 = arith.mulf %622, %623 : vector<16x128xbf16>
    %c0_422 = arith.constant 0 : index
    %c192_423 = arith.constant 192 : index
    %625 = vector.load %arg24[%c0_422, %c192_423] : memref<128x768xbf16, #tpu.memory_space<vmem>>, vector<128x192xbf16>
    %cst_424 = arith.constant dense<0.000000e+00> : vector<16x192xf32>
    %626 = tpu.matmul %624, %625, %cst_424 {dimension_numbers = #tpu.dot_dimension_numbers<[1], [0], [0], [1], [0, 0, 1, 1], [], []>} : vector<16x128xbf16>, vector<128x192xbf16>, vector<16x192xf32> -> vector<16x192xf32>
    %627 = arith.addf %621, %626 : vector<16x192xf32>
    %c9_425 = arith.constant 9 : index
    %c0_426 = arith.constant 0 : index
    %628 = vector.load %arg28[%c9_425, %c0_426] : memref<26x192xbf16, #tpu.memory_space<vmem>>, vector<16x128xbf16>
    %c0_427 = arith.constant 0 : index
    %c384_428 = arith.constant 384 : index
    %629 = vector.load %arg24[%c0_427, %c384_428] : memref<128x768xbf16, #tpu.memory_space<vmem>>, vector<128x192xbf16>
    %cst_429 = arith.constant dense<0.000000e+00> : vector<16x192xf32>
    %630 = tpu.matmul %628, %629, %cst_429 {dimension_numbers = #tpu.dot_dimension_numbers<[1], [0], [0], [1], [0, 0, 1, 1], [], []>} : vector<16x128xbf16>, vector<128x192xbf16>, vector<16x192xf32> -> vector<16x192xf32>
    %631 = arith.addf %627, %630 : vector<16x192xf32>
    %c10_430 = arith.constant 10 : index
    %c0_431 = arith.constant 0 : index
    %632 = vector.load %arg28[%c10_430, %c0_431] : memref<26x192xbf16, #tpu.memory_space<vmem>>, vector<16x128xbf16>
    %633 = vector.broadcast %28 : vector<16x1xbf16> to vector<16x128xbf16>
    %634 = arith.mulf %632, %633 : vector<16x128xbf16>
    %c0_432 = arith.constant 0 : index
    %c576 = arith.constant 576 : index
    %635 = vector.load %arg24[%c0_432, %c576] : memref<128x768xbf16, #tpu.memory_space<vmem>>, vector<128x192xbf16>
    %cst_433 = arith.constant dense<0.000000e+00> : vector<16x192xf32>
    %636 = tpu.matmul %634, %635, %cst_433 {dimension_numbers = #tpu.dot_dimension_numbers<[1], [0], [0], [1], [0, 0, 1, 1], [], []>} : vector<16x128xbf16>, vector<128x192xbf16>, vector<16x192xf32> -> vector<16x192xf32>
    %637 = arith.addf %631, %636 : vector<16x192xf32>
    %c0_434 = arith.constant 0 : index
    %c0_435 = arith.constant 0 : index
    %638 = vector.load %arg25[%c0_434, %c0_435] : memref<1x192xf32, #tpu.memory_space<vmem>>, vector<1x192xf32>
    %639 = vector.broadcast %638 : vector<1x192xf32> to vector<16x192xf32>
    %640 = arith.addf %637, %639 : vector<16x192xf32>
    %641 = math.tanh %640 : vector<16x192xf32>
    %c0_436 = arith.constant 0 : index
    %c0_437 = arith.constant 0 : index
    %c0_438 = arith.constant 0 : index
    %642 = vector.load %arg26[%c0_436, %c0_437, %c0_438] : memref<1x16x192xf32, #tpu.memory_space<vmem>>, vector<1x16x192xf32>
    %643 = vector.shape_cast %642 : vector<1x16x192xf32> to vector<16x192xf32>
    %644 = vector.shape_cast %641 : vector<16x192xf32> to vector<1x16x192xf32>
    tpu.vector_store %arg26[%c0_436, %c0_437, %c0_438], %644 {strides = array<i32>} : memref<1x16x192xf32, #tpu.memory_space<vmem>>, vector<1x16x192xf32>,
    return
  }
  func.func @transform_0(%arg0: i32) -> (i32, i32, i32) {
    %c0_i32 = arith.constant 0 : i32
    %c0_i32_0 = arith.constant 0 : i32
    %c0_i32_1 = arith.constant 0 : i32
    return %arg0, %c0_i32, %c0_i32_0 : i32, i32, i32
  }
  func.func @transform_1(%arg0: i32) -> (i32, i32) {
    %c0_i32 = arith.constant 0 : i32
    %c0_i32_0 = arith.constant 0 : i32
    %c0_i32_1 = arith.constant 0 : i32
    return %c0_i32, %c0_i32_0 : i32, i32
  }
  func.func @transform_2(%arg0: i32) -> (i32, i32) {
    %c0_i32 = arith.constant 0 : i32
    %c0_i32_0 = arith.constant 0 : i32
    %c0_i32_1 = arith.constant 0 : i32
    return %c0_i32, %c0_i32_0 : i32, i32
  }
  func.func @transform_3(%arg0: i32) -> (i32, i32) {
    %c0_i32 = arith.constant 0 : i32
    %c0_i32_0 = arith.constant 0 : i32
    %c0_i32_1 = arith.constant 0 : i32
    return %c0_i32, %c0_i32_0 : i32, i32
  }
  func.func @transform_4(%arg0: i32) -> (i32, i32) {
    %c0_i32 = arith.constant 0 : i32
    %c0_i32_0 = arith.constant 0 : i32
    %c0_i32_1 = arith.constant 0 : i32
    return %c0_i32, %c0_i32_0 : i32, i32
  }
  func.func @transform_5(%arg0: i32) -> (i32, i32) {
    %c0_i32 = arith.constant 0 : i32
    %c0_i32_0 = arith.constant 0 : i32
    %c0_i32_1 = arith.constant 0 : i32
    return %c0_i32, %c0_i32_0 : i32, i32
  }
  func.func @transform_6(%arg0: i32) -> (i32, i32) {
    %c0_i32 = arith.constant 0 : i32
    %c0_i32_0 = arith.constant 0 : i32
    %c0_i32_1 = arith.constant 0 : i32
    return %c0_i32, %c0_i32_0 : i32, i32
  }
  func.func @transform_7(%arg0: i32) -> (i32, i32) {
    %c0_i32 = arith.constant 0 : i32
    %c0_i32_0 = arith.constant 0 : i32
    %c0_i32_1 = arith.constant 0 : i32
    return %c0_i32, %c0_i32_0 : i32, i32
  }
  func.func @transform_8(%arg0: i32) -> (i32, i32) {
    %c0_i32 = arith.constant 0 : i32
    %c0_i32_0 = arith.constant 0 : i32
    %c0_i32_1 = arith.constant 0 : i32
    return %c0_i32, %c0_i32_0 : i32, i32
  }
  func.func @transform_9(%arg0: i32) -> (i32, i32) {
    %c0_i32 = arith.constant 0 : i32
    %c0_i32_0 = arith.constant 0 : i32
    %c0_i32_1 = arith.constant 0 : i32
    return %c0_i32, %c0_i32_0 : i32, i32
  }
  func.func @transform_10(%arg0: i32) -> (i32, i32) {
    %c0_i32 = arith.constant 0 : i32
    %c0_i32_0 = arith.constant 0 : i32
    %c0_i32_1 = arith.constant 0 : i32
    return %c0_i32, %c0_i32_0 : i32, i32
  }
  func.func @transform_11(%arg0: i32) -> (i32, i32) {
    %c0_i32 = arith.constant 0 : i32
    %c0_i32_0 = arith.constant 0 : i32
    %c0_i32_1 = arith.constant 0 : i32
    return %c0_i32, %c0_i32_0 : i32, i32
  }
  func.func @transform_12(%arg0: i32) -> (i32, i32) {
    %c0_i32 = arith.constant 0 : i32
    %c0_i32_0 = arith.constant 0 : i32
    %c0_i32_1 = arith.constant 0 : i32
    return %c0_i32, %c0_i32_0 : i32, i32
  }
  func.func @transform_13(%arg0: i32) -> (i32, i32) {
    %c0_i32 = arith.constant 0 : i32
    %c0_i32_0 = arith.constant 0 : i32
    %c0_i32_1 = arith.constant 0 : i32
    return %c0_i32, %c0_i32_0 : i32, i32
  }
  func.func @transform_14(%arg0: i32) -> (i32, i32) {
    %c0_i32 = arith.constant 0 : i32
    %c0_i32_0 = arith.constant 0 : i32
    %c0_i32_1 = arith.constant 0 : i32
    return %c0_i32, %c0_i32_0 : i32, i32
  }
  func.func @transform_15(%arg0: i32) -> (i32, i32) {
    %c0_i32 = arith.constant 0 : i32
    %c0_i32_0 = arith.constant 0 : i32
    %c0_i32_1 = arith.constant 0 : i32
    return %c0_i32, %c0_i32_0 : i32, i32
  }
  func.func @transform_16(%arg0: i32) -> (i32, i32) {
    %c0_i32 = arith.constant 0 : i32
    %c0_i32_0 = arith.constant 0 : i32
    %c0_i32_1 = arith.constant 0 : i32
    return %c0_i32, %c0_i32_0 : i32, i32
  }
  func.func @transform_17(%arg0: i32) -> (i32, i32) {
    %c0_i32 = arith.constant 0 : i32
    %c0_i32_0 = arith.constant 0 : i32
    %c0_i32_1 = arith.constant 0 : i32
    return %c0_i32, %c0_i32_0 : i32, i32
  }
  func.func @transform_18(%arg0: i32) -> (i32, i32) {
    %c0_i32 = arith.constant 0 : i32
    %c0_i32_0 = arith.constant 0 : i32
    %c0_i32_1 = arith.constant 0 : i32
    return %c0_i32, %c0_i32_0 : i32, i32
  }
  func.func @transform_19(%arg0: i32) -> (i32, i32) {
    %c0_i32 = arith.constant 0 : i32
    %c0_i32_0 = arith.constant 0 : i32
    %c0_i32_1 = arith.constant 0 : i32
    return %c0_i32, %c0_i32_0 : i32, i32
  }
  func.func @transform_20(%arg0: i32) -> (i32, i32) {
    %c0_i32 = arith.constant 0 : i32
    %c0_i32_0 = arith.constant 0 : i32
    %c0_i32_1 = arith.constant 0 : i32
    return %c0_i32, %c0_i32_0 : i32, i32
  }
  func.func @transform_21(%arg0: i32) -> (i32, i32) {
    %c0_i32 = arith.constant 0 : i32
    %c0_i32_0 = arith.constant 0 : i32
    %c0_i32_1 = arith.constant 0 : i32
    return %c0_i32, %c0_i32_0 : i32, i32
  }
  func.func @transform_22(%arg0: i32) -> (i32, i32) {
    %c0_i32 = arith.constant 0 : i32
    %c0_i32_0 = arith.constant 0 : i32
    %c0_i32_1 = arith.constant 0 : i32
    return %c0_i32, %c0_i32_0 : i32, i32
  }
  func.func @transform_23(%arg0: i32) -> (i32, i32) {
    %c0_i32 = arith.constant 0 : i32
    %c0_i32_0 = arith.constant 0 : i32
    %c0_i32_1 = arith.constant 0 : i32
    return %c0_i32, %c0_i32_0 : i32, i32
  }
  func.func @transform_24(%arg0: i32) -> (i32, i32) {
    %c0_i32 = arith.constant 0 : i32
    %c0_i32_0 = arith.constant 0 : i32
    %c0_i32_1 = arith.constant 0 : i32
    return %c0_i32, %c0_i32_0 : i32, i32
  }
  func.func @transform_25(%arg0: i32) -> (i32, i32, i32) {
    %c0_i32 = arith.constant 0 : i32
    %c0_i32_0 = arith.constant 0 : i32
    %c0_i32_1 = arith.constant 0 : i32
    return %arg0, %c0_i32, %c0_i32_0 : i32, i32, i32
  }
  func.func @transform_26(%arg0: i32) -> (i32, i32, i32) {
    %c0_i32 = arith.constant 0 : i32
    %c0_i32_0 = arith.constant 0 : i32
    %c0_i32_1 = arith.constant 0 : i32
    return %arg0, %c0_i32, %c0_i32_0 : i32, i32, i32
  }
}

</mosaic_0001>

<llo_original>
// kernel: autoencoder_forward.1
$region0: #{autoencoder_forward.1}
  #allocation0 [shape = 'u32[]', space=smem, size = 0x4, offset = 0x4, fixed_abs, tag = 'smem constant byte address 0x4 - core index']
  #allocation1 [shape = 'u32[72,128]{1,0:T(1,128)}', space=vmem, size = 0x9000, scoped, tag = 'internal scratch']
  #allocation2 [shape = 'bf16[26,192]{1,0:T(8,128)(2,1)}', space=vmem, size = 0x4000, scoped, tag = 'scratch operand']
  #allocation3 [shape = 'bf16[1,256]{1,0:T(2,128)(2,1)}', space=vmem, size = 0x400, scoped, tag = 'scratch operand']
  %s0 = inlined_call_operand.vmem [shape: bf16[2,16,192], index: 0, kind: input, shape index: {}]
  %s1 = inlined_call_operand.vmem [shape: bf16[192,512], index: 1, kind: input, shape index: {}]
  %s2 = inlined_call_operand.vmem [shape: f32[1,128], index: 2, kind: input, shape index: {}]
  %s3 = inlined_call_operand.vmem [shape: bf16[128,1152], index: 3, kind: input, shape index: {}]
  %s4 = inlined_call_operand.vmem [shape: f32[1,128], index: 4, kind: input, shape index: {}]
  %s5 = inlined_call_operand.vmem [shape: bf16[128,256], index: 5, kind: input, shape index: {}]
  %s6 = inlined_call_operand.vmem [shape: f32[1,64], index: 6, kind: input, shape index: {}]
  %s7 = inlined_call_operand.vmem [shape: bf16[64,576], index: 7, kind: input, shape index: {}]
  %s8 = inlined_call_operand.vmem [shape: f32[1,64], index: 8, kind: input, shape index: {}]
  %s9 = inlined_call_operand.vmem [shape: bf16[64,64], index: 9, kind: input, shape index: {}]
  %s10 = inlined_call_operand.vmem [shape: f32[1,16], index: 10, kind: input, shape index: {}]
  %s11 = inlined_call_operand.vmem [shape: bf16[256,32], index: 11, kind: input, shape index: {}]
  %s12 = inlined_call_operand.vmem [shape: f32[1,32], index: 12, kind: input, shape index: {}]
  %s13 = inlined_call_operand.vmem [shape: bf16[32,256], index: 13, kind: input, shape index: {}]
  %s14 = inlined_call_operand.vmem [shape: f32[1,256], index: 14, kind: input, shape index: {}]
  %s15 = inlined_call_operand.vmem [shape: bf16[16,256], index: 15, kind: input, shape index: {}]
  %s16 = inlined_call_operand.vmem [shape: f32[1,64], index: 16, kind: input, shape index: {}]
  %s17 = inlined_call_operand.vmem [shape: bf16[64,576], index: 17, kind: input, shape index: {}]
  %s18 = inlined_call_operand.vmem [shape: f32[1,64], index: 18, kind: input, shape index: {}]
  %s19 = inlined_call_operand.vmem [shape: bf16[64,512], index: 19, kind: input, shape index: {}]
  %s20 = inlined_call_operand.vmem [shape: f32[1,128], index: 20, kind: input, shape index: {}]
  %s21 = inlined_call_operand.vmem [shape: bf16[128,1152], index: 21, kind: input, shape index: {}]
  %s22 = inlined_call_operand.vmem [shape: f32[1,128], index: 22, kind: input, shape index: {}]
  %s23 = inlined_call_operand.vmem [shape: bf16[128,768], index: 23, kind: input, shape index: {}]
  %s24 = inlined_call_operand.vmem [shape: f32[1,192], index: 24, kind: input, shape index: {}]
  %s25 = inlined_call_operand.vmem [shape: f32[2,16,192], index: 25, kind: output, shape index: {0}]
  %s26 = inlined_call_operand.hbm [shape: f32[2,1,32], index: 26, kind: output, shape index: {1}]
  %27 = xla_tuple %s25, %s26
  %s28 = sld [smem:[#allocation0]]
  $region141: #{autoencoder_forward.1} parent=0
    _
  %s30 = ssub.s32 1, %s28
  %s31 = scalar_select 0, %s30, %s28
  $region1: #{autoencoder_forward.1} parent=0
    #allocation4 [shape = 'u8[1024]{0}', space=vmem, size = 0x400, scoped, tag = 'output window, operand 1']
    #allocation5 [shape = 's32[2]{0}', space=sflag, size = 0x8, scoped, tag = 'scoped memory for autoencoder_forward.1']
    %32 = vsyncpa [#allocation5], 0
    %s33 = scalar_lea.sflag [#allocation5], 1
    %34 = vsyncpa %s33, 0
    loop: start=0, step=1, limit=4
    $region2: #{autoencoder_forward.1} parent=1 // loop_pre_header
      _
    $region3: #{autoencoder_forward.1} parent=1 // loop_header
      %s36 = sphi 0, %s40
      %p37 = scmp.ge.s32.totalorder %s36, 4
      %s46 = sphi 0, %s48
      %s49 = sphi 0, %s46
      %s50 = sphi 0, %s49
      %s66 = sphi 0, %s50
      %s70 = sphi 0, %s70
      %s72 = sphi 0, %s70
      %s73 = sphi 0, %s72
      %s87 = sphi 0, %s73
      %s91 = sphi 0, %s91
      %s93 = sphi 0, %s91
      %s94 = sphi 0, %s93
      %s108 = sphi 0, %s94
      %s112 = sphi 0, %s112
      %s114 = sphi 0, %s112
      %s115 = sphi 0, %s114
      %s129 = sphi 0, %s115
      %s133 = sphi 0, %s133
      %s135 = sphi 0, %s133
      %s136 = sphi 0, %s135
      %s150 = sphi 0, %s136
      %s154 = sphi 0, %s154
      %s156 = sphi 0, %s154
      %s157 = sphi 0, %s156
      %s171 = sphi 0, %s157
      %s175 = sphi 0, %s175
      %s177 = sphi 0, %s175
      %s178 = sphi 0, %s177
      %s192 = sphi 0, %s178
      %s196 = sphi 0, %s196
      %s198 = sphi 0, %s196
      %s199 = sphi 0, %s198
      %s213 = sphi 0, %s199
      %s217 = sphi 0, %s217
      %s219 = sphi 0, %s217
      %s220 = sphi 0, %s219
      %s234 = sphi 0, %s220
      %s238 = sphi 0, %s238
      %s240 = sphi 0, %s238
      %s241 = sphi 0, %s240
      %s255 = sphi 0, %s241
      %s259 = sphi 0, %s259
      %s261 = sphi 0, %s259
      %s262 = sphi 0, %s261
      %s276 = sphi 0, %s262
      %s280 = sphi 0, %s280
      %s282 = sphi 0, %s280
      %s283 = sphi 0, %s282
      %s297 = sphi 0, %s283
      %s301 = sphi 0, %s301
      %s303 = sphi 0, %s301
      %s304 = sphi 0, %s303
      %s318 = sphi 0, %s304
      %s322 = sphi 0, %s322
      %s324 = sphi 0, %s322
      %s325 = sphi 0, %s324
      %s339 = sphi 0, %s325
      %s343 = sphi 0, %s343
      %s345 = sphi 0, %s343
      %s346 = sphi 0, %s345
      %s360 = sphi 0, %s346
      %s364 = sphi 0, %s364
      %s366 = sphi 0, %s364
      %s367 = sphi 0, %s366
      %s381 = sphi 0, %s367
      %s385 = sphi 0, %s385
      %s387 = sphi 0, %s385
      %s388 = sphi 0, %s387
      %s402 = sphi 0, %s388
      %s406 = sphi 0, %s406
      %s408 = sphi 0, %s406
      %s409 = sphi 0, %s408
      %s423 = sphi 0, %s409
      %s427 = sphi 0, %s427
      %s429 = sphi 0, %s427
      %s430 = sphi 0, %s429
      %s444 = sphi 0, %s430
      %s448 = sphi 0, %s448
      %s450 = sphi 0, %s448
      %s451 = sphi 0, %s450
      %s465 = sphi 0, %s451
      %s469 = sphi 0, %s469
      %s471 = sphi 0, %s469
      %s472 = sphi 0, %s471
      %s486 = sphi 0, %s472
      %s490 = sphi 0, %s490
      %s492 = sphi 0, %s490
      %s493 = sphi 0, %s492
      %s507 = sphi 0, %s493
      %s511 = sphi 0, %s511
      %s513 = sphi 0, %s511
      %s514 = sphi 0, %s513
      %s528 = sphi 0, %s514
      %s532 = sphi 0, %s532
      %s534 = sphi 0, %s532
      %s535 = sphi 0, %s534
      %s549 = sphi 0, %s535
      %s553 = sphi 0, %s553
      %s555 = sphi 0, %s553
      %s556 = sphi 0, %s555
      %s570 = sphi 0, %s556
      %s576 = sphi 0, %s578
      %s579 = sphi 0, %s576
      %s580 = sphi 0, %s579
      %s596 = sphi 0, %s580
      %s602 = sphi 0, %s604
      %s605 = sphi 0, %s602
      %s606 = sphi 0, %s605
      %s622 = sphi 0, %s606
    $region4: #{autoencoder_forward.1} parent=1 // loop_header_branch
      %39 = sbr.rel (%p37) target = $region8
    $region5: #{autoencoder_forward.1} parent=1 // loop_body
      %s41 = ssub.s32 %s36, 1
      %s42 = ssub.s32 %s36, 2
      %s43 = sadd.s32 %s36, 1
      %s44 = ssub.s32 %s36, %s43
      %p45 = scmp.eq.s32.totalorder %s44, 0
      %s47 = sadd.s32 %s46, 1
      %s48 = scalar_select %p45, %s46, %s47
      %p51 = pneg %p45
      %p52 = scmp.eq.s32.totalorder %s36, 1
      %p53 = por %p51, %p52
      %p54 = scmp.ne.s32.totalorder %s46, %s49
      %p55 = scmp.eq.s32.totalorder %s36, 0
      %p56 = por %p54, %p55
      %p57 = scmp.ne.s32.totalorder %s46, %s49
      %p58 = scmp.eq.s32.totalorder %s41, 1
      %p59 = por %p57, %p58
      %p60 = scmp.ne.s32.totalorder %s49, %s50
      %p61 = scmp.eq.s32.totalorder %s41, 0
      %p62 = por %p60, %p61
      %p63 = scmp.ne.s32.totalorder %s49, %s50
      %p64 = scmp.eq.s32.totalorder %s42, 1
      %p65 = por %p63, %p64
      %p67 = scmp.ne.s32.totalorder %s50, %s66
      %p68 = scmp.eq.s32.totalorder %s42, 0
      %p69 = por %p67, %p68
      %s71 = sadd.s32 %s70, 1
      %p74 = scmp.eq.s32.totalorder %s36, 1
      %p75 = scmp.ne.s32.totalorder %s70, %s72
      %p76 = scmp.eq.s32.totalorder %s36, 0
      %p77 = por %p75, %p76
      %p78 = scmp.ne.s32.totalorder %s70, %s72
      %p79 = scmp.eq.s32.totalorder %s41, 1
      %p80 = por %p78, %p79
      %p81 = scmp.ne.s32.totalorder %s72, %s73
      %p82 = scmp.eq.s32.totalorder %s41, 0
      %p83 = por %p81, %p82
      %p84 = scmp.ne.s32.totalorder %s72, %s73
      %p85 = scmp.eq.s32.totalorder %s42, 1
      %p86 = por %p84, %p85
      %p88 = scmp.ne.s32.totalorder %s73, %s87
      %p89 = scmp.eq.s32.totalorder %s42, 0
      %p90 = por %p88, %p89
      %s92 = sadd.s32 %s91, 1
      %p95 = scmp.eq.s32.totalorder %s36, 1
      %p96 = scmp.ne.s32.totalorder %s91, %s93
      %p97 = scmp.eq.s32.totalorder %s36, 0
      %p98 = por %p96, %p97
      %p99 = scmp.ne.s32.totalorder %s91, %s93
      %p100 = scmp.eq.s32.totalorder %s41, 1
      %p101 = por %p99, %p100
      %p102 = scmp.ne.s32.totalorder %s93, %s94
      %p103 = scmp.eq.s32.totalorder %s41, 0
      %p104 = por %p102, %p103
      %p105 = scmp.ne.s32.totalorder %s93, %s94
      %p106 = scmp.eq.s32.totalorder %s42, 1
      %p107 = por %p105, %p106
      %p109 = scmp.ne.s32.totalorder %s94, %s108
      %p110 = scmp.eq.s32.totalorder %s42, 0
      %p111 = por %p109, %p110
      %s113 = sadd.s32 %s112, 1
      %p116 = scmp.eq.s32.totalorder %s36, 1
      %p117 = scmp.ne.s32.totalorder %s112, %s114
      %p118 = scmp.eq.s32.totalorder %s36, 0
      %p119 = por %p117, %p118
      %p120 = scmp.ne.s32.totalorder %s112, %s114
      %p121 = scmp.eq.s32.totalorder %s41, 1
      %p122 = por %p120, %p121
      %p123 = scmp.ne.s32.totalorder %s114, %s115
      %p124 = scmp.eq.s32.totalorder %s41, 0
      %p125 = por %p123, %p124
      %p126 = scmp.ne.s32.totalorder %s114, %s115
      %p127 = scmp.eq.s32.totalorder %s42, 1
      %p128 = por %p126, %p127
      %p130 = scmp.ne.s32.totalorder %s115, %s129
      %p131 = scmp.eq.s32.totalorder %s42, 0
      %p132 = por %p130, %p131
      %s134 = sadd.s32 %s133, 1
      %p137 = scmp.eq.s32.totalorder %s36, 1
      %p138 = scmp.ne.s32.totalorder %s133, %s135
      %p139 = scmp.eq.s32.totalorder %s36, 0
      %p140 = por %p138, %p139
      %p141 = scmp.ne.s32.totalorder %s133, %s135
      %p142 = scmp.eq.s32.totalorder %s41, 1
      %p143 = por %p141, %p142
      %p144 = scmp.ne.s32.totalorder %s135, %s136
      %p145 = scmp.eq.s32.totalorder %s41, 0
      %p146 = por %p144, %p145
      %p147 = scmp.ne.s32.totalorder %s135, %s136
      %p148 = scmp.eq.s32.totalorder %s42, 1
      %p149 = por %p147, %p148
      %p151 = scmp.ne.s32.totalorder %s136, %s150
      %p152 = scmp.eq.s32.totalorder %s42, 0
      %p153 = por %p151, %p152
      %s155 = sadd.s32 %s154, 1
      %p158 = scmp.eq.s32.totalorder %s36, 1
      %p159 = scmp.ne.s32.totalorder %s154, %s156
      %p160 = scmp.eq.s32.totalorder %s36, 0
      %p161 = por %p159, %p160
      %p162 = scmp.ne.s32.totalorder %s154, %s156
      %p163 = scmp.eq.s32.totalorder %s41, 1
      %p164 = por %p162, %p163
      %p165 = scmp.ne.s32.totalorder %s156, %s157
      %p166 = scmp.eq.s32.totalorder %s41, 0
      %p167 = por %p165, %p166
      %p168 = scmp.ne.s32.totalorder %s156, %s157
      %p169 = scmp.eq.s32.totalorder %s42, 1
      %p170 = por %p168, %p169
      %p172 = scmp.ne.s32.totalorder %s157, %s171
      %p173 = scmp.eq.s32.totalorder %s42, 0
      %p174 = por %p172, %p173
      %s176 = sadd.s32 %s175, 1
      %p179 = scmp.eq.s32.totalorder %s36, 1
      %p180 = scmp.ne.s32.totalorder %s175, %s177
      %p181 = scmp.eq.s32.totalorder %s36, 0
      %p182 = por %p180, %p181
      %p183 = scmp.ne.s32.totalorder %s175, %s177
      %p184 = scmp.eq.s32.totalorder %s41, 1
      %p185 = por %p183, %p184
      %p186 = scmp.ne.s32.totalorder %s177, %s178
      %p187 = scmp.eq.s32.totalorder %s41, 0
      %p188 = por %p186, %p187
      %p189 = scmp.ne.s32.totalorder %s177, %s178
      %p190 = scmp.eq.s32.totalorder %s42, 1
      %p191 = por %p189, %p190
      %p193 = scmp.ne.s32.totalorder %s178, %s192
      %p194 = scmp.eq.s32.totalorder %s42, 0
      %p195 = por %p193, %p194
      %s197 = sadd.s32 %s196, 1
      %p200 = scmp.eq.s32.totalorder %s36, 1
      %p201 = scmp.ne.s32.totalorder %s196, %s198
      %p202 = scmp.eq.s32.totalorder %s36, 0
      %p203 = por %p201, %p202
      %p204 = scmp.ne.s32.totalorder %s196, %s198
      %p205 = scmp.eq.s32.totalorder %s41, 1
      %p206 = por %p204, %p205
      %p207 = scmp.ne.s32.totalorder %s198, %s199
      %p208 = scmp.eq.s32.totalorder %s41, 0
      %p209 = por %p207, %p208
      %p210 = scmp.ne.s32.totalorder %s198, %s199
      %p211 = scmp.eq.s32.totalorder %s42, 1
      %p212 = por %p210, %p211
      %p214 = scmp.ne.s32.totalorder %s199, %s213
      %p215 = scmp.eq.s32.totalorder %s42, 0
      %p216 = por %p214, %p215
      %s218 = sadd.s32 %s217, 1
      %p221 = scmp.eq.s32.totalorder %s36, 1
      %p222 = scmp.ne.s32.totalorder %s217, %s219
      %p223 = scmp.eq.s32.totalorder %s36, 0
      %p224 = por %p222, %p223
      %p225 = scmp.ne.s32.totalorder %s217, %s219
      %p226 = scmp.eq.s32.totalorder %s41, 1
      %p227 = por %p225, %p226
      %p228 = scmp.ne.s32.totalorder %s219, %s220
      %p229 = scmp.eq.s32.totalorder %s41, 0
      %p230 = por %p228, %p229
      %p231 = scmp.ne.s32.totalorder %s219, %s220
      %p232 = scmp.eq.s32.totalorder %s42, 1
      %p233 = por %p231, %p232
      %p235 = scmp.ne.s32.totalorder %s220, %s234
      %p236 = scmp.eq.s32.totalorder %s42, 0
      %p237 = por %p235, %p236
      %s239 = sadd.s32 %s238, 1
      %p242 = scmp.eq.s32.totalorder %s36, 1
      %p243 = scmp.ne.s32.totalorder %s238, %s240
      %p244 = scmp.eq.s32.totalorder %s36, 0
      %p245 = por %p243, %p244
      %p246 = scmp.ne.s32.totalorder %s238, %s240
      %p247 = scmp.eq.s32.totalorder %s41, 1
      %p248 = por %p246, %p247
      %p249 = scmp.ne.s32.totalorder %s240, %s241
      %p250 = scmp.eq.s32.totalorder %s41, 0
      %p251 = por %p249, %p250
      %p252 = scmp.ne.s32.totalorder %s240, %s241
      %p253 = scmp.eq.s32.totalorder %s42, 1
      %p254 = por %p252, %p253
      %p256 = scmp.ne.s32.totalorder %s241, %s255
      %p257 = scmp.eq.s32.totalorder %s42, 0
      %p258 = por %p256, %p257
      %s260 = sadd.s32 %s259, 1
      %p263 = scmp.eq.s32.totalorder %s36, 1
      %p264 = scmp.ne.s32.totalorder %s259, %s261
      %p265 = scmp.eq.s32.totalorder %s36, 0
      %p266 = por %p264, %p265
      %p267 = scmp.ne.s32.totalorder %s259, %s261
      %p268 = scmp.eq.s32.totalorder %s41, 1
      %p269 = por %p267, %p268
      %p270 = scmp.ne.s32.totalorder %s261, %s262
      %p271 = scmp.eq.s32.totalorder %s41, 0
      %p272 = por %p270, %p271
      %p273 = scmp.ne.s32.totalorder %s261, %s262
      %p274 = scmp.eq.s32.totalorder %s42, 1
      %p275 = por %p273, %p274
      %p277 = scmp.ne.s32.totalorder %s262, %s276
      %p278 = scmp.eq.s32.totalorder %s42, 0
      %p279 = por %p277, %p278
      %s281 = sadd.s32 %s280, 1
      %p284 = scmp.eq.s32.totalorder %s36, 1
      %p285 = scmp.ne.s32.totalorder %s280, %s282
      %p286 = scmp.eq.s32.totalorder %s36, 0
      %p287 = por %p285, %p286
      %p288 = scmp.ne.s32.totalorder %s280, %s282
      %p289 = scmp.eq.s32.totalorder %s41, 1
      %p290 = por %p288, %p289
      %p291 = scmp.ne.s32.totalorder %s282, %s283
      %p292 = scmp.eq.s32.totalorder %s41, 0
      %p293 = por %p291, %p292
      %p294 = scmp.ne.s32.totalorder %s282, %s283
      %p295 = scmp.eq.s32.totalorder %s42, 1
      %p296 = por %p294, %p295
      %p298 = scmp.ne.s32.totalorder %s283, %s297
      %p299 = scmp.eq.s32.totalorder %s42, 0
      %p300 = por %p298, %p299
      %s302 = sadd.s32 %s301, 1
      %p305 = scmp.eq.s32.totalorder %s36, 1
      %p306 = scmp.ne.s32.totalorder %s301, %s303
      %p307 = scmp.eq.s32.totalorder %s36, 0
      %p308 = por %p306, %p307
      %p309 = scmp.ne.s32.totalorder %s301, %s303
      %p310 = scmp.eq.s32.totalorder %s41, 1
      %p311 = por %p309, %p310
      %p312 = scmp.ne.s32.totalorder %s303, %s304
      %p313 = scmp.eq.s32.totalorder %s41, 0
      %p314 = por %p312, %p313
      %p315 = scmp.ne.s32.totalorder %s303, %s304
      %p316 = scmp.eq.s32.totalorder %s42, 1
      %p317 = por %p315, %p316
      %p319 = scmp.ne.s32.totalorder %s304, %s318
      %p320 = scmp.eq.s32.totalorder %s42, 0
      %p321 = por %p319, %p320
      %s323 = sadd.s32 %s322, 1
      %p326 = scmp.eq.s32.totalorder %s36, 1
      %p327 = scmp.ne.s32.totalorder %s322, %s324
      %p328 = scmp.eq.s32.totalorder %s36, 0
      %p329 = por %p327, %p328
      %p330 = scmp.ne.s32.totalorder %s322, %s324
      %p331 = scmp.eq.s32.totalorder %s41, 1
      %p332 = por %p330, %p331
      %p333 = scmp.ne.s32.totalorder %s324, %s325
      %p334 = scmp.eq.s32.totalorder %s41, 0
      %p335 = por %p333, %p334
      %p336 = scmp.ne.s32.totalorder %s324, %s325
      %p337 = scmp.eq.s32.totalorder %s42, 1
      %p338 = por %p336, %p337
      %p340 = scmp.ne.s32.totalorder %s325, %s339
      %p341 = scmp.eq.s32.totalorder %s42, 0
      %p342 = por %p340, %p341
      %s344 = sadd.s32 %s343, 1
      %p347 = scmp.eq.s32.totalorder %s36, 1
      %p348 = scmp.ne.s32.totalorder %s343, %s345
      %p349 = scmp.eq.s32.totalorder %s36, 0
      %p350 = por %p348, %p349
      %p351 = scmp.ne.s32.totalorder %s343, %s345
      %p352 = scmp.eq.s32.totalorder %s41, 1
      %p353 = por %p351, %p352
      %p354 = scmp.ne.s32.totalorder %s345, %s346
      %p355 = scmp.eq.s32.totalorder %s41, 0
      %p356 = por %p354, %p355
      %p357 = scmp.ne.s32.totalorder %s345, %s346
      %p358 = scmp.eq.s32.totalorder %s42, 1
      %p359 = por %p357, %p358
      %p361 = scmp.ne.s32.totalorder %s346, %s360
      %p362 = scmp.eq.s32.totalorder %s42, 0
      %p363 = por %p361, %p362
      %s365 = sadd.s32 %s364, 1
      %p368 = scmp.eq.s32.totalorder %s36, 1
      %p369 = scmp.ne.s32.totalorder %s364, %s366
      %p370 = scmp.eq.s32.totalorder %s36, 0
      %p371 = por %p369, %p370
      %p372 = scmp.ne.s32.totalorder %s364, %s366
      %p373 = scmp.eq.s32.totalorder %s41, 1
      %p374 = por %p372, %p373
      %p375 = scmp.ne.s32.totalorder %s366, %s367
      %p376 = scmp.eq.s32.totalorder %s41, 0
      %p377 = por %p375, %p376
      %p378 = scmp.ne.s32.totalorder %s366, %s367
      %p379 = scmp.eq.s32.totalorder %s42, 1
      %p380 = por %p378, %p379
      %p382 = scmp.ne.s32.totalorder %s367, %s381
      %p383 = scmp.eq.s32.totalorder %s42, 0
      %p384 = por %p382, %p383
      %s386 = sadd.s32 %s385, 1
      %p389 = scmp.eq.s32.totalorder %s36, 1
      %p390 = scmp.ne.s32.totalorder %s385, %s387
      %p391 = scmp.eq.s32.totalorder %s36, 0
      %p392 = por %p390, %p391
      %p393 = scmp.ne.s32.totalorder %s385, %s387
      %p394 = scmp.eq.s32.totalorder %s41, 1
      %p395 = por %p393, %p394
      %p396 = scmp.ne.s32.totalorder %s387, %s388
      %p397 = scmp.eq.s32.totalorder %s41, 0
      %p398 = por %p396, %p397
      %p399 = scmp.ne.s32.totalorder %s387, %s388
      %p400 = scmp.eq.s32.totalorder %s42, 1
      %p401 = por %p399, %p400
      %p403 = scmp.ne.s32.totalorder %s388, %s402
      %p404 = scmp.eq.s32.totalorder %s42, 0
      %p405 = por %p403, %p404
      %s407 = sadd.s32 %s406, 1
      %p410 = scmp.eq.s32.totalorder %s36, 1
      %p411 = scmp.ne.s32.totalorder %s406, %s408
      %p412 = scmp.eq.s32.totalorder %s36, 0
      %p413 = por %p411, %p412
      %p414 = scmp.ne.s32.totalorder %s406, %s408
      %p415 = scmp.eq.s32.totalorder %s41, 1
      %p416 = por %p414, %p415
      %p417 = scmp.ne.s32.totalorder %s408, %s409
      %p418 = scmp.eq.s32.totalorder %s41, 0
      %p419 = por %p417, %p418
      %p420 = scmp.ne.s32.totalorder %s408, %s409
      %p421 = scmp.eq.s32.totalorder %s42, 1
      %p422 = por %p420, %p421
      %p424 = scmp.ne.s32.totalorder %s409, %s423
      %p425 = scmp.eq.s32.totalorder %s42, 0
      %p426 = por %p424, %p425
      %s428 = sadd.s32 %s427, 1
      %p431 = scmp.eq.s32.totalorder %s36, 1
      %p432 = scmp.ne.s32.totalorder %s427, %s429
      %p433 = scmp.eq.s32.totalorder %s36, 0
      %p434 = por %p432, %p433
      %p435 = scmp.ne.s32.totalorder %s427, %s429
      %p436 = scmp.eq.s32.totalorder %s41, 1
      %p437 = por %p435, %p436
      %p438 = scmp.ne.s32.totalorder %s429, %s430
      %p439 = scmp.eq.s32.totalorder %s41, 0
      %p440 = por %p438, %p439
      %p441 = scmp.ne.s32.totalorder %s429, %s430
      %p442 = scmp.eq.s32.totalorder %s42, 1
      %p443 = por %p441, %p442
      %p445 = scmp.ne.s32.totalorder %s430, %s444
      %p446 = scmp.eq.s32.totalorder %s42, 0
      %p447 = por %p445, %p446
      %s449 = sadd.s32 %s448, 1
      %p452 = scmp.eq.s32.totalorder %s36, 1
      %p453 = scmp.ne.s32.totalorder %s448, %s450
      %p454 = scmp.eq.s32.totalorder %s36, 0
      %p455 = por %p453, %p454
      %p456 = scmp.ne.s32.totalorder %s448, %s450
      %p457 = scmp.eq.s32.totalorder %s41, 1
      %p458 = por %p456, %p457
      %p459 = scmp.ne.s32.totalorder %s450, %s451
      %p460 = scmp.eq.s32.totalorder %s41, 0
      %p461 = por %p459, %p460
      %p462 = scmp.ne.s32.totalorder %s450, %s451
      %p463 = scmp.eq.s32.totalorder %s42, 1
      %p464 = por %p462, %p463
      %p466 = scmp.ne.s32.totalorder %s451, %s465
      %p467 = scmp.eq.s32.totalorder %s42, 0
      %p468 = por %p466, %p467
      %s470 = sadd.s32 %s469, 1
      %p473 = scmp.eq.s32.totalorder %s36, 1
      %p474 = scmp.ne.s32.totalorder %s469, %s471
      %p475 = scmp.eq.s32.totalorder %s36, 0
      %p476 = por %p474, %p475
      %p477 = scmp.ne.s32.totalorder %s469, %s471
      %p478 = scmp.eq.s32.totalorder %s41, 1
      %p479 = por %p477, %p478
      %p480 = scmp.ne.s32.totalorder %s471, %s472
      %p481 = scmp.eq.s32.totalorder %s41, 0
      %p482 = por %p480, %p481
      %p483 = scmp.ne.s32.totalorder %s471, %s472
      %p484 = scmp.eq.s32.totalorder %s42, 1
      %p485 = por %p483, %p484
      %p487 = scmp.ne.s32.totalorder %s472, %s486
      %p488 = scmp.eq.s32.totalorder %s42, 0
      %p489 = por %p487, %p488
      %s491 = sadd.s32 %s490, 1
      %p494 = scmp.eq.s32.totalorder %s36, 1
      %p495 = scmp.ne.s32.totalorder %s490, %s492
      %p496 = scmp.eq.s32.totalorder %s36, 0
      %p497 = por %p495, %p496
      %p498 = scmp.ne.s32.totalorder %s490, %s492
      %p499 = scmp.eq.s32.totalorder %s41, 1
      %p500 = por %p498, %p499
      %p501 = scmp.ne.s32.totalorder %s492, %s493
      %p502 = scmp.eq.s32.totalorder %s41, 0
      %p503 = por %p501, %p502
      %p504 = scmp.ne.s32.totalorder %s492, %s493
      %p505 = scmp.eq.s32.totalorder %s42, 1
      %p506 = por %p504, %p505
      %p508 = scmp.ne.s32.totalorder %s493, %s507
      %p509 = scmp.eq.s32.totalorder %s42, 0
      %p510 = por %p508, %p509
      %s512 = sadd.s32 %s511, 1
      %p515 = scmp.eq.s32.totalorder %s36, 1
      %p516 = scmp.ne.s32.totalorder %s511, %s513
      %p517 = scmp.eq.s32.totalorder %s36, 0
      %p518 = por %p516, %p517
      %p519 = scmp.ne.s32.totalorder %s511, %s513
      %p520 = scmp.eq.s32.totalorder %s41, 1
      %p521 = por %p519, %p520
      %p522 = scmp.ne.s32.totalorder %s513, %s514
      %p523 = scmp.eq.s32.totalorder %s41, 0
      %p524 = por %p522, %p523
      %p525 = scmp.ne.s32.totalorder %s513, %s514
      %p526 = scmp.eq.s32.totalorder %s42, 1
      %p527 = por %p525, %p526
      %p529 = scmp.ne.s32.totalorder %s514, %s528
      %p530 = scmp.eq.s32.totalorder %s42, 0
      %p531 = por %p529, %p530
      %s533 = sadd.s32 %s532, 1
      %p536 = scmp.eq.s32.totalorder %s36, 1
      %p537 = scmp.ne.s32.totalorder %s532, %s534
      %p538 = scmp.eq.s32.totalorder %s36, 0
      %p539 = por %p537, %p538
      %p540 = scmp.ne.s32.totalorder %s532, %s534
      %p541 = scmp.eq.s32.totalorder %s41, 1
      %p542 = por %p540, %p541
      %p543 = scmp.ne.s32.totalorder %s534, %s535
      %p544 = scmp.eq.s32.totalorder %s41, 0
      %p545 = por %p543, %p544
      %p546 = scmp.ne.s32.totalorder %s534, %s535
      %p547 = scmp.eq.s32.totalorder %s42, 1
      %p548 = por %p546, %p547
      %p550 = scmp.ne.s32.totalorder %s535, %s549
      %p551 = scmp.eq.s32.totalorder %s42, 0
      %p552 = por %p550, %p551
      %s554 = sadd.s32 %s553, 1
      %p557 = scmp.eq.s32.totalorder %s36, 1
      %p558 = scmp.ne.s32.totalorder %s553, %s555
      %p559 = scmp.eq.s32.totalorder %s36, 0
      %p560 = por %p558, %p559
      %p561 = scmp.ne.s32.totalorder %s553, %s555
      %p562 = scmp.eq.s32.totalorder %s41, 1
      %p563 = por %p561, %p562
      %p564 = scmp.ne.s32.totalorder %s555, %s556
      %p565 = scmp.eq.s32.totalorder %s41, 0
      %p566 = por %p564, %p565
      %p567 = scmp.ne.s32.totalorder %s555, %s556
      %p568 = scmp.eq.s32.totalorder %s42, 1
      %p569 = por %p567, %p568
      %p571 = scmp.ne.s32.totalorder %s556, %s570
      %p572 = scmp.eq.s32.totalorder %s42, 0
      %p573 = por %p571, %p572
      %s574 = ssub.s32 %s36, %s43
      %p575 = scmp.eq.s32.totalorder %s574, 0
      %s577 = sadd.s32 %s576, 1
      %s578 = scalar_select %p575, %s576, %s577
      %p581 = pneg %p575
      %p582 = scmp.eq.s32.totalorder %s36, 1
      %p583 = por %p581, %p582
      %p584 = scmp.ne.s32.totalorder %s576, %s579
      %p585 = scmp.eq.s32.totalorder %s36, 0
      %p586 = por %p584, %p585
      %p587 = scmp.ne.s32.totalorder %s576, %s579
      %p588 = scmp.eq.s32.totalorder %s41, 1
      %p589 = por %p587, %p588
      %p590 = scmp.ne.s32.totalorder %s579, %s580
      %p591 = scmp.eq.s32.totalorder %s41, 0
      %p592 = por %p590, %p591
      %p593 = scmp.ne.s32.totalorder %s579, %s580
      %p594 = scmp.eq.s32.totalorder %s42, 1
      %p595 = por %p593, %p594
      %p597 = scmp.ne.s32.totalorder %s580, %s596
      %p598 = scmp.eq.s32.totalorder %s42, 0
      %p599 = por %p597, %p598
      %s600 = ssub.s32 %s36, %s43
      %p601 = scmp.eq.s32.totalorder %s600, 0
      %s603 = sadd.s32 %s602, 1
      %s604 = scalar_select %p601, %s602, %s603
      %p607 = pneg %p601
      %p608 = scmp.eq.s32.totalorder %s36, 1
      %p609 = por %p607, %p608
      %p610 = scmp.ne.s32.totalorder %s602, %s605
      %p611 = scmp.eq.s32.totalorder %s36, 0
      %p612 = por %p610, %p611
      %p613 = scmp.ne.s32.totalorder %s602, %s605
      %p614 = scmp.eq.s32.totalorder %s41, 1
      %p615 = por %p613, %p614
      %p616 = scmp.ne.s32.totalorder %s605, %s606
      %p617 = scmp.eq.s32.totalorder %s41, 0
      %p618 = por %p616, %p617
      %p619 = scmp.ne.s32.totalorder %s605, %s606
      %p620 = scmp.eq.s32.totalorder %s42, 1
      %p621 = por %p619, %p620
      %p623 = scmp.ne.s32.totalorder %s606, %s622
      %p624 = scmp.eq.s32.totalorder %s42, 0
      %p625 = por %p623, %p624
      %p626 = scmp.le.s32.totalorder 1, %s36
      %p627 = scmp.lt.s32.totalorder %s36, 3
      %p628 = pnand %p626, %p627
      %p629 = pneg %p628
      // Predicated region
      $region9: #{autoencoder_forward.1} parent=5 // pred_check
        _
      $region10: #{autoencoder_forward.1} parent=5 // pred_check_branch
        %631 = sbr.rel (%p628) target = $region12
      $region11: #{autoencoder_forward.1} parent=5 // pred_region
        %s632 = ssub.s32 %s36, 1
        // Predicated region
        $region13: #{autoencoder_forward.1} parent=11 // pred_check
          %p633 = pneg %p83
        $region14: #{autoencoder_forward.1} parent=11 // pred_check_branch
          %635 = sbr.rel (%p633) target = $region16
        $region15: #{autoencoder_forward.1} parent=11 // pred_region
          _
        $region16: #{autoencoder_forward.1} parent=11 // pred_fallthru
          _
        // Predicated region
        $region17: #{autoencoder_forward.1} parent=11 // pred_check
          %p636 = pneg %p104
        $region18: #{autoencoder_forward.1} parent=11 // pred_check_branch
          %638 = sbr.rel (%p636) target = $region20
        $region19: #{autoencoder_forward.1} parent=11 // pred_region
          _
        $region20: #{autoencoder_forward.1} parent=11 // pred_fallthru
          _
        // Predicated region
        $region21: #{autoencoder_forward.1} parent=11 // pred_check
          %p639 = pneg %p125
        $region22: #{autoencoder_forward.1} parent=11 // pred_check_branch
          %641 = sbr.rel (%p639) target = $region24
        $region23: #{autoencoder_forward.1} parent=11 // pred_region
          _
        $region24: #{autoencoder_forward.1} parent=11 // pred_fallthru
          _
        // Predicated region
        $region25: #{autoencoder_forward.1} parent=11 // pred_check
          %p642 = pneg %p146
        $region26: #{autoencoder_forward.1} parent=11 // pred_check_branch
          %644 = sbr.rel (%p642) target = $region28
        $region27: #{autoencoder_forward.1} parent=11 // pred_region
          _
        $region28: #{autoencoder_forward.1} parent=11 // pred_fallthru
          _
        // Predicated region
        $region29: #{autoencoder_forward.1} parent=11 // pred_check
          %p645 = pneg %p167
        $region30: #{autoencoder_forward.1} parent=11 // pred_check_branch
          %647 = sbr.rel (%p645) target = $region32
        $region31: #{autoencoder_forward.1} parent=11 // pred_region
          _
        $region32: #{autoencoder_forward.1} parent=11 // pred_fallthru
          _
        // Predicated region
        $region33: #{autoencoder_forward.1} parent=11 // pred_check
          %p648 = pneg %p188
        $region34: #{autoencoder_forward.1} parent=11 // pred_check_branch
          %650 = sbr.rel (%p648) target = $region36
        $region35: #{autoencoder_forward.1} parent=11 // pred_region
          _
        $region36: #{autoencoder_forward.1} parent=11 // pred_fallthru
          _
        // Predicated region
        $region37: #{autoencoder_forward.1} parent=11 // pred_check
          %p651 = pneg %p209
        $region38: #{autoencoder_forward.1} parent=11 // pred_check_branch
          %653 = sbr.rel (%p651) target = $region40
        $region39: #{autoencoder_forward.1} parent=11 // pred_region
          _
        $region40: #{autoencoder_forward.1} parent=11 // pred_fallthru
          _
        // Predicated region
        $region41: #{autoencoder_forward.1} parent=11 // pred_check
          %p654 = pneg %p230
        $region42: #{autoencoder_forward.1} parent=11 // pred_check_branch
          %656 = sbr.rel (%p654) target = $region44
        $region43: #{autoencoder_forward.1} parent=11 // pred_region
          _
        $region44: #{autoencoder_forward.1} parent=11 // pred_fallthru
          _
        // Predicated region
        $region45: #{autoencoder_forward.1} parent=11 // pred_check
          %p657 = pneg %p251
        $region46: #{autoencoder_forward.1} parent=11 // pred_check_branch
          %659 = sbr.rel (%p657) target = $region48
        $region47: #{autoencoder_forward.1} parent=11 // pred_region
          _
        $region48: #{autoencoder_forward.1} parent=11 // pred_fallthru
          _
        // Predicated region
        $region49: #{autoencoder_forward.1} parent=11 // pred_check
          %p660 = pneg %p272
        $region50: #{autoencoder_forward.1} parent=11 // pred_check_branch
          %662 = sbr.rel (%p660) target = $region52
        $region51: #{autoencoder_forward.1} parent=11 // pred_region
          _
        $region52: #{autoencoder_forward.1} parent=11 // pred_fallthru
          _
        // Predicated region
        $region53: #{autoencoder_forward.1} parent=11 // pred_check
          %p663 = pneg %p293
        $region54: #{autoencoder_forward.1} parent=11 // pred_check_branch
          %665 = sbr.rel (%p663) target = $region56
        $region55: #{autoencoder_forward.1} parent=11 // pred_region
          _
        $region56: #{autoencoder_forward.1} parent=11 // pred_fallthru
          _
        // Predicated region
        $region57: #{autoencoder_forward.1} parent=11 // pred_check
          %p666 = pneg %p314
        $region58: #{autoencoder_forward.1} parent=11 // pred_check_branch
          %668 = sbr.rel (%p666) target = $region60
        $region59: #{autoencoder_forward.1} parent=11 // pred_region
          _
        $region60: #{autoencoder_forward.1} parent=11 // pred_fallthru
          _
        // Predicated region
        $region61: #{autoencoder_forward.1} parent=11 // pred_check
          %p669 = pneg %p335
        $region62: #{autoencoder_forward.1} parent=11 // pred_check_branch
          %671 = sbr.rel (%p669) target = $region64
        $region63: #{autoencoder_forward.1} parent=11 // pred_region
          _
        $region64: #{autoencoder_forward.1} parent=11 // pred_fallthru
          _
        // Predicated region
        $region65: #{autoencoder_forward.1} parent=11 // pred_check
          %p672 = pneg %p356
        $region66: #{autoencoder_forward.1} parent=11 // pred_check_branch
          %674 = sbr.rel (%p672) target = $region68
        $region67: #{autoencoder_forward.1} parent=11 // pred_region
          _
        $region68: #{autoencoder_forward.1} parent=11 // pred_fallthru
          _
        // Predicated region
        $region69: #{autoencoder_forward.1} parent=11 // pred_check
          %p675 = pneg %p377
        $region70: #{autoencoder_forward.1} parent=11 // pred_check_branch
          %677 = sbr.rel (%p675) target = $region72
        $region71: #{autoencoder_forward.1} parent=11 // pred_region
          _
        $region72: #{autoencoder_forward.1} parent=11 // pred_fallthru
          _
        // Predicated region
        $region73: #{autoencoder_forward.1} parent=11 // pred_check
          %p678 = pneg %p398
        $region74: #{autoencoder_forward.1} parent=11 // pred_check_branch
          %680 = sbr.rel (%p678) target = $region76
        $region75: #{autoencoder_forward.1} parent=11 // pred_region
          _
        $region76: #{autoencoder_forward.1} parent=11 // pred_fallthru
          _
        // Predicated region
        $region77: #{autoencoder_forward.1} parent=11 // pred_check
          %p681 = pneg %p419
        $region78: #{autoencoder_forward.1} parent=11 // pred_check_branch
          %683 = sbr.rel (%p681) target = $region80
        $region79: #{autoencoder_forward.1} parent=11 // pred_region
          _
        $region80: #{autoencoder_forward.1} parent=11 // pred_fallthru
          _
        // Predicated region
        $region81: #{autoencoder_forward.1} parent=11 // pred_check
          %p684 = pneg %p440
        $region82: #{autoencoder_forward.1} parent=11 // pred_check_branch
          %686 = sbr.rel (%p684) target = $region84
        $region83: #{autoencoder_forward.1} parent=11 // pred_region
          _
        $region84: #{autoencoder_forward.1} parent=11 // pred_fallthru
          _
        // Predicated region
        $region85: #{autoencoder_forward.1} parent=11 // pred_check
          %p687 = pneg %p461
        $region86: #{autoencoder_forward.1} parent=11 // pred_check_branch
          %689 = sbr.rel (%p687) target = $region88
        $region87: #{autoencoder_forward.1} parent=11 // pred_region
          _
        $region88: #{autoencoder_forward.1} parent=11 // pred_fallthru
          _
        // Predicated region
        $region89: #{autoencoder_forward.1} parent=11 // pred_check
          %p690 = pneg %p482
        $region90: #{autoencoder_forward.1} parent=11 // pred_check_branch
          %692 = sbr.rel (%p690) target = $region92
        $region91: #{autoencoder_forward.1} parent=11 // pred_region
          _
        $region92: #{autoencoder_forward.1} parent=11 // pred_fallthru
          _
        // Predicated region
        $region93: #{autoencoder_forward.1} parent=11 // pred_check
          %p693 = pneg %p503
        $region94: #{autoencoder_forward.1} parent=11 // pred_check_branch
          %695 = sbr.rel (%p693) target = $region96
        $region95: #{autoencoder_forward.1} parent=11 // pred_region
          _
        $region96: #{autoencoder_forward.1} parent=11 // pred_fallthru
          _
        // Predicated region
        $region97: #{autoencoder_forward.1} parent=11 // pred_check
          %p696 = pneg %p524
        $region98: #{autoencoder_forward.1} parent=11 // pred_check_branch
          %698 = sbr.rel (%p696) target = $region100
        $region99: #{autoencoder_forward.1} parent=11 // pred_region
          _
        $region100: #{autoencoder_forward.1} parent=11 // pred_fallthru
          _
        // Predicated region
        $region101: #{autoencoder_forward.1} parent=11 // pred_check
          %p699 = pneg %p545
        $region102: #{autoencoder_forward.1} parent=11 // pred_check_branch
          %701 = sbr.rel (%p699) target = $region104
        $region103: #{autoencoder_forward.1} parent=11 // pred_region
          _
        $region104: #{autoencoder_forward.1} parent=11 // pred_fallthru
          _
        // Predicated region
        $region105: #{autoencoder_forward.1} parent=11 // pred_check
          %p702 = pneg %p566
        $region106: #{autoencoder_forward.1} parent=11 // pred_check_branch
          %704 = sbr.rel (%p702) target = $region108
        $region107: #{autoencoder_forward.1} parent=11 // pred_region
          _
        $region108: #{autoencoder_forward.1} parent=11 // pred_fallthru
          _
      $region12: #{autoencoder_forward.1} parent=5 // pred_fallthru
        _
      %p705 = scmp.lt.s32.totalorder %s36, 2
      // Predicated region
      $region109: #{autoencoder_forward.1} parent=5 // pred_check
        %p706 = pneg %p705
      $region110: #{autoencoder_forward.1} parent=5 // pred_check_branch
        %708 = sbr.rel (%p706) target = $region112
      $region111: #{autoencoder_forward.1} parent=5 // pred_region
        // Predicated region
        $region113: #{autoencoder_forward.1} parent=111 // pred_check
          %p709 = pneg %p56
        $region114: #{autoencoder_forward.1} parent=111 // pred_check_branch
          %711 = sbr.rel (%p709) target = $region116
        $region115: #{autoencoder_forward.1} parent=111 // pred_region
          %p712 = scmp.lt.s32.totalorder %s36, 1
          %s713 = scalar_select %p712, %s36, 1
          %s714 = smul.addr %s713, 4
          %s715 = smul.addr %s714, 4
          %s716 = scalar_lea.vmem %s0, %s715
        $region116: #{autoencoder_forward.1} parent=111 // pred_fallthru
          _
      $region112: #{autoencoder_forward.1} parent=5 // pred_fallthru
        _
      %p717 = scmp.le.s32.totalorder 1, %s36
      %p718 = scmp.lt.s32.totalorder %s36, 3
      %p719 = pnand %p717, %p718
      %p720 = pneg %p719
      // Predicated region
      $region117: #{autoencoder_forward.1} parent=5 // pred_check
        _
      $region118: #{autoencoder_forward.1} parent=5 // pred_check_branch
        %722 = sbr.rel (%p719) target = $region120
      $region119: #{autoencoder_forward.1} parent=5 // pred_region
        %s723 = ssub.s32 %s36, 1
        %p724 = scmp.lt.s32.totalorder %s41, 1
        %s725 = scalar_select %p724, %s41, 1
        %s726 = smul.addr %s725, 4
        %s727 = smul.addr %s726, 4
        %s728 = scalar_lea.vmem %s0, %s727
        %p729 = pneg %p62
        %p730 = pneg %p59
        %p731 = pneg %p83
        %p732 = pneg %p80
        %p733 = pneg %p104
        %p734 = pneg %p101
        %p735 = pneg %p125
        %p736 = pneg %p122
        %p737 = pneg %p146
        %p738 = pneg %p143
        %p739 = pneg %p167
        %p740 = pneg %p164
        %p741 = pneg %p188
        %p742 = pneg %p185
        %p743 = pneg %p209
        %p744 = pneg %p206
        %p745 = pneg %p230
        %p746 = pneg %p227
        %p747 = pneg %p251
        %p748 = pneg %p248
        %p749 = pneg %p272
        %p750 = pneg %p269
        %p751 = pneg %p293
        %p752 = pneg %p290
        %p753 = pneg %p314
        %p754 = pneg %p311
        %p755 = pneg %p335
        %p756 = pneg %p332
        %p757 = pneg %p356
        %p758 = pneg %p353
        %p759 = pneg %p377
        %p760 = pneg %p374
        %p761 = pneg %p398
        %p762 = pneg %p395
        %p763 = pneg %p419
        %p764 = pneg %p416
        %p765 = pneg %p440
        %p766 = pneg %p437
        %p767 = pneg %p461
        %p768 = pneg %p458
        %p769 = pneg %p482
        %p770 = pneg %p479
        %p771 = pneg %p503
        %p772 = pneg %p500
        %p773 = pneg %p524
        %p774 = pneg %p521
        %p775 = pneg %p545
        %p776 = pneg %p542
        %p777 = pneg %p566
        %p778 = pneg %p563
        %p779 = pneg %p592
        %p780 = pneg %p589
        %p781 = scmp.lt.s32.totalorder %s41, 1
        %s782 = scalar_select %p781, %s41, 1
        %s783 = smul.addr %s782, 4
        %s784 = smul.addr %s783, 8
        %s785 = scalar_lea.vmem %s25, %s784
        %p786 = pneg %p618
        %p787 = pneg %p615
        %s788 = sand.u32 %s605, 1
        %s789 = scalar_lea.sflag [#allocation5], %s788
        %s790 = sand.u32 %s605, 1
        %s791 = scalar_lea.vmem [#allocation4], %s790
        %p792 = scmp.lt.s32.totalorder %s41, 1
        %s793 = scalar_select %p792, %s41, 1
        %s794 = smul.addr %s793, 4
        %s795 = smul.addr %s794, 4
        %s796 = scalar_lea.vmem %s0, %s795
        %p797 = scmp.lt.s32.totalorder %s41, 1
        %s798 = scalar_select %p797, %s41, 1
        %s799 = smul.addr %s798, 4
        %s800 = smul.addr %s799, 8
        %s801 = scalar_lea.vmem %s25, %s800
        %vm803 = vcmask 1043456
        %vm804 = vcmask 523268
        %vm805 = vmor %vm804, %vm803
        %806 = vst.msk [vmem:[#allocation2] sm:$0xff] %vm805, 0
        %807 = vst.msk [vmem:[#allocation2 + $0x8] sm:$0xff] %vm805, 0
        %808 = vst.msk [vmem:[#allocation2 + $0x10] sm:$0xff] %vm805, 0
        %vm809 = vcmask 1040384
        %vm810 = vcmask 520196
        %vm811 = vmor %vm810, %vm809
        %812 = vst.msk [vmem:[#allocation2 + $0x18] sm:$0x11] %vm811, 0
        %v813 = vlaneseq
        %v814 = vshrl.u32 %v813, 7
        %v815 = vadd.s32 %v814, 8
        %vm816 = vcmp.lt.s32.totalorder %v814, 0
        %v817 = vsub.s32 0, %v814
        %v818 = vsel %vm816, %v817, %v814
        %v819 = vshrl.u32 %v818, 2
        %v820 = vand.u32 %v818, 3
        %v821 = vsub.s32 0, %v820
        %v822 = vsel %vm816, %v821, %v820
        %vm823 = vcmp.lt.s32.totalorder %v815, 0
        %v824 = vsub.s32 0, %v815
        %v825 = vsel %vm823, %v824, %v815
        %v826 = vshrl.u32 %v825, 2
        %v827 = vand.u32 %v825, 3
        %v828 = vsub.s32 0, %v827
        %v829 = vsel %vm823, %v828, %v827
        %vm830 = vcmp.ne.s32.totalorder %v822, 0
        %vm831 = vcmp.ne.s32.totalorder %v829, 0
        %vm832 = vcmp.lt.s32.totalorder %v822, 0
        %vm833 = vcmp.lt.s32.totalorder %v829, 0
        %vm834 = vmand %vm832, %vm830
        %vm835 = vmand %vm833, %vm831
        %v836 = vadd.s32 %v822, 4
        %v837 = vadd.s32 %v829, 4
        %v838 = vsel %vm834, %v836, %v822
        %v839 = vsel %vm835, %v837, %v829
        %vm840 = vcmp.ne.s32.totalorder %v838, 0
        %vm841 = vcmp.ne.s32.totalorder %v839, 0
        %v842 = vsel %vm840, 1, 0
        %v843 = vsel %vm841, 1, 0
        %v844 = vcvt.s32.f32 %v842
        %v845 = vcvt.s32.f32 %v843
        %v846 = vpack.c.bf16 %v844, %v844
        %v847 = vpack.c.bf16 %v845, %v845
        %vm848 = vcmp.ne.s32.totalorder %v838, 3
        %vm849 = vcmp.ne.s32.totalorder %v839, 3
        %v850 = vsel %vm848, 1, 0
        %v851 = vsel %vm849, 1, 0
        %v852 = vcvt.s32.f32 %v850
        %v853 = vcvt.s32.f32 %v851
        %v854 = vpack.c.bf16 %v852, %v852
        %v855 = vpack.c.bf16 %v853, %v853
        %v856 = vld [vmem:[%s796] sm:$0xff]
        %v857 = vld [vmem:[%s796 + $0x8] sm:$0xff]
        %vm858 = vsmask.f32 2304
        %vm859 = vsmask.f32 6416
        %vm860 = vmor %vm858, %vm859
        %v862 = vshrl.u32 %v856, 16
        %v864 = vrot.slane %v862, 5
        %v865 = vshll.u32 %v856, 16
        %v867 = vrot.slane %v865, 6
        %v868 = vor.u32 %v864, %v867
        %v869 = vrot.slane %v868, 4
        %v871 = vshrl.u32 %v857, 16
        %v873 = vrot.slane %v871, 5
        %v874 = vshll.u32 %v857, 16
        %v876 = vrot.slane %v874, 6
        %v877 = vor.u32 %v873, %v876
        %v878 = vsel %vm860, %v869, %v877
        %v879 = vrot.slane %v877, 4
        %vm883 = vcmask 1043458
        %vm884 = vsmask.f32 7946
        %vm885 = vmand %vm883, %vm884
        %vm886 = vcmask 523270
        %vm887 = vsmask.f32 7962
        %vm888 = vmand %vm886, %vm887
        %vm889 = vmor %vm888, %vm885
        %v890 = vld [vmem:[#allocation2] sm:$0xcc]
        %v891 = vsel %vm889, %v868, %v890
        %892 = vst [vmem:[#allocation2] sm:$0xcc] %v891
        %893 = vst.msk [vmem:[#allocation2 + $0x8] sm:$0xff] %vm805, %v878
        %vm894 = vcmask 1042432
        %vm895 = vmand %vm894, %vm858
        %vm896 = vcmask 522244
        %vm897 = vsmask.f32 6400
        %vm898 = vmand %vm896, %vm897
        %vm899 = vmor %vm898, %vm895
        %v900 = vld [vmem:[#allocation2 + $0x10] sm:$0x77]
        %v901 = vsel %vm899, %v879, %v900
        %902 = vst [vmem:[#allocation2 + $0x10] sm:$0x77] %v901
        %v903 = vld [vmem:[#allocation2] sm:$0xff]
        %v904 = vld [vmem:[#allocation2 + $0x8] sm:$0xff]
        %v905 = vunpack.c.l.bf16 %v903
        %v906 = vunpack.c.h.bf16 %v903
        %v907 = vunpack.c.l.bf16 %v904
        %v908 = vunpack.c.h.bf16 %v904
        %v909 = vunpack.c.l.bf16 %v846
        %v910 = vunpack.c.l.bf16 %v847
        %v911 = vmul.f32 %v905, %v909
        %v912 = vmul.f32 %v906, %v909
        %v913 = vmul.f32 %v907, %v910
        %v914 = vmul.f32 %v908, %v910
        %v915 = vpack.c.bf16 %v913, %v911
        %v916 = vpack.c.bf16 %v914, %v912
        %v917 = vld [vmem:[%s1] sm:$0xf]
        %v918 = vld [vmem:[%s1 + $0x10] sm:$0xf]
        %v919 = vld [vmem:[%s1 + $0x20] sm:$0xf]
        %v920 = vld [vmem:[%s1 + $0x30] sm:$0xf]
        %v921 = vld [vmem:[%s1 + $0x40] sm:$0xf]
        %v922 = vld [vmem:[%s1 + $0x50] sm:$0xf]
        %v923 = vld [vmem:[%s1 + $0x60] sm:$0xf]
        %v924 = vld [vmem:[%s1 + $0x70] sm:$0xf]
        %v925 = vld [vmem:[%s1 + $0x80] sm:$0xf]
        %v926 = vld [vmem:[%s1 + $0x90] sm:$0xf]
        %v927 = vld [vmem:[%s1 + $0xa0] sm:$0xf]
        %v928 = vld [vmem:[%s1 + $0xb0] sm:$0xf]
        %v929 = vld [vmem:[%s1 + $0xc0] sm:$0xf]
        %v930 = vld [vmem:[%s1 + $0xd0] sm:$0xf]
        %v931 = vld [vmem:[%s1 + $0xe0] sm:$0xf]
        %v932 = vld [vmem:[%s1 + $0xf0] sm:$0xf]
        %v933 = vld [vmem:[%s1 + $0x100] sm:$0xf]
        %v934 = vld [vmem:[%s1 + $0x110] sm:$0xf]
        %v935 = vld [vmem:[%s1 + $0x120] sm:$0xf]
        %v936 = vld [vmem:[%s1 + $0x130] sm:$0xf]
        %v937 = vld [vmem:[%s1 + $0x140] sm:$0xf]
        %v938 = vld [vmem:[%s1 + $0x150] sm:$0xf]
        %v939 = vld [vmem:[%s1 + $0x160] sm:$0xf]
        %v940 = vld [vmem:[%s1 + $0x170] sm:$0xf]
        %v941 = vld [vmem:[#allocation2 + $0x10] sm:$0x11]
        %v942 = vld [vmem:[%s1 + $0x4] sm:$0xf]
        %v943 = vld [vmem:[%s1 + $0x14] sm:$0xf]
        %v944 = vld [vmem:[%s1 + $0x24] sm:$0xf]
        %v945 = vld [vmem:[%s1 + $0x34] sm:$0xf]
        %v946 = vld [vmem:[%s1 + $0x44] sm:$0xf]
        %v947 = vld [vmem:[%s1 + $0x54] sm:$0xf]
        %v948 = vld [vmem:[%s1 + $0x64] sm:$0xf]
        %v949 = vld [vmem:[%s1 + $0x74] sm:$0xf]
        %v950 = vld [vmem:[%s1 + $0x84] sm:$0xf]
        %v951 = vld [vmem:[%s1 + $0x94] sm:$0xf]
        %v952 = vld [vmem:[%s1 + $0xa4] sm:$0xf]
        %v953 = vld [vmem:[%s1 + $0xb4] sm:$0xf]
        %v954 = vld [vmem:[%s1 + $0xc4] sm:$0xf]
        %v955 = vld [vmem:[%s1 + $0xd4] sm:$0xf]
        %v956 = vld [vmem:[%s1 + $0xe4] sm:$0xf]
        %v957 = vld [vmem:[%s1 + $0xf4] sm:$0xf]
        %v958 = vld [vmem:[%s1 + $0x104] sm:$0xf]
        %v959 = vld [vmem:[%s1 + $0x114] sm:$0xf]
        %v960 = vld [vmem:[%s1 + $0x124] sm:$0xf]
        %v961 = vld [vmem:[%s1 + $0x134] sm:$0xf]
        %v962 = vld [vmem:[%s1 + $0x144] sm:$0xf]
        %v963 = vld [vmem:[%s1 + $0x154] sm:$0xf]
        %v964 = vld [vmem:[%s1 + $0x164] sm:$0xf]
        %v965 = vld [vmem:[%s1 + $0x174] sm:$0xf]
        %v969 = vunpack.c.l.b16 %v903
        %v970 = vunpack.c.h.b16 %v903
        %v971 = vunpack.c.l.b16 %v904
        %v972 = vunpack.c.h.b16 %v904
        %v973 = vunpack.c.l.b16 %v941
        %v974 = vunpack.c.h.b16 %v941
        %v975 = vpack.c.b16 %v971, %v969
        %v976 = vpack.c.b16 %v972, %v970
        %v977 = vpack.c.b16 %v973, %v973
        %v978 = vpack.c.b16 %v974, %v974
        %vm979 = vsmask.f32 7424
        %v981 = vshrl.u32 %v975, 16
        %v983 = vshll.u32 %v975, 16
        %v985 = vrot.slane %v983, 1
        %v986 = vor.u32 %v981, %v985
        %v988 = vshll.u32 %v977, 16
        %v990 = vrot.slane %v988, 1
        %v991 = vsel %vm979, %v986, %v990
        %v993 = vshrl.u32 %v976, 16
        %v995 = vshll.u32 %v976, 16
        %v997 = vrot.slane %v995, 1
        %v998 = vor.u32 %v993, %v997
        %v1000 = vshll.u32 %v978, 16
        %v1002 = vrot.slane %v1000, 1
        %v1003 = vsel %vm979, %v998, %v1002
        %v1029 = vunpack.c.l.b16 %v942
        %v1030 = vunpack.c.l.b16 %v943
        %v1031 = vunpack.c.l.b16 %v944
        %v1032 = vunpack.c.l.b16 %v945
        %v1033 = vunpack.c.l.b16 %v946
        %v1034 = vunpack.c.l.b16 %v947
        %v1035 = vunpack.c.l.b16 %v948
        %v1036 = vunpack.c.l.b16 %v949
        %v1037 = vunpack.c.l.b16 %v950
        %v1038 = vunpack.c.l.b16 %v951
        %v1039 = vunpack.c.l.b16 %v952
        %v1040 = vunpack.c.l.b16 %v953
        %v1041 = vunpack.c.l.b16 %v954
        %v1042 = vunpack.c.l.b16 %v955
        %v1043 = vunpack.c.l.b16 %v956
        %v1044 = vunpack.c.l.b16 %v957
        %v1045 = vunpack.c.l.b16 %v958
        %v1046 = vunpack.c.l.b16 %v959
        %v1047 = vunpack.c.l.b16 %v960
        %v1048 = vunpack.c.l.b16 %v961
        %v1049 = vunpack.c.l.b16 %v962
        %v1050 = vunpack.c.l.b16 %v963
        %v1051 = vunpack.c.l.b16 %v964
        %v1052 = vunpack.c.l.b16 %v965
        %v1053 = vpack.c.b16 %v1030, %v1029
        %v1054 = vpack.c.b16 %v1032, %v1031
        %v1055 = vpack.c.b16 %v1034, %v1033
        %v1056 = vpack.c.b16 %v1036, %v1035
        %v1057 = vpack.c.b16 %v1038, %v1037
        %v1058 = vpack.c.b16 %v1040, %v1039
        %v1059 = vpack.c.b16 %v1042, %v1041
        %v1060 = vpack.c.b16 %v1044, %v1043
        %v1061 = vpack.c.b16 %v1046, %v1045
        %v1062 = vpack.c.b16 %v1048, %v1047
        %v1063 = vpack.c.b16 %v1050, %v1049
        %v1064 = vpack.c.b16 %v1052, %v1051
        %vm1077 = vcmask 523264
        %v1079 = vsel %vm1077, %v1003, 0
        %1081 = vmatpush.bf16.msra.mxu0 %v1060
        %1082 = vmatpush.bf16.msra.mxu0 %v1059
        %1083 = vmatpush.bf16.msra.mxu0 %v1058
        %1084 = vmatpush.bf16.msra.mxu0 %v1057
        %1085 = vmatpush.bf16.msra.mxu0 %v1056
        %1086 = vmatpush.bf16.msra.mxu0 %v1055
        %1087 = vmatpush.bf16.msra.mxu0 %v1054
        %1088 = vmatpush.bf16.msra.mxu0 %v1053
        %1089 = vmatmul.bf16.gmra.mxu0 %v991
        %v1090 = vpop.f32.mrf.mxu0
        %v1091 = vadd.f32 0.0, %v1090
        %v1092 = vpop.f32.mrf.mxu0
        %v1093 = vadd.f32 0.0, %v1092
        %1094 = vdwg.mxu0
        %1095 = vmatpush.bf16.msra.mxu0 0
        %1096 = vmatpush.bf16.msra.mxu0 0
        %1097 = vmatpush.bf16.msra.mxu0 0
        %1098 = vmatpush.bf16.msra.mxu0 0
        %1099 = vmatpush.bf16.msra.mxu0 %v1064
        %1100 = vmatpush.bf16.msra.mxu0 %v1063
        %1101 = vmatpush.bf16.msra.mxu0 %v1062
        %1102 = vmatpush.bf16.msra.mxu0 %v1061
        %1103 = vmatmul.bf16.gmra.mxu0 %v1079
        %v1104 = vpop.f32.mrf.mxu0
        %v1105 = vadd.f32 %v1091, %v1104
        %v1106 = vpop.f32.mrf.mxu0
        %v1107 = vadd.f32 %v1093, %v1106
        %1108 = vdwg.mxu0
        %v1133 = vunpack.c.l.b16 %v917
        %v1134 = vunpack.c.l.b16 %v918
        %v1135 = vunpack.c.l.b16 %v919
        %v1136 = vunpack.c.l.b16 %v920
        %v1137 = vunpack.c.l.b16 %v921
        %v1138 = vunpack.c.l.b16 %v922
        %v1139 = vunpack.c.l.b16 %v923
        %v1140 = vunpack.c.l.b16 %v924
        %v1141 = vunpack.c.l.b16 %v925
        %v1142 = vunpack.c.l.b16 %v926
        %v1143 = vunpack.c.l.b16 %v927
        %v1144 = vunpack.c.l.b16 %v928
        %v1145 = vunpack.c.l.b16 %v929
        %v1146 = vunpack.c.l.b16 %v930
        %v1147 = vunpack.c.l.b16 %v931
        %v1148 = vunpack.c.l.b16 %v932
        %v1149 = vunpack.c.l.b16 %v933
        %v1150 = vunpack.c.l.b16 %v934
        %v1151 = vunpack.c.l.b16 %v935
        %v1152 = vunpack.c.l.b16 %v936
        %v1153 = vunpack.c.l.b16 %v937
        %v1154 = vunpack.c.l.b16 %v938
        %v1155 = vunpack.c.l.b16 %v939
        %v1156 = vunpack.c.l.b16 %v940
        %v1157 = vpack.c.b16 %v1134, %v1133
        %v1158 = vpack.c.b16 %v1136, %v1135
        %v1159 = vpack.c.b16 %v1138, %v1137
        %v1160 = vpack.c.b16 %v1140, %v1139
        %v1161 = vpack.c.b16 %v1142, %v1141
        %v1162 = vpack.c.b16 %v1144, %v1143
        %v1163 = vpack.c.b16 %v1146, %v1145
        %v1164 = vpack.c.b16 %v1148, %v1147
        %v1165 = vpack.c.b16 %v1150, %v1149
        %v1166 = vpack.c.b16 %v1152, %v1151
        %v1167 = vpack.c.b16 %v1154, %v1153
        %v1168 = vpack.c.b16 %v1156, %v1155
        %v1182 = vsel %vm1077, %v916, 0
        %1184 = vmatpush.bf16.msra.mxu0 %v1164
        %1185 = vmatpush.bf16.msra.mxu0 %v1163
        %1186 = vmatpush.bf16.msra.mxu0 %v1162
        %1187 = vmatpush.bf16.msra.mxu0 %v1161
        %1188 = vmatpush.bf16.msra.mxu0 %v1160
        %1189 = vmatpush.bf16.msra.mxu0 %v1159
        %1190 = vmatpush.bf16.msra.mxu0 %v1158
        %1191 = vmatpush.bf16.msra.mxu0 %v1157
        %1192 = vmatmul.bf16.gmra.mxu0 %v915
        %v1193 = vpop.f32.mrf.mxu0
        %v1194 = vadd.f32 %v1105, %v1193
        %v1195 = vpop.f32.mrf.mxu0
        %v1196 = vadd.f32 %v1107, %v1195
        %1197 = vdwg.mxu0
        %1198 = vmatpush.bf16.msra.mxu0 0
        %1199 = vmatpush.bf16.msra.mxu0 0
        %1200 = vmatpush.bf16.msra.mxu0 0
        %1201 = vmatpush.bf16.msra.mxu0 0
        %1202 = vmatpush.bf16.msra.mxu0 %v1168
        %1203 = vmatpush.bf16.msra.mxu0 %v1167
        %1204 = vmatpush.bf16.msra.mxu0 %v1166
        %1205 = vmatpush.bf16.msra.mxu0 %v1165
        %1206 = vmatmul.bf16.gmra.mxu0 %v1182
        %v1207 = vpop.f32.mrf.mxu0
        %v1208 = vadd.f32 %v1194, %v1207
        %v1209 = vpop.f32.mrf.mxu0
        %v1210 = vadd.f32 %v1196, %v1209
        %1211 = vdwg.mxu0
        %v1212 = vld [vmem:[#allocation2] sm:$0xcc]
        %v1213 = vld [vmem:[#allocation2 + $0x10] sm:$0x33]
        %v1214 = vunpack.c.l.bf16 %v1212
        %v1215 = vunpack.c.h.bf16 %v1212
        %v1216 = vunpack.c.l.bf16 %v1213
        %v1217 = vunpack.c.h.bf16 %v1213
        %v1220 = vrot.slane %v909, 4
        %v1221 = vrot.slane %v910, 4
        %v1222 = vsel %vm803, %v1220, %v1221
        %v1226 = vmul.f32 %v1214, %v1220
        %v1227 = vmul.f32 %v1215, %v1220
        %v1228 = vmul.f32 %v907, %v1222
        %v1229 = vmul.f32 %v908, %v1222
        %v1230 = vmul.f32 %v1216, %v1221
        %v1231 = vmul.f32 %v1217, %v1221
        %v1232 = vpack.c.bf16 %v1228, %v1226
        %v1233 = vpack.c.bf16 %v1229, %v1227
        %v1234 = vpack.c.bf16 %v1230, %v1230
        %v1235 = vpack.c.bf16 %v1231, %v1231
        %v1236 = vld [vmem:[%s1 + $0x8] sm:$0xf]
        %v1237 = vld [vmem:[%s1 + $0x18] sm:$0xf]
        %v1238 = vld [vmem:[%s1 + $0x28] sm:$0xf]
        %v1239 = vld [vmem:[%s1 + $0x38] sm:$0xf]
        %v1240 = vld [vmem:[%s1 + $0x48] sm:$0xf]
        %v1241 = vld [vmem:[%s1 + $0x58] sm:$0xf]
        %v1242 = vld [vmem:[%s1 + $0x68] sm:$0xf]
        %v1243 = vld [vmem:[%s1 + $0x78] sm:$0xf]
        %v1244 = vld [vmem:[%s1 + $0x88] sm:$0xf]
        %v1245 = vld [vmem:[%s1 + $0x98] sm:$0xf]
        %v1246 = vld [vmem:[%s1 + $0xa8] sm:$0xf]
        %v1247 = vld [vmem:[%s1 + $0xb8] sm:$0xf]
        %v1248 = vld [vmem:[%s1 + $0xc8] sm:$0xf]
        %v1249 = vld [vmem:[%s1 + $0xd8] sm:$0xf]
        %v1250 = vld [vmem:[%s1 + $0xe8] sm:$0xf]
        %v1251 = vld [vmem:[%s1 + $0xf8] sm:$0xf]
        %v1252 = vld [vmem:[%s1 + $0x108] sm:$0xf]
        %v1253 = vld [vmem:[%s1 + $0x118] sm:$0xf]
        %v1254 = vld [vmem:[%s1 + $0x128] sm:$0xf]
        %v1255 = vld [vmem:[%s1 + $0x138] sm:$0xf]
        %v1256 = vld [vmem:[%s1 + $0x148] sm:$0xf]
        %v1257 = vld [vmem:[%s1 + $0x158] sm:$0xf]
        %v1258 = vld [vmem:[%s1 + $0x168] sm:$0xf]
        %v1259 = vld [vmem:[%s1 + $0x178] sm:$0xf]
        %vm1264 = vcmask 1045504
        %v1265 = vrot.slane %v1232, 2
        %v1266 = vrot.slane %v1234, 2
        %v1267 = vsel %vm1264, %v1265, %v1266
        %v1268 = vrot.slane %v1233, 2
        %v1269 = vrot.slane %v1235, 2
        %v1270 = vsel %vm1264, %v1268, %v1269
        %v1296 = vunpack.c.l.b16 %v1236
        %v1297 = vunpack.c.l.b16 %v1237
        %v1298 = vunpack.c.l.b16 %v1238
        %v1299 = vunpack.c.l.b16 %v1239
        %v1300 = vunpack.c.l.b16 %v1240
        %v1301 = vunpack.c.l.b16 %v1241
        %v1302 = vunpack.c.l.b16 %v1242
        %v1303 = vunpack.c.l.b16 %v1243
        %v1304 = vunpack.c.l.b16 %v1244
        %v1305 = vunpack.c.l.b16 %v1245
        %v1306 = vunpack.c.l.b16 %v1246
        %v1307 = vunpack.c.l.b16 %v1247
        %v1308 = vunpack.c.l.b16 %v1248
        %v1309 = vunpack.c.l.b16 %v1249
        %v1310 = vunpack.c.l.b16 %v1250
        %v1311 = vunpack.c.l.b16 %v1251
        %v1312 = vunpack.c.l.b16 %v1252
        %v1313 = vunpack.c.l.b16 %v1253
        %v1314 = vunpack.c.l.b16 %v1254
        %v1315 = vunpack.c.l.b16 %v1255
        %v1316 = vunpack.c.l.b16 %v1256
        %v1317 = vunpack.c.l.b16 %v1257
        %v1318 = vunpack.c.l.b16 %v1258
        %v1319 = vunpack.c.l.b16 %v1259
        %v1320 = vpack.c.b16 %v1297, %v1296
        %v1321 = vpack.c.b16 %v1299, %v1298
        %v1322 = vpack.c.b16 %v1301, %v1300
        %v1323 = vpack.c.b16 %v1303, %v1302
        %v1324 = vpack.c.b16 %v1305, %v1304
        %v1325 = vpack.c.b16 %v1307, %v1306
        %v1326 = vpack.c.b16 %v1309, %v1308
        %v1327 = vpack.c.b16 %v1311, %v1310
        %v1328 = vpack.c.b16 %v1313, %v1312
        %v1329 = vpack.c.b16 %v1315, %v1314
        %v1330 = vpack.c.b16 %v1317, %v1316
        %v1331 = vpack.c.b16 %v1319, %v1318
        %v1345 = vsel %vm1077, %v1270, 0
        %1347 = vmatpush.bf16.msra.mxu0 %v1327
        %1348 = vmatpush.bf16.msra.mxu0 %v1326
        %1349 = vmatpush.bf16.msra.mxu0 %v1325
        %1350 = vmatpush.bf16.msra.mxu0 %v1324
        %1351 = vmatpush.bf16.msra.mxu0 %v1323
        %1352 = vmatpush.bf16.msra.mxu0 %v1322
        %1353 = vmatpush.bf16.msra.mxu0 %v1321
        %1354 = vmatpush.bf16.msra.mxu0 %v1320
        %1355 = vmatmul.bf16.gmra.mxu0 %v1267
        %v1356 = vpop.f32.mrf.mxu0
        %v1357 = vadd.f32 0.0, %v1356
        %v1358 = vpop.f32.mrf.mxu0
        %v1359 = vadd.f32 0.0, %v1358
        %1360 = vdwg.mxu0
        %1361 = vmatpush.bf16.msra.mxu0 0
        %1362 = vmatpush.bf16.msra.mxu0 0
        %1363 = vmatpush.bf16.msra.mxu0 0
        %1364 = vmatpush.bf16.msra.mxu0 0
        %1365 = vmatpush.bf16.msra.mxu0 %v1331
        %1366 = vmatpush.bf16.msra.mxu0 %v1330
        %1367 = vmatpush.bf16.msra.mxu0 %v1329
        %1368 = vmatpush.bf16.msra.mxu0 %v1328
        %1369 = vmatmul.bf16.gmra.mxu0 %v1345
        %v1370 = vpop.f32.mrf.mxu0
        %v1371 = vadd.f32 %v1357, %v1370
        %v1372 = vpop.f32.mrf.mxu0
        %v1373 = vadd.f32 %v1359, %v1372
        %1374 = vdwg.mxu0
        %v1375 = vadd.f32 %v1208, %v1371
        %v1376 = vadd.f32 %v1210, %v1373
        %v1377 = vld [vmem:[#allocation2 + $0x10] sm:$0x77]
        %v1378 = vld [vmem:[%s1 + $0xc] sm:$0xf]
        %v1379 = vld [vmem:[%s1 + $0x1c] sm:$0xf]
        %v1380 = vld [vmem:[%s1 + $0x2c] sm:$0xf]
        %v1381 = vld [vmem:[%s1 + $0x3c] sm:$0xf]
        %v1382 = vld [vmem:[%s1 + $0x4c] sm:$0xf]
        %v1383 = vld [vmem:[%s1 + $0x5c] sm:$0xf]
        %v1384 = vld [vmem:[%s1 + $0x6c] sm:$0xf]
        %v1385 = vld [vmem:[%s1 + $0x7c] sm:$0xf]
        %v1386 = vld [vmem:[%s1 + $0x8c] sm:$0xf]
        %v1387 = vld [vmem:[%s1 + $0x9c] sm:$0xf]
        %v1388 = vld [vmem:[%s1 + $0xac] sm:$0xf]
        %v1389 = vld [vmem:[%s1 + $0xbc] sm:$0xf]
        %v1390 = vld [vmem:[%s1 + $0xcc] sm:$0xf]
        %v1391 = vld [vmem:[%s1 + $0xdc] sm:$0xf]
        %v1392 = vld [vmem:[%s1 + $0xec] sm:$0xf]
        %v1393 = vld [vmem:[%s1 + $0xfc] sm:$0xf]
        %v1394 = vld [vmem:[%s1 + $0x10c] sm:$0xf]
        %v1395 = vld [vmem:[%s1 + $0x11c] sm:$0xf]
        %v1396 = vld [vmem:[%s1 + $0x12c] sm:$0xf]
        %v1397 = vld [vmem:[%s1 + $0x13c] sm:$0xf]
        %v1398 = vld [vmem:[%s1 + $0x14c] sm:$0xf]
        %v1399 = vld [vmem:[%s1 + $0x15c] sm:$0xf]
        %v1400 = vld [vmem:[%s1 + $0x16c] sm:$0xf]
        %v1401 = vld [vmem:[%s1 + $0x17c] sm:$0xf]
        %v1404 = vunpack.c.l.b16 %v1212
        %v1405 = vunpack.c.h.b16 %v1212
        %v1406 = vunpack.c.l.b16 %v1377
        %v1407 = vunpack.c.h.b16 %v1377
        %v1408 = vpack.c.b16 %v971, %v1404
        %v1409 = vpack.c.b16 %v972, %v1405
        %v1410 = vpack.c.b16 %v1406, %v1406
        %v1411 = vpack.c.b16 %v1407, %v1407
        %vm1412 = vsmask.f32 5376
        %v1414 = vshrl.u32 %v1408, 16
        %v1416 = vrot.slane %v1414, 2
        %v1417 = vshll.u32 %v1408, 16
        %v1419 = vrot.slane %v1417, 3
        %v1420 = vor.u32 %v1416, %v1419
        %v1422 = vshrl.u32 %v1410, 16
        %v1424 = vrot.slane %v1422, 2
        %v1425 = vshll.u32 %v1410, 16
        %v1427 = vrot.slane %v1425, 3
        %v1428 = vor.u32 %v1424, %v1427
        %v1429 = vsel %vm1412, %v1420, %v1428
        %v1431 = vshrl.u32 %v1409, 16
        %v1433 = vrot.slane %v1431, 2
        %v1434 = vshll.u32 %v1409, 16
        %v1436 = vrot.slane %v1434, 3
        %v1437 = vor.u32 %v1433, %v1436
        %v1439 = vshrl.u32 %v1411, 16
        %v1441 = vrot.slane %v1439, 2
        %v1442 = vshll.u32 %v1411, 16
        %v1444 = vrot.slane %v1442, 3
        %v1445 = vor.u32 %v1441, %v1444
        %v1446 = vsel %vm1412, %v1437, %v1445
        %v1472 = vunpack.c.l.b16 %v1378
        %v1473 = vunpack.c.l.b16 %v1379
        %v1474 = vunpack.c.l.b16 %v1380
        %v1475 = vunpack.c.l.b16 %v1381
        %v1476 = vunpack.c.l.b16 %v1382
        %v1477 = vunpack.c.l.b16 %v1383
        %v1478 = vunpack.c.l.b16 %v1384
        %v1479 = vunpack.c.l.b16 %v1385
        %v1480 = vunpack.c.l.b16 %v1386
        %v1481 = vunpack.c.l.b16 %v1387
        %v1482 = vunpack.c.l.b16 %v1388
        %v1483 = vunpack.c.l.b16 %v1389
        %v1484 = vunpack.c.l.b16 %v1390
        %v1485 = vunpack.c.l.b16 %v1391
        %v1486 = vunpack.c.l.b16 %v1392
        %v1487 = vunpack.c.l.b16 %v1393
        %v1488 = vunpack.c.l.b16 %v1394
        %v1489 = vunpack.c.l.b16 %v1395
        %v1490 = vunpack.c.l.b16 %v1396
        %v1491 = vunpack.c.l.b16 %v1397
        %v1492 = vunpack.c.l.b16 %v1398
        %v1493 = vunpack.c.l.b16 %v1399
        %v1494 = vunpack.c.l.b16 %v1400
        %v1495 = vunpack.c.l.b16 %v1401
        %v1496 = vpack.c.b16 %v1473, %v1472
        %v1497 = vpack.c.b16 %v1475, %v1474
        %v1498 = vpack.c.b16 %v1477, %v1476
        %v1499 = vpack.c.b16 %v1479, %v1478
        %v1500 = vpack.c.b16 %v1481, %v1480
        %v1501 = vpack.c.b16 %v1483, %v1482
        %v1502 = vpack.c.b16 %v1485, %v1484
        %v1503 = vpack.c.b16 %v1487, %v1486
        %v1504 = vpack.c.b16 %v1489, %v1488
        %v1505 = vpack.c.b16 %v1491, %v1490
        %v1506 = vpack.c.b16 %v1493, %v1492
        %v1507 = vpack.c.b16 %v1495, %v1494
        %v1521 = vsel %vm1077, %v1446, 0
        %1523 = vmatpush.bf16.msra.mxu0 %v1503
        %1524 = vmatpush.bf16.msra.mxu0 %v1502
        %1525 = vmatpush.bf16.msra.mxu0 %v1501
        %1526 = vmatpush.bf16.msra.mxu0 %v1500
        %1527 = vmatpush.bf16.msra.mxu0 %v1499
        %1528 = vmatpush.bf16.msra.mxu0 %v1498
        %1529 = vmatpush.bf16.msra.mxu0 %v1497
        %1530 = vmatpush.bf16.msra.mxu0 %v1496
        %1531 = vmatmul.bf16.gmra.mxu0 %v1429
        %v1532 = vpop.f32.mrf.mxu0
        %v1533 = vadd.f32 0.0, %v1532
        %v1534 = vpop.f32.mrf.mxu0
        %v1535 = vadd.f32 0.0, %v1534
        %1536 = vdwg.mxu0
        %1537 = vmatpush.bf16.msra.mxu0 0
        %1538 = vmatpush.bf16.msra.mxu0 0
        %1539 = vmatpush.bf16.msra.mxu0 0
        %1540 = vmatpush.bf16.msra.mxu0 0
        %1541 = vmatpush.bf16.msra.mxu0 %v1507
        %1542 = vmatpush.bf16.msra.mxu0 %v1506
        %1543 = vmatpush.bf16.msra.mxu0 %v1505
        %1544 = vmatpush.bf16.msra.mxu0 %v1504
        %1545 = vmatmul.bf16.gmra.mxu0 %v1521
        %v1546 = vpop.f32.mrf.mxu0
        %v1547 = vadd.f32 %v1533, %v1546
        %v1548 = vpop.f32.mrf.mxu0
        %v1549 = vadd.f32 %v1535, %v1548
        %1550 = vdwg.mxu0
        %v1551 = vadd.f32 %v1375, %v1547
        %v1552 = vadd.f32 %v1376, %v1549
        %v1553 = vld [vmem:[%s2] sm:$0x1]
        %v1555 = vperm.slane %v1553, 0
        %v1557 = vadd.f32 %v1551, %v1555
        %v1558 = vadd.f32 %v1552, %v1555
        %v1559 = vmul.f32 %v1557, 0.5
        %v1560 = vmul.f32 %v1558, 0.5
        %v1561 = vmul.f32 %v1557, 0.044715
        %v1562 = vmul.f32 %v1558, 0.044715
        %v1563 = vmul.f32 %v1561, %v1557
        %v1564 = vmul.f32 %v1562, %v1558
        %v1565 = vmul.f32 %v1563, %v1557
        %v1566 = vmul.f32 %v1564, %v1558
        %v1567 = vadd.f32 %v1557, %v1565
        %v1568 = vadd.f32 %v1558, %v1566
        %v1569 = vmul.f32 %v1567, 0.7978846
        %v1570 = vmul.f32 %v1568, 0.7978846
        %v1571 = vtanh.pop %v1569
        %v1572 = vtanh.pop %v1570
        %v1573 = vadd.f32 %v1571, 1.0
        %v1574 = vadd.f32 %v1572, 1.0
        %v1575 = vmul.f32 %v1559, %v1573
        %v1576 = vmul.f32 %v1560, %v1574
        %v1577 = vpack.c.bf16 %v1575, %v1575
        %v1578 = vpack.c.bf16 %v1576, %v1576
        %v1580 = vshrl.u32 %v1577, 16
        %v1582 = vrot.slane %v1580, 5
        %v1583 = vshll.u32 %v1577, 16
        %v1585 = vrot.slane %v1583, 6
        %v1586 = vor.u32 %v1582, %v1585
        %v1587 = vrot.slane %v1586, 4
        %v1589 = vshrl.u32 %v1578, 16
        %v1591 = vrot.slane %v1589, 5
        %v1592 = vshll.u32 %v1578, 16
        %v1594 = vrot.slane %v1592, 6
        %v1595 = vor.u32 %v1591, %v1594
        %v1596 = vsel %vm860, %v1587, %v1595
        %v1597 = vrot.slane %v1595, 4
        %v1601 = vld [vmem:[#allocation2] sm:$0xc]
        %v1602 = vsel %vm885, %v1586, %v1601
        %1603 = vst [vmem:[#allocation2] sm:$0xc] %v1602
        %1604 = vst [vmem:[#allocation2 + $0x8] sm:$0xf] %v1596
        %v1605 = vld [vmem:[#allocation2 + $0x10] sm:$0x7]
        %v1606 = vsel %vm895, %v1597, %v1605
        %1607 = vst [vmem:[#allocation2 + $0x10] sm:$0x7] %v1606
        %v1608 = vld [vmem:[#allocation2] sm:$0xf]
        %v1609 = vld [vmem:[#allocation2 + $0x8] sm:$0xf]
        %v1610 = vunpack.c.l.bf16 %v1608
        %v1611 = vunpack.c.l.bf16 %v1609
        %v1612 = vmul.f32 %v1610, %v909
        %v1613 = vmul.f32 %v1611, %v910
        %v1614 = vpack.c.bf16 %v1613, %v1612
        %v1615 = vld [vmem:[%s3] sm:$0xf]
        %v1616 = vld [vmem:[%s3 + $0x24] sm:$0xf]
        %v1617 = vld [vmem:[%s3 + $0x48] sm:$0xf]
        %v1618 = vld [vmem:[%s3 + $0x6c] sm:$0xf]
        %v1619 = vld [vmem:[%s3 + $0x90] sm:$0xf]
        %v1620 = vld [vmem:[%s3 + $0xb4] sm:$0xf]
        %v1621 = vld [vmem:[%s3 + $0xd8] sm:$0xf]
        %v1622 = vld [vmem:[%s3 + $0xfc] sm:$0xf]
        %v1623 = vld [vmem:[%s3 + $0x120] sm:$0xf]
        %v1624 = vld [vmem:[%s3 + $0x144] sm:$0xf]
        %v1625 = vld [vmem:[%s3 + $0x168] sm:$0xf]
        %v1626 = vld [vmem:[%s3 + $0x18c] sm:$0xf]
        %v1627 = vld [vmem:[%s3 + $0x1b0] sm:$0xf]
        %v1628 = vld [vmem:[%s3 + $0x1d4] sm:$0xf]
        %v1629 = vld [vmem:[%s3 + $0x1f8] sm:$0xf]
        %v1630 = vld [vmem:[%s3 + $0x21c] sm:$0xf]
        %v1631 = vld [vmem:[#allocation2 + $0x10] sm:$0x1]
        %v1632 = vld [vmem:[%s3 + $0x4] sm:$0xf]
        %v1633 = vld [vmem:[%s3 + $0x28] sm:$0xf]
        %v1634 = vld [vmem:[%s3 + $0x4c] sm:$0xf]
        %v1635 = vld [vmem:[%s3 + $0x70] sm:$0xf]
        %v1636 = vld [vmem:[%s3 + $0x94] sm:$0xf]
        %v1637 = vld [vmem:[%s3 + $0xb8] sm:$0xf]
        %v1638 = vld [vmem:[%s3 + $0xdc] sm:$0xf]
        %v1639 = vld [vmem:[%s3 + $0x100] sm:$0xf]
        %v1640 = vld [vmem:[%s3 + $0x124] sm:$0xf]
        %v1641 = vld [vmem:[%s3 + $0x148] sm:$0xf]
        %v1642 = vld [vmem:[%s3 + $0x16c] sm:$0xf]
        %v1643 = vld [vmem:[%s3 + $0x190] sm:$0xf]
        %v1644 = vld [vmem:[%s3 + $0x1b4] sm:$0xf]
        %v1645 = vld [vmem:[%s3 + $0x1d8] sm:$0xf]
        %v1646 = vld [vmem:[%s3 + $0x1fc] sm:$0xf]
        %v1647 = vld [vmem:[%s3 + $0x220] sm:$0xf]
        %v1651 = vunpack.c.l.b16 %v1608
        %v1652 = vunpack.c.l.b16 %v1609
        %v1653 = vunpack.c.l.b16 %v1631
        %v1654 = vpack.c.b16 %v1652, %v1651
        %v1655 = vpack.c.b16 %v1653, %v1653
        %v1657 = vshrl.u32 %v1654, 16
        %v1659 = vshll.u32 %v1654, 16
        %v1661 = vrot.slane %v1659, 1
        %v1662 = vor.u32 %v1657, %v1661
        %v1664 = vshll.u32 %v1655, 16
        %v1666 = vrot.slane %v1664, 1
        %v1667 = vsel %vm979, %v1662, %v1666
        %v1685 = vunpack.c.l.b16 %v1632
        %v1686 = vunpack.c.l.b16 %v1633
        %v1687 = vunpack.c.l.b16 %v1634
        %v1688 = vunpack.c.l.b16 %v1635
        %v1689 = vunpack.c.l.b16 %v1636
        %v1690 = vunpack.c.l.b16 %v1637
        %v1691 = vunpack.c.l.b16 %v1638
        %v1692 = vunpack.c.l.b16 %v1639
        %v1693 = vunpack.c.l.b16 %v1640
        %v1694 = vunpack.c.l.b16 %v1641
        %v1695 = vunpack.c.l.b16 %v1642
        %v1696 = vunpack.c.l.b16 %v1643
        %v1697 = vunpack.c.l.b16 %v1644
        %v1698 = vunpack.c.l.b16 %v1645
        %v1699 = vunpack.c.l.b16 %v1646
        %v1700 = vunpack.c.l.b16 %v1647
        %v1701 = vpack.c.b16 %v1686, %v1685
        %v1702 = vpack.c.b16 %v1688, %v1687
        %v1703 = vpack.c.b16 %v1690, %v1689
        %v1704 = vpack.c.b16 %v1692, %v1691
        %v1705 = vpack.c.b16 %v1694, %v1693
        %v1706 = vpack.c.b16 %v1696, %v1695
        %v1707 = vpack.c.b16 %v1698, %v1697
        %v1708 = vpack.c.b16 %v1700, %v1699
        %1717 = vmatpush.bf16.msra.mxu0 %v1708
        %1718 = vmatpush.bf16.msra.mxu0 %v1707
        %1719 = vmatpush.bf16.msra.mxu0 %v1706
        %1720 = vmatpush.bf16.msra.mxu0 %v1705
        %1721 = vmatpush.bf16.msra.mxu0 %v1704
        %1722 = vmatpush.bf16.msra.mxu0 %v1703
        %1723 = vmatpush.bf16.msra.mxu0 %v1702
        %1724 = vmatpush.bf16.msra.mxu0 %v1701
        %1725 = vmatmul.bf16.gmra.mxu0 %v1667
        %v1726 = vpop.f32.mrf.mxu0
        %v1727 = vadd.f32 0.0, %v1726
        %v1728 = vpop.f32.mrf.mxu0
        %v1729 = vadd.f32 0.0, %v1728
        %1730 = vdwg.mxu0
        %v1747 = vunpack.c.l.b16 %v1615
        %v1748 = vunpack.c.l.b16 %v1616
        %v1749 = vunpack.c.l.b16 %v1617
        %v1750 = vunpack.c.l.b16 %v1618
        %v1751 = vunpack.c.l.b16 %v1619
        %v1752 = vunpack.c.l.b16 %v1620
        %v1753 = vunpack.c.l.b16 %v1621
        %v1754 = vunpack.c.l.b16 %v1622
        %v1755 = vunpack.c.l.b16 %v1623
        %v1756 = vunpack.c.l.b16 %v1624
        %v1757 = vunpack.c.l.b16 %v1625
        %v1758 = vunpack.c.l.b16 %v1626
        %v1759 = vunpack.c.l.b16 %v1627
        %v1760 = vunpack.c.l.b16 %v1628
        %v1761 = vunpack.c.l.b16 %v1629
        %v1762 = vunpack.c.l.b16 %v1630
        %v1763 = vpack.c.b16 %v1748, %v1747
        %v1764 = vpack.c.b16 %v1750, %v1749
        %v1765 = vpack.c.b16 %v1752, %v1751
        %v1766 = vpack.c.b16 %v1754, %v1753
        %v1767 = vpack.c.b16 %v1756, %v1755
        %v1768 = vpack.c.b16 %v1758, %v1757
        %v1769 = vpack.c.b16 %v1760, %v1759
        %v1770 = vpack.c.b16 %v1762, %v1761
        %1779 = vmatpush.bf16.msra.mxu0 %v1770
        %1780 = vmatpush.bf16.msra.mxu0 %v1769
        %1781 = vmatpush.bf16.msra.mxu0 %v1768
        %1782 = vmatpush.bf16.msra.mxu0 %v1767
        %1783 = vmatpush.bf16.msra.mxu0 %v1766
        %1784 = vmatpush.bf16.msra.mxu0 %v1765
        %1785 = vmatpush.bf16.msra.mxu0 %v1764
        %1786 = vmatpush.bf16.msra.mxu0 %v1763
        %1787 = vmatmul.bf16.gmra.mxu0 %v1614
        %v1788 = vpop.f32.mrf.mxu0
        %v1789 = vadd.f32 %v1727, %v1788
        %v1790 = vpop.f32.mrf.mxu0
        %v1791 = vadd.f32 %v1729, %v1790
        %1792 = vdwg.mxu0
        %v1793 = vld [vmem:[#allocation2] sm:$0xe]
        %v1794 = vunpack.c.l.bf16 %v1793
        %v1795 = vunpack.c.l.bf16 %v1631
        %v1796 = vunpack.c.l.bf16 %v854
        %v1797 = vunpack.c.l.bf16 %v855
        %vm1800 = vcmask 1041408
        %v1801 = vrot.slane %v1796, 6
        %v1802 = vrot.slane %v1797, 6
        %v1803 = vsel %vm1800, %v1801, %v1802
        %v1807 = vmul.f32 %v1794, %v1801
        %v1808 = vmul.f32 %v1611, %v1803
        %v1809 = vmul.f32 %v1795, %v1802
        %v1810 = vpack.c.bf16 %v1808, %v1807
        %v1811 = vpack.c.bf16 %v1809, %v1809
        %v1812 = vld [vmem:[%s3 + $0x8] sm:$0xf]
        %v1813 = vld [vmem:[%s3 + $0x2c] sm:$0xf]
        %v1814 = vld [vmem:[%s3 + $0x50] sm:$0xf]
        %v1815 = vld [vmem:[%s3 + $0x74] sm:$0xf]
        %v1816 = vld [vmem:[%s3 + $0x98] sm:$0xf]
        %v1817 = vld [vmem:[%s3 + $0xbc] sm:$0xf]
        %v1818 = vld [vmem:[%s3 + $0xe0] sm:$0xf]
        %v1819 = vld [vmem:[%s3 + $0x104] sm:$0xf]
        %v1820 = vld [vmem:[%s3 + $0x128] sm:$0xf]
        %v1821 = vld [vmem:[%s3 + $0x14c] sm:$0xf]
        %v1822 = vld [vmem:[%s3 + $0x170] sm:$0xf]
        %v1823 = vld [vmem:[%s3 + $0x194] sm:$0xf]
        %v1824 = vld [vmem:[%s3 + $0x1b8] sm:$0xf]
        %v1825 = vld [vmem:[%s3 + $0x1dc] sm:$0xf]
        %v1826 = vld [vmem:[%s3 + $0x200] sm:$0xf]
        %v1827 = vld [vmem:[%s3 + $0x224] sm:$0xf]
        %vm1830 = vcmask 1046528
        %v1831 = vrot.slane %v1810, 1
        %v1832 = vrot.slane %v1811, 1
        %v1833 = vsel %vm1830, %v1831, %v1832
        %v1851 = vunpack.c.l.b16 %v1812
        %v1852 = vunpack.c.l.b16 %v1813
        %v1853 = vunpack.c.l.b16 %v1814
        %v1854 = vunpack.c.l.b16 %v1815
        %v1855 = vunpack.c.l.b16 %v1816
        %v1856 = vunpack.c.l.b16 %v1817
        %v1857 = vunpack.c.l.b16 %v1818
        %v1858 = vunpack.c.l.b16 %v1819
        %v1859 = vunpack.c.l.b16 %v1820
        %v1860 = vunpack.c.l.b16 %v1821
        %v1861 = vunpack.c.l.b16 %v1822
        %v1862 = vunpack.c.l.b16 %v1823
        %v1863 = vunpack.c.l.b16 %v1824
        %v1864 = vunpack.c.l.b16 %v1825
        %v1865 = vunpack.c.l.b16 %v1826
        %v1866 = vunpack.c.l.b16 %v1827
        %v1867 = vpack.c.b16 %v1852, %v1851
        %v1868 = vpack.c.b16 %v1854, %v1853
        %v1869 = vpack.c.b16 %v1856, %v1855
        %v1870 = vpack.c.b16 %v1858, %v1857
        %v1871 = vpack.c.b16 %v1860, %v1859
        %v1872 = vpack.c.b16 %v1862, %v1861
        %v1873 = vpack.c.b16 %v1864, %v1863
        %v1874 = vpack.c.b16 %v1866, %v1865
        %1883 = vmatpush.bf16.msra.mxu0 %v1874
        %1884 = vmatpush.bf16.msra.mxu0 %v1873
        %1885 = vmatpush.bf16.msra.mxu0 %v1872
        %1886 = vmatpush.bf16.msra.mxu0 %v1871
        %1887 = vmatpush.bf16.msra.mxu0 %v1870
        %1888 = vmatpush.bf16.msra.mxu0 %v1869
        %1889 = vmatpush.bf16.msra.mxu0 %v1868
        %1890 = vmatpush.bf16.msra.mxu0 %v1867
        %1891 = vmatmul.bf16.gmra.mxu0 %v1833
        %v1892 = vpop.f32.mrf.mxu0
        %v1893 = vadd.f32 0.0, %v1892
        %v1894 = vpop.f32.mrf.mxu0
        %v1895 = vadd.f32 0.0, %v1894
        %1896 = vdwg.mxu0
        %v1897 = vadd.f32 %v1789, %v1893
        %v1898 = vadd.f32 %v1791, %v1895
        %v1899 = vld [vmem:[#allocation2] sm:$0xc]
        %v1900 = vld [vmem:[#allocation2 + $0x10] sm:$0x3]
        %v1901 = vunpack.c.l.bf16 %v1899
        %v1902 = vunpack.c.l.bf16 %v1900
        %v1903 = vmul.f32 %v1901, %v1220
        %v1904 = vmul.f32 %v1611, %v1222
        %v1905 = vmul.f32 %v1902, %v1221
        %v1906 = vpack.c.bf16 %v1904, %v1903
        %v1907 = vpack.c.bf16 %v1905, %v1905
        %v1908 = vld [vmem:[%s3 + $0xc] sm:$0xf]
        %v1909 = vld [vmem:[%s3 + $0x30] sm:$0xf]
        %v1910 = vld [vmem:[%s3 + $0x54] sm:$0xf]
        %v1911 = vld [vmem:[%s3 + $0x78] sm:$0xf]
        %v1912 = vld [vmem:[%s3 + $0x9c] sm:$0xf]
        %v1913 = vld [vmem:[%s3 + $0xc0] sm:$0xf]
        %v1914 = vld [vmem:[%s3 + $0xe4] sm:$0xf]
        %v1915 = vld [vmem:[%s3 + $0x108] sm:$0xf]
        %v1916 = vld [vmem:[%s3 + $0x12c] sm:$0xf]
        %v1917 = vld [vmem:[%s3 + $0x150] sm:$0xf]
        %v1918 = vld [vmem:[%s3 + $0x174] sm:$0xf]
        %v1919 = vld [vmem:[%s3 + $0x198] sm:$0xf]
        %v1920 = vld [vmem:[%s3 + $0x1bc] sm:$0xf]
        %v1921 = vld [vmem:[%s3 + $0x1e0] sm:$0xf]
        %v1922 = vld [vmem:[%s3 + $0x204] sm:$0xf]
        %v1923 = vld [vmem:[%s3 + $0x228] sm:$0xf]
        %v1926 = vrot.slane %v1906, 2
        %v1927 = vrot.slane %v1907, 2
        %v1928 = vsel %vm1264, %v1926, %v1927
        %v1946 = vunpack.c.l.b16 %v1908
        %v1947 = vunpack.c.l.b16 %v1909
        %v1948 = vunpack.c.l.b16 %v1910
        %v1949 = vunpack.c.l.b16 %v1911
        %v1950 = vunpack.c.l.b16 %v1912
        %v1951 = vunpack.c.l.b16 %v1913
        %v1952 = vunpack.c.l.b16 %v1914
        %v1953 = vunpack.c.l.b16 %v1915
        %v1954 = vunpack.c.l.b16 %v1916
        %v1955 = vunpack.c.l.b16 %v1917
        %v1956 = vunpack.c.l.b16 %v1918
        %v1957 = vunpack.c.l.b16 %v1919
        %v1958 = vunpack.c.l.b16 %v1920
        %v1959 = vunpack.c.l.b16 %v1921
        %v1960 = vunpack.c.l.b16 %v1922
        %v1961 = vunpack.c.l.b16 %v1923
        %v1962 = vpack.c.b16 %v1947, %v1946
        %v1963 = vpack.c.b16 %v1949, %v1948
        %v1964 = vpack.c.b16 %v1951, %v1950
        %v1965 = vpack.c.b16 %v1953, %v1952
        %v1966 = vpack.c.b16 %v1955, %v1954
        %v1967 = vpack.c.b16 %v1957, %v1956
        %v1968 = vpack.c.b16 %v1959, %v1958
        %v1969 = vpack.c.b16 %v1961, %v1960
        %1978 = vmatpush.bf16.msra.mxu0 %v1969
        %1979 = vmatpush.bf16.msra.mxu0 %v1968
        %1980 = vmatpush.bf16.msra.mxu0 %v1967
        %1981 = vmatpush.bf16.msra.mxu0 %v1966
        %1982 = vmatpush.bf16.msra.mxu0 %v1965
        %1983 = vmatpush.bf16.msra.mxu0 %v1964
        %1984 = vmatpush.bf16.msra.mxu0 %v1963
        %1985 = vmatpush.bf16.msra.mxu0 %v1962
        %1986 = vmatmul.bf16.gmra.mxu0 %v1928
        %v1987 = vpop.f32.mrf.mxu0
        %v1988 = vadd.f32 0.0, %v1987
        %v1989 = vpop.f32.mrf.mxu0
        %v1990 = vadd.f32 0.0, %v1989
        %1991 = vdwg.mxu0
        %v1992 = vadd.f32 %v1897, %v1988
        %v1993 = vadd.f32 %v1898, %v1990
        %v1994 = vld [vmem:[#allocation2 + $0x10] sm:$0x7]
        %v1995 = vld [vmem:[%s3 + $0x10] sm:$0xf]
        %v1996 = vld [vmem:[%s3 + $0x34] sm:$0xf]
        %v1997 = vld [vmem:[%s3 + $0x58] sm:$0xf]
        %v1998 = vld [vmem:[%s3 + $0x7c] sm:$0xf]
        %v1999 = vld [vmem:[%s3 + $0xa0] sm:$0xf]
        %v2000 = vld [vmem:[%s3 + $0xc4] sm:$0xf]
        %v2001 = vld [vmem:[%s3 + $0xe8] sm:$0xf]
        %v2002 = vld [vmem:[%s3 + $0x10c] sm:$0xf]
        %v2003 = vld [vmem:[%s3 + $0x130] sm:$0xf]
        %v2004 = vld [vmem:[%s3 + $0x154] sm:$0xf]
        %v2005 = vld [vmem:[%s3 + $0x178] sm:$0xf]
        %v2006 = vld [vmem:[%s3 + $0x19c] sm:$0xf]
        %v2007 = vld [vmem:[%s3 + $0x1c0] sm:$0xf]
        %v2008 = vld [vmem:[%s3 + $0x1e4] sm:$0xf]
        %v2009 = vld [vmem:[%s3 + $0x208] sm:$0xf]
        %v2010 = vld [vmem:[%s3 + $0x22c] sm:$0xf]
        %v2013 = vunpack.c.l.b16 %v1899
        %v2014 = vunpack.c.l.b16 %v1994
        %v2015 = vpack.c.b16 %v1652, %v2013
        %v2016 = vpack.c.b16 %v2014, %v2014
        %v2018 = vshrl.u32 %v2015, 16
        %v2020 = vrot.slane %v2018, 2
        %v2021 = vshll.u32 %v2015, 16
        %v2023 = vrot.slane %v2021, 3
        %v2024 = vor.u32 %v2020, %v2023
        %v2026 = vshrl.u32 %v2016, 16
        %v2028 = vrot.slane %v2026, 2
        %v2029 = vshll.u32 %v2016, 16
        %v2031 = vrot.slane %v2029, 3
        %v2032 = vor.u32 %v2028, %v2031
        %v2033 = vsel %vm1412, %v2024, %v2032
        %v2051 = vunpack.c.l.b16 %v1995
        %v2052 = vunpack.c.l.b16 %v1996
        %v2053 = vunpack.c.l.b16 %v1997
        %v2054 = vunpack.c.l.b16 %v1998
        %v2055 = vunpack.c.l.b16 %v1999
        %v2056 = vunpack.c.l.b16 %v2000
        %v2057 = vunpack.c.l.b16 %v2001
        %v2058 = vunpack.c.l.b16 %v2002
        %v2059 = vunpack.c.l.b16 %v2003
        %v2060 = vunpack.c.l.b16 %v2004
        %v2061 = vunpack.c.l.b16 %v2005
        %v2062 = vunpack.c.l.b16 %v2006
        %v2063 = vunpack.c.l.b16 %v2007
        %v2064 = vunpack.c.l.b16 %v2008
        %v2065 = vunpack.c.l.b16 %v2009
        %v2066 = vunpack.c.l.b16 %v2010
        %v2067 = vpack.c.b16 %v2052, %v2051
        %v2068 = vpack.c.b16 %v2054, %v2053
        %v2069 = vpack.c.b16 %v2056, %v2055
        %v2070 = vpack.c.b16 %v2058, %v2057
        %v2071 = vpack.c.b16 %v2060, %v2059
        %v2072 = vpack.c.b16 %v2062, %v2061
        %v2073 = vpack.c.b16 %v2064, %v2063
        %v2074 = vpack.c.b16 %v2066, %v2065
        %2083 = vmatpush.bf16.msra.mxu0 %v2074
        %2084 = vmatpush.bf16.msra.mxu0 %v2073
        %2085 = vmatpush.bf16.msra.mxu0 %v2072
        %2086 = vmatpush.bf16.msra.mxu0 %v2071
        %2087 = vmatpush.bf16.msra.mxu0 %v2070
        %2088 = vmatpush.bf16.msra.mxu0 %v2069
        %2089 = vmatpush.bf16.msra.mxu0 %v2068
        %2090 = vmatpush.bf16.msra.mxu0 %v2067
        %2091 = vmatmul.bf16.gmra.mxu0 %v2033
        %v2092 = vpop.f32.mrf.mxu0
        %v2093 = vadd.f32 0.0, %v2092
        %v2094 = vpop.f32.mrf.mxu0
        %v2095 = vadd.f32 0.0, %v2094
        %2096 = vdwg.mxu0
        %v2097 = vadd.f32 %v1992, %v2093
        %v2098 = vadd.f32 %v1993, %v2095
        %v2099 = vld [vmem:[#allocation2] sm:$0x8]
        %v2100 = vunpack.c.l.bf16 %v2099
        %v2101 = vunpack.c.l.bf16 %v1994
        %vm2102 = vcmask 1045504
        %v2103 = vrot.slane %v1796, 2
        %v2104 = vrot.slane %v1797, 2
        %v2105 = vsel %vm2102, %v2103, %v2104
        %v2109 = vmul.f32 %v2100, %v2103
        %v2110 = vmul.f32 %v1611, %v2105
        %v2111 = vmul.f32 %v2101, %v2104
        %v2112 = vpack.c.bf16 %v2110, %v2109
        %v2113 = vpack.c.bf16 %v2111, %v2111
        %v2114 = vld [vmem:[%s3 + $0x14] sm:$0xf]
        %v2115 = vld [vmem:[%s3 + $0x38] sm:$0xf]
        %v2116 = vld [vmem:[%s3 + $0x5c] sm:$0xf]
        %v2117 = vld [vmem:[%s3 + $0x80] sm:$0xf]
        %v2118 = vld [vmem:[%s3 + $0xa4] sm:$0xf]
        %v2119 = vld [vmem:[%s3 + $0xc8] sm:$0xf]
        %v2120 = vld [vmem:[%s3 + $0xec] sm:$0xf]
        %v2121 = vld [vmem:[%s3 + $0x110] sm:$0xf]
        %v2122 = vld [vmem:[%s3 + $0x134] sm:$0xf]
        %v2123 = vld [vmem:[%s3 + $0x158] sm:$0xf]
        %v2124 = vld [vmem:[%s3 + $0x17c] sm:$0xf]
        %v2125 = vld [vmem:[%s3 + $0x1a0] sm:$0xf]
        %v2126 = vld [vmem:[%s3 + $0x1c4] sm:$0xf]
        %v2127 = vld [vmem:[%s3 + $0x1e8] sm:$0xf]
        %v2128 = vld [vmem:[%s3 + $0x20c] sm:$0xf]
        %v2129 = vld [vmem:[%s3 + $0x230] sm:$0xf]
        %vm2132 = vcmask 1044480
        %v2133 = vrot.slane %v2112, 3
        %v2134 = vrot.slane %v2113, 3
        %v2135 = vsel %vm2132, %v2133, %v2134
        %v2153 = vunpack.c.l.b16 %v2114
        %v2154 = vunpack.c.l.b16 %v2115
        %v2155 = vunpack.c.l.b16 %v2116
        %v2156 = vunpack.c.l.b16 %v2117
        %v2157 = vunpack.c.l.b16 %v2118
        %v2158 = vunpack.c.l.b16 %v2119
        %v2159 = vunpack.c.l.b16 %v2120
        %v2160 = vunpack.c.l.b16 %v2121
        %v2161 = vunpack.c.l.b16 %v2122
        %v2162 = vunpack.c.l.b16 %v2123
        %v2163 = vunpack.c.l.b16 %v2124
        %v2164 = vunpack.c.l.b16 %v2125
        %v2165 = vunpack.c.l.b16 %v2126
        %v2166 = vunpack.c.l.b16 %v2127
        %v2167 = vunpack.c.l.b16 %v2128
        %v2168 = vunpack.c.l.b16 %v2129
        %v2169 = vpack.c.b16 %v2154, %v2153
        %v2170 = vpack.c.b16 %v2156, %v2155
        %v2171 = vpack.c.b16 %v2158, %v2157
        %v2172 = vpack.c.b16 %v2160, %v2159
        %v2173 = vpack.c.b16 %v2162, %v2161
        %v2174 = vpack.c.b16 %v2164, %v2163
        %v2175 = vpack.c.b16 %v2166, %v2165
        %v2176 = vpack.c.b16 %v2168, %v2167
        %2185 = vmatpush.bf16.msra.mxu0 %v2176
        %2186 = vmatpush.bf16.msra.mxu0 %v2175
        %2187 = vmatpush.bf16.msra.mxu0 %v2174
        %2188 = vmatpush.bf16.msra.mxu0 %v2173
        %2189 = vmatpush.bf16.msra.mxu0 %v2172
        %2190 = vmatpush.bf16.msra.mxu0 %v2171
        %2191 = vmatpush.bf16.msra.mxu0 %v2170
        %2192 = vmatpush.bf16.msra.mxu0 %v2169
        %2193 = vmatmul.bf16.gmra.mxu0 %v2135
        %v2194 = vpop.f32.mrf.mxu0
        %v2195 = vadd.f32 0.0, %v2194
        %v2196 = vpop.f32.mrf.mxu0
        %v2197 = vadd.f32 0.0, %v2196
        %2198 = vdwg.mxu0
        %v2199 = vadd.f32 %v2097, %v2195
        %v2200 = vadd.f32 %v2098, %v2197
        %v2201 = vld [vmem:[#allocation2 + $0x10] sm:$0xf]
        %v2202 = vunpack.c.l.bf16 %v2201
        %v2203 = vmul.f32 %v1611, %v909
        %v2204 = vmul.f32 %v2202, %v910
        %v2205 = vpack.c.bf16 %v2204, %v2203
        %v2206 = vld [vmem:[%s3 + $0x18] sm:$0xf]
        %v2207 = vld [vmem:[%s3 + $0x3c] sm:$0xf]
        %v2208 = vld [vmem:[%s3 + $0x60] sm:$0xf]
        %v2209 = vld [vmem:[%s3 + $0x84] sm:$0xf]
        %v2210 = vld [vmem:[%s3 + $0xa8] sm:$0xf]
        %v2211 = vld [vmem:[%s3 + $0xcc] sm:$0xf]
        %v2212 = vld [vmem:[%s3 + $0xf0] sm:$0xf]
        %v2213 = vld [vmem:[%s3 + $0x114] sm:$0xf]
        %v2214 = vld [vmem:[%s3 + $0x138] sm:$0xf]
        %v2215 = vld [vmem:[%s3 + $0x15c] sm:$0xf]
        %v2216 = vld [vmem:[%s3 + $0x180] sm:$0xf]
        %v2217 = vld [vmem:[%s3 + $0x1a4] sm:$0xf]
        %v2218 = vld [vmem:[%s3 + $0x1c8] sm:$0xf]
        %v2219 = vld [vmem:[%s3 + $0x1ec] sm:$0xf]
        %v2220 = vld [vmem:[%s3 + $0x210] sm:$0xf]
        %v2221 = vld [vmem:[%s3 + $0x234] sm:$0xf]
        %v2238 = vunpack.c.l.b16 %v2206
        %v2239 = vunpack.c.l.b16 %v2207
        %v2240 = vunpack.c.l.b16 %v2208
        %v2241 = vunpack.c.l.b16 %v2209
        %v2242 = vunpack.c.l.b16 %v2210
        %v2243 = vunpack.c.l.b16 %v2211
        %v2244 = vunpack.c.l.b16 %v2212
        %v2245 = vunpack.c.l.b16 %v2213
        %v2246 = vunpack.c.l.b16 %v2214
        %v2247 = vunpack.c.l.b16 %v2215
        %v2248 = vunpack.c.l.b16 %v2216
        %v2249 = vunpack.c.l.b16 %v2217
        %v2250 = vunpack.c.l.b16 %v2218
        %v2251 = vunpack.c.l.b16 %v2219
        %v2252 = vunpack.c.l.b16 %v2220
        %v2253 = vunpack.c.l.b16 %v2221
        %v2254 = vpack.c.b16 %v2239, %v2238
        %v2255 = vpack.c.b16 %v2241, %v2240
        %v2256 = vpack.c.b16 %v2243, %v2242
        %v2257 = vpack.c.b16 %v2245, %v2244
        %v2258 = vpack.c.b16 %v2247, %v2246
        %v2259 = vpack.c.b16 %v2249, %v2248
        %v2260 = vpack.c.b16 %v2251, %v2250
        %v2261 = vpack.c.b16 %v2253, %v2252
        %2270 = vmatpush.bf16.msra.mxu0 %v2261
        %2271 = vmatpush.bf16.msra.mxu0 %v2260
        %2272 = vmatpush.bf16.msra.mxu0 %v2259
        %2273 = vmatpush.bf16.msra.mxu0 %v2258
        %2274 = vmatpush.bf16.msra.mxu0 %v2257
        %2275 = vmatpush.bf16.msra.mxu0 %v2256
        %2276 = vmatpush.bf16.msra.mxu0 %v2255
        %2277 = vmatpush.bf16.msra.mxu0 %v2254
        %2278 = vmatmul.bf16.gmra.mxu0 %v2205
        %v2279 = vpop.f32.mrf.mxu0
        %v2280 = vadd.f32 0.0, %v2279
        %v2281 = vpop.f32.mrf.mxu0
        %v2282 = vadd.f32 0.0, %v2281
        %2283 = vdwg.mxu0
        %v2284 = vadd.f32 %v2199, %v2280
        %v2285 = vadd.f32 %v2200, %v2282
        %v2286 = vld [vmem:[#allocation2 + $0x8] sm:$0xf]
        %v2287 = vld [vmem:[#allocation2 + $0x10] sm:$0xf]
        %v2288 = vld [vmem:[#allocation2 + $0x18] sm:$0x1]
        %v2289 = vld [vmem:[%s3 + $0x1c] sm:$0xf]
        %v2290 = vld [vmem:[%s3 + $0x40] sm:$0xf]
        %v2291 = vld [vmem:[%s3 + $0x64] sm:$0xf]
        %v2292 = vld [vmem:[%s3 + $0x88] sm:$0xf]
        %v2293 = vld [vmem:[%s3 + $0xac] sm:$0xf]
        %v2294 = vld [vmem:[%s3 + $0xd0] sm:$0xf]
        %v2295 = vld [vmem:[%s3 + $0xf4] sm:$0xf]
        %v2296 = vld [vmem:[%s3 + $0x118] sm:$0xf]
        %v2297 = vld [vmem:[%s3 + $0x13c] sm:$0xf]
        %v2298 = vld [vmem:[%s3 + $0x160] sm:$0xf]
        %v2299 = vld [vmem:[%s3 + $0x184] sm:$0xf]
        %v2300 = vld [vmem:[%s3 + $0x1a8] sm:$0xf]
        %v2301 = vld [vmem:[%s3 + $0x1cc] sm:$0xf]
        %v2302 = vld [vmem:[%s3 + $0x1f0] sm:$0xf]
        %v2303 = vld [vmem:[%s3 + $0x214] sm:$0xf]
        %v2304 = vld [vmem:[%s3 + $0x238] sm:$0xf]
        %v2308 = vunpack.c.l.b16 %v2286
        %v2309 = vunpack.c.l.b16 %v2287
        %v2310 = vunpack.c.l.b16 %v2288
        %v2311 = vpack.c.b16 %v2309, %v2308
        %v2312 = vpack.c.b16 %v2310, %v2310
        %v2314 = vshrl.u32 %v2311, 16
        %v2316 = vshll.u32 %v2311, 16
        %v2318 = vrot.slane %v2316, 1
        %v2319 = vor.u32 %v2314, %v2318
        %v2321 = vshll.u32 %v2312, 16
        %v2323 = vrot.slane %v2321, 1
        %v2324 = vsel %vm979, %v2319, %v2323
        %v2342 = vunpack.c.l.b16 %v2289
        %v2343 = vunpack.c.l.b16 %v2290
        %v2344 = vunpack.c.l.b16 %v2291
        %v2345 = vunpack.c.l.b16 %v2292
        %v2346 = vunpack.c.l.b16 %v2293
        %v2347 = vunpack.c.l.b16 %v2294
        %v2348 = vunpack.c.l.b16 %v2295
        %v2349 = vunpack.c.l.b16 %v2296
        %v2350 = vunpack.c.l.b16 %v2297
        %v2351 = vunpack.c.l.b16 %v2298
        %v2352 = vunpack.c.l.b16 %v2299
        %v2353 = vunpack.c.l.b16 %v2300
        %v2354 = vunpack.c.l.b16 %v2301
        %v2355 = vunpack.c.l.b16 %v2302
        %v2356 = vunpack.c.l.b16 %v2303
        %v2357 = vunpack.c.l.b16 %v2304
        %v2358 = vpack.c.b16 %v2343, %v2342
        %v2359 = vpack.c.b16 %v2345, %v2344
        %v2360 = vpack.c.b16 %v2347, %v2346
        %v2361 = vpack.c.b16 %v2349, %v2348
        %v2362 = vpack.c.b16 %v2351, %v2350
        %v2363 = vpack.c.b16 %v2353, %v2352
        %v2364 = vpack.c.b16 %v2355, %v2354
        %v2365 = vpack.c.b16 %v2357, %v2356
        %2374 = vmatpush.bf16.msra.mxu0 %v2365
        %2375 = vmatpush.bf16.msra.mxu0 %v2364
        %2376 = vmatpush.bf16.msra.mxu0 %v2363
        %2377 = vmatpush.bf16.msra.mxu0 %v2362
        %2378 = vmatpush.bf16.msra.mxu0 %v2361
        %2379 = vmatpush.bf16.msra.mxu0 %v2360
        %2380 = vmatpush.bf16.msra.mxu0 %v2359
        %2381 = vmatpush.bf16.msra.mxu0 %v2358
        %2382 = vmatmul.bf16.gmra.mxu0 %v2324
        %v2383 = vpop.f32.mrf.mxu0
        %v2384 = vadd.f32 0.0, %v2383
        %v2385 = vpop.f32.mrf.mxu0
        %v2386 = vadd.f32 0.0, %v2385
        %2387 = vdwg.mxu0
        %v2388 = vadd.f32 %v2284, %v2384
        %v2389 = vadd.f32 %v2285, %v2386
        %v2390 = vld [vmem:[#allocation2 + $0x8] sm:$0xe]
        %v2391 = vunpack.c.l.bf16 %v2390
        %v2392 = vunpack.c.l.bf16 %v2287
        %v2393 = vunpack.c.l.bf16 %v2288
        %v2394 = vmul.f32 %v2391, %v1801
        %v2395 = vmul.f32 %v2392, %v1803
        %v2396 = vmul.f32 %v2393, %v1802
        %v2397 = vpack.c.bf16 %v2395, %v2394
        %v2398 = vpack.c.bf16 %v2396, %v2396
        %v2399 = vld [vmem:[%s3 + $0x20] sm:$0xf]
        %v2400 = vld [vmem:[%s3 + $0x44] sm:$0xf]
        %v2401 = vld [vmem:[%s3 + $0x68] sm:$0xf]
        %v2402 = vld [vmem:[%s3 + $0x8c] sm:$0xf]
        %v2403 = vld [vmem:[%s3 + $0xb0] sm:$0xf]
        %v2404 = vld [vmem:[%s3 + $0xd4] sm:$0xf]
        %v2405 = vld [vmem:[%s3 + $0xf8] sm:$0xf]
        %v2406 = vld [vmem:[%s3 + $0x11c] sm:$0xf]
        %v2407 = vld [vmem:[%s3 + $0x140] sm:$0xf]
        %v2408 = vld [vmem:[%s3 + $0x164] sm:$0xf]
        %v2409 = vld [vmem:[%s3 + $0x188] sm:$0xf]
        %v2410 = vld [vmem:[%s3 + $0x1ac] sm:$0xf]
        %v2411 = vld [vmem:[%s3 + $0x1d0] sm:$0xf]
        %v2412 = vld [vmem:[%s3 + $0x1f4] sm:$0xf]
        %v2413 = vld [vmem:[%s3 + $0x218] sm:$0xf]
        %v2414 = vld [vmem:[%s3 + $0x23c] sm:$0xf]
        %v2417 = vrot.slane %v2397, 1
        %v2418 = vrot.slane %v2398, 1
        %v2419 = vsel %vm1830, %v2417, %v2418
        %v2437 = vunpack.c.l.b16 %v2399
        %v2438 = vunpack.c.l.b16 %v2400
        %v2439 = vunpack.c.l.b16 %v2401
        %v2440 = vunpack.c.l.b16 %v2402
        %v2441 = vunpack.c.l.b16 %v2403
        %v2442 = vunpack.c.l.b16 %v2404
        %v2443 = vunpack.c.l.b16 %v2405
        %v2444 = vunpack.c.l.b16 %v2406
        %v2445 = vunpack.c.l.b16 %v2407
        %v2446 = vunpack.c.l.b16 %v2408
        %v2447 = vunpack.c.l.b16 %v2409
        %v2448 = vunpack.c.l.b16 %v2410
        %v2449 = vunpack.c.l.b16 %v2411
        %v2450 = vunpack.c.l.b16 %v2412
        %v2451 = vunpack.c.l.b16 %v2413
        %v2452 = vunpack.c.l.b16 %v2414
        %v2453 = vpack.c.b16 %v2438, %v2437
        %v2454 = vpack.c.b16 %v2440, %v2439
        %v2455 = vpack.c.b16 %v2442, %v2441
        %v2456 = vpack.c.b16 %v2444, %v2443
        %v2457 = vpack.c.b16 %v2446, %v2445
        %v2458 = vpack.c.b16 %v2448, %v2447
        %v2459 = vpack.c.b16 %v2450, %v2449
        %v2460 = vpack.c.b16 %v2452, %v2451
        %2469 = vmatpush.bf16.msra.mxu0 %v2460
        %2470 = vmatpush.bf16.msra.mxu0 %v2459
        %2471 = vmatpush.bf16.msra.mxu0 %v2458
        %2472 = vmatpush.bf16.msra.mxu0 %v2457
        %2473 = vmatpush.bf16.msra.mxu0 %v2456
        %2474 = vmatpush.bf16.msra.mxu0 %v2455
        %2475 = vmatpush.bf16.msra.mxu0 %v2454
        %2476 = vmatpush.bf16.msra.mxu0 %v2453
        %2477 = vmatmul.bf16.gmra.mxu0 %v2419
        %v2478 = vpop.f32.mrf.mxu0
        %v2479 = vadd.f32 0.0, %v2478
        %v2480 = vpop.f32.mrf.mxu0
        %v2481 = vadd.f32 0.0, %v2480
        %2482 = vdwg.mxu0
        %v2483 = vadd.f32 %v2388, %v2479
        %v2484 = vadd.f32 %v2389, %v2481
        %v2485 = vld [vmem:[%s4] sm:$0x1]
        %v2487 = vperm.slane %v2485, 0
        %v2489 = vadd.f32 %v2483, %v2487
        %v2490 = vadd.f32 %v2484, %v2487
        %v2491 = vmul.f32 %v2489, 0.5
        %v2492 = vmul.f32 %v2490, 0.5
        %v2493 = vmul.f32 %v2489, 0.044715
        %v2494 = vmul.f32 %v2490, 0.044715
        %v2495 = vmul.f32 %v2493, %v2489
        %v2496 = vmul.f32 %v2494, %v2490
        %v2497 = vmul.f32 %v2495, %v2489
        %v2498 = vmul.f32 %v2496, %v2490
        %v2499 = vadd.f32 %v2489, %v2497
        %v2500 = vadd.f32 %v2490, %v2498
        %v2501 = vmul.f32 %v2499, 0.7978846
        %v2502 = vmul.f32 %v2500, 0.7978846
        %v2503 = vtanh.pop %v2501
        %v2504 = vtanh.pop %v2502
        %v2505 = vadd.f32 %v2503, 1.0
        %v2506 = vadd.f32 %v2504, 1.0
        %v2507 = vmul.f32 %v2491, %v2505
        %v2508 = vmul.f32 %v2492, %v2506
        %v2509 = vpack.c.bf16 %v2507, %v2507
        %v2510 = vpack.c.bf16 %v2508, %v2508
        %v2512 = vshrl.u32 %v2509, 16
        %v2514 = vrot.slane %v2512, 5
        %v2515 = vshll.u32 %v2509, 16
        %v2517 = vrot.slane %v2515, 6
        %v2518 = vor.u32 %v2514, %v2517
        %v2519 = vrot.slane %v2518, 4
        %v2521 = vshrl.u32 %v2510, 16
        %v2523 = vrot.slane %v2521, 5
        %v2524 = vshll.u32 %v2510, 16
        %v2526 = vrot.slane %v2524, 6
        %v2527 = vor.u32 %v2523, %v2526
        %v2528 = vsel %vm860, %v2519, %v2527
        %v2529 = vrot.slane %v2527, 4
        %v2533 = vsel %vm885, %v2518, %v1899
        %2534 = vst [vmem:[#allocation2] sm:$0xc] %v2533
        %2535 = vst [vmem:[#allocation2 + $0x8] sm:$0xf] %v2528
        %v2536 = vld [vmem:[#allocation2 + $0x10] sm:$0x7]
        %v2537 = vsel %vm895, %v2529, %v2536
        %2538 = vst [vmem:[#allocation2 + $0x10] sm:$0x7] %v2537
        %v2539 = vld [vmem:[#allocation2] sm:$0xf]
        %v2540 = vld [vmem:[#allocation2 + $0x8] sm:$0xf]
        %v2541 = vunpack.c.l.bf16 %v2539
        %v2542 = vunpack.c.l.bf16 %v2540
        %v2543 = vmul.f32 %v2541, %v909
        %v2544 = vmul.f32 %v2542, %v910
        %v2545 = vpack.c.bf16 %v2544, %v2543
        %v2546 = vld [vmem:[%s5] sm:$0xf]
        %v2547 = vld [vmem:[%s5 + $0x8] sm:$0xf]
        %v2548 = vld [vmem:[%s5 + $0x10] sm:$0xf]
        %v2549 = vld [vmem:[%s5 + $0x18] sm:$0xf]
        %v2550 = vld [vmem:[%s5 + $0x20] sm:$0xf]
        %v2551 = vld [vmem:[%s5 + $0x28] sm:$0xf]
        %v2552 = vld [vmem:[%s5 + $0x30] sm:$0xf]
        %v2553 = vld [vmem:[%s5 + $0x38] sm:$0xf]
        %v2554 = vld [vmem:[%s5 + $0x40] sm:$0xf]
        %v2555 = vld [vmem:[%s5 + $0x48] sm:$0xf]
        %v2556 = vld [vmem:[%s5 + $0x50] sm:$0xf]
        %v2557 = vld [vmem:[%s5 + $0x58] sm:$0xf]
        %v2558 = vld [vmem:[%s5 + $0x60] sm:$0xf]
        %v2559 = vld [vmem:[%s5 + $0x68] sm:$0xf]
        %v2560 = vld [vmem:[%s5 + $0x70] sm:$0xf]
        %v2561 = vld [vmem:[%s5 + $0x78] sm:$0xf]
        %v2562 = vld [vmem:[#allocation2 + $0x10] sm:$0x1]
        %v2566 = vunpack.c.l.b16 %v2539
        %v2567 = vunpack.c.l.b16 %v2540
        %v2568 = vunpack.c.l.b16 %v2562
        %v2569 = vpack.c.b16 %v2567, %v2566
        %v2570 = vpack.c.b16 %v2568, %v2568
        %v2572 = vshrl.u32 %v2569, 16
        %v2574 = vshll.u32 %v2569, 16
        %v2576 = vrot.slane %v2574, 1
        %v2577 = vor.u32 %v2572, %v2576
        %v2579 = vshll.u32 %v2570, 16
        %v2581 = vrot.slane %v2579, 1
        %v2582 = vsel %vm979, %v2577, %v2581
        %v2600 = vunpack.c.l.b16 %v2546
        %v2601 = vunpack.c.l.b16 %v2547
        %v2602 = vunpack.c.l.b16 %v2548
        %v2603 = vunpack.c.l.b16 %v2549
        %v2604 = vunpack.c.l.b16 %v2550
        %v2605 = vunpack.c.l.b16 %v2551
        %v2606 = vunpack.c.l.b16 %v2552
        %v2607 = vunpack.c.l.b16 %v2553
        %v2608 = vunpack.c.l.b16 %v2554
        %v2609 = vunpack.c.l.b16 %v2555
        %v2610 = vunpack.c.l.b16 %v2556
        %v2611 = vunpack.c.l.b16 %v2557
        %v2612 = vunpack.c.l.b16 %v2558
        %v2613 = vunpack.c.l.b16 %v2559
        %v2614 = vunpack.c.l.b16 %v2560
        %v2615 = vunpack.c.l.b16 %v2561
        %v2616 = vpack.c.b16 %v2601, %v2600
        %v2617 = vpack.c.b16 %v2603, %v2602
        %v2618 = vpack.c.b16 %v2605, %v2604
        %v2619 = vpack.c.b16 %v2607, %v2606
        %v2620 = vpack.c.b16 %v2609, %v2608
        %v2621 = vpack.c.b16 %v2611, %v2610
        %v2622 = vpack.c.b16 %v2613, %v2612
        %v2623 = vpack.c.b16 %v2615, %v2614
        %2624 = vrot.lane.b32.xlu0 %v2616, 64
        %v2625 = vpop.permute.xlu0 %2624
        %2626 = vrot.lane.b32.xlu0 %v2617, 64
        %v2627 = vpop.permute.xlu0 %2626
        %2628 = vrot.lane.b32.xlu0 %v2618, 64
        %v2629 = vpop.permute.xlu0 %2628
        %2630 = vrot.lane.b32.xlu0 %v2619, 64
        %v2631 = vpop.permute.xlu0 %2630
        %2632 = vrot.lane.b32.xlu0 %v2620, 64
        %v2633 = vpop.permute.xlu0 %2632
        %2634 = vrot.lane.b32.xlu0 %v2621, 64
        %v2635 = vpop.permute.xlu0 %2634
        %2636 = vrot.lane.b32.xlu0 %v2622, 64
        %v2637 = vpop.permute.xlu0 %2636
        %2638 = vrot.lane.b32.xlu0 %v2623, 64
        %v2639 = vpop.permute.xlu0 %2638
        %2648 = vmatpush.bf16.msra.mxu0 %v2639
        %2649 = vmatpush.bf16.msra.mxu0 %v2637
        %2650 = vmatpush.bf16.msra.mxu0 %v2635
        %2651 = vmatpush.bf16.msra.mxu0 %v2633
        %2652 = vmatpush.bf16.msra.mxu0 %v2631
        %2653 = vmatpush.bf16.msra.mxu0 %v2629
        %2654 = vmatpush.bf16.msra.mxu0 %v2627
        %2655 = vmatpush.bf16.msra.mxu0 %v2625
        %2656 = vmatmul.bf16.gmra.mxu0 %v2582
        %v2657 = vpop.f32.mrf.mxu0
        %v2658 = vadd.f32 0.0, %v2657
        %v2659 = vpop.f32.mrf.mxu0
        %v2660 = vadd.f32 0.0, %v2659
        %2661 = vdwg.mxu0
        %2670 = vmatpush.bf16.msra.mxu0 %v2623
        %2671 = vmatpush.bf16.msra.mxu0 %v2622
        %2672 = vmatpush.bf16.msra.mxu0 %v2621
        %2673 = vmatpush.bf16.msra.mxu0 %v2620
        %2674 = vmatpush.bf16.msra.mxu0 %v2619
        %2675 = vmatpush.bf16.msra.mxu0 %v2618
        %2676 = vmatpush.bf16.msra.mxu0 %v2617
        %2677 = vmatpush.bf16.msra.mxu0 %v2616
        %2678 = vmatmul.bf16.gmra.mxu0 %v2545
        %v2679 = vpop.f32.mrf.mxu0
        %v2680 = vadd.f32 %v2658, %v2679
        %v2681 = vpop.f32.mrf.mxu0
        %v2682 = vadd.f32 %v2660, %v2681
        %2683 = vdwg.mxu0
        %v2684 = vld [vmem:[#allocation2] sm:$0xc]
        %v2685 = vld [vmem:[#allocation2 + $0x10] sm:$0x3]
        %v2686 = vunpack.c.l.bf16 %v2684
        %v2687 = vunpack.c.l.bf16 %v2685
        %v2688 = vmul.f32 %v2686, %v1220
        %v2689 = vmul.f32 %v2542, %v1222
        %v2690 = vmul.f32 %v2687, %v1221
        %v2691 = vpack.c.bf16 %v2689, %v2688
        %v2692 = vpack.c.bf16 %v2690, %v2690
        %v2693 = vld [vmem:[%s5 + $0x4] sm:$0xf]
        %v2694 = vld [vmem:[%s5 + $0xc] sm:$0xf]
        %v2695 = vld [vmem:[%s5 + $0x14] sm:$0xf]
        %v2696 = vld [vmem:[%s5 + $0x1c] sm:$0xf]
        %v2697 = vld [vmem:[%s5 + $0x24] sm:$0xf]
        %v2698 = vld [vmem:[%s5 + $0x2c] sm:$0xf]
        %v2699 = vld [vmem:[%s5 + $0x34] sm:$0xf]
        %v2700 = vld [vmem:[%s5 + $0x3c] sm:$0xf]
        %v2701 = vld [vmem:[%s5 + $0x44] sm:$0xf]
        %v2702 = vld [vmem:[%s5 + $0x4c] sm:$0xf]
        %v2703 = vld [vmem:[%s5 + $0x54] sm:$0xf]
        %v2704 = vld [vmem:[%s5 + $0x5c] sm:$0xf]
        %v2705 = vld [vmem:[%s5 + $0x64] sm:$0xf]
        %v2706 = vld [vmem:[%s5 + $0x6c] sm:$0xf]
        %v2707 = vld [vmem:[%s5 + $0x74] sm:$0xf]
        %v2708 = vld [vmem:[%s5 + $0x7c] sm:$0xf]
        %v2711 = vrot.slane %v2691, 2
        %v2712 = vrot.slane %v2692, 2
        %v2713 = vsel %vm1264, %v2711, %v2712
        %v2731 = vunpack.c.l.b16 %v2693
        %v2732 = vunpack.c.l.b16 %v2694
        %v2733 = vunpack.c.l.b16 %v2695
        %v2734 = vunpack.c.l.b16 %v2696
        %v2735 = vunpack.c.l.b16 %v2697
        %v2736 = vunpack.c.l.b16 %v2698
        %v2737 = vunpack.c.l.b16 %v2699
        %v2738 = vunpack.c.l.b16 %v2700
        %v2739 = vunpack.c.l.b16 %v2701
        %v2740 = vunpack.c.l.b16 %v2702
        %v2741 = vunpack.c.l.b16 %v2703
        %v2742 = vunpack.c.l.b16 %v2704
        %v2743 = vunpack.c.l.b16 %v2705
        %v2744 = vunpack.c.l.b16 %v2706
        %v2745 = vunpack.c.l.b16 %v2707
        %v2746 = vunpack.c.l.b16 %v2708
        %v2747 = vpack.c.b16 %v2732, %v2731
        %v2748 = vpack.c.b16 %v2734, %v2733
        %v2749 = vpack.c.b16 %v2736, %v2735
        %v2750 = vpack.c.b16 %v2738, %v2737
        %v2751 = vpack.c.b16 %v2740, %v2739
        %v2752 = vpack.c.b16 %v2742, %v2741
        %v2753 = vpack.c.b16 %v2744, %v2743
        %v2754 = vpack.c.b16 %v2746, %v2745
        %2763 = vmatpush.bf16.msra.mxu0 %v2754
        %2764 = vmatpush.bf16.msra.mxu0 %v2753
        %2765 = vmatpush.bf16.msra.mxu0 %v2752
        %2766 = vmatpush.bf16.msra.mxu0 %v2751
        %2767 = vmatpush.bf16.msra.mxu0 %v2750
        %2768 = vmatpush.bf16.msra.mxu0 %v2749
        %2769 = vmatpush.bf16.msra.mxu0 %v2748
        %2770 = vmatpush.bf16.msra.mxu0 %v2747
        %2771 = vmatmul.bf16.gmra.mxu0 %v2713
        %v2772 = vpop.f32.mrf.mxu0
        %v2773 = vadd.f32 0.0, %v2772
        %v2774 = vpop.f32.mrf.mxu0
        %v2775 = vadd.f32 0.0, %v2774
        %2776 = vdwg.mxu0
        %v2777 = vadd.f32 %v2680, %v2773
        %v2778 = vadd.f32 %v2682, %v2775
        %v2779 = vld [vmem:[#allocation2 + $0x10] sm:$0x7]
        %v2782 = vunpack.c.l.b16 %v2684
        %v2783 = vunpack.c.l.b16 %v2779
        %v2784 = vpack.c.b16 %v2567, %v2782
        %v2785 = vpack.c.b16 %v2783, %v2783
        %v2787 = vshrl.u32 %v2784, 16
        %v2789 = vrot.slane %v2787, 2
        %v2790 = vshll.u32 %v2784, 16
        %v2792 = vrot.slane %v2790, 3
        %v2793 = vor.u32 %v2789, %v2792
        %v2795 = vshrl.u32 %v2785, 16
        %v2797 = vrot.slane %v2795, 2
        %v2798 = vshll.u32 %v2785, 16
        %v2800 = vrot.slane %v2798, 3
        %v2801 = vor.u32 %v2797, %v2800
        %v2802 = vsel %vm1412, %v2793, %v2801
        %2804 = vrot.lane.b32.xlu0 %v2747, 64
        %v2805 = vpop.permute.xlu0 %2804
        %2806 = vrot.lane.b32.xlu0 %v2748, 64
        %v2807 = vpop.permute.xlu0 %2806
        %2808 = vrot.lane.b32.xlu0 %v2749, 64
        %v2809 = vpop.permute.xlu0 %2808
        %2810 = vrot.lane.b32.xlu0 %v2750, 64
        %v2811 = vpop.permute.xlu0 %2810
        %2812 = vrot.lane.b32.xlu0 %v2751, 64
        %v2813 = vpop.permute.xlu0 %2812
        %2814 = vrot.lane.b32.xlu0 %v2752, 64
        %v2815 = vpop.permute.xlu0 %2814
        %2816 = vrot.lane.b32.xlu0 %v2753, 64
        %v2817 = vpop.permute.xlu0 %2816
        %2818 = vrot.lane.b32.xlu0 %v2754, 64
        %v2819 = vpop.permute.xlu0 %2818
        %2828 = vmatpush.bf16.msra.mxu0 %v2819
        %2829 = vmatpush.bf16.msra.mxu0 %v2817
        %2830 = vmatpush.bf16.msra.mxu0 %v2815
        %2831 = vmatpush.bf16.msra.mxu0 %v2813
        %2832 = vmatpush.bf16.msra.mxu0 %v2811
        %2833 = vmatpush.bf16.msra.mxu0 %v2809
        %2834 = vmatpush.bf16.msra.mxu0 %v2807
        %2835 = vmatpush.bf16.msra.mxu0 %v2805
        %2836 = vmatmul.bf16.gmra.mxu0 %v2802
        %v2837 = vpop.f32.mrf.mxu0
        %v2838 = vadd.f32 0.0, %v2837
        %v2839 = vpop.f32.mrf.mxu0
        %v2840 = vadd.f32 0.0, %v2839
        %2841 = vdwg.mxu0
        %v2842 = vadd.f32 %v2777, %v2838
        %v2843 = vadd.f32 %v2778, %v2840
        %v2844 = vld [vmem:[%s6] sm:$0x1]
        %v2846 = vperm.slane %v2844, 0
        %v2848 = vadd.f32 %v2842, %v2846
        %v2849 = vadd.f32 %v2843, %v2846
        %v2850 = vmul.f32 %v2848, 0.5
        %v2851 = vmul.f32 %v2849, 0.5
        %v2852 = vmul.f32 %v2848, 0.044715
        %v2853 = vmul.f32 %v2849, 0.044715
        %v2854 = vmul.f32 %v2852, %v2848
        %v2855 = vmul.f32 %v2853, %v2849
        %v2856 = vmul.f32 %v2854, %v2848
        %v2857 = vmul.f32 %v2855, %v2849
        %v2858 = vadd.f32 %v2848, %v2856
        %v2859 = vadd.f32 %v2849, %v2857
        %v2860 = vmul.f32 %v2858, 0.7978846
        %v2861 = vmul.f32 %v2859, 0.7978846
        %v2862 = vtanh.pop %v2860
        %v2863 = vtanh.pop %v2861
        %v2864 = vadd.f32 %v2862, 1.0
        %v2865 = vadd.f32 %v2863, 1.0
        %v2866 = vmul.f32 %v2850, %v2864
        %v2867 = vmul.f32 %v2851, %v2865
        %v2868 = vpack.c.bf16 %v2866, %v2866
        %v2869 = vpack.c.bf16 %v2867, %v2867
        %v2871 = vshrl.u32 %v2868, 16
        %v2873 = vrot.slane %v2871, 5
        %v2874 = vshll.u32 %v2868, 16
        %v2876 = vrot.slane %v2874, 6
        %v2877 = vor.u32 %v2873, %v2876
        %v2878 = vrot.slane %v2877, 4
        %v2880 = vshrl.u32 %v2869, 16
        %v2882 = vrot.slane %v2880, 5
        %v2883 = vshll.u32 %v2869, 16
        %v2885 = vrot.slane %v2883, 6
        %v2886 = vor.u32 %v2882, %v2885
        %v2887 = vsel %vm860, %v2878, %v2886
        %v2888 = vrot.slane %v2886, 4
        %vm2892 = vcmask 519170
        %vm2893 = vmand %vm2892, %vm884
        %v2894 = vsel %vm2893, %v2877, %v2684
        %2895 = vst [vmem:[#allocation2] sm:$0xc] %v2894
        %vm2896 = vcmask 519168
        %2897 = vst.msk [vmem:[#allocation2 + $0x8] sm:$0xf] %vm2896, %v2887
        %vm2898 = vcmask 518144
        %vm2899 = vmand %vm2898, %vm858
        %v2900 = vld [vmem:[#allocation2 + $0x10] sm:$0x7]
        %v2901 = vsel %vm2899, %v2888, %v2900
        %2902 = vst [vmem:[#allocation2 + $0x10] sm:$0x7] %v2901
        %v2903 = vld [vmem:[#allocation2] sm:$0xf]
        %v2904 = vld [vmem:[#allocation2 + $0x8] sm:$0xf]
        %v2905 = vunpack.c.l.bf16 %v2903
        %v2906 = vunpack.c.l.bf16 %v2904
        %v2907 = vmul.f32 %v2905, %v909
        %v2908 = vmul.f32 %v2906, %v910
        %v2909 = vpack.c.bf16 %v2908, %v2907
        %v2910 = vld [vmem:[%s7] sm:$0xf]
        %v2911 = vld [vmem:[%s7 + $0x14] sm:$0xf]
        %v2912 = vld [vmem:[%s7 + $0x28] sm:$0xf]
        %v2913 = vld [vmem:[%s7 + $0x3c] sm:$0xf]
        %v2914 = vld [vmem:[%s7 + $0x50] sm:$0xf]
        %v2915 = vld [vmem:[%s7 + $0x64] sm:$0xf]
        %v2916 = vld [vmem:[%s7 + $0x78] sm:$0xf]
        %v2917 = vld [vmem:[%s7 + $0x8c] sm:$0xf]
        %v2918 = vld [vmem:[#allocation2 + $0x10] sm:$0x1]
        %v2922 = vunpack.c.l.b16 %v2903
        %v2923 = vunpack.c.l.b16 %v2904
        %v2924 = vunpack.c.l.b16 %v2918
        %v2925 = vpack.c.b16 %v2923, %v2922
        %v2926 = vpack.c.b16 %v2924, %v2924
        %v2928 = vshrl.u32 %v2925, 16
        %v2930 = vshll.u32 %v2925, 16
        %v2932 = vrot.slane %v2930, 1
        %v2933 = vor.u32 %v2928, %v2932
        %v2935 = vshll.u32 %v2926, 16
        %v2937 = vrot.slane %v2935, 1
        %v2938 = vsel %vm979, %v2933, %v2937
        %v2947 = vunpack.c.l.b16 %v2910
        %v2948 = vunpack.c.l.b16 %v2911
        %v2949 = vunpack.c.l.b16 %v2912
        %v2950 = vunpack.c.l.b16 %v2913
        %v2951 = vunpack.c.l.b16 %v2914
        %v2952 = vunpack.c.l.b16 %v2915
        %v2953 = vunpack.c.l.b16 %v2916
        %v2954 = vunpack.c.l.b16 %v2917
        %v2955 = vpack.c.b16 %v2948, %v2947
        %v2956 = vpack.c.b16 %v2950, %v2949
        %v2957 = vpack.c.b16 %v2952, %v2951
        %v2958 = vpack.c.b16 %v2954, %v2953
        %2959 = vrot.lane.b32.xlu0 %v2955, 64
        %v2960 = vpop.permute.xlu0 %2959
        %2961 = vrot.lane.b32.xlu0 %v2956, 64
        %v2962 = vpop.permute.xlu0 %2961
        %2963 = vrot.lane.b32.xlu0 %v2957, 64
        %v2964 = vpop.permute.xlu0 %2963
        %2965 = vrot.lane.b32.xlu0 %v2958, 64
        %v2966 = vpop.permute.xlu0 %2965
        %v2972 = vsel %vm1077, %v2938, 0
        %2974 = vmatpush.bf16.msra.mxu0 0
        %2975 = vmatpush.bf16.msra.mxu0 0
        %2976 = vmatpush.bf16.msra.mxu0 0
        %2977 = vmatpush.bf16.msra.mxu0 0
        %2978 = vmatpush.bf16.msra.mxu0 %v2966
        %2979 = vmatpush.bf16.msra.mxu0 %v2964
        %2980 = vmatpush.bf16.msra.mxu0 %v2962
        %2981 = vmatpush.bf16.msra.mxu0 %v2960
        %2982 = vmatmul.bf16.gmra.mxu0 %v2972
        %v2983 = vpop.f32.mrf.mxu0
        %v2984 = vadd.f32 0.0, %v2983
        %v2985 = vpop.f32.mrf.mxu0
        %v2986 = vadd.f32 0.0, %v2985
        %2987 = vdwg.mxu0
        %v2993 = vsel %vm1077, %v2909, 0
        %2995 = vmatpush.bf16.msra.mxu0 0
        %2996 = vmatpush.bf16.msra.mxu0 0
        %2997 = vmatpush.bf16.msra.mxu0 0
        %2998 = vmatpush.bf16.msra.mxu0 0
        %2999 = vmatpush.bf16.msra.mxu0 %v2958
        %3000 = vmatpush.bf16.msra.mxu0 %v2957
        %3001 = vmatpush.bf16.msra.mxu0 %v2956
        %3002 = vmatpush.bf16.msra.mxu0 %v2955
        %3003 = vmatmul.bf16.gmra.mxu0 %v2993
        %v3004 = vpop.f32.mrf.mxu0
        %v3005 = vadd.f32 %v2984, %v3004
        %v3006 = vpop.f32.mrf.mxu0
        %v3007 = vadd.f32 %v2986, %v3006
        %3008 = vdwg.mxu0
        %v3009 = vld [vmem:[#allocation2] sm:$0xe]
        %v3010 = vunpack.c.l.bf16 %v3009
        %v3011 = vunpack.c.l.bf16 %v2918
        %v3012 = vmul.f32 %v3010, %v1801
        %v3013 = vmul.f32 %v2906, %v1803
        %v3014 = vmul.f32 %v3011, %v1802
        %v3015 = vpack.c.bf16 %v3013, %v3012
        %v3016 = vpack.c.bf16 %v3014, %v3014
        %v3017 = vld [vmem:[%s7 + $0x4] sm:$0xf]
        %v3018 = vld [vmem:[%s7 + $0x18] sm:$0xf]
        %v3019 = vld [vmem:[%s7 + $0x2c] sm:$0xf]
        %v3020 = vld [vmem:[%s7 + $0x40] sm:$0xf]
        %v3021 = vld [vmem:[%s7 + $0x54] sm:$0xf]
        %v3022 = vld [vmem:[%s7 + $0x68] sm:$0xf]
        %v3023 = vld [vmem:[%s7 + $0x7c] sm:$0xf]
        %v3024 = vld [vmem:[%s7 + $0x90] sm:$0xf]
        %v3027 = vrot.slane %v3015, 1
        %v3028 = vrot.slane %v3016, 1
        %v3029 = vsel %vm1830, %v3027, %v3028
        %v3038 = vunpack.c.l.b16 %v3017
        %v3039 = vunpack.c.l.b16 %v3018
        %v3040 = vunpack.c.l.b16 %v3019
        %v3041 = vunpack.c.l.b16 %v3020
        %v3042 = vunpack.c.l.b16 %v3021
        %v3043 = vunpack.c.l.b16 %v3022
        %v3044 = vunpack.c.l.b16 %v3023
        %v3045 = vunpack.c.l.b16 %v3024
        %v3046 = vpack.c.b16 %v3039, %v3038
        %v3047 = vpack.c.b16 %v3041, %v3040
        %v3048 = vpack.c.b16 %v3043, %v3042
        %v3049 = vpack.c.b16 %v3045, %v3044
        %v3055 = vsel %vm1077, %v3029, 0
        %3057 = vmatpush.bf16.msra.mxu0 0
        %3058 = vmatpush.bf16.msra.mxu0 0
        %3059 = vmatpush.bf16.msra.mxu0 0
        %3060 = vmatpush.bf16.msra.mxu0 0
        %3061 = vmatpush.bf16.msra.mxu0 %v3049
        %3062 = vmatpush.bf16.msra.mxu0 %v3048
        %3063 = vmatpush.bf16.msra.mxu0 %v3047
        %3064 = vmatpush.bf16.msra.mxu0 %v3046
        %3065 = vmatmul.bf16.gmra.mxu0 %v3055
        %v3066 = vpop.f32.mrf.mxu0
        %v3067 = vadd.f32 0.0, %v3066
        %v3068 = vpop.f32.mrf.mxu0
        %v3069 = vadd.f32 0.0, %v3068
        %3070 = vdwg.mxu0
        %v3071 = vadd.f32 %v3005, %v3067
        %v3072 = vadd.f32 %v3007, %v3069
        %v3073 = vld [vmem:[#allocation2] sm:$0xc]
        %v3074 = vld [vmem:[#allocation2 + $0x10] sm:$0x3]
        %v3075 = vunpack.c.l.bf16 %v3073
        %v3076 = vunpack.c.l.bf16 %v3074
        %v3077 = vmul.f32 %v3075, %v1220
        %v3078 = vmul.f32 %v2906, %v1222
        %v3079 = vmul.f32 %v3076, %v1221
        %v3080 = vpack.c.bf16 %v3078, %v3077
        %v3081 = vpack.c.bf16 %v3079, %v3079
        %v3084 = vrot.slane %v3080, 2
        %v3085 = vrot.slane %v3081, 2
        %v3086 = vsel %vm1264, %v3084, %v3085
        %3087 = vrot.lane.b32.xlu0 %v3046, 64
        %v3088 = vpop.permute.xlu0 %3087
        %3089 = vrot.lane.b32.xlu0 %v3047, 64
        %v3090 = vpop.permute.xlu0 %3089
        %3091 = vrot.lane.b32.xlu0 %v3048, 64
        %v3092 = vpop.permute.xlu0 %3091
        %3093 = vrot.lane.b32.xlu0 %v3049, 64
        %v3094 = vpop.permute.xlu0 %3093
        %v3100 = vsel %vm1077, %v3086, 0
        %3102 = vmatpush.bf16.msra.mxu0 0
        %3103 = vmatpush.bf16.msra.mxu0 0
        %3104 = vmatpush.bf16.msra.mxu0 0
        %3105 = vmatpush.bf16.msra.mxu0 0
        %3106 = vmatpush.bf16.msra.mxu0 %v3094
        %3107 = vmatpush.bf16.msra.mxu0 %v3092
        %3108 = vmatpush.bf16.msra.mxu0 %v3090
        %3109 = vmatpush.bf16.msra.mxu0 %v3088
        %3110 = vmatmul.bf16.gmra.mxu0 %v3100
        %v3111 = vpop.f32.mrf.mxu0
        %v3112 = vadd.f32 0.0, %v3111
        %v3113 = vpop.f32.mrf.mxu0
        %v3114 = vadd.f32 0.0, %v3113
        %3115 = vdwg.mxu0
        %v3116 = vadd.f32 %v3071, %v3112
        %v3117 = vadd.f32 %v3072, %v3114
        %v3118 = vld [vmem:[#allocation2 + $0x10] sm:$0x7]
        %v3119 = vld [vmem:[%s7 + $0x8] sm:$0xf]
        %v3120 = vld [vmem:[%s7 + $0x1c] sm:$0xf]
        %v3121 = vld [vmem:[%s7 + $0x30] sm:$0xf]
        %v3122 = vld [vmem:[%s7 + $0x44] sm:$0xf]
        %v3123 = vld [vmem:[%s7 + $0x58] sm:$0xf]
        %v3124 = vld [vmem:[%s7 + $0x6c] sm:$0xf]
        %v3125 = vld [vmem:[%s7 + $0x80] sm:$0xf]
        %v3126 = vld [vmem:[%s7 + $0x94] sm:$0xf]
        %v3129 = vunpack.c.l.b16 %v3073
        %v3130 = vunpack.c.l.b16 %v3118
        %v3131 = vpack.c.b16 %v2923, %v3129
        %v3132 = vpack.c.b16 %v3130, %v3130
        %v3134 = vshrl.u32 %v3131, 16
        %v3136 = vrot.slane %v3134, 2
        %v3137 = vshll.u32 %v3131, 16
        %v3139 = vrot.slane %v3137, 3
        %v3140 = vor.u32 %v3136, %v3139
        %v3142 = vshrl.u32 %v3132, 16
        %v3144 = vrot.slane %v3142, 2
        %v3145 = vshll.u32 %v3132, 16
        %v3147 = vrot.slane %v3145, 3
        %v3148 = vor.u32 %v3144, %v3147
        %v3149 = vsel %vm1412, %v3140, %v3148
        %v3158 = vunpack.c.l.b16 %v3119
        %v3159 = vunpack.c.l.b16 %v3120
        %v3160 = vunpack.c.l.b16 %v3121
        %v3161 = vunpack.c.l.b16 %v3122
        %v3162 = vunpack.c.l.b16 %v3123
        %v3163 = vunpack.c.l.b16 %v3124
        %v3164 = vunpack.c.l.b16 %v3125
        %v3165 = vunpack.c.l.b16 %v3126
        %v3166 = vpack.c.b16 %v3159, %v3158
        %v3167 = vpack.c.b16 %v3161, %v3160
        %v3168 = vpack.c.b16 %v3163, %v3162
        %v3169 = vpack.c.b16 %v3165, %v3164
        %v3175 = vsel %vm1077, %v3149, 0
        %3177 = vmatpush.bf16.msra.mxu0 0
        %3178 = vmatpush.bf16.msra.mxu0 0
        %3179 = vmatpush.bf16.msra.mxu0 0
        %3180 = vmatpush.bf16.msra.mxu0 0
        %3181 = vmatpush.bf16.msra.mxu0 %v3169
        %3182 = vmatpush.bf16.msra.mxu0 %v3168
        %3183 = vmatpush.bf16.msra.mxu0 %v3167
        %3184 = vmatpush.bf16.msra.mxu0 %v3166
        %3185 = vmatmul.bf16.gmra.mxu0 %v3175
        %v3186 = vpop.f32.mrf.mxu0
        %v3187 = vadd.f32 0.0, %v3186
        %v3188 = vpop.f32.mrf.mxu0
        %v3189 = vadd.f32 0.0, %v3188
        %3190 = vdwg.mxu0
        %v3191 = vadd.f32 %v3116, %v3187
        %v3192 = vadd.f32 %v3117, %v3189
        %v3193 = vld [vmem:[#allocation2] sm:$0x8]
        %v3194 = vunpack.c.l.bf16 %v3193
        %v3195 = vunpack.c.l.bf16 %v3118
        %v3196 = vmul.f32 %v3194, %v2103
        %v3197 = vmul.f32 %v2906, %v2105
        %v3198 = vmul.f32 %v3195, %v2104
        %v3199 = vpack.c.bf16 %v3197, %v3196
        %v3200 = vpack.c.bf16 %v3198, %v3198
        %v3203 = vrot.slane %v3199, 3
        %v3204 = vrot.slane %v3200, 3
        %v3205 = vsel %vm2132, %v3203, %v3204
        %3206 = vrot.lane.b32.xlu0 %v3166, 64
        %v3207 = vpop.permute.xlu0 %3206
        %3208 = vrot.lane.b32.xlu0 %v3167, 64
        %v3209 = vpop.permute.xlu0 %3208
        %3210 = vrot.lane.b32.xlu0 %v3168, 64
        %v3211 = vpop.permute.xlu0 %3210
        %3212 = vrot.lane.b32.xlu0 %v3169, 64
        %v3213 = vpop.permute.xlu0 %3212
        %v3219 = vsel %vm1077, %v3205, 0
        %3221 = vmatpush.bf16.msra.mxu0 0
        %3222 = vmatpush.bf16.msra.mxu0 0
        %3223 = vmatpush.bf16.msra.mxu0 0
        %3224 = vmatpush.bf16.msra.mxu0 0
        %3225 = vmatpush.bf16.msra.mxu0 %v3213
        %3226 = vmatpush.bf16.msra.mxu0 %v3211
        %3227 = vmatpush.bf16.msra.mxu0 %v3209
        %3228 = vmatpush.bf16.msra.mxu0 %v3207
        %3229 = vmatmul.bf16.gmra.mxu0 %v3219
        %v3230 = vpop.f32.mrf.mxu0
        %v3231 = vadd.f32 0.0, %v3230
        %v3232 = vpop.f32.mrf.mxu0
        %v3233 = vadd.f32 0.0, %v3232
        %3234 = vdwg.mxu0
        %v3235 = vadd.f32 %v3191, %v3231
        %v3236 = vadd.f32 %v3192, %v3233
        %v3237 = vld [vmem:[#allocation2 + $0x10] sm:$0xf]
        %v3238 = vunpack.c.l.bf16 %v3237
        %v3239 = vmul.f32 %v2906, %v909
        %v3240 = vmul.f32 %v3238, %v910
        %v3241 = vpack.c.bf16 %v3240, %v3239
        %v3242 = vld [vmem:[%s7 + $0xc] sm:$0xf]
        %v3243 = vld [vmem:[%s7 + $0x20] sm:$0xf]
        %v3244 = vld [vmem:[%s7 + $0x34] sm:$0xf]
        %v3245 = vld [vmem:[%s7 + $0x48] sm:$0xf]
        %v3246 = vld [vmem:[%s7 + $0x5c] sm:$0xf]
        %v3247 = vld [vmem:[%s7 + $0x70] sm:$0xf]
        %v3248 = vld [vmem:[%s7 + $0x84] sm:$0xf]
        %v3249 = vld [vmem:[%s7 + $0x98] sm:$0xf]
        %v3258 = vunpack.c.l.b16 %v3242
        %v3259 = vunpack.c.l.b16 %v3243
        %v3260 = vunpack.c.l.b16 %v3244
        %v3261 = vunpack.c.l.b16 %v3245
        %v3262 = vunpack.c.l.b16 %v3246
        %v3263 = vunpack.c.l.b16 %v3247
        %v3264 = vunpack.c.l.b16 %v3248
        %v3265 = vunpack.c.l.b16 %v3249
        %v3266 = vpack.c.b16 %v3259, %v3258
        %v3267 = vpack.c.b16 %v3261, %v3260
        %v3268 = vpack.c.b16 %v3263, %v3262
        %v3269 = vpack.c.b16 %v3265, %v3264
        %v3275 = vsel %vm1077, %v3241, 0
        %3277 = vmatpush.bf16.msra.mxu0 0
        %3278 = vmatpush.bf16.msra.mxu0 0
        %3279 = vmatpush.bf16.msra.mxu0 0
        %3280 = vmatpush.bf16.msra.mxu0 0
        %3281 = vmatpush.bf16.msra.mxu0 %v3269
        %3282 = vmatpush.bf16.msra.mxu0 %v3268
        %3283 = vmatpush.bf16.msra.mxu0 %v3267
        %3284 = vmatpush.bf16.msra.mxu0 %v3266
        %3285 = vmatmul.bf16.gmra.mxu0 %v3275
        %v3286 = vpop.f32.mrf.mxu0
        %v3287 = vadd.f32 0.0, %v3286
        %v3288 = vpop.f32.mrf.mxu0
        %v3289 = vadd.f32 0.0, %v3288
        %3290 = vdwg.mxu0
        %v3291 = vadd.f32 %v3235, %v3287
        %v3292 = vadd.f32 %v3236, %v3289
        %v3293 = vld [vmem:[#allocation2 + $0x8] sm:$0xf]
        %v3294 = vld [vmem:[#allocation2 + $0x10] sm:$0xf]
        %v3295 = vld [vmem:[#allocation2 + $0x18] sm:$0x1]
        %v3299 = vunpack.c.l.b16 %v3293
        %v3300 = vunpack.c.l.b16 %v3294
        %v3301 = vunpack.c.l.b16 %v3295
        %v3302 = vpack.c.b16 %v3300, %v3299
        %v3303 = vpack.c.b16 %v3301, %v3301
        %v3305 = vshrl.u32 %v3302, 16
        %v3307 = vshll.u32 %v3302, 16
        %v3309 = vrot.slane %v3307, 1
        %v3310 = vor.u32 %v3305, %v3309
        %v3312 = vshll.u32 %v3303, 16
        %v3314 = vrot.slane %v3312, 1
        %v3315 = vsel %vm979, %v3310, %v3314
        %3316 = vrot.lane.b32.xlu0 %v3266, 64
        %v3317 = vpop.permute.xlu0 %3316
        %3318 = vrot.lane.b32.xlu0 %v3267, 64
        %v3319 = vpop.permute.xlu0 %3318
        %3320 = vrot.lane.b32.xlu0 %v3268, 64
        %v3321 = vpop.permute.xlu0 %3320
        %3322 = vrot.lane.b32.xlu0 %v3269, 64
        %v3323 = vpop.permute.xlu0 %3322
        %v3329 = vsel %vm1077, %v3315, 0
        %3331 = vmatpush.bf16.msra.mxu0 0
        %3332 = vmatpush.bf16.msra.mxu0 0
        %3333 = vmatpush.bf16.msra.mxu0 0
        %3334 = vmatpush.bf16.msra.mxu0 0
        %3335 = vmatpush.bf16.msra.mxu0 %v3323
        %3336 = vmatpush.bf16.msra.mxu0 %v3321
        %3337 = vmatpush.bf16.msra.mxu0 %v3319
        %3338 = vmatpush.bf16.msra.mxu0 %v3317
        %3339 = vmatmul.bf16.gmra.mxu0 %v3329
        %v3340 = vpop.f32.mrf.mxu0
        %v3341 = vadd.f32 0.0, %v3340
        %v3342 = vpop.f32.mrf.mxu0
        %v3343 = vadd.f32 0.0, %v3342
        %3344 = vdwg.mxu0
        %v3345 = vadd.f32 %v3291, %v3341
        %v3346 = vadd.f32 %v3292, %v3343
        %v3347 = vld [vmem:[#allocation2 + $0x8] sm:$0xe]
        %v3348 = vunpack.c.l.bf16 %v3347
        %v3349 = vunpack.c.l.bf16 %v3294
        %v3350 = vunpack.c.l.bf16 %v3295
        %v3351 = vmul.f32 %v3348, %v1801
        %v3352 = vmul.f32 %v3349, %v1803
        %v3353 = vmul.f32 %v3350, %v1802
        %v3354 = vpack.c.bf16 %v3352, %v3351
        %v3355 = vpack.c.bf16 %v3353, %v3353
        %v3356 = vld [vmem:[%s7 + $0x10] sm:$0xf]
        %v3357 = vld [vmem:[%s7 + $0x24] sm:$0xf]
        %v3358 = vld [vmem:[%s7 + $0x38] sm:$0xf]
        %v3359 = vld [vmem:[%s7 + $0x4c] sm:$0xf]
        %v3360 = vld [vmem:[%s7 + $0x60] sm:$0xf]
        %v3361 = vld [vmem:[%s7 + $0x74] sm:$0xf]
        %v3362 = vld [vmem:[%s7 + $0x88] sm:$0xf]
        %v3363 = vld [vmem:[%s7 + $0x9c] sm:$0xf]
        %v3366 = vrot.slane %v3354, 1
        %v3367 = vrot.slane %v3355, 1
        %v3368 = vsel %vm1830, %v3366, %v3367
        %v3377 = vunpack.c.l.b16 %v3356
        %v3378 = vunpack.c.l.b16 %v3357
        %v3379 = vunpack.c.l.b16 %v3358
        %v3380 = vunpack.c.l.b16 %v3359
        %v3381 = vunpack.c.l.b16 %v3360
        %v3382 = vunpack.c.l.b16 %v3361
        %v3383 = vunpack.c.l.b16 %v3362
        %v3384 = vunpack.c.l.b16 %v3363
        %v3385 = vpack.c.b16 %v3378, %v3377
        %v3386 = vpack.c.b16 %v3380, %v3379
        %v3387 = vpack.c.b16 %v3382, %v3381
        %v3388 = vpack.c.b16 %v3384, %v3383
        %v3394 = vsel %vm1077, %v3368, 0
        %3396 = vmatpush.bf16.msra.mxu0 0
        %3397 = vmatpush.bf16.msra.mxu0 0
        %3398 = vmatpush.bf16.msra.mxu0 0
        %3399 = vmatpush.bf16.msra.mxu0 0
        %3400 = vmatpush.bf16.msra.mxu0 %v3388
        %3401 = vmatpush.bf16.msra.mxu0 %v3387
        %3402 = vmatpush.bf16.msra.mxu0 %v3386
        %3403 = vmatpush.bf16.msra.mxu0 %v3385
        %3404 = vmatmul.bf16.gmra.mxu0 %v3394
        %v3405 = vpop.f32.mrf.mxu0
        %v3406 = vadd.f32 0.0, %v3405
        %v3407 = vpop.f32.mrf.mxu0
        %v3408 = vadd.f32 0.0, %v3407
        %3409 = vdwg.mxu0
        %v3410 = vadd.f32 %v3345, %v3406
        %v3411 = vadd.f32 %v3346, %v3408
        %v3412 = vld [vmem:[%s8] sm:$0x1]
        %v3414 = vperm.slane %v3412, 0
        %v3416 = vadd.f32 %v3410, %v3414
        %v3417 = vadd.f32 %v3411, %v3414
        %v3418 = vmul.f32 %v3416, 0.5
        %v3419 = vmul.f32 %v3417, 0.5
        %v3420 = vmul.f32 %v3416, 0.044715
        %v3421 = vmul.f32 %v3417, 0.044715
        %v3422 = vmul.f32 %v3420, %v3416
        %v3423 = vmul.f32 %v3421, %v3417
        %v3424 = vmul.f32 %v3422, %v3416
        %v3425 = vmul.f32 %v3423, %v3417
        %v3426 = vadd.f32 %v3416, %v3424
        %v3427 = vadd.f32 %v3417, %v3425
        %v3428 = vmul.f32 %v3426, 0.7978846
        %v3429 = vmul.f32 %v3427, 0.7978846
        %v3430 = vtanh.pop %v3428
        %v3431 = vtanh.pop %v3429
        %v3432 = vadd.f32 %v3430, 1.0
        %v3433 = vadd.f32 %v3431, 1.0
        %v3434 = vmul.f32 %v3418, %v3432
        %v3435 = vmul.f32 %v3419, %v3433
        %v3436 = vpack.c.bf16 %v3434, %v3434
        %v3437 = vpack.c.bf16 %v3435, %v3435
        %v3439 = vshrl.u32 %v3436, 16
        %v3441 = vrot.slane %v3439, 5
        %v3442 = vshll.u32 %v3436, 16
        %v3444 = vrot.slane %v3442, 6
        %v3445 = vor.u32 %v3441, %v3444
        %v3446 = vrot.slane %v3445, 4
        %v3448 = vshrl.u32 %v3437, 16
        %v3450 = vrot.slane %v3448, 5
        %v3451 = vshll.u32 %v3437, 16
        %v3453 = vrot.slane %v3451, 6
        %v3454 = vor.u32 %v3450, %v3453
        %v3455 = vsel %vm860, %v3446, %v3454
        %v3456 = vrot.slane %v3454, 4
        %v3460 = vsel %vm2893, %v3445, %v3073
        %3461 = vst [vmem:[#allocation2] sm:$0xc] %v3460
        %3462 = vst.msk [vmem:[#allocation2 + $0x8] sm:$0xf] %vm2896, %v3455
        %v3463 = vld [vmem:[#allocation2 + $0x10] sm:$0x7]
        %v3464 = vsel %vm2899, %v3456, %v3463
        %3465 = vst [vmem:[#allocation2 + $0x10] sm:$0x7] %v3464
        %v3466 = vld [vmem:[#allocation2] sm:$0xf]
        %v3467 = vld [vmem:[#allocation2 + $0x8] sm:$0xf]
        %v3468 = vunpack.c.l.bf16 %v3466
        %v3469 = vunpack.c.l.bf16 %v3467
        %v3470 = vmul.f32 %v3468, %v909
        %v3471 = vmul.f32 %v3469, %v910
        %v3472 = vpack.c.bf16 %v3471, %v3470
        %v3473 = vld [vmem:[%s9] sm:$0xf]
        %v3474 = vld [vmem:[%s9 + $0x4] sm:$0xf]
        %v3475 = vld [vmem:[%s9 + $0x8] sm:$0xf]
        %v3476 = vld [vmem:[%s9 + $0xc] sm:$0xf]
        %v3477 = vld [vmem:[%s9 + $0x10] sm:$0xf]
        %v3478 = vld [vmem:[%s9 + $0x14] sm:$0xf]
        %v3479 = vld [vmem:[%s9 + $0x18] sm:$0xf]
        %v3480 = vld [vmem:[%s9 + $0x1c] sm:$0xf]
        %v3481 = vld [vmem:[#allocation2 + $0x10] sm:$0x1]
        %v3485 = vunpack.c.l.b16 %v3466
        %v3486 = vunpack.c.l.b16 %v3467
        %v3487 = vunpack.c.l.b16 %v3481
        %v3488 = vpack.c.b16 %v3486, %v3485
        %v3489 = vpack.c.b16 %v3487, %v3487
        %v3491 = vshrl.u32 %v3488, 16
        %v3493 = vshll.u32 %v3488, 16
        %v3495 = vrot.slane %v3493, 1
        %v3496 = vor.u32 %v3491, %v3495
        %v3498 = vshll.u32 %v3489, 16
        %v3500 = vrot.slane %v3498, 1
        %v3501 = vsel %vm979, %v3496, %v3500
        %v3510 = vunpack.c.l.b16 %v3473
        %v3511 = vunpack.c.l.b16 %v3474
        %v3512 = vunpack.c.l.b16 %v3475
        %v3513 = vunpack.c.l.b16 %v3476
        %v3514 = vunpack.c.l.b16 %v3477
        %v3515 = vunpack.c.l.b16 %v3478
        %v3516 = vunpack.c.l.b16 %v3479
        %v3517 = vunpack.c.l.b16 %v3480
        %v3518 = vpack.c.b16 %v3511, %v3510
        %v3519 = vpack.c.b16 %v3513, %v3512
        %v3520 = vpack.c.b16 %v3515, %v3514
        %v3521 = vpack.c.b16 %v3517, %v3516
        %3522 = vrot.lane.b32.xlu0 %v3518, 112
        %v3523 = vpop.permute.xlu0 %3522
        %3524 = vrot.lane.b32.xlu0 %v3519, 112
        %v3525 = vpop.permute.xlu0 %3524
        %3526 = vrot.lane.b32.xlu0 %v3520, 112
        %v3527 = vpop.permute.xlu0 %3526
        %3528 = vrot.lane.b32.xlu0 %v3521, 112
        %v3529 = vpop.permute.xlu0 %3528
        %v3535 = vsel %vm1077, %v3501, 0
        %3537 = vmatpush.bf16.msra.mxu0 0
        %3538 = vmatpush.bf16.msra.mxu0 0
        %3539 = vmatpush.bf16.msra.mxu0 0
        %3540 = vmatpush.bf16.msra.mxu0 0
        %3541 = vmatpush.bf16.msra.mxu0 %v3529
        %3542 = vmatpush.bf16.msra.mxu0 %v3527
        %3543 = vmatpush.bf16.msra.mxu0 %v3525
        %3544 = vmatpush.bf16.msra.mxu0 %v3523
        %3545 = vmatmul.bf16.gmra.mxu0 %v3535
        %v3546 = vpop.f32.mrf.mxu0
        %v3547 = vadd.f32 0.0, %v3546
        %v3548 = vpop.f32.mrf.mxu0
        %v3549 = vadd.f32 0.0, %v3548
        %3550 = vdwg.mxu0
        %v3556 = vsel %vm1077, %v3472, 0
        %3558 = vmatpush.bf16.msra.mxu0 0
        %3559 = vmatpush.bf16.msra.mxu0 0
        %3560 = vmatpush.bf16.msra.mxu0 0
        %3561 = vmatpush.bf16.msra.mxu0 0
        %3562 = vmatpush.bf16.msra.mxu0 %v3521
        %3563 = vmatpush.bf16.msra.mxu0 %v3520
        %3564 = vmatpush.bf16.msra.mxu0 %v3519
        %3565 = vmatpush.bf16.msra.mxu0 %v3518
        %3566 = vmatmul.bf16.gmra.mxu0 %v3556
        %v3567 = vpop.f32.mrf.mxu0
        %v3568 = vadd.f32 %v3547, %v3567
        %v3569 = vpop.f32.mrf.mxu0
        %v3570 = vadd.f32 %v3549, %v3569
        %3571 = vdwg.mxu0
        %v3572 = vld [vmem:[#allocation2] sm:$0xc]
        %v3573 = vld [vmem:[#allocation2 + $0x10] sm:$0x3]
        %v3574 = vunpack.c.l.bf16 %v3572
        %v3575 = vunpack.c.l.bf16 %v3573
        %v3576 = vmul.f32 %v3574, %v1220
        %v3577 = vmul.f32 %v3469, %v1222
        %v3578 = vmul.f32 %v3575, %v1221
        %v3579 = vpack.c.bf16 %v3577, %v3576
        %v3580 = vpack.c.bf16 %v3578, %v3578
        %v3583 = vrot.slane %v3579, 2
        %v3584 = vrot.slane %v3580, 2
        %v3585 = vsel %vm1264, %v3583, %v3584
        %3586 = vrot.lane.b32.xlu0 %v3518, 96
        %v3587 = vpop.permute.xlu0 %3586
        %3588 = vrot.lane.b32.xlu0 %v3519, 96
        %v3589 = vpop.permute.xlu0 %3588
        %3590 = vrot.lane.b32.xlu0 %v3520, 96
        %v3591 = vpop.permute.xlu0 %3590
        %3592 = vrot.lane.b32.xlu0 %v3521, 96
        %v3593 = vpop.permute.xlu0 %3592
        %v3599 = vsel %vm1077, %v3585, 0
        %3601 = vmatpush.bf16.msra.mxu0 0
        %3602 = vmatpush.bf16.msra.mxu0 0
        %3603 = vmatpush.bf16.msra.mxu0 0
        %3604 = vmatpush.bf16.msra.mxu0 0
        %3605 = vmatpush.bf16.msra.mxu0 %v3593
        %3606 = vmatpush.bf16.msra.mxu0 %v3591
        %3607 = vmatpush.bf16.msra.mxu0 %v3589
        %3608 = vmatpush.bf16.msra.mxu0 %v3587
        %3609 = vmatmul.bf16.gmra.mxu0 %v3599
        %v3610 = vpop.f32.mrf.mxu0
        %v3611 = vadd.f32 0.0, %v3610
        %v3612 = vpop.f32.mrf.mxu0
        %v3613 = vadd.f32 0.0, %v3612
        %3614 = vdwg.mxu0
        %v3615 = vadd.f32 %v3568, %v3611
        %v3616 = vadd.f32 %v3570, %v3613
        %v3617 = vld [vmem:[#allocation2 + $0x10] sm:$0x7]
        %v3620 = vunpack.c.l.b16 %v3572
        %v3621 = vunpack.c.l.b16 %v3617
        %v3622 = vpack.c.b16 %v3486, %v3620
        %v3623 = vpack.c.b16 %v3621, %v3621
        %v3625 = vshrl.u32 %v3622, 16
        %v3627 = vrot.slane %v3625, 2
        %v3628 = vshll.u32 %v3622, 16
        %v3630 = vrot.slane %v3628, 3
        %v3631 = vor.u32 %v3627, %v3630
        %v3633 = vshrl.u32 %v3623, 16
        %v3635 = vrot.slane %v3633, 2
        %v3636 = vshll.u32 %v3623, 16
        %v3638 = vrot.slane %v3636, 3
        %v3639 = vor.u32 %v3635, %v3638
        %v3640 = vsel %vm1412, %v3631, %v3639
        %3641 = vrot.lane.b32.xlu0 %v3518, 80
        %v3642 = vpop.permute.xlu0 %3641
        %3643 = vrot.lane.b32.xlu0 %v3519, 80
        %v3644 = vpop.permute.xlu0 %3643
        %3645 = vrot.lane.b32.xlu0 %v3520, 80
        %v3646 = vpop.permute.xlu0 %3645
        %3647 = vrot.lane.b32.xlu0 %v3521, 80
        %v3648 = vpop.permute.xlu0 %3647
        %v3654 = vsel %vm1077, %v3640, 0
        %3656 = vmatpush.bf16.msra.mxu0 0
        %3657 = vmatpush.bf16.msra.mxu0 0
        %3658 = vmatpush.bf16.msra.mxu0 0
        %3659 = vmatpush.bf16.msra.mxu0 0
        %3660 = vmatpush.bf16.msra.mxu0 %v3648
        %3661 = vmatpush.bf16.msra.mxu0 %v3646
        %3662 = vmatpush.bf16.msra.mxu0 %v3644
        %3663 = vmatpush.bf16.msra.mxu0 %v3642
        %3664 = vmatmul.bf16.gmra.mxu0 %v3654
        %v3665 = vpop.f32.mrf.mxu0
        %v3666 = vadd.f32 0.0, %v3665
        %v3667 = vpop.f32.mrf.mxu0
        %v3668 = vadd.f32 0.0, %v3667
        %3669 = vdwg.mxu0
        %v3670 = vadd.f32 %v3615, %v3666
        %v3671 = vadd.f32 %v3616, %v3668
        %v3672 = vld [vmem:[%s10] sm:$0x1]
        %v3674 = vperm.slane %v3672, 0
        %v3676 = vadd.f32 %v3670, %v3674
        %v3677 = vadd.f32 %v3671, %v3674
        %v3678 = vmul.f32 %v3676, 0.5
        %v3679 = vmul.f32 %v3677, 0.5
        %v3680 = vmul.f32 %v3676, 0.044715
        %v3681 = vmul.f32 %v3677, 0.044715
        %v3682 = vmul.f32 %v3680, %v3676
        %v3683 = vmul.f32 %v3681, %v3677
        %v3684 = vmul.f32 %v3682, %v3676
        %v3685 = vmul.f32 %v3683, %v3677
        %v3686 = vadd.f32 %v3676, %v3684
        %v3687 = vadd.f32 %v3677, %v3685
        %v3688 = vmul.f32 %v3686, 0.7978846
        %v3689 = vmul.f32 %v3687, 0.7978846
        %v3690 = vtanh.pop %v3688
        %v3691 = vtanh.pop %v3689
        %v3692 = vadd.f32 %v3690, 1.0
        %v3693 = vadd.f32 %v3691, 1.0
        %v3694 = vmul.f32 %v3678, %v3692
        %v3695 = vmul.f32 %v3679, %v3693
        %v3696 = vpack.c.bf16 %v3694, %v3694
        %vm3697 = vcmask 122880
        %vm3698 = vsmask.f32 256
        %vm3699 = vmand %vm3697, %vm3698
        %v3700 = vld [vmem:[#allocation3] sm:$0x1]
        %v3701 = vsel %vm3699, %v3696, %v3700
        %3702 = vst [vmem:[#allocation3] sm:$0x1] %v3701
        %v3704 = vrot.slane %v3696, 3
        %v3707 = vsel %vm809, %v3696, %v3704
        %v3708 = vshrl.u32 %v3707, 16
        %v3710 = vrot.slane %v3708, 7
        %v3711 = vrot.slane %v3710, 1
        %3712 = vrot.lane.b32.xlu0 %v3711, 16
        %v3713 = vpop.permute.xlu0 %3712
        %vm3715 = vcmask 254080
        %vm3716 = vmand %vm3715, %vm3698
        %v3717 = vld [vmem:[#allocation3] sm:$0x1]
        %v3718 = vsel %vm3716, %v3713, %v3717
        %3719 = vst [vmem:[#allocation3] sm:$0x1] %v3718
        %3720 = vst [vmem:[#allocation1] sm:$0xff] %v3696
        %s3721 = scalar_lea.vmem [#allocation1], 1
        %v3722 = vld [vmem:[%s3721] ss:$4 sm:$0xff]
        %3724 = vrot.lane.b32.xlu0 %v3722, 32
        %v3725 = vpop.permute.xlu0 %3724
        %vm3727 = vcmask 385280
        %vm3728 = vmand %vm3727, %vm3698
        %v3729 = vld [vmem:[#allocation3] sm:$0x1]
        %v3730 = vsel %vm3728, %v3725, %v3729
        %3731 = vst [vmem:[#allocation3] sm:$0x1] %v3730
        %3732 = vst [vmem:[#allocation1] sm:$0xff] %v3696
        %s3733 = scalar_lea.vmem [#allocation1], 1
        %v3734 = vld [vmem:[%s3733] ss:$4 sm:$0xff]
        %v3735 = vshrl.u32 %v3734, 16
        %v3737 = vrot.slane %v3735, 7
        %v3738 = vrot.slane %v3737, 1
        %3739 = vrot.lane.b32.xlu0 %v3738, 48
        %v3740 = vpop.permute.xlu0 %3739
        %vm3742 = vcmask 516480
        %vm3743 = vmand %vm3742, %vm3698
        %v3744 = vld [vmem:[#allocation3] sm:$0x1]
        %v3745 = vsel %vm3743, %v3740, %v3744
        %3746 = vst [vmem:[#allocation3] sm:$0x1] %v3745
        %3747 = vst [vmem:[#allocation1] sm:$0xff] %v3696
        %s3748 = scalar_lea.vmem [#allocation1], 2
        %v3749 = vld [vmem:[%s3748] ss:$4 sm:$0xff]
        %3751 = vrot.lane.b32.xlu0 %v3749, 64
        %v3752 = vpop.permute.xlu0 %3751
        %vm3754 = vcmask 647680
        %vm3755 = vmand %vm3754, %vm3698
        %v3756 = vld [vmem:[#allocation3] sm:$0x1]
        %v3757 = vsel %vm3755, %v3752, %v3756
        %3758 = vst [vmem:[#allocation3] sm:$0x1] %v3757
        %3759 = vst [vmem:[#allocation1] sm:$0xff] %v3696
        %s3760 = scalar_lea.vmem [#allocation1], 2
        %v3761 = vld [vmem:[%s3760] ss:$4 sm:$0xff]
        %v3762 = vshrl.u32 %v3761, 16
        %v3764 = vrot.slane %v3762, 7
        %v3765 = vrot.slane %v3764, 1
        %3766 = vrot.lane.b32.xlu0 %v3765, 80
        %v3767 = vpop.permute.xlu0 %3766
        %vm3769 = vcmask 778880
        %vm3770 = vmand %vm3769, %vm3698
        %v3771 = vld [vmem:[#allocation3] sm:$0x1]
        %v3772 = vsel %vm3770, %v3767, %v3771
        %3773 = vst [vmem:[#allocation3] sm:$0x1] %v3772
        %3774 = vst [vmem:[#allocation1] sm:$0xff] %v3696
        %s3775 = scalar_lea.vmem [#allocation1], 3
        %v3776 = vld [vmem:[%s3775] ss:$4 sm:$0xff]
        %3778 = vrot.lane.b32.xlu0 %v3776, 96
        %v3779 = vpop.permute.xlu0 %3778
        %vm3781 = vcmask 910080
        %vm3782 = vmand %vm3781, %vm3698
        %v3783 = vld [vmem:[#allocation3] sm:$0x1]
        %v3784 = vsel %vm3782, %v3779, %v3783
        %3785 = vst [vmem:[#allocation3] sm:$0x1] %v3784
        %3786 = vst [vmem:[#allocation1] sm:$0xff] %v3696
        %s3787 = scalar_lea.vmem [#allocation1], 3
        %v3788 = vld [vmem:[%s3787] ss:$4 sm:$0xff]
        %v3789 = vshrl.u32 %v3788, 16
        %v3791 = vrot.slane %v3789, 7
        %v3792 = vrot.slane %v3791, 1
        %3793 = vrot.lane.b32.xlu0 %v3792, 112
        %v3794 = vpop.permute.xlu0 %3793
        %vm3796 = vcmask 1041280
        %vm3797 = vmand %vm3796, %vm3698
        %v3798 = vld [vmem:[#allocation3] sm:$0x1]
        %v3799 = vsel %vm3797, %v3794, %v3798
        %3800 = vst [vmem:[#allocation3] sm:$0x1] %v3799
        %v3801 = vpack.c.bf16 %v3695, %v3695
        %v3802 = vld [vmem:[#allocation3 + $0x1] sm:$0x1]
        %v3803 = vsel %vm3699, %v3801, %v3802
        %3804 = vst [vmem:[#allocation3 + $0x1] sm:$0x1] %v3803
        %v3806 = vrot.slane %v3801, 3
        %v3809 = vsel %vm809, %v3801, %v3806
        %v3810 = vshrl.u32 %v3809, 16
        %v3812 = vrot.slane %v3810, 7
        %v3813 = vrot.slane %v3812, 1
        %3814 = vrot.lane.b32.xlu0 %v3813, 16
        %v3815 = vpop.permute.xlu0 %3814
        %v3817 = vld [vmem:[#allocation3 + $0x1] sm:$0x1]
        %v3818 = vsel %vm3716, %v3815, %v3817
        %3819 = vst [vmem:[#allocation3 + $0x1] sm:$0x1] %v3818
        %3820 = vst [vmem:[#allocation1] sm:$0xff] %v3801
        %s3821 = scalar_lea.vmem [#allocation1], 1
        %v3822 = vld [vmem:[%s3821] ss:$4 sm:$0xff]
        %3824 = vrot.lane.b32.xlu0 %v3822, 32
        %v3825 = vpop.permute.xlu0 %3824
        %v3827 = vld [vmem:[#allocation3 + $0x1] sm:$0x1]
        %v3828 = vsel %vm3728, %v3825, %v3827
        %3829 = vst [vmem:[#allocation3 + $0x1] sm:$0x1] %v3828
        %3830 = vst [vmem:[#allocation1] sm:$0xff] %v3801
        %s3831 = scalar_lea.vmem [#allocation1], 1
        %v3832 = vld [vmem:[%s3831] ss:$4 sm:$0xff]
        %v3833 = vshrl.u32 %v3832, 16
        %v3835 = vrot.slane %v3833, 7
        %v3836 = vrot.slane %v3835, 1
        %3837 = vrot.lane.b32.xlu0 %v3836, 48
        %v3838 = vpop.permute.xlu0 %3837
        %v3840 = vld [vmem:[#allocation3 + $0x1] sm:$0x1]
        %v3841 = vsel %vm3743, %v3838, %v3840
        %3842 = vst [vmem:[#allocation3 + $0x1] sm:$0x1] %v3841
        %3843 = vst [vmem:[#allocation1] sm:$0xff] %v3801
        %s3844 = scalar_lea.vmem [#allocation1], 2
        %v3845 = vld [vmem:[%s3844] ss:$4 sm:$0xff]
        %3847 = vrot.lane.b32.xlu0 %v3845, 64
        %v3848 = vpop.permute.xlu0 %3847
        %v3850 = vld [vmem:[#allocation3 + $0x1] sm:$0x1]
        %v3851 = vsel %vm3755, %v3848, %v3850
        %3852 = vst [vmem:[#allocation3 + $0x1] sm:$0x1] %v3851
        %3853 = vst [vmem:[#allocation1] sm:$0xff] %v3801
        %s3854 = scalar_lea.vmem [#allocation1], 2
        %v3855 = vld [vmem:[%s3854] ss:$4 sm:$0xff]
        %v3856 = vshrl.u32 %v3855, 16
        %v3858 = vrot.slane %v3856, 7
        %v3859 = vrot.slane %v3858, 1
        %3860 = vrot.lane.b32.xlu0 %v3859, 80
        %v3861 = vpop.permute.xlu0 %3860
        %v3863 = vld [vmem:[#allocation3 + $0x1] sm:$0x1]
        %v3864 = vsel %vm3770, %v3861, %v3863
        %3865 = vst [vmem:[#allocation3 + $0x1] sm:$0x1] %v3864
        %3866 = vst [vmem:[#allocation1] sm:$0xff] %v3801
        %s3867 = scalar_lea.vmem [#allocation1], 3
        %v3868 = vld [vmem:[%s3867] ss:$4 sm:$0xff]
        %3870 = vrot.lane.b32.xlu0 %v3868, 96
        %v3871 = vpop.permute.xlu0 %3870
        %v3873 = vld [vmem:[#allocation3 + $0x1] sm:$0x1]
        %v3874 = vsel %vm3782, %v3871, %v3873
        %3875 = vst [vmem:[#allocation3 + $0x1] sm:$0x1] %v3874
        %3876 = vst [vmem:[#allocation1] sm:$0xff] %v3801
        %s3877 = scalar_lea.vmem [#allocation1], 3
        %v3878 = vld [vmem:[%s3877] ss:$4 sm:$0xff]
        %v3879 = vshrl.u32 %v3878, 16
        %v3881 = vrot.slane %v3879, 7
        %v3882 = vrot.slane %v3881, 1
        %3883 = vrot.lane.b32.xlu0 %v3882, 112
        %v3884 = vpop.permute.xlu0 %3883
        %v3886 = vld [vmem:[#allocation3 + $0x1] sm:$0x1]
        %v3887 = vsel %vm3797, %v3884, %v3886
        %3888 = vst [vmem:[#allocation3 + $0x1] sm:$0x1] %v3887
        %v3889 = vld [vmem:[#allocation3] sm:$0x3]
        %v3890 = vld [vmem:[%s11] sm:$0xf]
        %v3891 = vld [vmem:[%s11 + $0x4] sm:$0xf]
        %v3892 = vld [vmem:[%s11 + $0x8] sm:$0xf]
        %v3893 = vld [vmem:[%s11 + $0xc] sm:$0xf]
        %v3894 = vld [vmem:[%s11 + $0x10] sm:$0xf]
        %v3895 = vld [vmem:[%s11 + $0x14] sm:$0xf]
        %v3896 = vld [vmem:[%s11 + $0x18] sm:$0xf]
        %v3897 = vld [vmem:[%s11 + $0x1c] sm:$0xf]
        %v3898 = vld [vmem:[%s11 + $0x20] sm:$0xf]
        %v3899 = vld [vmem:[%s11 + $0x24] sm:$0xf]
        %v3900 = vld [vmem:[%s11 + $0x28] sm:$0xf]
        %v3901 = vld [vmem:[%s11 + $0x2c] sm:$0xf]
        %v3902 = vld [vmem:[%s11 + $0x30] sm:$0xf]
        %v3903 = vld [vmem:[%s11 + $0x34] sm:$0xf]
        %v3904 = vld [vmem:[%s11 + $0x38] sm:$0xf]
        %v3905 = vld [vmem:[%s11 + $0x3c] sm:$0xf]
        %v3906 = vld [vmem:[%s11 + $0x40] sm:$0xf]
        %v3907 = vld [vmem:[%s11 + $0x44] sm:$0xf]
        %v3908 = vld [vmem:[%s11 + $0x48] sm:$0xf]
        %v3909 = vld [vmem:[%s11 + $0x4c] sm:$0xf]
        %v3910 = vld [vmem:[%s11 + $0x50] sm:$0xf]
        %v3911 = vld [vmem:[%s11 + $0x54] sm:$0xf]
        %v3912 = vld [vmem:[%s11 + $0x58] sm:$0xf]
        %v3913 = vld [vmem:[%s11 + $0x5c] sm:$0xf]
        %v3914 = vld [vmem:[%s11 + $0x60] sm:$0xf]
        %v3915 = vld [vmem:[%s11 + $0x64] sm:$0xf]
        %v3916 = vld [vmem:[%s11 + $0x68] sm:$0xf]
        %v3917 = vld [vmem:[%s11 + $0x6c] sm:$0xf]
        %v3918 = vld [vmem:[%s11 + $0x70] sm:$0xf]
        %v3919 = vld [vmem:[%s11 + $0x74] sm:$0xf]
        %v3920 = vld [vmem:[%s11 + $0x78] sm:$0xf]
        %v3921 = vld [vmem:[%s11 + $0x7c] sm:$0xf]
        %v3922 = vld [vmem:[%s12] sm:$0x1]
        %3924 = vst [vmem:[#allocation1] ss:$9 sm:$0xff] %v3889
        %v3925 = vld [vmem:[#allocation1] sm:$0xff]
        %v3926 = vld [vmem:[#allocation1 + $0x9] sm:$0xff]
        %v3961 = vunpack.c.l.b16 %v3890
        %v3962 = vunpack.c.l.b16 %v3891
        %v3963 = vunpack.c.l.b16 %v3892
        %v3964 = vunpack.c.l.b16 %v3893
        %v3965 = vunpack.c.l.b16 %v3894
        %v3966 = vunpack.c.l.b16 %v3895
        %v3967 = vunpack.c.l.b16 %v3896
        %v3968 = vunpack.c.l.b16 %v3897
        %v3969 = vunpack.c.l.b16 %v3898
        %v3970 = vunpack.c.l.b16 %v3899
        %v3971 = vunpack.c.l.b16 %v3900
        %v3972 = vunpack.c.l.b16 %v3901
        %v3973 = vunpack.c.l.b16 %v3902
        %v3974 = vunpack.c.l.b16 %v3903
        %v3975 = vunpack.c.l.b16 %v3904
        %v3976 = vunpack.c.l.b16 %v3905
        %v3977 = vunpack.c.l.b16 %v3906
        %v3978 = vunpack.c.l.b16 %v3907
        %v3979 = vunpack.c.l.b16 %v3908
        %v3980 = vunpack.c.l.b16 %v3909
        %v3981 = vunpack.c.l.b16 %v3910
        %v3982 = vunpack.c.l.b16 %v3911
        %v3983 = vunpack.c.l.b16 %v3912
        %v3984 = vunpack.c.l.b16 %v3913
        %v3985 = vunpack.c.l.b16 %v3914
        %v3986 = vunpack.c.l.b16 %v3915
        %v3987 = vunpack.c.l.b16 %v3916
        %v3988 = vunpack.c.l.b16 %v3917
        %v3989 = vunpack.c.l.b16 %v3918
        %v3990 = vunpack.c.l.b16 %v3919
        %v3991 = vunpack.c.l.b16 %v3920
        %v3992 = vunpack.c.l.b16 %v3921
        %v3993 = vpack.c.b16 %v3962, %v3961
        %v3994 = vpack.c.b16 %v3964, %v3963
        %v3995 = vpack.c.b16 %v3966, %v3965
        %v3996 = vpack.c.b16 %v3968, %v3967
        %v3997 = vpack.c.b16 %v3970, %v3969
        %v3998 = vpack.c.b16 %v3972, %v3971
        %v3999 = vpack.c.b16 %v3974, %v3973
        %v4000 = vpack.c.b16 %v3976, %v3975
        %v4001 = vpack.c.b16 %v3978, %v3977
        %v4002 = vpack.c.b16 %v3980, %v3979
        %v4003 = vpack.c.b16 %v3982, %v3981
        %v4004 = vpack.c.b16 %v3984, %v3983
        %v4005 = vpack.c.b16 %v3986, %v3985
        %v4006 = vpack.c.b16 %v3988, %v3987
        %v4007 = vpack.c.b16 %v3990, %v3989
        %v4008 = vpack.c.b16 %v3992, %v3991
        %4025 = vmatpush.bf16.msra.mxu0 %v4000
        %4026 = vmatpush.bf16.msra.mxu0 %v3999
        %4027 = vmatpush.bf16.msra.mxu0 %v3998
        %4028 = vmatpush.bf16.msra.mxu0 %v3997
        %4029 = vmatpush.bf16.msra.mxu0 %v3996
        %4030 = vmatpush.bf16.msra.mxu0 %v3995
        %4031 = vmatpush.bf16.msra.mxu0 %v3994
        %4032 = vmatpush.bf16.msra.mxu0 %v3993
        %4033 = vmatmul.bf16.gmra.mxu0 %v3925
        %v4034 = vpop.f32.mrf.mxu0
        %v4035 = vadd.f32 %v3922, %v4034
        %v4036 = vpop.f32.mrf.mxu0
        %4037 = vdwg.mxu0
        %4038 = vmatpush.bf16.msra.mxu0 %v4008
        %4039 = vmatpush.bf16.msra.mxu0 %v4007
        %4040 = vmatpush.bf16.msra.mxu0 %v4006
        %4041 = vmatpush.bf16.msra.mxu0 %v4005
        %4042 = vmatpush.bf16.msra.mxu0 %v4004
        %4043 = vmatpush.bf16.msra.mxu0 %v4003
        %4044 = vmatpush.bf16.msra.mxu0 %v4002
        %4045 = vmatpush.bf16.msra.mxu0 %v4001
        %4046 = vmatmul.bf16.gmra.mxu0 %v3926
        %v4047 = vpop.f32.mrf.mxu0
        %v4048 = vadd.f32 %v4035, %v4047
        %v4049 = vpop.f32.mrf.mxu0
        %4050 = vdwg.mxu0
        %vm4051 = vcmask 253952
        %4052 = vst.msk [vmem:[%s791] sm:$0x1] %vm4051, %v4048
        %v4053 = vpack.c.bf16 %v4048, %v4048
        %v4054 = vld [vmem:[%s13] sm:$0xff]
        %v4055 = vld [vmem:[%s13 + $0x8] sm:$0xff]
        %v4056 = vld [vmem:[%s13 + $0x10] sm:$0xff]
        %v4057 = vld [vmem:[%s13 + $0x18] sm:$0xff]
        %v4058 = vld [vmem:[%s14] sm:$0x3]
        %v4063 = vunpack.c.l.b16 %v4054
        %v4064 = vunpack.c.h.b16 %v4054
        %v4065 = vunpack.c.l.b16 %v4055
        %v4066 = vunpack.c.h.b16 %v4055
        %v4067 = vunpack.c.l.b16 %v4056
        %v4068 = vunpack.c.h.b16 %v4056
        %v4069 = vunpack.c.l.b16 %v4057
        %v4070 = vunpack.c.h.b16 %v4057
        %v4071 = vpack.c.b16 %v4065, %v4063
        %v4072 = vpack.c.b16 %v4066, %v4064
        %v4073 = vpack.c.b16 %v4069, %v4067
        %v4074 = vpack.c.b16 %v4070, %v4068
        %v4080 = vperm.slane %v4058, 0
        %v4081 = vperm.slane %v4058, 1
        %vm4084 = vcmask 261120
        %v4086 = vsel %vm4084, %v4053, 0
        %4088 = vmatpush.bf16.msra.mxu0 0
        %4089 = vmatpush.bf16.msra.mxu0 0
        %4090 = vmatpush.bf16.msra.mxu0 0
        %4091 = vmatpush.bf16.msra.mxu0 0
        %4092 = vmatpush.bf16.msra.mxu0 0
        %4093 = vmatpush.bf16.msra.mxu0 0
        %4094 = vmatpush.bf16.msra.mxu0 %v4073
        %4095 = vmatpush.bf16.msra.mxu0 %v4071
        %4096 = vmatmul.bf16.gmra.mxu0 %v4086
        %v4097 = vpop.f32.mrf.mxu0
        %v4098 = vadd.f32 %v4080, %v4097
        %v4099 = vpop.f32.mrf.mxu0
        %4100 = vdwg.mxu0
        %4101 = vmatpush.bf16.msra.mxu0 0
        %4102 = vmatpush.bf16.msra.mxu0 0
        %4103 = vmatpush.bf16.msra.mxu0 0
        %4104 = vmatpush.bf16.msra.mxu0 0
        %4105 = vmatpush.bf16.msra.mxu0 0
        %4106 = vmatpush.bf16.msra.mxu0 0
        %4107 = vmatpush.bf16.msra.mxu0 %v4074
        %4108 = vmatpush.bf16.msra.mxu0 %v4072
        %4109 = vmatmul.bf16.gmra.mxu0 %v4086
        %v4110 = vpop.f32.mrf.mxu0
        %v4111 = vadd.f32 %v4081, %v4110
        %v4112 = vpop.f32.mrf.mxu0
        %4113 = vdwg.mxu0
        %v4114 = vmul.f32 %v4098, 0.5
        %v4115 = vmul.f32 %v4111, 0.5
        %v4116 = vmul.f32 %v4098, 0.044715
        %v4117 = vmul.f32 %v4111, 0.044715
        %v4118 = vmul.f32 %v4116, %v4098
        %v4119 = vmul.f32 %v4117, %v4111
        %v4120 = vmul.f32 %v4118, %v4098
        %v4121 = vmul.f32 %v4119, %v4111
        %v4122 = vadd.f32 %v4098, %v4120
        %v4123 = vadd.f32 %v4111, %v4121
        %v4124 = vmul.f32 %v4122, 0.7978846
        %v4125 = vmul.f32 %v4123, 0.7978846
        %v4126 = vtanh.pop %v4124
        %v4127 = vtanh.pop %v4125
        %v4128 = vadd.f32 %v4126, 1.0
        %v4129 = vadd.f32 %v4127, 1.0
        %v4130 = vmul.f32 %v4114, %v4128
        %v4131 = vmul.f32 %v4115, %v4129
        %v4132 = vpack.c.bf16 %v4130, %v4130
        %v4134 = vshll.u32 %v4132, 16
        %v4136 = vrot.slane %v4134, 6
        %vm4138 = vcmask 124930
        %vm4139 = vmand %vm4138, %vm884
        %v4140 = vld [vmem:[#allocation2] sm:$0x4]
        %v4141 = vsel %vm4139, %v4136, %v4140
        %4142 = vst [vmem:[#allocation2] sm:$0x4] %v4141
        %v4144 = vrot.slane %v4132, 5
        %4145 = vrot.lane.b32.xlu0 %v4144, 112
        %v4146 = vpop.permute.xlu0 %4145
        %vm4148 = vcmask 125955
        %vm4149 = vsmask.f32 3328
        %vm4150 = vmand %vm4148, %vm4149
        %v4151 = vld [vmem:[#allocation2] sm:$0x8]
        %v4152 = vsel %vm4150, %v4146, %v4151
        %4153 = vst [vmem:[#allocation2] sm:$0x8] %v4152
        %v4154 = vrot.slane %v4134, 5
        %4155 = vrot.lane.b32.xlu0 %v4154, 96
        %v4156 = vpop.permute.xlu0 %4155
        %vm4158 = vsmask.f32 7950
        %vm4159 = vmand %vm4148, %vm4158
        %v4160 = vld [vmem:[#allocation2] sm:$0x8]
        %v4161 = vsel %vm4159, %v4156, %v4160
        %4162 = vst [vmem:[#allocation2] sm:$0x8] %v4161
        %4163 = vrot.lane.b32.xlu0 %v4132, 80
        %v4164 = vpop.permute.xlu0 %4163
        %v4166 = vld [vmem:[#allocation2 + $0x8] sm:$0x1]
        %v4167 = vsel %vm3699, %v4164, %v4166
        %4168 = vst [vmem:[#allocation2 + $0x8] sm:$0x1] %v4167
        %4169 = vrot.lane.b32.xlu0 %v4134, 64
        %v4170 = vpop.permute.xlu0 %4169
        %vm4172 = vsmask.f32 7938
        %vm4173 = vmand %vm3697, %vm4172
        %v4174 = vld [vmem:[#allocation2 + $0x8] sm:$0x1]
        %v4175 = vsel %vm4173, %v4170, %v4174
        %4176 = vst [vmem:[#allocation2 + $0x8] sm:$0x1] %v4175
        %v4177 = vrot.slane %v4132, 7
        %4178 = vrot.lane.b32.xlu0 %v4177, 48
        %v4179 = vpop.permute.xlu0 %4178
        %vm4181 = vcmask 123905
        %vm4182 = vsmask.f32 1280
        %vm4183 = vmand %vm4181, %vm4182
        %v4184 = vld [vmem:[#allocation2 + $0x8] sm:$0x2]
        %v4185 = vsel %vm4183, %v4179, %v4184
        %4186 = vst [vmem:[#allocation2 + $0x8] sm:$0x2] %v4185
        %v4187 = vrot.slane %v4134, 7
        %4188 = vrot.lane.b32.xlu0 %v4187, 32
        %v4189 = vpop.permute.xlu0 %4188
        %vm4191 = vsmask.f32 7942
        %vm4192 = vmand %vm4181, %vm4191
        %v4193 = vld [vmem:[#allocation2 + $0x8] sm:$0x2]
        %v4194 = vsel %vm4192, %v4189, %v4193
        %4195 = vst [vmem:[#allocation2 + $0x8] sm:$0x2] %v4194
        %v4196 = vrot.slane %v4132, 6
        %4197 = vrot.lane.b32.xlu0 %v4196, 16
        %v4198 = vpop.permute.xlu0 %4197
        %vm4200 = vmand %vm4138, %vm858
        %v4201 = vld [vmem:[#allocation2 + $0x8] sm:$0x4]
        %v4202 = vsel %vm4200, %v4198, %v4201
        %4203 = vst [vmem:[#allocation2 + $0x8] sm:$0x4] %v4202
        %v4204 = vpack.c.bf16 %v4131, %v4131
        %v4206 = vshll.u32 %v4204, 16
        %v4208 = vrot.slane %v4206, 6
        %v4210 = vld [vmem:[#allocation2 + $0x8] sm:$0x4]
        %v4211 = vsel %vm4139, %v4208, %v4210
        %4212 = vst [vmem:[#allocation2 + $0x8] sm:$0x4] %v4211
        %v4214 = vrot.slane %v4204, 5
        %4215 = vrot.lane.b32.xlu0 %v4214, 112
        %v4216 = vpop.permute.xlu0 %4215
        %v4218 = vld [vmem:[#allocation2 + $0x8] sm:$0x8]
        %v4219 = vsel %vm4150, %v4216, %v4218
        %4220 = vst [vmem:[#allocation2 + $0x8] sm:$0x8] %v4219
        %v4221 = vrot.slane %v4206, 5
        %4222 = vrot.lane.b32.xlu0 %v4221, 96
        %v4223 = vpop.permute.xlu0 %4222
        %v4225 = vld [vmem:[#allocation2 + $0x8] sm:$0x8]
        %v4226 = vsel %vm4159, %v4223, %v4225
        %4227 = vst [vmem:[#allocation2 + $0x8] sm:$0x8] %v4226
        %4228 = vrot.lane.b32.xlu0 %v4204, 80
        %v4229 = vpop.permute.xlu0 %4228
        %v4231 = vld [vmem:[#allocation2 + $0x10] sm:$0x1]
        %v4232 = vsel %vm3699, %v4229, %v4231
        %4233 = vst [vmem:[#allocation2 + $0x10] sm:$0x1] %v4232
        %4234 = vrot.lane.b32.xlu0 %v4206, 64
        %v4235 = vpop.permute.xlu0 %4234
        %v4237 = vld [vmem:[#allocation2 + $0x10] sm:$0x1]
        %v4238 = vsel %vm4173, %v4235, %v4237
        %4239 = vst [vmem:[#allocation2 + $0x10] sm:$0x1] %v4238
        %v4240 = vrot.slane %v4204, 7
        %4241 = vrot.lane.b32.xlu0 %v4240, 48
        %v4242 = vpop.permute.xlu0 %4241
        %v4244 = vld [vmem:[#allocation2 + $0x10] sm:$0x2]
        %v4245 = vsel %vm4183, %v4242, %v4244
        %4246 = vst [vmem:[#allocation2 + $0x10] sm:$0x2] %v4245
        %v4247 = vrot.slane %v4206, 7
        %4248 = vrot.lane.b32.xlu0 %v4247, 32
        %v4249 = vpop.permute.xlu0 %4248
        %v4251 = vld [vmem:[#allocation2 + $0x10] sm:$0x2]
        %v4252 = vsel %vm4192, %v4249, %v4251
        %4253 = vst [vmem:[#allocation2 + $0x10] sm:$0x2] %v4252
        %v4254 = vrot.slane %v4204, 6
        %4255 = vrot.lane.b32.xlu0 %v4254, 16
        %v4256 = vpop.permute.xlu0 %4255
        %v4258 = vld [vmem:[#allocation2 + $0x10] sm:$0x4]
        %v4259 = vsel %vm4200, %v4256, %v4258
        %4260 = vst [vmem:[#allocation2 + $0x10] sm:$0x4] %v4259
        %v4261 = vld [vmem:[#allocation2] sm:$0xc]
        %v4262 = vld [vmem:[#allocation2 + $0x8] sm:$0xf]
        %v4263 = vld [vmem:[#allocation2 + $0x10] sm:$0x7]
        %4264 = vst [vmem:[#allocation2] sm:$0xc] %v4261
        %vm4265 = vcmask 125952
        %4266 = vst.msk [vmem:[#allocation2 + $0x8] sm:$0xf] %vm4265, %v4262
        %vm4267 = vcmask 124928
        %vm4268 = vmand %vm4267, %vm858
        %v4269 = vld [vmem:[#allocation2 + $0x10] sm:$0x7]
        %v4270 = vsel %vm4268, %v4263, %v4269
        %4271 = vst [vmem:[#allocation2 + $0x10] sm:$0x7] %v4270
        %v4272 = vld [vmem:[#allocation2] sm:$0xc]
        %v4273 = vld [vmem:[#allocation2 + $0x8] sm:$0xf]
        %v4274 = vld [vmem:[#allocation2 + $0x10] sm:$0x7]
        %v4275 = vld [vmem:[%s15] sm:$0xf]
        %v4276 = vld [vmem:[%s15 + $0x8] sm:$0xf]
        %v4277 = vld [vmem:[#allocation2] sm:$0x8]
        %v4278 = vunpack.c.l.bf16 %v4277
        %v4279 = vunpack.c.l.bf16 %v4273
        %v4280 = vunpack.c.l.bf16 %v4274
        %v4281 = vmul.f32 %v4278, %v2103
        %v4282 = vmul.f32 %v4279, %v2105
        %v4283 = vmul.f32 %v4280, %v2104
        %v4284 = vpack.c.bf16 %v4282, %v4281
        %v4285 = vpack.c.bf16 %v4283, %v4283
        %v4288 = vrot.slane %v4284, 3
        %v4289 = vrot.slane %v4285, 3
        %v4290 = vsel %vm2132, %v4288, %v4289
        %v4293 = vunpack.c.l.b16 %v4275
        %v4294 = vunpack.c.l.b16 %v4276
        %v4295 = vpack.c.b16 %v4294, %v4293
        %4296 = vrot.lane.b32.xlu0 %v4295, 64
        %v4297 = vpop.permute.xlu0 %4296
        %vm4299 = vcmask 130048
        %v4301 = vsel %vm4299, %v4290, 0
        %4303 = vmatpush.bf16.msra.mxu0 0
        %4304 = vmatpush.bf16.msra.mxu0 0
        %4305 = vmatpush.bf16.msra.mxu0 0
        %4306 = vmatpush.bf16.msra.mxu0 0
        %4307 = vmatpush.bf16.msra.mxu0 0
        %4308 = vmatpush.bf16.msra.mxu0 0
        %4309 = vmatpush.bf16.msra.mxu0 0
        %4310 = vmatpush.bf16.msra.mxu0 %v4297
        %4311 = vmatmul.bf16.gmra.mxu0 %v4301
        %v4312 = vpop.f32.mrf.mxu0
        %v4313 = vadd.f32 0.0, %v4312
        %v4314 = vpop.f32.mrf.mxu0
        %v4315 = vadd.f32 0.0, %v4314
        %4316 = vdwg.mxu0
        %v4320 = vunpack.c.l.b16 %v4272
        %v4321 = vunpack.c.l.b16 %v4273
        %v4322 = vunpack.c.l.b16 %v4274
        %v4323 = vpack.c.b16 %v4321, %v4320
        %v4324 = vpack.c.b16 %v4322, %v4322
        %v4326 = vshrl.u32 %v4323, 16
        %v4328 = vrot.slane %v4326, 2
        %v4329 = vshll.u32 %v4323, 16
        %v4331 = vrot.slane %v4329, 3
        %v4332 = vor.u32 %v4328, %v4331
        %v4334 = vshrl.u32 %v4324, 16
        %v4336 = vrot.slane %v4334, 2
        %v4337 = vshll.u32 %v4324, 16
        %v4339 = vrot.slane %v4337, 3
        %v4340 = vor.u32 %v4336, %v4339
        %v4341 = vsel %vm1412, %v4332, %v4340
        %v4344 = vsel %vm4299, %v4341, 0
        %4346 = vmatpush.bf16.msra.mxu0 0
        %4347 = vmatpush.bf16.msra.mxu0 0
        %4348 = vmatpush.bf16.msra.mxu0 0
        %4349 = vmatpush.bf16.msra.mxu0 0
        %4350 = vmatpush.bf16.msra.mxu0 0
        %4351 = vmatpush.bf16.msra.mxu0 0
        %4352 = vmatpush.bf16.msra.mxu0 0
        %4353 = vmatpush.bf16.msra.mxu0 %v4295
        %4354 = vmatmul.bf16.gmra.mxu0 %v4344
        %v4355 = vpop.f32.mrf.mxu0
        %v4356 = vadd.f32 %v4313, %v4355
        %v4357 = vpop.f32.mrf.mxu0
        %v4358 = vadd.f32 %v4315, %v4357
        %4359 = vdwg.mxu0
        %v4360 = vld [vmem:[#allocation2 + $0x8] sm:$0xf]
        %v4361 = vld [vmem:[#allocation2 + $0x10] sm:$0xf]
        %v4362 = vld [vmem:[#allocation2 + $0x18] sm:$0x1]
        %v4363 = vld [vmem:[%s15 + $0x4] sm:$0xf]
        %v4364 = vld [vmem:[%s15 + $0xc] sm:$0xf]
        %v4368 = vunpack.c.l.b16 %v4360
        %v4369 = vunpack.c.l.b16 %v4361
        %v4370 = vunpack.c.l.b16 %v4362
        %v4371 = vpack.c.b16 %v4369, %v4368
        %v4372 = vpack.c.b16 %v4370, %v4370
        %v4374 = vshrl.u32 %v4371, 16
        %v4376 = vshll.u32 %v4371, 16
        %v4378 = vrot.slane %v4376, 1
        %v4379 = vor.u32 %v4374, %v4378
        %v4381 = vshll.u32 %v4372, 16
        %v4383 = vrot.slane %v4381, 1
        %v4384 = vsel %vm979, %v4379, %v4383
        %v4387 = vunpack.c.l.b16 %v4363
        %v4388 = vunpack.c.l.b16 %v4364
        %v4389 = vpack.c.b16 %v4388, %v4387
        %v4392 = vsel %vm4299, %v4384, 0
        %4394 = vmatpush.bf16.msra.mxu0 0
        %4395 = vmatpush.bf16.msra.mxu0 0
        %4396 = vmatpush.bf16.msra.mxu0 0
        %4397 = vmatpush.bf16.msra.mxu0 0
        %4398 = vmatpush.bf16.msra.mxu0 0
        %4399 = vmatpush.bf16.msra.mxu0 0
        %4400 = vmatpush.bf16.msra.mxu0 0
        %4401 = vmatpush.bf16.msra.mxu0 %v4389
        %4402 = vmatmul.bf16.gmra.mxu0 %v4392
        %v4403 = vpop.f32.mrf.mxu0
        %v4404 = vadd.f32 0.0, %v4403
        %v4405 = vpop.f32.mrf.mxu0
        %v4406 = vadd.f32 0.0, %v4405
        %4407 = vdwg.mxu0
        %v4408 = vadd.f32 %v4356, %v4404
        %v4409 = vadd.f32 %v4358, %v4406
        %v4410 = vld [vmem:[#allocation2 + $0x8] sm:$0xe]
        %v4411 = vunpack.c.l.bf16 %v4410
        %v4412 = vunpack.c.l.bf16 %v4361
        %v4413 = vunpack.c.l.bf16 %v4362
        %v4414 = vmul.f32 %v4411, %v1801
        %v4415 = vmul.f32 %v4412, %v1803
        %v4416 = vmul.f32 %v4413, %v1802
        %v4417 = vpack.c.bf16 %v4415, %v4414
        %v4418 = vpack.c.bf16 %v4416, %v4416
        %v4421 = vrot.slane %v4417, 1
        %v4422 = vrot.slane %v4418, 1
        %v4423 = vsel %vm1830, %v4421, %v4422
        %4424 = vrot.lane.b32.xlu0 %v4389, 64
        %v4425 = vpop.permute.xlu0 %4424
        %v4428 = vsel %vm4299, %v4423, 0
        %4430 = vmatpush.bf16.msra.mxu0 0
        %4431 = vmatpush.bf16.msra.mxu0 0
        %4432 = vmatpush.bf16.msra.mxu0 0
        %4433 = vmatpush.bf16.msra.mxu0 0
        %4434 = vmatpush.bf16.msra.mxu0 0
        %4435 = vmatpush.bf16.msra.mxu0 0
        %4436 = vmatpush.bf16.msra.mxu0 0
        %4437 = vmatpush.bf16.msra.mxu0 %v4425
        %4438 = vmatmul.bf16.gmra.mxu0 %v4428
        %v4439 = vpop.f32.mrf.mxu0
        %v4440 = vadd.f32 0.0, %v4439
        %v4441 = vpop.f32.mrf.mxu0
        %v4442 = vadd.f32 0.0, %v4441
        %4443 = vdwg.mxu0
        %v4444 = vadd.f32 %v4408, %v4440
        %v4445 = vadd.f32 %v4409, %v4442
        %v4446 = vld [vmem:[%s16] sm:$0x1]
        %v4448 = vperm.slane %v4446, 0
        %v4450 = vadd.f32 %v4444, %v4448
        %v4451 = vadd.f32 %v4445, %v4448
        %v4452 = vmul.f32 %v4450, 0.5
        %v4453 = vmul.f32 %v4451, 0.5
        %v4454 = vmul.f32 %v4450, 0.044715
        %v4455 = vmul.f32 %v4451, 0.044715
        %v4456 = vmul.f32 %v4454, %v4450
        %v4457 = vmul.f32 %v4455, %v4451
        %v4458 = vmul.f32 %v4456, %v4450
        %v4459 = vmul.f32 %v4457, %v4451
        %v4460 = vadd.f32 %v4450, %v4458
        %v4461 = vadd.f32 %v4451, %v4459
        %v4462 = vmul.f32 %v4460, 0.7978846
        %v4463 = vmul.f32 %v4461, 0.7978846
        %v4464 = vtanh.pop %v4462
        %v4465 = vtanh.pop %v4463
        %v4466 = vadd.f32 %v4464, 1.0
        %v4467 = vadd.f32 %v4465, 1.0
        %v4468 = vmul.f32 %v4452, %v4466
        %v4469 = vmul.f32 %v4453, %v4467
        %v4470 = vpack.c.bf16 %v4468, %v4468
        %v4471 = vpack.c.bf16 %v4469, %v4469
        %v4473 = vshrl.u32 %v4470, 16
        %v4475 = vrot.slane %v4473, 5
        %v4476 = vshll.u32 %v4470, 16
        %v4478 = vrot.slane %v4476, 6
        %v4479 = vor.u32 %v4475, %v4478
        %v4480 = vrot.slane %v4479, 4
        %v4482 = vshrl.u32 %v4471, 16
        %v4484 = vrot.slane %v4482, 5
        %v4485 = vshll.u32 %v4471, 16
        %v4487 = vrot.slane %v4485, 6
        %v4488 = vor.u32 %v4484, %v4487
        %v4489 = vsel %vm860, %v4480, %v4488
        %v4490 = vrot.slane %v4488, 4
        %v4494 = vsel %vm2893, %v4479, %v4272
        %4495 = vst [vmem:[#allocation2] sm:$0xc] %v4494
        %4496 = vst.msk [vmem:[#allocation2 + $0x8] sm:$0xf] %vm2896, %v4489
        %v4497 = vld [vmem:[#allocation2 + $0x10] sm:$0x7]
        %v4498 = vsel %vm2899, %v4490, %v4497
        %4499 = vst [vmem:[#allocation2 + $0x10] sm:$0x7] %v4498
        %v4500 = vld [vmem:[#allocation2] sm:$0xf]
        %v4501 = vld [vmem:[#allocation2 + $0x8] sm:$0xf]
        %v4502 = vunpack.c.l.bf16 %v4500
        %v4503 = vunpack.c.l.bf16 %v4501
        %v4504 = vmul.f32 %v4502, %v909
        %v4505 = vmul.f32 %v4503, %v910
        %v4506 = vpack.c.bf16 %v4505, %v4504
        %v4507 = vld [vmem:[%s17] sm:$0xf]
        %v4508 = vld [vmem:[%s17 + $0x14] sm:$0xf]
        %v4509 = vld [vmem:[%s17 + $0x28] sm:$0xf]
        %v4510 = vld [vmem:[%s17 + $0x3c] sm:$0xf]
        %v4511 = vld [vmem:[%s17 + $0x50] sm:$0xf]
        %v4512 = vld [vmem:[%s17 + $0x64] sm:$0xf]
        %v4513 = vld [vmem:[%s17 + $0x78] sm:$0xf]
        %v4514 = vld [vmem:[%s17 + $0x8c] sm:$0xf]
        %v4515 = vld [vmem:[#allocation2 + $0x10] sm:$0x1]
        %v4519 = vunpack.c.l.b16 %v4500
        %v4520 = vunpack.c.l.b16 %v4501
        %v4521 = vunpack.c.l.b16 %v4515
        %v4522 = vpack.c.b16 %v4520, %v4519
        %v4523 = vpack.c.b16 %v4521, %v4521
        %v4525 = vshrl.u32 %v4522, 16
        %v4527 = vshll.u32 %v4522, 16
        %v4529 = vrot.slane %v4527, 1
        %v4530 = vor.u32 %v4525, %v4529
        %v4532 = vshll.u32 %v4523, 16
        %v4534 = vrot.slane %v4532, 1
        %v4535 = vsel %vm979, %v4530, %v4534
        %v4544 = vunpack.c.l.b16 %v4507
        %v4545 = vunpack.c.l.b16 %v4508
        %v4546 = vunpack.c.l.b16 %v4509
        %v4547 = vunpack.c.l.b16 %v4510
        %v4548 = vunpack.c.l.b16 %v4511
        %v4549 = vunpack.c.l.b16 %v4512
        %v4550 = vunpack.c.l.b16 %v4513
        %v4551 = vunpack.c.l.b16 %v4514
        %v4552 = vpack.c.b16 %v4545, %v4544
        %v4553 = vpack.c.b16 %v4547, %v4546
        %v4554 = vpack.c.b16 %v4549, %v4548
        %v4555 = vpack.c.b16 %v4551, %v4550
        %4556 = vrot.lane.b32.xlu0 %v4552, 64
        %v4557 = vpop.permute.xlu0 %4556
        %4558 = vrot.lane.b32.xlu0 %v4553, 64
        %v4559 = vpop.permute.xlu0 %4558
        %4560 = vrot.lane.b32.xlu0 %v4554, 64
        %v4561 = vpop.permute.xlu0 %4560
        %4562 = vrot.lane.b32.xlu0 %v4555, 64
        %v4563 = vpop.permute.xlu0 %4562
        %v4569 = vsel %vm1077, %v4535, 0
        %4571 = vmatpush.bf16.msra.mxu0 0
        %4572 = vmatpush.bf16.msra.mxu0 0
        %4573 = vmatpush.bf16.msra.mxu0 0
        %4574 = vmatpush.bf16.msra.mxu0 0
        %4575 = vmatpush.bf16.msra.mxu0 %v4563
        %4576 = vmatpush.bf16.msra.mxu0 %v4561
        %4577 = vmatpush.bf16.msra.mxu0 %v4559
        %4578 = vmatpush.bf16.msra.mxu0 %v4557
        %4579 = vmatmul.bf16.gmra.mxu0 %v4569
        %v4580 = vpop.f32.mrf.mxu0
        %v4581 = vadd.f32 0.0, %v4580
        %v4582 = vpop.f32.mrf.mxu0
        %v4583 = vadd.f32 0.0, %v4582
        %4584 = vdwg.mxu0
        %v4590 = vsel %vm1077, %v4506, 0
        %4592 = vmatpush.bf16.msra.mxu0 0
        %4593 = vmatpush.bf16.msra.mxu0 0
        %4594 = vmatpush.bf16.msra.mxu0 0
        %4595 = vmatpush.bf16.msra.mxu0 0
        %4596 = vmatpush.bf16.msra.mxu0 %v4555
        %4597 = vmatpush.bf16.msra.mxu0 %v4554
        %4598 = vmatpush.bf16.msra.mxu0 %v4553
        %4599 = vmatpush.bf16.msra.mxu0 %v4552
        %4600 = vmatmul.bf16.gmra.mxu0 %v4590
        %v4601 = vpop.f32.mrf.mxu0
        %v4602 = vadd.f32 %v4581, %v4601
        %v4603 = vpop.f32.mrf.mxu0
        %v4604 = vadd.f32 %v4583, %v4603
        %4605 = vdwg.mxu0
        %v4606 = vld [vmem:[#allocation2] sm:$0xe]
        %v4607 = vunpack.c.l.bf16 %v4606
        %v4608 = vunpack.c.l.bf16 %v4515
        %v4609 = vmul.f32 %v4607, %v1801
        %v4610 = vmul.f32 %v4503, %v1803
        %v4611 = vmul.f32 %v4608, %v1802
        %v4612 = vpack.c.bf16 %v4610, %v4609
        %v4613 = vpack.c.bf16 %v4611, %v4611
        %v4614 = vld [vmem:[%s17 + $0x4] sm:$0xf]
        %v4615 = vld [vmem:[%s17 + $0x18] sm:$0xf]
        %v4616 = vld [vmem:[%s17 + $0x2c] sm:$0xf]
        %v4617 = vld [vmem:[%s17 + $0x40] sm:$0xf]
        %v4618 = vld [vmem:[%s17 + $0x54] sm:$0xf]
        %v4619 = vld [vmem:[%s17 + $0x68] sm:$0xf]
        %v4620 = vld [vmem:[%s17 + $0x7c] sm:$0xf]
        %v4621 = vld [vmem:[%s17 + $0x90] sm:$0xf]
        %v4624 = vrot.slane %v4612, 1
        %v4625 = vrot.slane %v4613, 1
        %v4626 = vsel %vm1830, %v4624, %v4625
        %v4635 = vunpack.c.l.b16 %v4614
        %v4636 = vunpack.c.l.b16 %v4615
        %v4637 = vunpack.c.l.b16 %v4616
        %v4638 = vunpack.c.l.b16 %v4617
        %v4639 = vunpack.c.l.b16 %v4618
        %v4640 = vunpack.c.l.b16 %v4619
        %v4641 = vunpack.c.l.b16 %v4620
        %v4642 = vunpack.c.l.b16 %v4621
        %v4643 = vpack.c.b16 %v4636, %v4635
        %v4644 = vpack.c.b16 %v4638, %v4637
        %v4645 = vpack.c.b16 %v4640, %v4639
        %v4646 = vpack.c.b16 %v4642, %v4641
        %v4652 = vsel %vm1077, %v4626, 0
        %4654 = vmatpush.bf16.msra.mxu0 0
        %4655 = vmatpush.bf16.msra.mxu0 0
        %4656 = vmatpush.bf16.msra.mxu0 0
        %4657 = vmatpush.bf16.msra.mxu0 0
        %4658 = vmatpush.bf16.msra.mxu0 %v4646
        %4659 = vmatpush.bf16.msra.mxu0 %v4645
        %4660 = vmatpush.bf16.msra.mxu0 %v4644
        %4661 = vmatpush.bf16.msra.mxu0 %v4643
        %4662 = vmatmul.bf16.gmra.mxu0 %v4652
        %v4663 = vpop.f32.mrf.mxu0
        %v4664 = vadd.f32 0.0, %v4663
        %v4665 = vpop.f32.mrf.mxu0
        %v4666 = vadd.f32 0.0, %v4665
        %4667 = vdwg.mxu0
        %v4668 = vadd.f32 %v4602, %v4664
        %v4669 = vadd.f32 %v4604, %v4666
        %v4670 = vld [vmem:[#allocation2] sm:$0xc]
        %v4671 = vld [vmem:[#allocation2 + $0x10] sm:$0x3]
        %v4672 = vunpack.c.l.bf16 %v4670
        %v4673 = vunpack.c.l.bf16 %v4671
        %v4674 = vmul.f32 %v4672, %v1220
        %v4675 = vmul.f32 %v4503, %v1222
        %v4676 = vmul.f32 %v4673, %v1221
        %v4677 = vpack.c.bf16 %v4675, %v4674
        %v4678 = vpack.c.bf16 %v4676, %v4676
        %v4681 = vrot.slane %v4677, 2
        %v4682 = vrot.slane %v4678, 2
        %v4683 = vsel %vm1264, %v4681, %v4682
        %4684 = vrot.lane.b32.xlu0 %v4643, 64
        %v4685 = vpop.permute.xlu0 %4684
        %4686 = vrot.lane.b32.xlu0 %v4644, 64
        %v4687 = vpop.permute.xlu0 %4686
        %4688 = vrot.lane.b32.xlu0 %v4645, 64
        %v4689 = vpop.permute.xlu0 %4688
        %4690 = vrot.lane.b32.xlu0 %v4646, 64
        %v4691 = vpop.permute.xlu0 %4690
        %v4697 = vsel %vm1077, %v4683, 0
        %4699 = vmatpush.bf16.msra.mxu0 0
        %4700 = vmatpush.bf16.msra.mxu0 0
        %4701 = vmatpush.bf16.msra.mxu0 0
        %4702 = vmatpush.bf16.msra.mxu0 0
        %4703 = vmatpush.bf16.msra.mxu0 %v4691
        %4704 = vmatpush.bf16.msra.mxu0 %v4689
        %4705 = vmatpush.bf16.msra.mxu0 %v4687
        %4706 = vmatpush.bf16.msra.mxu0 %v4685
        %4707 = vmatmul.bf16.gmra.mxu0 %v4697
        %v4708 = vpop.f32.mrf.mxu0
        %v4709 = vadd.f32 0.0, %v4708
        %v4710 = vpop.f32.mrf.mxu0
        %v4711 = vadd.f32 0.0, %v4710
        %4712 = vdwg.mxu0
        %v4713 = vadd.f32 %v4668, %v4709
        %v4714 = vadd.f32 %v4669, %v4711
        %v4715 = vld [vmem:[#allocation2 + $0x10] sm:$0x7]
        %v4716 = vld [vmem:[%s17 + $0x8] sm:$0xf]
        %v4717 = vld [vmem:[%s17 + $0x1c] sm:$0xf]
        %v4718 = vld [vmem:[%s17 + $0x30] sm:$0xf]
        %v4719 = vld [vmem:[%s17 + $0x44] sm:$0xf]
        %v4720 = vld [vmem:[%s17 + $0x58] sm:$0xf]
        %v4721 = vld [vmem:[%s17 + $0x6c] sm:$0xf]
        %v4722 = vld [vmem:[%s17 + $0x80] sm:$0xf]
        %v4723 = vld [vmem:[%s17 + $0x94] sm:$0xf]
        %v4726 = vunpack.c.l.b16 %v4670
        %v4727 = vunpack.c.l.b16 %v4715
        %v4728 = vpack.c.b16 %v4520, %v4726
        %v4729 = vpack.c.b16 %v4727, %v4727
        %v4731 = vshrl.u32 %v4728, 16
        %v4733 = vrot.slane %v4731, 2
        %v4734 = vshll.u32 %v4728, 16
        %v4736 = vrot.slane %v4734, 3
        %v4737 = vor.u32 %v4733, %v4736
        %v4739 = vshrl.u32 %v4729, 16
        %v4741 = vrot.slane %v4739, 2
        %v4742 = vshll.u32 %v4729, 16
        %v4744 = vrot.slane %v4742, 3
        %v4745 = vor.u32 %v4741, %v4744
        %v4746 = vsel %vm1412, %v4737, %v4745
        %v4755 = vunpack.c.l.b16 %v4716
        %v4756 = vunpack.c.l.b16 %v4717
        %v4757 = vunpack.c.l.b16 %v4718
        %v4758 = vunpack.c.l.b16 %v4719
        %v4759 = vunpack.c.l.b16 %v4720
        %v4760 = vunpack.c.l.b16 %v4721
        %v4761 = vunpack.c.l.b16 %v4722
        %v4762 = vunpack.c.l.b16 %v4723
        %v4763 = vpack.c.b16 %v4756, %v4755
        %v4764 = vpack.c.b16 %v4758, %v4757
        %v4765 = vpack.c.b16 %v4760, %v4759
        %v4766 = vpack.c.b16 %v4762, %v4761
        %v4772 = vsel %vm1077, %v4746, 0
        %4774 = vmatpush.bf16.msra.mxu0 0
        %4775 = vmatpush.bf16.msra.mxu0 0
        %4776 = vmatpush.bf16.msra.mxu0 0
        %4777 = vmatpush.bf16.msra.mxu0 0
        %4778 = vmatpush.bf16.msra.mxu0 %v4766
        %4779 = vmatpush.bf16.msra.mxu0 %v4765
        %4780 = vmatpush.bf16.msra.mxu0 %v4764
        %4781 = vmatpush.bf16.msra.mxu0 %v4763
        %4782 = vmatmul.bf16.gmra.mxu0 %v4772
        %v4783 = vpop.f32.mrf.mxu0
        %v4784 = vadd.f32 0.0, %v4783
        %v4785 = vpop.f32.mrf.mxu0
        %v4786 = vadd.f32 0.0, %v4785
        %4787 = vdwg.mxu0
        %v4788 = vadd.f32 %v4713, %v4784
        %v4789 = vadd.f32 %v4714, %v4786
        %v4790 = vld [vmem:[#allocation2] sm:$0x8]
        %v4791 = vunpack.c.l.bf16 %v4790
        %v4792 = vunpack.c.l.bf16 %v4715
        %v4793 = vmul.f32 %v4791, %v2103
        %v4794 = vmul.f32 %v4503, %v2105
        %v4795 = vmul.f32 %v4792, %v2104
        %v4796 = vpack.c.bf16 %v4794, %v4793
        %v4797 = vpack.c.bf16 %v4795, %v4795
        %v4800 = vrot.slane %v4796, 3
        %v4801 = vrot.slane %v4797, 3
        %v4802 = vsel %vm2132, %v4800, %v4801
        %4803 = vrot.lane.b32.xlu0 %v4763, 64
        %v4804 = vpop.permute.xlu0 %4803
        %4805 = vrot.lane.b32.xlu0 %v4764, 64
        %v4806 = vpop.permute.xlu0 %4805
        %4807 = vrot.lane.b32.xlu0 %v4765, 64
        %v4808 = vpop.permute.xlu0 %4807
        %4809 = vrot.lane.b32.xlu0 %v4766, 64
        %v4810 = vpop.permute.xlu0 %4809
        %v4816 = vsel %vm1077, %v4802, 0
        %4818 = vmatpush.bf16.msra.mxu0 0
        %4819 = vmatpush.bf16.msra.mxu0 0
        %4820 = vmatpush.bf16.msra.mxu0 0
        %4821 = vmatpush.bf16.msra.mxu0 0
        %4822 = vmatpush.bf16.msra.mxu0 %v4810
        %4823 = vmatpush.bf16.msra.mxu0 %v4808
        %4824 = vmatpush.bf16.msra.mxu0 %v4806
        %4825 = vmatpush.bf16.msra.mxu0 %v4804
        %4826 = vmatmul.bf16.gmra.mxu0 %v4816
        %v4827 = vpop.f32.mrf.mxu0
        %v4828 = vadd.f32 0.0, %v4827
        %v4829 = vpop.f32.mrf.mxu0
        %v4830 = vadd.f32 0.0, %v4829
        %4831 = vdwg.mxu0
        %v4832 = vadd.f32 %v4788, %v4828
        %v4833 = vadd.f32 %v4789, %v4830
        %v4834 = vld [vmem:[#allocation2 + $0x10] sm:$0xf]
        %v4835 = vunpack.c.l.bf16 %v4834
        %v4836 = vmul.f32 %v4503, %v909
        %v4837 = vmul.f32 %v4835, %v910
        %v4838 = vpack.c.bf16 %v4837, %v4836
        %v4839 = vld [vmem:[%s17 + $0xc] sm:$0xf]
        %v4840 = vld [vmem:[%s17 + $0x20] sm:$0xf]
        %v4841 = vld [vmem:[%s17 + $0x34] sm:$0xf]
        %v4842 = vld [vmem:[%s17 + $0x48] sm:$0xf]
        %v4843 = vld [vmem:[%s17 + $0x5c] sm:$0xf]
        %v4844 = vld [vmem:[%s17 + $0x70] sm:$0xf]
        %v4845 = vld [vmem:[%s17 + $0x84] sm:$0xf]
        %v4846 = vld [vmem:[%s17 + $0x98] sm:$0xf]
        %v4855 = vunpack.c.l.b16 %v4839
        %v4856 = vunpack.c.l.b16 %v4840
        %v4857 = vunpack.c.l.b16 %v4841
        %v4858 = vunpack.c.l.b16 %v4842
        %v4859 = vunpack.c.l.b16 %v4843
        %v4860 = vunpack.c.l.b16 %v4844
        %v4861 = vunpack.c.l.b16 %v4845
        %v4862 = vunpack.c.l.b16 %v4846
        %v4863 = vpack.c.b16 %v4856, %v4855
        %v4864 = vpack.c.b16 %v4858, %v4857
        %v4865 = vpack.c.b16 %v4860, %v4859
        %v4866 = vpack.c.b16 %v4862, %v4861
        %v4872 = vsel %vm1077, %v4838, 0
        %4874 = vmatpush.bf16.msra.mxu0 0
        %4875 = vmatpush.bf16.msra.mxu0 0
        %4876 = vmatpush.bf16.msra.mxu0 0
        %4877 = vmatpush.bf16.msra.mxu0 0
        %4878 = vmatpush.bf16.msra.mxu0 %v4866
        %4879 = vmatpush.bf16.msra.mxu0 %v4865
        %4880 = vmatpush.bf16.msra.mxu0 %v4864
        %4881 = vmatpush.bf16.msra.mxu0 %v4863
        %4882 = vmatmul.bf16.gmra.mxu0 %v4872
        %v4883 = vpop.f32.mrf.mxu0
        %v4884 = vadd.f32 0.0, %v4883
        %v4885 = vpop.f32.mrf.mxu0
        %v4886 = vadd.f32 0.0, %v4885
        %4887 = vdwg.mxu0
        %v4888 = vadd.f32 %v4832, %v4884
        %v4889 = vadd.f32 %v4833, %v4886
        %v4890 = vld [vmem:[#allocation2 + $0x8] sm:$0xf]
        %v4891 = vld [vmem:[#allocation2 + $0x10] sm:$0xf]
        %v4892 = vld [vmem:[#allocation2 + $0x18] sm:$0x1]
        %v4896 = vunpack.c.l.b16 %v4890
        %v4897 = vunpack.c.l.b16 %v4891
        %v4898 = vunpack.c.l.b16 %v4892
        %v4899 = vpack.c.b16 %v4897, %v4896
        %v4900 = vpack.c.b16 %v4898, %v4898
        %v4902 = vshrl.u32 %v4899, 16
        %v4904 = vshll.u32 %v4899, 16
        %v4906 = vrot.slane %v4904, 1
        %v4907 = vor.u32 %v4902, %v4906
        %v4909 = vshll.u32 %v4900, 16
        %v4911 = vrot.slane %v4909, 1
        %v4912 = vsel %vm979, %v4907, %v4911
        %4913 = vrot.lane.b32.xlu0 %v4863, 64
        %v4914 = vpop.permute.xlu0 %4913
        %4915 = vrot.lane.b32.xlu0 %v4864, 64
        %v4916 = vpop.permute.xlu0 %4915
        %4917 = vrot.lane.b32.xlu0 %v4865, 64
        %v4918 = vpop.permute.xlu0 %4917
        %4919 = vrot.lane.b32.xlu0 %v4866, 64
        %v4920 = vpop.permute.xlu0 %4919
        %v4926 = vsel %vm1077, %v4912, 0
        %4928 = vmatpush.bf16.msra.mxu0 0
        %4929 = vmatpush.bf16.msra.mxu0 0
        %4930 = vmatpush.bf16.msra.mxu0 0
        %4931 = vmatpush.bf16.msra.mxu0 0
        %4932 = vmatpush.bf16.msra.mxu0 %v4920
        %4933 = vmatpush.bf16.msra.mxu0 %v4918
        %4934 = vmatpush.bf16.msra.mxu0 %v4916
        %4935 = vmatpush.bf16.msra.mxu0 %v4914
        %4936 = vmatmul.bf16.gmra.mxu0 %v4926
        %v4937 = vpop.f32.mrf.mxu0
        %v4938 = vadd.f32 0.0, %v4937
        %v4939 = vpop.f32.mrf.mxu0
        %v4940 = vadd.f32 0.0, %v4939
        %4941 = vdwg.mxu0
        %v4942 = vadd.f32 %v4888, %v4938
        %v4943 = vadd.f32 %v4889, %v4940
        %v4944 = vld [vmem:[#allocation2 + $0x8] sm:$0xe]
        %v4945 = vunpack.c.l.bf16 %v4944
        %v4946 = vunpack.c.l.bf16 %v4891
        %v4947 = vunpack.c.l.bf16 %v4892
        %v4948 = vmul.f32 %v4945, %v1801
        %v4949 = vmul.f32 %v4946, %v1803
        %v4950 = vmul.f32 %v4947, %v1802
        %v4951 = vpack.c.bf16 %v4949, %v4948
        %v4952 = vpack.c.bf16 %v4950, %v4950
        %v4953 = vld [vmem:[%s17 + $0x10] sm:$0xf]
        %v4954 = vld [vmem:[%s17 + $0x24] sm:$0xf]
        %v4955 = vld [vmem:[%s17 + $0x38] sm:$0xf]
        %v4956 = vld [vmem:[%s17 + $0x4c] sm:$0xf]
        %v4957 = vld [vmem:[%s17 + $0x60] sm:$0xf]
        %v4958 = vld [vmem:[%s17 + $0x74] sm:$0xf]
        %v4959 = vld [vmem:[%s17 + $0x88] sm:$0xf]
        %v4960 = vld [vmem:[%s17 + $0x9c] sm:$0xf]
        %v4963 = vrot.slane %v4951, 1
        %v4964 = vrot.slane %v4952, 1
        %v4965 = vsel %vm1830, %v4963, %v4964
        %v4974 = vunpack.c.l.b16 %v4953
        %v4975 = vunpack.c.l.b16 %v4954
        %v4976 = vunpack.c.l.b16 %v4955
        %v4977 = vunpack.c.l.b16 %v4956
        %v4978 = vunpack.c.l.b16 %v4957
        %v4979 = vunpack.c.l.b16 %v4958
        %v4980 = vunpack.c.l.b16 %v4959
        %v4981 = vunpack.c.l.b16 %v4960
        %v4982 = vpack.c.b16 %v4975, %v4974
        %v4983 = vpack.c.b16 %v4977, %v4976
        %v4984 = vpack.c.b16 %v4979, %v4978
        %v4985 = vpack.c.b16 %v4981, %v4980
        %v4991 = vsel %vm1077, %v4965, 0
        %4993 = vmatpush.bf16.msra.mxu0 0
        %4994 = vmatpush.bf16.msra.mxu0 0
        %4995 = vmatpush.bf16.msra.mxu0 0
        %4996 = vmatpush.bf16.msra.mxu0 0
        %4997 = vmatpush.bf16.msra.mxu0 %v4985
        %4998 = vmatpush.bf16.msra.mxu0 %v4984
        %4999 = vmatpush.bf16.msra.mxu0 %v4983
        %5000 = vmatpush.bf16.msra.mxu0 %v4982
        %5001 = vmatmul.bf16.gmra.mxu0 %v4991
        %v5002 = vpop.f32.mrf.mxu0
        %v5003 = vadd.f32 0.0, %v5002
        %v5004 = vpop.f32.mrf.mxu0
        %v5005 = vadd.f32 0.0, %v5004
        %5006 = vdwg.mxu0
        %v5007 = vadd.f32 %v4942, %v5003
        %v5008 = vadd.f32 %v4943, %v5005
        %v5009 = vld [vmem:[%s18] sm:$0x1]
        %v5011 = vperm.slane %v5009, 0
        %v5013 = vadd.f32 %v5007, %v5011
        %v5014 = vadd.f32 %v5008, %v5011
        %v5015 = vmul.f32 %v5013, 0.5
        %v5016 = vmul.f32 %v5014, 0.5
        %v5017 = vmul.f32 %v5013, 0.044715
        %v5018 = vmul.f32 %v5014, 0.044715
        %v5019 = vmul.f32 %v5017, %v5013
        %v5020 = vmul.f32 %v5018, %v5014
        %v5021 = vmul.f32 %v5019, %v5013
        %v5022 = vmul.f32 %v5020, %v5014
        %v5023 = vadd.f32 %v5013, %v5021
        %v5024 = vadd.f32 %v5014, %v5022
        %v5025 = vmul.f32 %v5023, 0.7978846
        %v5026 = vmul.f32 %v5024, 0.7978846
        %v5027 = vtanh.pop %v5025
        %v5028 = vtanh.pop %v5026
        %v5029 = vadd.f32 %v5027, 1.0
        %v5030 = vadd.f32 %v5028, 1.0
        %v5031 = vmul.f32 %v5015, %v5029
        %v5032 = vmul.f32 %v5016, %v5030
        %v5033 = vpack.c.bf16 %v5031, %v5031
        %v5034 = vpack.c.bf16 %v5032, %v5032
        %v5036 = vshrl.u32 %v5033, 16
        %v5038 = vrot.slane %v5036, 5
        %v5039 = vshll.u32 %v5033, 16
        %v5041 = vrot.slane %v5039, 6
        %v5042 = vor.u32 %v5038, %v5041
        %v5043 = vrot.slane %v5042, 4
        %v5045 = vshrl.u32 %v5034, 16
        %v5047 = vrot.slane %v5045, 5
        %v5048 = vshll.u32 %v5034, 16
        %v5050 = vrot.slane %v5048, 6
        %v5051 = vor.u32 %v5047, %v5050
        %v5052 = vsel %vm860, %v5043, %v5051
        %v5053 = vrot.slane %v5051, 4
        %v5057 = vsel %vm2893, %v5042, %v4670
        %5058 = vst [vmem:[#allocation2] sm:$0xc] %v5057
        %5059 = vst.msk [vmem:[#allocation2 + $0x8] sm:$0xf] %vm2896, %v5052
        %v5060 = vld [vmem:[#allocation2 + $0x10] sm:$0x7]
        %v5061 = vsel %vm2899, %v5053, %v5060
        %5062 = vst [vmem:[#allocation2 + $0x10] sm:$0x7] %v5061
        %v5063 = vld [vmem:[#allocation2] sm:$0xc]
        %v5064 = vld [vmem:[#allocation2 + $0x8] sm:$0xf]
        %v5065 = vld [vmem:[#allocation2 + $0x10] sm:$0x7]
        %v5066 = vld [vmem:[%s19] sm:$0xf]
        %v5067 = vld [vmem:[%s19 + $0x10] sm:$0xf]
        %v5068 = vld [vmem:[%s19 + $0x20] sm:$0xf]
        %v5069 = vld [vmem:[%s19 + $0x30] sm:$0xf]
        %v5070 = vld [vmem:[%s19 + $0x40] sm:$0xf]
        %v5071 = vld [vmem:[%s19 + $0x50] sm:$0xf]
        %v5072 = vld [vmem:[%s19 + $0x60] sm:$0xf]
        %v5073 = vld [vmem:[%s19 + $0x70] sm:$0xf]
        %v5074 = vld [vmem:[#allocation2] sm:$0x8]
        %v5075 = vunpack.c.l.bf16 %v5074
        %v5076 = vunpack.c.l.bf16 %v5064
        %v5077 = vunpack.c.l.bf16 %v5065
        %v5078 = vmul.f32 %v5075, %v2103
        %v5079 = vmul.f32 %v5076, %v2105
        %v5080 = vmul.f32 %v5077, %v2104
        %v5081 = vpack.c.bf16 %v5079, %v5078
        %v5082 = vpack.c.bf16 %v5080, %v5080
        %v5083 = vld [vmem:[%s19 + $0x4] sm:$0xf]
        %v5084 = vld [vmem:[%s19 + $0x14] sm:$0xf]
        %v5085 = vld [vmem:[%s19 + $0x24] sm:$0xf]
        %v5086 = vld [vmem:[%s19 + $0x34] sm:$0xf]
        %v5087 = vld [vmem:[%s19 + $0x44] sm:$0xf]
        %v5088 = vld [vmem:[%s19 + $0x54] sm:$0xf]
        %v5089 = vld [vmem:[%s19 + $0x64] sm:$0xf]
        %v5090 = vld [vmem:[%s19 + $0x74] sm:$0xf]
        %v5093 = vrot.slane %v5081, 3
        %v5094 = vrot.slane %v5082, 3
        %v5095 = vsel %vm2132, %v5093, %v5094
        %v5104 = vunpack.c.l.b16 %v5083
        %v5105 = vunpack.c.l.b16 %v5084
        %v5106 = vunpack.c.l.b16 %v5085
        %v5107 = vunpack.c.l.b16 %v5086
        %v5108 = vunpack.c.l.b16 %v5087
        %v5109 = vunpack.c.l.b16 %v5088
        %v5110 = vunpack.c.l.b16 %v5089
        %v5111 = vunpack.c.l.b16 %v5090
        %v5112 = vpack.c.b16 %v5105, %v5104
        %v5113 = vpack.c.b16 %v5107, %v5106
        %v5114 = vpack.c.b16 %v5109, %v5108
        %v5115 = vpack.c.b16 %v5111, %v5110
        %v5121 = vsel %vm1077, %v5095, 0
        %5123 = vmatpush.bf16.msra.mxu0 0
        %5124 = vmatpush.bf16.msra.mxu0 0
        %5125 = vmatpush.bf16.msra.mxu0 0
        %5126 = vmatpush.bf16.msra.mxu0 0
        %5127 = vmatpush.bf16.msra.mxu0 %v5115
        %5128 = vmatpush.bf16.msra.mxu0 %v5114
        %5129 = vmatpush.bf16.msra.mxu0 %v5113
        %5130 = vmatpush.bf16.msra.mxu0 %v5112
        %5131 = vmatmul.bf16.gmra.mxu0 %v5121
        %v5132 = vpop.f32.mrf.mxu0
        %v5133 = vadd.f32 0.0, %v5132
        %v5134 = vpop.f32.mrf.mxu0
        %v5135 = vadd.f32 0.0, %v5134
        %5136 = vdwg.mxu0
        %v5140 = vunpack.c.l.b16 %v5063
        %v5141 = vunpack.c.l.b16 %v5064
        %v5142 = vunpack.c.l.b16 %v5065
        %v5143 = vpack.c.b16 %v5141, %v5140
        %v5144 = vpack.c.b16 %v5142, %v5142
        %v5146 = vshrl.u32 %v5143, 16
        %v5148 = vrot.slane %v5146, 2
        %v5149 = vshll.u32 %v5143, 16
        %v5151 = vrot.slane %v5149, 3
        %v5152 = vor.u32 %v5148, %v5151
        %v5154 = vshrl.u32 %v5144, 16
        %v5156 = vrot.slane %v5154, 2
        %v5157 = vshll.u32 %v5144, 16
        %v5159 = vrot.slane %v5157, 3
        %v5160 = vor.u32 %v5156, %v5159
        %v5161 = vsel %vm1412, %v5152, %v5160
        %v5170 = vunpack.c.l.b16 %v5066
        %v5171 = vunpack.c.l.b16 %v5067
        %v5172 = vunpack.c.l.b16 %v5068
        %v5173 = vunpack.c.l.b16 %v5069
        %v5174 = vunpack.c.l.b16 %v5070
        %v5175 = vunpack.c.l.b16 %v5071
        %v5176 = vunpack.c.l.b16 %v5072
        %v5177 = vunpack.c.l.b16 %v5073
        %v5178 = vpack.c.b16 %v5171, %v5170
        %v5179 = vpack.c.b16 %v5173, %v5172
        %v5180 = vpack.c.b16 %v5175, %v5174
        %v5181 = vpack.c.b16 %v5177, %v5176
        %v5187 = vsel %vm1077, %v5161, 0
        %5189 = vmatpush.bf16.msra.mxu0 0
        %5190 = vmatpush.bf16.msra.mxu0 0
        %5191 = vmatpush.bf16.msra.mxu0 0
        %5192 = vmatpush.bf16.msra.mxu0 0
        %5193 = vmatpush.bf16.msra.mxu0 %v5181
        %5194 = vmatpush.bf16.msra.mxu0 %v5180
        %5195 = vmatpush.bf16.msra.mxu0 %v5179
        %5196 = vmatpush.bf16.msra.mxu0 %v5178
        %5197 = vmatmul.bf16.gmra.mxu0 %v5187
        %v5198 = vpop.f32.mrf.mxu0
        %v5199 = vadd.f32 %v5133, %v5198
        %v5200 = vpop.f32.mrf.mxu0
        %v5201 = vadd.f32 %v5135, %v5200
        %5202 = vdwg.mxu0
        %v5203 = vld [vmem:[#allocation2 + $0x8] sm:$0xf]
        %v5204 = vld [vmem:[#allocation2 + $0x10] sm:$0xf]
        %v5205 = vld [vmem:[#allocation2 + $0x18] sm:$0x1]
        %v5206 = vld [vmem:[%s19 + $0x8] sm:$0xf]
        %v5207 = vld [vmem:[%s19 + $0x18] sm:$0xf]
        %v5208 = vld [vmem:[%s19 + $0x28] sm:$0xf]
        %v5209 = vld [vmem:[%s19 + $0x38] sm:$0xf]
        %v5210 = vld [vmem:[%s19 + $0x48] sm:$0xf]
        %v5211 = vld [vmem:[%s19 + $0x58] sm:$0xf]
        %v5212 = vld [vmem:[%s19 + $0x68] sm:$0xf]
        %v5213 = vld [vmem:[%s19 + $0x78] sm:$0xf]
        %v5217 = vunpack.c.l.b16 %v5203
        %v5218 = vunpack.c.l.b16 %v5204
        %v5219 = vunpack.c.l.b16 %v5205
        %v5220 = vpack.c.b16 %v5218, %v5217
        %v5221 = vpack.c.b16 %v5219, %v5219
        %v5223 = vshrl.u32 %v5220, 16
        %v5225 = vshll.u32 %v5220, 16
        %v5227 = vrot.slane %v5225, 1
        %v5228 = vor.u32 %v5223, %v5227
        %v5230 = vshll.u32 %v5221, 16
        %v5232 = vrot.slane %v5230, 1
        %v5233 = vsel %vm979, %v5228, %v5232
        %v5242 = vunpack.c.l.b16 %v5206
        %v5243 = vunpack.c.l.b16 %v5207
        %v5244 = vunpack.c.l.b16 %v5208
        %v5245 = vunpack.c.l.b16 %v5209
        %v5246 = vunpack.c.l.b16 %v5210
        %v5247 = vunpack.c.l.b16 %v5211
        %v5248 = vunpack.c.l.b16 %v5212
        %v5249 = vunpack.c.l.b16 %v5213
        %v5250 = vpack.c.b16 %v5243, %v5242
        %v5251 = vpack.c.b16 %v5245, %v5244
        %v5252 = vpack.c.b16 %v5247, %v5246
        %v5253 = vpack.c.b16 %v5249, %v5248
        %v5259 = vsel %vm1077, %v5233, 0
        %5261 = vmatpush.bf16.msra.mxu0 0
        %5262 = vmatpush.bf16.msra.mxu0 0
        %5263 = vmatpush.bf16.msra.mxu0 0
        %5264 = vmatpush.bf16.msra.mxu0 0
        %5265 = vmatpush.bf16.msra.mxu0 %v5253
        %5266 = vmatpush.bf16.msra.mxu0 %v5252
        %5267 = vmatpush.bf16.msra.mxu0 %v5251
        %5268 = vmatpush.bf16.msra.mxu0 %v5250
        %5269 = vmatmul.bf16.gmra.mxu0 %v5259
        %v5270 = vpop.f32.mrf.mxu0
        %v5271 = vadd.f32 0.0, %v5270
        %v5272 = vpop.f32.mrf.mxu0
        %v5273 = vadd.f32 0.0, %v5272
        %5274 = vdwg.mxu0
        %v5275 = vadd.f32 %v5199, %v5271
        %v5276 = vadd.f32 %v5201, %v5273
        %v5277 = vld [vmem:[#allocation2 + $0x8] sm:$0xe]
        %v5278 = vunpack.c.l.bf16 %v5277
        %v5279 = vunpack.c.l.bf16 %v5204
        %v5280 = vunpack.c.l.bf16 %v5205
        %v5281 = vmul.f32 %v5278, %v1801
        %v5282 = vmul.f32 %v5279, %v1803
        %v5283 = vmul.f32 %v5280, %v1802
        %v5284 = vpack.c.bf16 %v5282, %v5281
        %v5285 = vpack.c.bf16 %v5283, %v5283
        %v5286 = vld [vmem:[%s19 + $0xc] sm:$0xf]
        %v5287 = vld [vmem:[%s19 + $0x1c] sm:$0xf]
        %v5288 = vld [vmem:[%s19 + $0x2c] sm:$0xf]
        %v5289 = vld [vmem:[%s19 + $0x3c] sm:$0xf]
        %v5290 = vld [vmem:[%s19 + $0x4c] sm:$0xf]
        %v5291 = vld [vmem:[%s19 + $0x5c] sm:$0xf]
        %v5292 = vld [vmem:[%s19 + $0x6c] sm:$0xf]
        %v5293 = vld [vmem:[%s19 + $0x7c] sm:$0xf]
        %v5296 = vrot.slane %v5284, 1
        %v5297 = vrot.slane %v5285, 1
        %v5298 = vsel %vm1830, %v5296, %v5297
        %v5307 = vunpack.c.l.b16 %v5286
        %v5308 = vunpack.c.l.b16 %v5287
        %v5309 = vunpack.c.l.b16 %v5288
        %v5310 = vunpack.c.l.b16 %v5289
        %v5311 = vunpack.c.l.b16 %v5290
        %v5312 = vunpack.c.l.b16 %v5291
        %v5313 = vunpack.c.l.b16 %v5292
        %v5314 = vunpack.c.l.b16 %v5293
        %v5315 = vpack.c.b16 %v5308, %v5307
        %v5316 = vpack.c.b16 %v5310, %v5309
        %v5317 = vpack.c.b16 %v5312, %v5311
        %v5318 = vpack.c.b16 %v5314, %v5313
        %v5324 = vsel %vm1077, %v5298, 0
        %5326 = vmatpush.bf16.msra.mxu0 0
        %5327 = vmatpush.bf16.msra.mxu0 0
        %5328 = vmatpush.bf16.msra.mxu0 0
        %5329 = vmatpush.bf16.msra.mxu0 0
        %5330 = vmatpush.bf16.msra.mxu0 %v5318
        %5331 = vmatpush.bf16.msra.mxu0 %v5317
        %5332 = vmatpush.bf16.msra.mxu0 %v5316
        %5333 = vmatpush.bf16.msra.mxu0 %v5315
        %5334 = vmatmul.bf16.gmra.mxu0 %v5324
        %v5335 = vpop.f32.mrf.mxu0
        %v5336 = vadd.f32 0.0, %v5335
        %v5337 = vpop.f32.mrf.mxu0
        %v5338 = vadd.f32 0.0, %v5337
        %5339 = vdwg.mxu0
        %v5340 = vadd.f32 %v5275, %v5336
        %v5341 = vadd.f32 %v5276, %v5338
        %v5342 = vld [vmem:[%s20] sm:$0x1]
        %v5344 = vperm.slane %v5342, 0
        %v5346 = vadd.f32 %v5340, %v5344
        %v5347 = vadd.f32 %v5341, %v5344
        %v5348 = vmul.f32 %v5346, 0.5
        %v5349 = vmul.f32 %v5347, 0.5
        %v5350 = vmul.f32 %v5346, 0.044715
        %v5351 = vmul.f32 %v5347, 0.044715
        %v5352 = vmul.f32 %v5350, %v5346
        %v5353 = vmul.f32 %v5351, %v5347
        %v5354 = vmul.f32 %v5352, %v5346
        %v5355 = vmul.f32 %v5353, %v5347
        %v5356 = vadd.f32 %v5346, %v5354
        %v5357 = vadd.f32 %v5347, %v5355
        %v5358 = vmul.f32 %v5356, 0.7978846
        %v5359 = vmul.f32 %v5357, 0.7978846
        %v5360 = vtanh.pop %v5358
        %v5361 = vtanh.pop %v5359
        %v5362 = vadd.f32 %v5360, 1.0
        %v5363 = vadd.f32 %v5361, 1.0
        %v5364 = vmul.f32 %v5348, %v5362
        %v5365 = vmul.f32 %v5349, %v5363
        %v5366 = vpack.c.bf16 %v5364, %v5364
        %v5367 = vpack.c.bf16 %v5365, %v5365
        %v5369 = vshrl.u32 %v5366, 16
        %v5371 = vrot.slane %v5369, 5
        %v5372 = vshll.u32 %v5366, 16
        %v5374 = vrot.slane %v5372, 6
        %v5375 = vor.u32 %v5371, %v5374
        %v5376 = vrot.slane %v5375, 4
        %v5378 = vshrl.u32 %v5367, 16
        %v5380 = vrot.slane %v5378, 5
        %v5381 = vshll.u32 %v5367, 16
        %v5383 = vrot.slane %v5381, 6
        %v5384 = vor.u32 %v5380, %v5383
        %v5385 = vsel %vm860, %v5376, %v5384
        %v5386 = vrot.slane %v5384, 4
        %v5390 = vsel %vm885, %v5375, %v5063
        %5391 = vst [vmem:[#allocation2] sm:$0xc] %v5390
        %5392 = vst [vmem:[#allocation2 + $0x8] sm:$0xf] %v5385
        %v5393 = vld [vmem:[#allocation2 + $0x10] sm:$0x7]
        %v5394 = vsel %vm895, %v5386, %v5393
        %5395 = vst [vmem:[#allocation2 + $0x10] sm:$0x7] %v5394
        %v5396 = vld [vmem:[#allocation2] sm:$0xf]
        %v5397 = vld [vmem:[#allocation2 + $0x8] sm:$0xf]
        %v5398 = vunpack.c.l.bf16 %v5396
        %v5399 = vunpack.c.l.bf16 %v5397
        %v5400 = vmul.f32 %v5398, %v909
        %v5401 = vmul.f32 %v5399, %v910
        %v5402 = vpack.c.bf16 %v5401, %v5400
        %v5403 = vld [vmem:[%s21] sm:$0xf]
        %v5404 = vld [vmem:[%s21 + $0x24] sm:$0xf]
        %v5405 = vld [vmem:[%s21 + $0x48] sm:$0xf]
        %v5406 = vld [vmem:[%s21 + $0x6c] sm:$0xf]
        %v5407 = vld [vmem:[%s21 + $0x90] sm:$0xf]
        %v5408 = vld [vmem:[%s21 + $0xb4] sm:$0xf]
        %v5409 = vld [vmem:[%s21 + $0xd8] sm:$0xf]
        %v5410 = vld [vmem:[%s21 + $0xfc] sm:$0xf]
        %v5411 = vld [vmem:[%s21 + $0x120] sm:$0xf]
        %v5412 = vld [vmem:[%s21 + $0x144] sm:$0xf]
        %v5413 = vld [vmem:[%s21 + $0x168] sm:$0xf]
        %v5414 = vld [vmem:[%s21 + $0x18c] sm:$0xf]
        %v5415 = vld [vmem:[%s21 + $0x1b0] sm:$0xf]
        %v5416 = vld [vmem:[%s21 + $0x1d4] sm:$0xf]
        %v5417 = vld [vmem:[%s21 + $0x1f8] sm:$0xf]
        %v5418 = vld [vmem:[%s21 + $0x21c] sm:$0xf]
        %v5419 = vld [vmem:[#allocation2 + $0x10] sm:$0x1]
        %v5420 = vld [vmem:[%s21 + $0x4] sm:$0xf]
        %v5421 = vld [vmem:[%s21 + $0x28] sm:$0xf]
        %v5422 = vld [vmem:[%s21 + $0x4c] sm:$0xf]
        %v5423 = vld [vmem:[%s21 + $0x70] sm:$0xf]
        %v5424 = vld [vmem:[%s21 + $0x94] sm:$0xf]
        %v5425 = vld [vmem:[%s21 + $0xb8] sm:$0xf]
        %v5426 = vld [vmem:[%s21 + $0xdc] sm:$0xf]
        %v5427 = vld [vmem:[%s21 + $0x100] sm:$0xf]
        %v5428 = vld [vmem:[%s21 + $0x124] sm:$0xf]
        %v5429 = vld [vmem:[%s21 + $0x148] sm:$0xf]
        %v5430 = vld [vmem:[%s21 + $0x16c] sm:$0xf]
        %v5431 = vld [vmem:[%s21 + $0x190] sm:$0xf]
        %v5432 = vld [vmem:[%s21 + $0x1b4] sm:$0xf]
        %v5433 = vld [vmem:[%s21 + $0x1d8] sm:$0xf]
        %v5434 = vld [vmem:[%s21 + $0x1fc] sm:$0xf]
        %v5435 = vld [vmem:[%s21 + $0x220] sm:$0xf]
        %v5439 = vunpack.c.l.b16 %v5396
        %v5440 = vunpack.c.l.b16 %v5397
        %v5441 = vunpack.c.l.b16 %v5419
        %v5442 = vpack.c.b16 %v5440, %v5439
        %v5443 = vpack.c.b16 %v5441, %v5441
        %v5445 = vshrl.u32 %v5442, 16
        %v5447 = vshll.u32 %v5442, 16
        %v5449 = vrot.slane %v5447, 1
        %v5450 = vor.u32 %v5445, %v5449
        %v5452 = vshll.u32 %v5443, 16
        %v5454 = vrot.slane %v5452, 1
        %v5455 = vsel %vm979, %v5450, %v5454
        %v5473 = vunpack.c.l.b16 %v5420
        %v5474 = vunpack.c.l.b16 %v5421
        %v5475 = vunpack.c.l.b16 %v5422
        %v5476 = vunpack.c.l.b16 %v5423
        %v5477 = vunpack.c.l.b16 %v5424
        %v5478 = vunpack.c.l.b16 %v5425
        %v5479 = vunpack.c.l.b16 %v5426
        %v5480 = vunpack.c.l.b16 %v5427
        %v5481 = vunpack.c.l.b16 %v5428
        %v5482 = vunpack.c.l.b16 %v5429
        %v5483 = vunpack.c.l.b16 %v5430
        %v5484 = vunpack.c.l.b16 %v5431
        %v5485 = vunpack.c.l.b16 %v5432
        %v5486 = vunpack.c.l.b16 %v5433
        %v5487 = vunpack.c.l.b16 %v5434
        %v5488 = vunpack.c.l.b16 %v5435
        %v5489 = vpack.c.b16 %v5474, %v5473
        %v5490 = vpack.c.b16 %v5476, %v5475
        %v5491 = vpack.c.b16 %v5478, %v5477
        %v5492 = vpack.c.b16 %v5480, %v5479
        %v5493 = vpack.c.b16 %v5482, %v5481
        %v5494 = vpack.c.b16 %v5484, %v5483
        %v5495 = vpack.c.b16 %v5486, %v5485
        %v5496 = vpack.c.b16 %v5488, %v5487
        %5505 = vmatpush.bf16.msra.mxu0 %v5496
        %5506 = vmatpush.bf16.msra.mxu0 %v5495
        %5507 = vmatpush.bf16.msra.mxu0 %v5494
        %5508 = vmatpush.bf16.msra.mxu0 %v5493
        %5509 = vmatpush.bf16.msra.mxu0 %v5492
        %5510 = vmatpush.bf16.msra.mxu0 %v5491
        %5511 = vmatpush.bf16.msra.mxu0 %v5490
        %5512 = vmatpush.bf16.msra.mxu0 %v5489
        %5513 = vmatmul.bf16.gmra.mxu0 %v5455
        %v5514 = vpop.f32.mrf.mxu0
        %v5515 = vadd.f32 0.0, %v5514
        %v5516 = vpop.f32.mrf.mxu0
        %v5517 = vadd.f32 0.0, %v5516
        %5518 = vdwg.mxu0
        %v5535 = vunpack.c.l.b16 %v5403
        %v5536 = vunpack.c.l.b16 %v5404
        %v5537 = vunpack.c.l.b16 %v5405
        %v5538 = vunpack.c.l.b16 %v5406
        %v5539 = vunpack.c.l.b16 %v5407
        %v5540 = vunpack.c.l.b16 %v5408
        %v5541 = vunpack.c.l.b16 %v5409
        %v5542 = vunpack.c.l.b16 %v5410
        %v5543 = vunpack.c.l.b16 %v5411
        %v5544 = vunpack.c.l.b16 %v5412
        %v5545 = vunpack.c.l.b16 %v5413
        %v5546 = vunpack.c.l.b16 %v5414
        %v5547 = vunpack.c.l.b16 %v5415
        %v5548 = vunpack.c.l.b16 %v5416
        %v5549 = vunpack.c.l.b16 %v5417
        %v5550 = vunpack.c.l.b16 %v5418
        %v5551 = vpack.c.b16 %v5536, %v5535
        %v5552 = vpack.c.b16 %v5538, %v5537
        %v5553 = vpack.c.b16 %v5540, %v5539
        %v5554 = vpack.c.b16 %v5542, %v5541
        %v5555 = vpack.c.b16 %v5544, %v5543
        %v5556 = vpack.c.b16 %v5546, %v5545
        %v5557 = vpack.c.b16 %v5548, %v5547
        %v5558 = vpack.c.b16 %v5550, %v5549
        %5567 = vmatpush.bf16.msra.mxu0 %v5558
        %5568 = vmatpush.bf16.msra.mxu0 %v5557
        %5569 = vmatpush.bf16.msra.mxu0 %v5556
        %5570 = vmatpush.bf16.msra.mxu0 %v5555
        %5571 = vmatpush.bf16.msra.mxu0 %v5554
        %5572 = vmatpush.bf16.msra.mxu0 %v5553
        %5573 = vmatpush.bf16.msra.mxu0 %v5552
        %5574 = vmatpush.bf16.msra.mxu0 %v5551
        %5575 = vmatmul.bf16.gmra.mxu0 %v5402
        %v5576 = vpop.f32.mrf.mxu0
        %v5577 = vadd.f32 %v5515, %v5576
        %v5578 = vpop.f32.mrf.mxu0
        %v5579 = vadd.f32 %v5517, %v5578
        %5580 = vdwg.mxu0
        %v5581 = vld [vmem:[#allocation2] sm:$0xe]
        %v5582 = vunpack.c.l.bf16 %v5581
        %v5583 = vunpack.c.l.bf16 %v5419
        %v5584 = vmul.f32 %v5582, %v1801
        %v5585 = vmul.f32 %v5399, %v1803
        %v5586 = vmul.f32 %v5583, %v1802
        %v5587 = vpack.c.bf16 %v5585, %v5584
        %v5588 = vpack.c.bf16 %v5586, %v5586
        %v5589 = vld [vmem:[%s21 + $0x8] sm:$0xf]
        %v5590 = vld [vmem:[%s21 + $0x2c] sm:$0xf]
        %v5591 = vld [vmem:[%s21 + $0x50] sm:$0xf]
        %v5592 = vld [vmem:[%s21 + $0x74] sm:$0xf]
        %v5593 = vld [vmem:[%s21 + $0x98] sm:$0xf]
        %v5594 = vld [vmem:[%s21 + $0xbc] sm:$0xf]
        %v5595 = vld [vmem:[%s21 + $0xe0] sm:$0xf]
        %v5596 = vld [vmem:[%s21 + $0x104] sm:$0xf]
        %v5597 = vld [vmem:[%s21 + $0x128] sm:$0xf]
        %v5598 = vld [vmem:[%s21 + $0x14c] sm:$0xf]
        %v5599 = vld [vmem:[%s21 + $0x170] sm:$0xf]
        %v5600 = vld [vmem:[%s21 + $0x194] sm:$0xf]
        %v5601 = vld [vmem:[%s21 + $0x1b8] sm:$0xf]
        %v5602 = vld [vmem:[%s21 + $0x1dc] sm:$0xf]
        %v5603 = vld [vmem:[%s21 + $0x200] sm:$0xf]
        %v5604 = vld [vmem:[%s21 + $0x224] sm:$0xf]
        %v5607 = vrot.slane %v5587, 1
        %v5608 = vrot.slane %v5588, 1
        %v5609 = vsel %vm1830, %v5607, %v5608
        %v5627 = vunpack.c.l.b16 %v5589
        %v5628 = vunpack.c.l.b16 %v5590
        %v5629 = vunpack.c.l.b16 %v5591
        %v5630 = vunpack.c.l.b16 %v5592
        %v5631 = vunpack.c.l.b16 %v5593
        %v5632 = vunpack.c.l.b16 %v5594
        %v5633 = vunpack.c.l.b16 %v5595
        %v5634 = vunpack.c.l.b16 %v5596
        %v5635 = vunpack.c.l.b16 %v5597
        %v5636 = vunpack.c.l.b16 %v5598
        %v5637 = vunpack.c.l.b16 %v5599
        %v5638 = vunpack.c.l.b16 %v5600
        %v5639 = vunpack.c.l.b16 %v5601
        %v5640 = vunpack.c.l.b16 %v5602
        %v5641 = vunpack.c.l.b16 %v5603
        %v5642 = vunpack.c.l.b16 %v5604
        %v5643 = vpack.c.b16 %v5628, %v5627
        %v5644 = vpack.c.b16 %v5630, %v5629
        %v5645 = vpack.c.b16 %v5632, %v5631
        %v5646 = vpack.c.b16 %v5634, %v5633
        %v5647 = vpack.c.b16 %v5636, %v5635
        %v5648 = vpack.c.b16 %v5638, %v5637
        %v5649 = vpack.c.b16 %v5640, %v5639
        %v5650 = vpack.c.b16 %v5642, %v5641
        %5659 = vmatpush.bf16.msra.mxu0 %v5650
        %5660 = vmatpush.bf16.msra.mxu0 %v5649
        %5661 = vmatpush.bf16.msra.mxu0 %v5648
        %5662 = vmatpush.bf16.msra.mxu0 %v5647
        %5663 = vmatpush.bf16.msra.mxu0 %v5646
        %5664 = vmatpush.bf16.msra.mxu0 %v5645
        %5665 = vmatpush.bf16.msra.mxu0 %v5644
        %5666 = vmatpush.bf16.msra.mxu0 %v5643
        %5667 = vmatmul.bf16.gmra.mxu0 %v5609
        %v5668 = vpop.f32.mrf.mxu0
        %v5669 = vadd.f32 0.0, %v5668
        %v5670 = vpop.f32.mrf.mxu0
        %v5671 = vadd.f32 0.0, %v5670
        %5672 = vdwg.mxu0
        %v5673 = vadd.f32 %v5577, %v5669
        %v5674 = vadd.f32 %v5579, %v5671
        %v5675 = vld [vmem:[#allocation2] sm:$0xc]
        %v5676 = vld [vmem:[#allocation2 + $0x10] sm:$0x3]
        %v5677 = vunpack.c.l.bf16 %v5675
        %v5678 = vunpack.c.l.bf16 %v5676
        %v5679 = vmul.f32 %v5677, %v1220
        %v5680 = vmul.f32 %v5399, %v1222
        %v5681 = vmul.f32 %v5678, %v1221
        %v5682 = vpack.c.bf16 %v5680, %v5679
        %v5683 = vpack.c.bf16 %v5681, %v5681
        %v5684 = vld [vmem:[%s21 + $0xc] sm:$0xf]
        %v5685 = vld [vmem:[%s21 + $0x30] sm:$0xf]
        %v5686 = vld [vmem:[%s21 + $0x54] sm:$0xf]
        %v5687 = vld [vmem:[%s21 + $0x78] sm:$0xf]
        %v5688 = vld [vmem:[%s21 + $0x9c] sm:$0xf]
        %v5689 = vld [vmem:[%s21 + $0xc0] sm:$0xf]
        %v5690 = vld [vmem:[%s21 + $0xe4] sm:$0xf]
        %v5691 = vld [vmem:[%s21 + $0x108] sm:$0xf]
        %v5692 = vld [vmem:[%s21 + $0x12c] sm:$0xf]
        %v5693 = vld [vmem:[%s21 + $0x150] sm:$0xf]
        %v5694 = vld [vmem:[%s21 + $0x174] sm:$0xf]
        %v5695 = vld [vmem:[%s21 + $0x198] sm:$0xf]
        %v5696 = vld [vmem:[%s21 + $0x1bc] sm:$0xf]
        %v5697 = vld [vmem:[%s21 + $0x1e0] sm:$0xf]
        %v5698 = vld [vmem:[%s21 + $0x204] sm:$0xf]
        %v5699 = vld [vmem:[%s21 + $0x228] sm:$0xf]
        %v5702 = vrot.slane %v5682, 2
        %v5703 = vrot.slane %v5683, 2
        %v5704 = vsel %vm1264, %v5702, %v5703
        %v5722 = vunpack.c.l.b16 %v5684
        %v5723 = vunpack.c.l.b16 %v5685
        %v5724 = vunpack.c.l.b16 %v5686
        %v5725 = vunpack.c.l.b16 %v5687
        %v5726 = vunpack.c.l.b16 %v5688
        %v5727 = vunpack.c.l.b16 %v5689
        %v5728 = vunpack.c.l.b16 %v5690
        %v5729 = vunpack.c.l.b16 %v5691
        %v5730 = vunpack.c.l.b16 %v5692
        %v5731 = vunpack.c.l.b16 %v5693
        %v5732 = vunpack.c.l.b16 %v5694
        %v5733 = vunpack.c.l.b16 %v5695
        %v5734 = vunpack.c.l.b16 %v5696
        %v5735 = vunpack.c.l.b16 %v5697
        %v5736 = vunpack.c.l.b16 %v5698
        %v5737 = vunpack.c.l.b16 %v5699
        %v5738 = vpack.c.b16 %v5723, %v5722
        %v5739 = vpack.c.b16 %v5725, %v5724
        %v5740 = vpack.c.b16 %v5727, %v5726
        %v5741 = vpack.c.b16 %v5729, %v5728
        %v5742 = vpack.c.b16 %v5731, %v5730
        %v5743 = vpack.c.b16 %v5733, %v5732
        %v5744 = vpack.c.b16 %v5735, %v5734
        %v5745 = vpack.c.b16 %v5737, %v5736
        %5754 = vmatpush.bf16.msra.mxu0 %v5745
        %5755 = vmatpush.bf16.msra.mxu0 %v5744
        %5756 = vmatpush.bf16.msra.mxu0 %v5743
        %5757 = vmatpush.bf16.msra.mxu0 %v5742
        %5758 = vmatpush.bf16.msra.mxu0 %v5741
        %5759 = vmatpush.bf16.msra.mxu0 %v5740
        %5760 = vmatpush.bf16.msra.mxu0 %v5739
        %5761 = vmatpush.bf16.msra.mxu0 %v5738
        %5762 = vmatmul.bf16.gmra.mxu0 %v5704
        %v5763 = vpop.f32.mrf.mxu0
        %v5764 = vadd.f32 0.0, %v5763
        %v5765 = vpop.f32.mrf.mxu0
        %v5766 = vadd.f32 0.0, %v5765
        %5767 = vdwg.mxu0
        %v5768 = vadd.f32 %v5673, %v5764
        %v5769 = vadd.f32 %v5674, %v5766
        %v5770 = vld [vmem:[#allocation2 + $0x10] sm:$0x7]
        %v5771 = vld [vmem:[%s21 + $0x10] sm:$0xf]
        %v5772 = vld [vmem:[%s21 + $0x34] sm:$0xf]
        %v5773 = vld [vmem:[%s21 + $0x58] sm:$0xf]
        %v5774 = vld [vmem:[%s21 + $0x7c] sm:$0xf]
        %v5775 = vld [vmem:[%s21 + $0xa0] sm:$0xf]
        %v5776 = vld [vmem:[%s21 + $0xc4] sm:$0xf]
        %v5777 = vld [vmem:[%s21 + $0xe8] sm:$0xf]
        %v5778 = vld [vmem:[%s21 + $0x10c] sm:$0xf]
        %v5779 = vld [vmem:[%s21 + $0x130] sm:$0xf]
        %v5780 = vld [vmem:[%s21 + $0x154] sm:$0xf]
        %v5781 = vld [vmem:[%s21 + $0x178] sm:$0xf]
        %v5782 = vld [vmem:[%s21 + $0x19c] sm:$0xf]
        %v5783 = vld [vmem:[%s21 + $0x1c0] sm:$0xf]
        %v5784 = vld [vmem:[%s21 + $0x1e4] sm:$0xf]
        %v5785 = vld [vmem:[%s21 + $0x208] sm:$0xf]
        %v5786 = vld [vmem:[%s21 + $0x22c] sm:$0xf]
        %v5789 = vunpack.c.l.b16 %v5675
        %v5790 = vunpack.c.l.b16 %v5770
        %v5791 = vpack.c.b16 %v5440, %v5789
        %v5792 = vpack.c.b16 %v5790, %v5790
        %v5794 = vshrl.u32 %v5791, 16
        %v5796 = vrot.slane %v5794, 2
        %v5797 = vshll.u32 %v5791, 16
        %v5799 = vrot.slane %v5797, 3
        %v5800 = vor.u32 %v5796, %v5799
        %v5802 = vshrl.u32 %v5792, 16
        %v5804 = vrot.slane %v5802, 2
        %v5805 = vshll.u32 %v5792, 16
        %v5807 = vrot.slane %v5805, 3
        %v5808 = vor.u32 %v5804, %v5807
        %v5809 = vsel %vm1412, %v5800, %v5808
        %v5827 = vunpack.c.l.b16 %v5771
        %v5828 = vunpack.c.l.b16 %v5772
        %v5829 = vunpack.c.l.b16 %v5773
        %v5830 = vunpack.c.l.b16 %v5774
        %v5831 = vunpack.c.l.b16 %v5775
        %v5832 = vunpack.c.l.b16 %v5776
        %v5833 = vunpack.c.l.b16 %v5777
        %v5834 = vunpack.c.l.b16 %v5778
        %v5835 = vunpack.c.l.b16 %v5779
        %v5836 = vunpack.c.l.b16 %v5780
        %v5837 = vunpack.c.l.b16 %v5781
        %v5838 = vunpack.c.l.b16 %v5782
        %v5839 = vunpack.c.l.b16 %v5783
        %v5840 = vunpack.c.l.b16 %v5784
        %v5841 = vunpack.c.l.b16 %v5785
        %v5842 = vunpack.c.l.b16 %v5786
        %v5843 = vpack.c.b16 %v5828, %v5827
        %v5844 = vpack.c.b16 %v5830, %v5829
        %v5845 = vpack.c.b16 %v5832, %v5831
        %v5846 = vpack.c.b16 %v5834, %v5833
        %v5847 = vpack.c.b16 %v5836, %v5835
        %v5848 = vpack.c.b16 %v5838, %v5837
        %v5849 = vpack.c.b16 %v5840, %v5839
        %v5850 = vpack.c.b16 %v5842, %v5841
        %5859 = vmatpush.bf16.msra.mxu0 %v5850
        %5860 = vmatpush.bf16.msra.mxu0 %v5849
        %5861 = vmatpush.bf16.msra.mxu0 %v5848
        %5862 = vmatpush.bf16.msra.mxu0 %v5847
        %5863 = vmatpush.bf16.msra.mxu0 %v5846
        %5864 = vmatpush.bf16.msra.mxu0 %v5845
        %5865 = vmatpush.bf16.msra.mxu0 %v5844
        %5866 = vmatpush.bf16.msra.mxu0 %v5843
        %5867 = vmatmul.bf16.gmra.mxu0 %v5809
        %v5868 = vpop.f32.mrf.mxu0
        %v5869 = vadd.f32 0.0, %v5868
        %v5870 = vpop.f32.mrf.mxu0
        %v5871 = vadd.f32 0.0, %v5870
        %5872 = vdwg.mxu0
        %v5873 = vadd.f32 %v5768, %v5869
        %v5874 = vadd.f32 %v5769, %v5871
        %v5875 = vld [vmem:[#allocation2] sm:$0x8]
        %v5876 = vunpack.c.l.bf16 %v5875
        %v5877 = vunpack.c.l.bf16 %v5770
        %v5878 = vmul.f32 %v5876, %v2103
        %v5879 = vmul.f32 %v5399, %v2105
        %v5880 = vmul.f32 %v5877, %v2104
        %v5881 = vpack.c.bf16 %v5879, %v5878
        %v5882 = vpack.c.bf16 %v5880, %v5880
        %v5883 = vld [vmem:[%s21 + $0x14] sm:$0xf]
        %v5884 = vld [vmem:[%s21 + $0x38] sm:$0xf]
        %v5885 = vld [vmem:[%s21 + $0x5c] sm:$0xf]
        %v5886 = vld [vmem:[%s21 + $0x80] sm:$0xf]
        %v5887 = vld [vmem:[%s21 + $0xa4] sm:$0xf]
        %v5888 = vld [vmem:[%s21 + $0xc8] sm:$0xf]
        %v5889 = vld [vmem:[%s21 + $0xec] sm:$0xf]
        %v5890 = vld [vmem:[%s21 + $0x110] sm:$0xf]
        %v5891 = vld [vmem:[%s21 + $0x134] sm:$0xf]
        %v5892 = vld [vmem:[%s21 + $0x158] sm:$0xf]
        %v5893 = vld [vmem:[%s21 + $0x17c] sm:$0xf]
        %v5894 = vld [vmem:[%s21 + $0x1a0] sm:$0xf]
        %v5895 = vld [vmem:[%s21 + $0x1c4] sm:$0xf]
        %v5896 = vld [vmem:[%s21 + $0x1e8] sm:$0xf]
        %v5897 = vld [vmem:[%s21 + $0x20c] sm:$0xf]
        %v5898 = vld [vmem:[%s21 + $0x230] sm:$0xf]
        %v5901 = vrot.slane %v5881, 3
        %v5902 = vrot.slane %v5882, 3
        %v5903 = vsel %vm2132, %v5901, %v5902
        %v5921 = vunpack.c.l.b16 %v5883
        %v5922 = vunpack.c.l.b16 %v5884
        %v5923 = vunpack.c.l.b16 %v5885
        %v5924 = vunpack.c.l.b16 %v5886
        %v5925 = vunpack.c.l.b16 %v5887
        %v5926 = vunpack.c.l.b16 %v5888
        %v5927 = vunpack.c.l.b16 %v5889
        %v5928 = vunpack.c.l.b16 %v5890
        %v5929 = vunpack.c.l.b16 %v5891
        %v5930 = vunpack.c.l.b16 %v5892
        %v5931 = vunpack.c.l.b16 %v5893
        %v5932 = vunpack.c.l.b16 %v5894
        %v5933 = vunpack.c.l.b16 %v5895
        %v5934 = vunpack.c.l.b16 %v5896
        %v5935 = vunpack.c.l.b16 %v5897
        %v5936 = vunpack.c.l.b16 %v5898
        %v5937 = vpack.c.b16 %v5922, %v5921
        %v5938 = vpack.c.b16 %v5924, %v5923
        %v5939 = vpack.c.b16 %v5926, %v5925
        %v5940 = vpack.c.b16 %v5928, %v5927
        %v5941 = vpack.c.b16 %v5930, %v5929
        %v5942 = vpack.c.b16 %v5932, %v5931
        %v5943 = vpack.c.b16 %v5934, %v5933
        %v5944 = vpack.c.b16 %v5936, %v5935
        %5953 = vmatpush.bf16.msra.mxu0 %v5944
        %5954 = vmatpush.bf16.msra.mxu0 %v5943
        %5955 = vmatpush.bf16.msra.mxu0 %v5942
        %5956 = vmatpush.bf16.msra.mxu0 %v5941
        %5957 = vmatpush.bf16.msra.mxu0 %v5940
        %5958 = vmatpush.bf16.msra.mxu0 %v5939
        %5959 = vmatpush.bf16.msra.mxu0 %v5938
        %5960 = vmatpush.bf16.msra.mxu0 %v5937
        %5961 = vmatmul.bf16.gmra.mxu0 %v5903
        %v5962 = vpop.f32.mrf.mxu0
        %v5963 = vadd.f32 0.0, %v5962
        %v5964 = vpop.f32.mrf.mxu0
        %v5965 = vadd.f32 0.0, %v5964
        %5966 = vdwg.mxu0
        %v5967 = vadd.f32 %v5873, %v5963
        %v5968 = vadd.f32 %v5874, %v5965
        %v5969 = vld [vmem:[#allocation2 + $0x10] sm:$0xf]
        %v5970 = vunpack.c.l.bf16 %v5969
        %v5971 = vmul.f32 %v5399, %v909
        %v5972 = vmul.f32 %v5970, %v910
        %v5973 = vpack.c.bf16 %v5972, %v5971
        %v5974 = vld [vmem:[%s21 + $0x18] sm:$0xf]
        %v5975 = vld [vmem:[%s21 + $0x3c] sm:$0xf]
        %v5976 = vld [vmem:[%s21 + $0x60] sm:$0xf]
        %v5977 = vld [vmem:[%s21 + $0x84] sm:$0xf]
        %v5978 = vld [vmem:[%s21 + $0xa8] sm:$0xf]
        %v5979 = vld [vmem:[%s21 + $0xcc] sm:$0xf]
        %v5980 = vld [vmem:[%s21 + $0xf0] sm:$0xf]
        %v5981 = vld [vmem:[%s21 + $0x114] sm:$0xf]
        %v5982 = vld [vmem:[%s21 + $0x138] sm:$0xf]
        %v5983 = vld [vmem:[%s21 + $0x15c] sm:$0xf]
        %v5984 = vld [vmem:[%s21 + $0x180] sm:$0xf]
        %v5985 = vld [vmem:[%s21 + $0x1a4] sm:$0xf]
        %v5986 = vld [vmem:[%s21 + $0x1c8] sm:$0xf]
        %v5987 = vld [vmem:[%s21 + $0x1ec] sm:$0xf]
        %v5988 = vld [vmem:[%s21 + $0x210] sm:$0xf]
        %v5989 = vld [vmem:[%s21 + $0x234] sm:$0xf]
        %v6006 = vunpack.c.l.b16 %v5974
        %v6007 = vunpack.c.l.b16 %v5975
        %v6008 = vunpack.c.l.b16 %v5976
        %v6009 = vunpack.c.l.b16 %v5977
        %v6010 = vunpack.c.l.b16 %v5978
        %v6011 = vunpack.c.l.b16 %v5979
        %v6012 = vunpack.c.l.b16 %v5980
        %v6013 = vunpack.c.l.b16 %v5981
        %v6014 = vunpack.c.l.b16 %v5982
        %v6015 = vunpack.c.l.b16 %v5983
        %v6016 = vunpack.c.l.b16 %v5984
        %v6017 = vunpack.c.l.b16 %v5985
        %v6018 = vunpack.c.l.b16 %v5986
        %v6019 = vunpack.c.l.b16 %v5987
        %v6020 = vunpack.c.l.b16 %v5988
        %v6021 = vunpack.c.l.b16 %v5989
        %v6022 = vpack.c.b16 %v6007, %v6006
        %v6023 = vpack.c.b16 %v6009, %v6008
        %v6024 = vpack.c.b16 %v6011, %v6010
        %v6025 = vpack.c.b16 %v6013, %v6012
        %v6026 = vpack.c.b16 %v6015, %v6014
        %v6027 = vpack.c.b16 %v6017, %v6016
        %v6028 = vpack.c.b16 %v6019, %v6018
        %v6029 = vpack.c.b16 %v6021, %v6020
        %6038 = vmatpush.bf16.msra.mxu0 %v6029
        %6039 = vmatpush.bf16.msra.mxu0 %v6028
        %6040 = vmatpush.bf16.msra.mxu0 %v6027
        %6041 = vmatpush.bf16.msra.mxu0 %v6026
        %6042 = vmatpush.bf16.msra.mxu0 %v6025
        %6043 = vmatpush.bf16.msra.mxu0 %v6024
        %6044 = vmatpush.bf16.msra.mxu0 %v6023
        %6045 = vmatpush.bf16.msra.mxu0 %v6022
        %6046 = vmatmul.bf16.gmra.mxu0 %v5973
        %v6047 = vpop.f32.mrf.mxu0
        %v6048 = vadd.f32 0.0, %v6047
        %v6049 = vpop.f32.mrf.mxu0
        %v6050 = vadd.f32 0.0, %v6049
        %6051 = vdwg.mxu0
        %v6052 = vadd.f32 %v5967, %v6048
        %v6053 = vadd.f32 %v5968, %v6050
        %v6054 = vld [vmem:[#allocation2 + $0x8] sm:$0xf]
        %v6055 = vld [vmem:[#allocation2 + $0x10] sm:$0xf]
        %v6056 = vld [vmem:[#allocation2 + $0x18] sm:$0x1]
        %v6057 = vld [vmem:[%s21 + $0x1c] sm:$0xf]
        %v6058 = vld [vmem:[%s21 + $0x40] sm:$0xf]
        %v6059 = vld [vmem:[%s21 + $0x64] sm:$0xf]
        %v6060 = vld [vmem:[%s21 + $0x88] sm:$0xf]
        %v6061 = vld [vmem:[%s21 + $0xac] sm:$0xf]
        %v6062 = vld [vmem:[%s21 + $0xd0] sm:$0xf]
        %v6063 = vld [vmem:[%s21 + $0xf4] sm:$0xf]
        %v6064 = vld [vmem:[%s21 + $0x118] sm:$0xf]
        %v6065 = vld [vmem:[%s21 + $0x13c] sm:$0xf]
        %v6066 = vld [vmem:[%s21 + $0x160] sm:$0xf]
        %v6067 = vld [vmem:[%s21 + $0x184] sm:$0xf]
        %v6068 = vld [vmem:[%s21 + $0x1a8] sm:$0xf]
        %v6069 = vld [vmem:[%s21 + $0x1cc] sm:$0xf]
        %v6070 = vld [vmem:[%s21 + $0x1f0] sm:$0xf]
        %v6071 = vld [vmem:[%s21 + $0x214] sm:$0xf]
        %v6072 = vld [vmem:[%s21 + $0x238] sm:$0xf]
        %v6076 = vunpack.c.l.b16 %v6054
        %v6077 = vunpack.c.l.b16 %v6055
        %v6078 = vunpack.c.l.b16 %v6056
        %v6079 = vpack.c.b16 %v6077, %v6076
        %v6080 = vpack.c.b16 %v6078, %v6078
        %v6082 = vshrl.u32 %v6079, 16
        %v6084 = vshll.u32 %v6079, 16
        %v6086 = vrot.slane %v6084, 1
        %v6087 = vor.u32 %v6082, %v6086
        %v6089 = vshll.u32 %v6080, 16
        %v6091 = vrot.slane %v6089, 1
        %v6092 = vsel %vm979, %v6087, %v6091
        %v6110 = vunpack.c.l.b16 %v6057
        %v6111 = vunpack.c.l.b16 %v6058
        %v6112 = vunpack.c.l.b16 %v6059
        %v6113 = vunpack.c.l.b16 %v6060
        %v6114 = vunpack.c.l.b16 %v6061
        %v6115 = vunpack.c.l.b16 %v6062
        %v6116 = vunpack.c.l.b16 %v6063
        %v6117 = vunpack.c.l.b16 %v6064
        %v6118 = vunpack.c.l.b16 %v6065
        %v6119 = vunpack.c.l.b16 %v6066
        %v6120 = vunpack.c.l.b16 %v6067
        %v6121 = vunpack.c.l.b16 %v6068
        %v6122 = vunpack.c.l.b16 %v6069
        %v6123 = vunpack.c.l.b16 %v6070
        %v6124 = vunpack.c.l.b16 %v6071
        %v6125 = vunpack.c.l.b16 %v6072
        %v6126 = vpack.c.b16 %v6111, %v6110
        %v6127 = vpack.c.b16 %v6113, %v6112
        %v6128 = vpack.c.b16 %v6115, %v6114
        %v6129 = vpack.c.b16 %v6117, %v6116
        %v6130 = vpack.c.b16 %v6119, %v6118
        %v6131 = vpack.c.b16 %v6121, %v6120
        %v6132 = vpack.c.b16 %v6123, %v6122
        %v6133 = vpack.c.b16 %v6125, %v6124
        %6142 = vmatpush.bf16.msra.mxu0 %v6133
        %6143 = vmatpush.bf16.msra.mxu0 %v6132
        %6144 = vmatpush.bf16.msra.mxu0 %v6131
        %6145 = vmatpush.bf16.msra.mxu0 %v6130
        %6146 = vmatpush.bf16.msra.mxu0 %v6129
        %6147 = vmatpush.bf16.msra.mxu0 %v6128
        %6148 = vmatpush.bf16.msra.mxu0 %v6127
        %6149 = vmatpush.bf16.msra.mxu0 %v6126
        %6150 = vmatmul.bf16.gmra.mxu0 %v6092
        %v6151 = vpop.f32.mrf.mxu0
        %v6152 = vadd.f32 0.0, %v6151
        %v6153 = vpop.f32.mrf.mxu0
        %v6154 = vadd.f32 0.0, %v6153
        %6155 = vdwg.mxu0
        %v6156 = vadd.f32 %v6052, %v6152
        %v6157 = vadd.f32 %v6053, %v6154
        %v6158 = vld [vmem:[#allocation2 + $0x8] sm:$0xe]
        %v6159 = vunpack.c.l.bf16 %v6158
        %v6160 = vunpack.c.l.bf16 %v6055
        %v6161 = vunpack.c.l.bf16 %v6056
        %v6162 = vmul.f32 %v6159, %v1801
        %v6163 = vmul.f32 %v6160, %v1803
        %v6164 = vmul.f32 %v6161, %v1802
        %v6165 = vpack.c.bf16 %v6163, %v6162
        %v6166 = vpack.c.bf16 %v6164, %v6164
        %v6167 = vld [vmem:[%s21 + $0x20] sm:$0xf]
        %v6168 = vld [vmem:[%s21 + $0x44] sm:$0xf]
        %v6169 = vld [vmem:[%s21 + $0x68] sm:$0xf]
        %v6170 = vld [vmem:[%s21 + $0x8c] sm:$0xf]
        %v6171 = vld [vmem:[%s21 + $0xb0] sm:$0xf]
        %v6172 = vld [vmem:[%s21 + $0xd4] sm:$0xf]
        %v6173 = vld [vmem:[%s21 + $0xf8] sm:$0xf]
        %v6174 = vld [vmem:[%s21 + $0x11c] sm:$0xf]
        %v6175 = vld [vmem:[%s21 + $0x140] sm:$0xf]
        %v6176 = vld [vmem:[%s21 + $0x164] sm:$0xf]
        %v6177 = vld [vmem:[%s21 + $0x188] sm:$0xf]
        %v6178 = vld [vmem:[%s21 + $0x1ac] sm:$0xf]
        %v6179 = vld [vmem:[%s21 + $0x1d0] sm:$0xf]
        %v6180 = vld [vmem:[%s21 + $0x1f4] sm:$0xf]
        %v6181 = vld [vmem:[%s21 + $0x218] sm:$0xf]
        %v6182 = vld [vmem:[%s21 + $0x23c] sm:$0xf]
        %v6185 = vrot.slane %v6165, 1
        %v6186 = vrot.slane %v6166, 1
        %v6187 = vsel %vm1830, %v6185, %v6186
        %v6205 = vunpack.c.l.b16 %v6167
        %v6206 = vunpack.c.l.b16 %v6168
        %v6207 = vunpack.c.l.b16 %v6169
        %v6208 = vunpack.c.l.b16 %v6170
        %v6209 = vunpack.c.l.b16 %v6171
        %v6210 = vunpack.c.l.b16 %v6172
        %v6211 = vunpack.c.l.b16 %v6173
        %v6212 = vunpack.c.l.b16 %v6174
        %v6213 = vunpack.c.l.b16 %v6175
        %v6214 = vunpack.c.l.b16 %v6176
        %v6215 = vunpack.c.l.b16 %v6177
        %v6216 = vunpack.c.l.b16 %v6178
        %v6217 = vunpack.c.l.b16 %v6179
        %v6218 = vunpack.c.l.b16 %v6180
        %v6219 = vunpack.c.l.b16 %v6181
        %v6220 = vunpack.c.l.b16 %v6182
        %v6221 = vpack.c.b16 %v6206, %v6205
        %v6222 = vpack.c.b16 %v6208, %v6207
        %v6223 = vpack.c.b16 %v6210, %v6209
        %v6224 = vpack.c.b16 %v6212, %v6211
        %v6225 = vpack.c.b16 %v6214, %v6213
        %v6226 = vpack.c.b16 %v6216, %v6215
        %v6227 = vpack.c.b16 %v6218, %v6217
        %v6228 = vpack.c.b16 %v6220, %v6219
        %6237 = vmatpush.bf16.msra.mxu0 %v6228
        %6238 = vmatpush.bf16.msra.mxu0 %v6227
        %6239 = vmatpush.bf16.msra.mxu0 %v6226
        %6240 = vmatpush.bf16.msra.mxu0 %v6225
        %6241 = vmatpush.bf16.msra.mxu0 %v6224
        %6242 = vmatpush.bf16.msra.mxu0 %v6223
        %6243 = vmatpush.bf16.msra.mxu0 %v6222
        %6244 = vmatpush.bf16.msra.mxu0 %v6221
        %6245 = vmatmul.bf16.gmra.mxu0 %v6187
        %v6246 = vpop.f32.mrf.mxu0
        %v6247 = vadd.f32 0.0, %v6246
        %v6248 = vpop.f32.mrf.mxu0
        %v6249 = vadd.f32 0.0, %v6248
        %6250 = vdwg.mxu0
        %v6251 = vadd.f32 %v6156, %v6247
        %v6252 = vadd.f32 %v6157, %v6249
        %v6253 = vld [vmem:[%s22] sm:$0x1]
        %v6255 = vperm.slane %v6253, 0
        %v6257 = vadd.f32 %v6251, %v6255
        %v6258 = vadd.f32 %v6252, %v6255
        %v6259 = vmul.f32 %v6257, 0.5
        %v6260 = vmul.f32 %v6258, 0.5
        %v6261 = vmul.f32 %v6257, 0.044715
        %v6262 = vmul.f32 %v6258, 0.044715
        %v6263 = vmul.f32 %v6261, %v6257
        %v6264 = vmul.f32 %v6262, %v6258
        %v6265 = vmul.f32 %v6263, %v6257
        %v6266 = vmul.f32 %v6264, %v6258
        %v6267 = vadd.f32 %v6257, %v6265
        %v6268 = vadd.f32 %v6258, %v6266
        %v6269 = vmul.f32 %v6267, 0.7978846
        %v6270 = vmul.f32 %v6268, 0.7978846
        %v6271 = vtanh.pop %v6269
        %v6272 = vtanh.pop %v6270
        %v6273 = vadd.f32 %v6271, 1.0
        %v6274 = vadd.f32 %v6272, 1.0
        %v6275 = vmul.f32 %v6259, %v6273
        %v6276 = vmul.f32 %v6260, %v6274
        %v6277 = vpack.c.bf16 %v6275, %v6275
        %v6278 = vpack.c.bf16 %v6276, %v6276
        %v6280 = vshrl.u32 %v6277, 16
        %v6282 = vrot.slane %v6280, 5
        %v6283 = vshll.u32 %v6277, 16
        %v6285 = vrot.slane %v6283, 6
        %v6286 = vor.u32 %v6282, %v6285
        %v6287 = vrot.slane %v6286, 4
        %v6289 = vshrl.u32 %v6278, 16
        %v6291 = vrot.slane %v6289, 5
        %v6292 = vshll.u32 %v6278, 16
        %v6294 = vrot.slane %v6292, 6
        %v6295 = vor.u32 %v6291, %v6294
        %v6296 = vsel %vm860, %v6287, %v6295
        %v6297 = vrot.slane %v6295, 4
        %v6301 = vsel %vm885, %v6286, %v5675
        %6302 = vst [vmem:[#allocation2] sm:$0xc] %v6301
        %6303 = vst [vmem:[#allocation2 + $0x8] sm:$0xf] %v6296
        %v6304 = vld [vmem:[#allocation2 + $0x10] sm:$0x7]
        %v6305 = vsel %vm895, %v6297, %v6304
        %6306 = vst [vmem:[#allocation2 + $0x10] sm:$0x7] %v6305
        %v6307 = vld [vmem:[#allocation2] sm:$0xc]
        %v6308 = vld [vmem:[#allocation2 + $0x8] sm:$0xf]
        %v6309 = vld [vmem:[#allocation2 + $0x10] sm:$0x7]
        %v6310 = vld [vmem:[%s23] sm:$0xff]
        %v6311 = vld [vmem:[%s23 + $0x18] sm:$0xff]
        %v6312 = vld [vmem:[%s23 + $0x30] sm:$0xff]
        %v6313 = vld [vmem:[%s23 + $0x48] sm:$0xff]
        %v6314 = vld [vmem:[%s23 + $0x60] sm:$0xff]
        %v6315 = vld [vmem:[%s23 + $0x78] sm:$0xff]
        %v6316 = vld [vmem:[%s23 + $0x90] sm:$0xff]
        %v6317 = vld [vmem:[%s23 + $0xa8] sm:$0xff]
        %v6318 = vld [vmem:[%s23 + $0xc0] sm:$0xff]
        %v6319 = vld [vmem:[%s23 + $0xd8] sm:$0xff]
        %v6320 = vld [vmem:[%s23 + $0xf0] sm:$0xff]
        %v6321 = vld [vmem:[%s23 + $0x108] sm:$0xff]
        %v6322 = vld [vmem:[%s23 + $0x120] sm:$0xff]
        %v6323 = vld [vmem:[%s23 + $0x138] sm:$0xff]
        %v6324 = vld [vmem:[%s23 + $0x150] sm:$0xff]
        %v6325 = vld [vmem:[%s23 + $0x168] sm:$0xff]
        %v6326 = vld [vmem:[#allocation2] sm:$0x8]
        %v6327 = vunpack.c.l.bf16 %v6326
        %v6328 = vunpack.c.l.bf16 %v6308
        %v6329 = vunpack.c.l.bf16 %v6309
        %v6330 = vmul.f32 %v6327, %v2103
        %v6331 = vmul.f32 %v6328, %v2105
        %v6332 = vmul.f32 %v6329, %v2104
        %v6333 = vpack.c.bf16 %v6331, %v6330
        %v6334 = vpack.c.bf16 %v6332, %v6332
        %v6335 = vld [vmem:[%s23 + $0x4] sm:$0xff]
        %v6336 = vld [vmem:[%s23 + $0x1c] sm:$0xff]
        %v6337 = vld [vmem:[%s23 + $0x34] sm:$0xff]
        %v6338 = vld [vmem:[%s23 + $0x4c] sm:$0xff]
        %v6339 = vld [vmem:[%s23 + $0x64] sm:$0xff]
        %v6340 = vld [vmem:[%s23 + $0x7c] sm:$0xff]
        %v6341 = vld [vmem:[%s23 + $0x94] sm:$0xff]
        %v6342 = vld [vmem:[%s23 + $0xac] sm:$0xff]
        %v6343 = vld [vmem:[%s23 + $0xc4] sm:$0xff]
        %v6344 = vld [vmem:[%s23 + $0xdc] sm:$0xff]
        %v6345 = vld [vmem:[%s23 + $0xf4] sm:$0xff]
        %v6346 = vld [vmem:[%s23 + $0x10c] sm:$0xff]
        %v6347 = vld [vmem:[%s23 + $0x124] sm:$0xff]
        %v6348 = vld [vmem:[%s23 + $0x13c] sm:$0xff]
        %v6349 = vld [vmem:[%s23 + $0x154] sm:$0xff]
        %v6350 = vld [vmem:[%s23 + $0x16c] sm:$0xff]
        %v6353 = vrot.slane %v6333, 3
        %v6354 = vrot.slane %v6334, 3
        %v6355 = vsel %vm2132, %v6353, %v6354
        %v6373 = vunpack.c.l.b16 %v6335
        %v6374 = vunpack.c.h.b16 %v6335
        %v6375 = vunpack.c.l.b16 %v6336
        %v6376 = vunpack.c.h.b16 %v6336
        %v6377 = vunpack.c.l.b16 %v6337
        %v6378 = vunpack.c.h.b16 %v6337
        %v6379 = vunpack.c.l.b16 %v6338
        %v6380 = vunpack.c.h.b16 %v6338
        %v6381 = vunpack.c.l.b16 %v6339
        %v6382 = vunpack.c.h.b16 %v6339
        %v6383 = vunpack.c.l.b16 %v6340
        %v6384 = vunpack.c.h.b16 %v6340
        %v6385 = vunpack.c.l.b16 %v6341
        %v6386 = vunpack.c.h.b16 %v6341
        %v6387 = vunpack.c.l.b16 %v6342
        %v6388 = vunpack.c.h.b16 %v6342
        %v6389 = vunpack.c.l.b16 %v6343
        %v6390 = vunpack.c.h.b16 %v6343
        %v6391 = vunpack.c.l.b16 %v6344
        %v6392 = vunpack.c.h.b16 %v6344
        %v6393 = vunpack.c.l.b16 %v6345
        %v6394 = vunpack.c.h.b16 %v6345
        %v6395 = vunpack.c.l.b16 %v6346
        %v6396 = vunpack.c.h.b16 %v6346
        %v6397 = vunpack.c.l.b16 %v6347
        %v6398 = vunpack.c.h.b16 %v6347
        %v6399 = vunpack.c.l.b16 %v6348
        %v6400 = vunpack.c.h.b16 %v6348
        %v6401 = vunpack.c.l.b16 %v6349
        %v6402 = vunpack.c.h.b16 %v6349
        %v6403 = vunpack.c.l.b16 %v6350
        %v6404 = vunpack.c.h.b16 %v6350
        %v6405 = vpack.c.b16 %v6375, %v6373
        %v6406 = vpack.c.b16 %v6376, %v6374
        %v6407 = vpack.c.b16 %v6379, %v6377
        %v6408 = vpack.c.b16 %v6380, %v6378
        %v6409 = vpack.c.b16 %v6383, %v6381
        %v6410 = vpack.c.b16 %v6384, %v6382
        %v6411 = vpack.c.b16 %v6387, %v6385
        %v6412 = vpack.c.b16 %v6388, %v6386
        %v6413 = vpack.c.b16 %v6391, %v6389
        %v6414 = vpack.c.b16 %v6392, %v6390
        %v6415 = vpack.c.b16 %v6395, %v6393
        %v6416 = vpack.c.b16 %v6396, %v6394
        %v6417 = vpack.c.b16 %v6399, %v6397
        %v6418 = vpack.c.b16 %v6400, %v6398
        %v6419 = vpack.c.b16 %v6403, %v6401
        %v6420 = vpack.c.b16 %v6404, %v6402
        %6421 = vrot.lane.b32.xlu0 %v6405, 64
        %v6422 = vpop.permute.xlu0 %6421
        %6423 = vrot.lane.b32.xlu0 %v6406, 64
        %v6424 = vpop.permute.xlu0 %6423
        %6425 = vrot.lane.b32.xlu0 %v6407, 64
        %v6426 = vpop.permute.xlu0 %6425
        %6427 = vrot.lane.b32.xlu0 %v6408, 64
        %v6428 = vpop.permute.xlu0 %6427
        %6429 = vrot.lane.b32.xlu0 %v6409, 64
        %v6430 = vpop.permute.xlu0 %6429
        %6431 = vrot.lane.b32.xlu0 %v6410, 64
        %v6432 = vpop.permute.xlu0 %6431
        %6433 = vrot.lane.b32.xlu0 %v6411, 64
        %v6434 = vpop.permute.xlu0 %6433
        %6435 = vrot.lane.b32.xlu0 %v6412, 64
        %v6436 = vpop.permute.xlu0 %6435
        %6437 = vrot.lane.b32.xlu0 %v6413, 64
        %v6438 = vpop.permute.xlu0 %6437
        %6439 = vrot.lane.b32.xlu0 %v6414, 64
        %v6440 = vpop.permute.xlu0 %6439
        %6441 = vrot.lane.b32.xlu0 %v6415, 64
        %v6442 = vpop.permute.xlu0 %6441
        %6443 = vrot.lane.b32.xlu0 %v6416, 64
        %v6444 = vpop.permute.xlu0 %6443
        %6445 = vrot.lane.b32.xlu0 %v6417, 64
        %v6446 = vpop.permute.xlu0 %6445
        %6447 = vrot.lane.b32.xlu0 %v6418, 64
        %v6448 = vpop.permute.xlu0 %6447
        %6449 = vrot.lane.b32.xlu0 %v6419, 64
        %v6450 = vpop.permute.xlu0 %6449
        %6451 = vrot.lane.b32.xlu0 %v6420, 64
        %v6452 = vpop.permute.xlu0 %6451
        %vm6453 = vcmask 523264
        %v6454 = vsel %vm6453, %v6422, %v6424
        %v6455 = vsel %vm6453, %v6426, %v6428
        %v6456 = vsel %vm6453, %v6430, %v6432
        %v6457 = vsel %vm6453, %v6434, %v6436
        %v6458 = vsel %vm6453, %v6438, %v6440
        %v6459 = vsel %vm6453, %v6442, %v6444
        %v6460 = vsel %vm6453, %v6446, %v6448
        %v6461 = vsel %vm6453, %v6450, %v6452
        %6478 = vmatpush.bf16.msra.mxu0 %v6461
        %6479 = vmatpush.bf16.msra.mxu0 %v6460
        %6480 = vmatpush.bf16.msra.mxu0 %v6459
        %6481 = vmatpush.bf16.msra.mxu0 %v6458
        %6482 = vmatpush.bf16.msra.mxu0 %v6457
        %6483 = vmatpush.bf16.msra.mxu0 %v6456
        %6484 = vmatpush.bf16.msra.mxu0 %v6455
        %6485 = vmatpush.bf16.msra.mxu0 %v6454
        %6486 = vmatmul.bf16.gmra.mxu0 %v6355
        %v6487 = vpop.f32.mrf.mxu0
        %v6488 = vadd.f32 0.0, %v6487
        %v6489 = vpop.f32.mrf.mxu0
        %v6490 = vadd.f32 0.0, %v6489
        %6491 = vdwg.mxu0
        %6492 = vmatpush.bf16.msra.mxu0 %v6452
        %6493 = vmatpush.bf16.msra.mxu0 %v6448
        %6494 = vmatpush.bf16.msra.mxu0 %v6444
        %6495 = vmatpush.bf16.msra.mxu0 %v6440
        %6496 = vmatpush.bf16.msra.mxu0 %v6436
        %6497 = vmatpush.bf16.msra.mxu0 %v6432
        %6498 = vmatpush.bf16.msra.mxu0 %v6428
        %6499 = vmatpush.bf16.msra.mxu0 %v6424
        %6500 = vmatmul.bf16.gmra.mxu0 %v6355
        %v6501 = vpop.f32.mrf.mxu0
        %v6502 = vadd.f32 0.0, %v6501
        %v6503 = vpop.f32.mrf.mxu0
        %v6504 = vadd.f32 0.0, %v6503
        %6505 = vdwg.mxu0
        %v6509 = vunpack.c.l.b16 %v6307
        %v6510 = vunpack.c.l.b16 %v6308
        %v6511 = vunpack.c.l.b16 %v6309
        %v6512 = vpack.c.b16 %v6510, %v6509
        %v6513 = vpack.c.b16 %v6511, %v6511
        %v6515 = vshrl.u32 %v6512, 16
        %v6517 = vrot.slane %v6515, 2
        %v6518 = vshll.u32 %v6512, 16
        %v6520 = vrot.slane %v6518, 3
        %v6521 = vor.u32 %v6517, %v6520
        %v6523 = vshrl.u32 %v6513, 16
        %v6525 = vrot.slane %v6523, 2
        %v6526 = vshll.u32 %v6513, 16
        %v6528 = vrot.slane %v6526, 3
        %v6529 = vor.u32 %v6525, %v6528
        %v6530 = vsel %vm1412, %v6521, %v6529
        %v6548 = vunpack.c.l.b16 %v6310
        %v6549 = vunpack.c.h.b16 %v6310
        %v6550 = vunpack.c.l.b16 %v6311
        %v6551 = vunpack.c.h.b16 %v6311
        %v6552 = vunpack.c.l.b16 %v6312
        %v6553 = vunpack.c.h.b16 %v6312
        %v6554 = vunpack.c.l.b16 %v6313
        %v6555 = vunpack.c.h.b16 %v6313
        %v6556 = vunpack.c.l.b16 %v6314
        %v6557 = vunpack.c.h.b16 %v6314
        %v6558 = vunpack.c.l.b16 %v6315
        %v6559 = vunpack.c.h.b16 %v6315
        %v6560 = vunpack.c.l.b16 %v6316
        %v6561 = vunpack.c.h.b16 %v6316
        %v6562 = vunpack.c.l.b16 %v6317
        %v6563 = vunpack.c.h.b16 %v6317
        %v6564 = vunpack.c.l.b16 %v6318
        %v6565 = vunpack.c.h.b16 %v6318
        %v6566 = vunpack.c.l.b16 %v6319
        %v6567 = vunpack.c.h.b16 %v6319
        %v6568 = vunpack.c.l.b16 %v6320
        %v6569 = vunpack.c.h.b16 %v6320
        %v6570 = vunpack.c.l.b16 %v6321
        %v6571 = vunpack.c.h.b16 %v6321
        %v6572 = vunpack.c.l.b16 %v6322
        %v6573 = vunpack.c.h.b16 %v6322
        %v6574 = vunpack.c.l.b16 %v6323
        %v6575 = vunpack.c.h.b16 %v6323
        %v6576 = vunpack.c.l.b16 %v6324
        %v6577 = vunpack.c.h.b16 %v6324
        %v6578 = vunpack.c.l.b16 %v6325
        %v6579 = vunpack.c.h.b16 %v6325
        %v6580 = vpack.c.b16 %v6550, %v6548
        %v6581 = vpack.c.b16 %v6551, %v6549
        %v6582 = vpack.c.b16 %v6554, %v6552
        %v6583 = vpack.c.b16 %v6555, %v6553
        %v6584 = vpack.c.b16 %v6558, %v6556
        %v6585 = vpack.c.b16 %v6559, %v6557
        %v6586 = vpack.c.b16 %v6562, %v6560
        %v6587 = vpack.c.b16 %v6563, %v6561
        %v6588 = vpack.c.b16 %v6566, %v6564
        %v6589 = vpack.c.b16 %v6567, %v6565
        %v6590 = vpack.c.b16 %v6570, %v6568
        %v6591 = vpack.c.b16 %v6571, %v6569
        %v6592 = vpack.c.b16 %v6574, %v6572
        %v6593 = vpack.c.b16 %v6575, %v6573
        %v6594 = vpack.c.b16 %v6578, %v6576
        %v6595 = vpack.c.b16 %v6579, %v6577
        %6612 = vmatpush.bf16.msra.mxu0 %v6594
        %6613 = vmatpush.bf16.msra.mxu0 %v6592
        %6614 = vmatpush.bf16.msra.mxu0 %v6590
        %6615 = vmatpush.bf16.msra.mxu0 %v6588
        %6616 = vmatpush.bf16.msra.mxu0 %v6586
        %6617 = vmatpush.bf16.msra.mxu0 %v6584
        %6618 = vmatpush.bf16.msra.mxu0 %v6582
        %6619 = vmatpush.bf16.msra.mxu0 %v6580
        %6620 = vmatmul.bf16.gmra.mxu0 %v6530
        %v6621 = vpop.f32.mrf.mxu0
        %v6622 = vadd.f32 %v6488, %v6621
        %v6623 = vpop.f32.mrf.mxu0
        %v6624 = vadd.f32 %v6490, %v6623
        %6625 = vdwg.mxu0
        %6626 = vmatpush.bf16.msra.mxu0 %v6595
        %6627 = vmatpush.bf16.msra.mxu0 %v6593
        %6628 = vmatpush.bf16.msra.mxu0 %v6591
        %6629 = vmatpush.bf16.msra.mxu0 %v6589
        %6630 = vmatpush.bf16.msra.mxu0 %v6587
        %6631 = vmatpush.bf16.msra.mxu0 %v6585
        %6632 = vmatpush.bf16.msra.mxu0 %v6583
        %6633 = vmatpush.bf16.msra.mxu0 %v6581
        %6634 = vmatmul.bf16.gmra.mxu0 %v6530
        %v6635 = vpop.f32.mrf.mxu0
        %v6636 = vadd.f32 %v6502, %v6635
        %v6637 = vpop.f32.mrf.mxu0
        %v6638 = vadd.f32 %v6504, %v6637
        %6639 = vdwg.mxu0
        %v6640 = vld [vmem:[#allocation2 + $0x8] sm:$0xf]
        %v6641 = vld [vmem:[#allocation2 + $0x10] sm:$0xf]
        %v6642 = vld [vmem:[#allocation2 + $0x18] sm:$0x1]
        %v6643 = vld [vmem:[%s23 + $0xc] sm:$0xff]
        %v6644 = vld [vmem:[%s23 + $0x24] sm:$0xff]
        %v6645 = vld [vmem:[%s23 + $0x3c] sm:$0xff]
        %v6646 = vld [vmem:[%s23 + $0x54] sm:$0xff]
        %v6647 = vld [vmem:[%s23 + $0x6c] sm:$0xff]
        %v6648 = vld [vmem:[%s23 + $0x84] sm:$0xff]
        %v6649 = vld [vmem:[%s23 + $0x9c] sm:$0xff]
        %v6650 = vld [vmem:[%s23 + $0xb4] sm:$0xff]
        %v6651 = vld [vmem:[%s23 + $0xcc] sm:$0xff]
        %v6652 = vld [vmem:[%s23 + $0xe4] sm:$0xff]
        %v6653 = vld [vmem:[%s23 + $0xfc] sm:$0xff]
        %v6654 = vld [vmem:[%s23 + $0x114] sm:$0xff]
        %v6655 = vld [vmem:[%s23 + $0x12c] sm:$0xff]
        %v6656 = vld [vmem:[%s23 + $0x144] sm:$0xff]
        %v6657 = vld [vmem:[%s23 + $0x15c] sm:$0xff]
        %v6658 = vld [vmem:[%s23 + $0x174] sm:$0xff]
        %v6662 = vunpack.c.l.b16 %v6640
        %v6663 = vunpack.c.l.b16 %v6641
        %v6664 = vunpack.c.l.b16 %v6642
        %v6665 = vpack.c.b16 %v6663, %v6662
        %v6666 = vpack.c.b16 %v6664, %v6664
        %v6668 = vshrl.u32 %v6665, 16
        %v6670 = vshll.u32 %v6665, 16
        %v6672 = vrot.slane %v6670, 1
        %v6673 = vor.u32 %v6668, %v6672
        %v6675 = vshll.u32 %v6666, 16
        %v6677 = vrot.slane %v6675, 1
        %v6678 = vsel %vm979, %v6673, %v6677
        %v6696 = vunpack.c.l.b16 %v6643
        %v6697 = vunpack.c.h.b16 %v6643
        %v6698 = vunpack.c.l.b16 %v6644
        %v6699 = vunpack.c.h.b16 %v6644
        %v6700 = vunpack.c.l.b16 %v6645
        %v6701 = vunpack.c.h.b16 %v6645
        %v6702 = vunpack.c.l.b16 %v6646
        %v6703 = vunpack.c.h.b16 %v6646
        %v6704 = vunpack.c.l.b16 %v6647
        %v6705 = vunpack.c.h.b16 %v6647
        %v6706 = vunpack.c.l.b16 %v6648
        %v6707 = vunpack.c.h.b16 %v6648
        %v6708 = vunpack.c.l.b16 %v6649
        %v6709 = vunpack.c.h.b16 %v6649
        %v6710 = vunpack.c.l.b16 %v6650
        %v6711 = vunpack.c.h.b16 %v6650
        %v6712 = vunpack.c.l.b16 %v6651
        %v6713 = vunpack.c.h.b16 %v6651
        %v6714 = vunpack.c.l.b16 %v6652
        %v6715 = vunpack.c.h.b16 %v6652
        %v6716 = vunpack.c.l.b16 %v6653
        %v6717 = vunpack.c.h.b16 %v6653
        %v6718 = vunpack.c.l.b16 %v6654
        %v6719 = vunpack.c.h.b16 %v6654
        %v6720 = vunpack.c.l.b16 %v6655
        %v6721 = vunpack.c.h.b16 %v6655
        %v6722 = vunpack.c.l.b16 %v6656
        %v6723 = vunpack.c.h.b16 %v6656
        %v6724 = vunpack.c.l.b16 %v6657
        %v6725 = vunpack.c.h.b16 %v6657
        %v6726 = vunpack.c.l.b16 %v6658
        %v6727 = vunpack.c.h.b16 %v6658
        %v6728 = vpack.c.b16 %v6698, %v6696
        %v6729 = vpack.c.b16 %v6699, %v6697
        %v6730 = vpack.c.b16 %v6702, %v6700
        %v6731 = vpack.c.b16 %v6703, %v6701
        %v6732 = vpack.c.b16 %v6706, %v6704
        %v6733 = vpack.c.b16 %v6707, %v6705
        %v6734 = vpack.c.b16 %v6710, %v6708
        %v6735 = vpack.c.b16 %v6711, %v6709
        %v6736 = vpack.c.b16 %v6714, %v6712
        %v6737 = vpack.c.b16 %v6715, %v6713
        %v6738 = vpack.c.b16 %v6718, %v6716
        %v6739 = vpack.c.b16 %v6719, %v6717
        %v6740 = vpack.c.b16 %v6722, %v6720
        %v6741 = vpack.c.b16 %v6723, %v6721
        %v6742 = vpack.c.b16 %v6726, %v6724
        %v6743 = vpack.c.b16 %v6727, %v6725
        %6760 = vmatpush.bf16.msra.mxu0 %v6742
        %6761 = vmatpush.bf16.msra.mxu0 %v6740
        %6762 = vmatpush.bf16.msra.mxu0 %v6738
        %6763 = vmatpush.bf16.msra.mxu0 %v6736
        %6764 = vmatpush.bf16.msra.mxu0 %v6734
        %6765 = vmatpush.bf16.msra.mxu0 %v6732
        %6766 = vmatpush.bf16.msra.mxu0 %v6730
        %6767 = vmatpush.bf16.msra.mxu0 %v6728
        %6768 = vmatmul.bf16.gmra.mxu0 %v6678
        %v6769 = vpop.f32.mrf.mxu0
        %v6770 = vadd.f32 0.0, %v6769
        %v6771 = vpop.f32.mrf.mxu0
        %v6772 = vadd.f32 0.0, %v6771
        %6773 = vdwg.mxu0
        %6774 = vmatpush.bf16.msra.mxu0 %v6743
        %6775 = vmatpush.bf16.msra.mxu0 %v6741
        %6776 = vmatpush.bf16.msra.mxu0 %v6739
        %6777 = vmatpush.bf16.msra.mxu0 %v6737
        %6778 = vmatpush.bf16.msra.mxu0 %v6735
        %6779 = vmatpush.bf16.msra.mxu0 %v6733
        %6780 = vmatpush.bf16.msra.mxu0 %v6731
        %6781 = vmatpush.bf16.msra.mxu0 %v6729
        %6782 = vmatmul.bf16.gmra.mxu0 %v6678
        %v6783 = vpop.f32.mrf.mxu0
        %v6784 = vadd.f32 0.0, %v6783
        %v6785 = vpop.f32.mrf.mxu0
        %v6786 = vadd.f32 0.0, %v6785
        %6787 = vdwg.mxu0
        %v6788 = vadd.f32 %v6622, %v6770
        %v6789 = vadd.f32 %v6636, %v6784
        %v6790 = vadd.f32 %v6624, %v6772
        %v6791 = vadd.f32 %v6638, %v6786
        %v6792 = vld [vmem:[#allocation2 + $0x8] sm:$0xe]
        %v6793 = vunpack.c.l.bf16 %v6792
        %v6794 = vunpack.c.l.bf16 %v6641
        %v6795 = vunpack.c.l.bf16 %v6642
        %v6796 = vmul.f32 %v6793, %v1801
        %v6797 = vmul.f32 %v6794, %v1803
        %v6798 = vmul.f32 %v6795, %v1802
        %v6799 = vpack.c.bf16 %v6797, %v6796
        %v6800 = vpack.c.bf16 %v6798, %v6798
        %v6801 = vld [vmem:[%s23 + $0x10] sm:$0xff]
        %v6802 = vld [vmem:[%s23 + $0x28] sm:$0xff]
        %v6803 = vld [vmem:[%s23 + $0x40] sm:$0xff]
        %v6804 = vld [vmem:[%s23 + $0x58] sm:$0xff]
        %v6805 = vld [vmem:[%s23 + $0x70] sm:$0xff]
        %v6806 = vld [vmem:[%s23 + $0x88] sm:$0xff]
        %v6807 = vld [vmem:[%s23 + $0xa0] sm:$0xff]
        %v6808 = vld [vmem:[%s23 + $0xb8] sm:$0xff]
        %v6809 = vld [vmem:[%s23 + $0xd0] sm:$0xff]
        %v6810 = vld [vmem:[%s23 + $0xe8] sm:$0xff]
        %v6811 = vld [vmem:[%s23 + $0x100] sm:$0xff]
        %v6812 = vld [vmem:[%s23 + $0x118] sm:$0xff]
        %v6813 = vld [vmem:[%s23 + $0x130] sm:$0xff]
        %v6814 = vld [vmem:[%s23 + $0x148] sm:$0xff]
        %v6815 = vld [vmem:[%s23 + $0x160] sm:$0xff]
        %v6816 = vld [vmem:[%s23 + $0x178] sm:$0xff]
        %v6819 = vrot.slane %v6799, 1
        %v6820 = vrot.slane %v6800, 1
        %v6821 = vsel %vm1830, %v6819, %v6820
        %v6839 = vunpack.c.l.b16 %v6801
        %v6840 = vunpack.c.h.b16 %v6801
        %v6841 = vunpack.c.l.b16 %v6802
        %v6842 = vunpack.c.h.b16 %v6802
        %v6843 = vunpack.c.l.b16 %v6803
        %v6844 = vunpack.c.h.b16 %v6803
        %v6845 = vunpack.c.l.b16 %v6804
        %v6846 = vunpack.c.h.b16 %v6804
        %v6847 = vunpack.c.l.b16 %v6805
        %v6848 = vunpack.c.h.b16 %v6805
        %v6849 = vunpack.c.l.b16 %v6806
        %v6850 = vunpack.c.h.b16 %v6806
        %v6851 = vunpack.c.l.b16 %v6807
        %v6852 = vunpack.c.h.b16 %v6807
        %v6853 = vunpack.c.l.b16 %v6808
        %v6854 = vunpack.c.h.b16 %v6808
        %v6855 = vunpack.c.l.b16 %v6809
        %v6856 = vunpack.c.h.b16 %v6809
        %v6857 = vunpack.c.l.b16 %v6810
        %v6858 = vunpack.c.h.b16 %v6810
        %v6859 = vunpack.c.l.b16 %v6811
        %v6860 = vunpack.c.h.b16 %v6811
        %v6861 = vunpack.c.l.b16 %v6812
        %v6862 = vunpack.c.h.b16 %v6812
        %v6863 = vunpack.c.l.b16 %v6813
        %v6864 = vunpack.c.h.b16 %v6813
        %v6865 = vunpack.c.l.b16 %v6814
        %v6866 = vunpack.c.h.b16 %v6814
        %v6867 = vunpack.c.l.b16 %v6815
        %v6868 = vunpack.c.h.b16 %v6815
        %v6869 = vunpack.c.l.b16 %v6816
        %v6870 = vunpack.c.h.b16 %v6816
        %v6871 = vpack.c.b16 %v6841, %v6839
        %v6872 = vpack.c.b16 %v6842, %v6840
        %v6873 = vpack.c.b16 %v6845, %v6843
        %v6874 = vpack.c.b16 %v6846, %v6844
        %v6875 = vpack.c.b16 %v6849, %v6847
        %v6876 = vpack.c.b16 %v6850, %v6848
        %v6877 = vpack.c.b16 %v6853, %v6851
        %v6878 = vpack.c.b16 %v6854, %v6852
        %v6879 = vpack.c.b16 %v6857, %v6855
        %v6880 = vpack.c.b16 %v6858, %v6856
        %v6881 = vpack.c.b16 %v6861, %v6859
        %v6882 = vpack.c.b16 %v6862, %v6860
        %v6883 = vpack.c.b16 %v6865, %v6863
        %v6884 = vpack.c.b16 %v6866, %v6864
        %v6885 = vpack.c.b16 %v6869, %v6867
        %v6886 = vpack.c.b16 %v6870, %v6868
        %6887 = vrot.lane.b32.xlu0 %v6871, 64
        %v6888 = vpop.permute.xlu0 %6887
        %6889 = vrot.lane.b32.xlu0 %v6872, 64
        %v6890 = vpop.permute.xlu0 %6889
        %6891 = vrot.lane.b32.xlu0 %v6873, 64
        %v6892 = vpop.permute.xlu0 %6891
        %6893 = vrot.lane.b32.xlu0 %v6874, 64
        %v6894 = vpop.permute.xlu0 %6893
        %6895 = vrot.lane.b32.xlu0 %v6875, 64
        %v6896 = vpop.permute.xlu0 %6895
        %6897 = vrot.lane.b32.xlu0 %v6876, 64
        %v6898 = vpop.permute.xlu0 %6897
        %6899 = vrot.lane.b32.xlu0 %v6877, 64
        %v6900 = vpop.permute.xlu0 %6899
        %6901 = vrot.lane.b32.xlu0 %v6878, 64
        %v6902 = vpop.permute.xlu0 %6901
        %6903 = vrot.lane.b32.xlu0 %v6879, 64
        %v6904 = vpop.permute.xlu0 %6903
        %6905 = vrot.lane.b32.xlu0 %v6880, 64
        %v6906 = vpop.permute.xlu0 %6905
        %6907 = vrot.lane.b32.xlu0 %v6881, 64
        %v6908 = vpop.permute.xlu0 %6907
        %6909 = vrot.lane.b32.xlu0 %v6882, 64
        %v6910 = vpop.permute.xlu0 %6909
        %6911 = vrot.lane.b32.xlu0 %v6883, 64
        %v6912 = vpop.permute.xlu0 %6911
        %6913 = vrot.lane.b32.xlu0 %v6884, 64
        %v6914 = vpop.permute.xlu0 %6913
        %6915 = vrot.lane.b32.xlu0 %v6885, 64
        %v6916 = vpop.permute.xlu0 %6915
        %6917 = vrot.lane.b32.xlu0 %v6886, 64
        %v6918 = vpop.permute.xlu0 %6917
        %v6919 = vsel %vm6453, %v6888, %v6890
        %v6920 = vsel %vm6453, %v6892, %v6894
        %v6921 = vsel %vm6453, %v6896, %v6898
        %v6922 = vsel %vm6453, %v6900, %v6902
        %v6923 = vsel %vm6453, %v6904, %v6906
        %v6924 = vsel %vm6453, %v6908, %v6910
        %v6925 = vsel %vm6453, %v6912, %v6914
        %v6926 = vsel %vm6453, %v6916, %v6918
        %6943 = vmatpush.bf16.msra.mxu0 %v6926
        %6944 = vmatpush.bf16.msra.mxu0 %v6925
        %6945 = vmatpush.bf16.msra.mxu0 %v6924
        %6946 = vmatpush.bf16.msra.mxu0 %v6923
        %6947 = vmatpush.bf16.msra.mxu0 %v6922
        %6948 = vmatpush.bf16.msra.mxu0 %v6921
        %6949 = vmatpush.bf16.msra.mxu0 %v6920
        %6950 = vmatpush.bf16.msra.mxu0 %v6919
        %6951 = vmatmul.bf16.gmra.mxu0 %v6821
        %v6952 = vpop.f32.mrf.mxu0
        %v6953 = vadd.f32 0.0, %v6952
        %v6954 = vpop.f32.mrf.mxu0
        %v6955 = vadd.f32 0.0, %v6954
        %6956 = vdwg.mxu0
        %6957 = vmatpush.bf16.msra.mxu0 %v6918
        %6958 = vmatpush.bf16.msra.mxu0 %v6914
        %6959 = vmatpush.bf16.msra.mxu0 %v6910
        %6960 = vmatpush.bf16.msra.mxu0 %v6906
        %6961 = vmatpush.bf16.msra.mxu0 %v6902
        %6962 = vmatpush.bf16.msra.mxu0 %v6898
        %6963 = vmatpush.bf16.msra.mxu0 %v6894
        %6964 = vmatpush.bf16.msra.mxu0 %v6890
        %6965 = vmatmul.bf16.gmra.mxu0 %v6821
        %v6966 = vpop.f32.mrf.mxu0
        %v6967 = vadd.f32 0.0, %v6966
        %v6968 = vpop.f32.mrf.mxu0
        %v6969 = vadd.f32 0.0, %v6968
        %6970 = vdwg.mxu0
        %v6971 = vadd.f32 %v6788, %v6953
        %v6972 = vadd.f32 %v6789, %v6967
        %v6973 = vadd.f32 %v6790, %v6955
        %v6974 = vadd.f32 %v6791, %v6969
        %v6975 = vld [vmem:[%s24] sm:$0x3]
        %v6977 = vperm.slane %v6975, 0
        %v6978 = vperm.slane %v6975, 1
        %v6981 = vadd.f32 %v6971, %v6977
        %v6982 = vadd.f32 %v6972, %v6978
        %v6983 = vadd.f32 %v6973, %v6977
        %v6984 = vadd.f32 %v6974, %v6978
        %v6985 = vtanh.pop %v6981
        %v6986 = vtanh.pop %v6982
        %v6987 = vtanh.pop %v6983
        %v6988 = vtanh.pop %v6984
        %6989 = vst [vmem:[%s801] sm:$0xff] %v6985
        %6990 = vst.msk [vmem:[%s801 + $0x8] sm:$0xff] %vm1077, %v6986
        %6991 = vst [vmem:[%s801 + $0x10] sm:$0xff] %v6987
        %6992 = vst.msk [vmem:[%s801 + $0x18] sm:$0xff] %vm1077, %v6988
        %p6993 = scmp.lt.s32.totalorder %s41, 1
        %s6994 = scalar_select %p6993, %s41, 1
        %s6995 = smul.addr %s6994, 4
        %s6996 = smul.addr %s6995, 8
        %s6997 = scalar_lea.vmem %s25, %s6996
        %s6998 = sand.u32 %s605, 1
        %s6999 = scalar_lea.sflag [#allocation5], %s6998
        %s7000 = sand.u32 %s605, 1
        %s7001 = scalar_lea.vmem [#allocation4], %s7000
        // Predicated region
        $region121: #{autoencoder_forward.1} parent=119 // pred_check
          %p7002 = pneg %p589
        $region122: #{autoencoder_forward.1} parent=119 // pred_check_branch
          %7004 = sbr.rel (%p7002) target = $region124
        $region123: #{autoencoder_forward.1} parent=119 // pred_region
          _
        $region124: #{autoencoder_forward.1} parent=119 // pred_fallthru
          _
        // Predicated region
        $region125: #{autoencoder_forward.1} parent=119 // pred_check
          %p7005 = pneg %p615
        $region126: #{autoencoder_forward.1} parent=119 // pred_check_branch
          %7007 = sbr.rel (%p7005) target = $region128
        $region127: #{autoencoder_forward.1} parent=119 // pred_region
          %7009 = vsyncadd %s6999, 0
          %s7010 = scalar_lea.hbm %s26, %s41
          %s7012 = sshll.u32 %s7001, 4
          %s7013 = int_to_ptr.vmem [resolvable:$true] %s7012
          %s7014 = sshll.u32 %s7010, 4
          %s7015 = int_to_ptr.hbm [resolvable:$true] %s7014
          %7017 = dma.vmem_to_hbm [thread:$0]  %s7013, 16, %s7015, %s6999
        $region128: #{autoencoder_forward.1} parent=119 // pred_fallthru
          _
      $region120: #{autoencoder_forward.1} parent=5 // pred_fallthru
        _
      %p7018 = scmp.le.s32.totalorder 2, %s36
      // Predicated region
      $region129: #{autoencoder_forward.1} parent=5 // pred_check
        %p7019 = pneg %p7018
      $region130: #{autoencoder_forward.1} parent=5 // pred_check_branch
        %7021 = sbr.rel (%p7019) target = $region132
      $region131: #{autoencoder_forward.1} parent=5 // pred_region
        %s7022 = ssub.s32 %s36, 2
        // Predicated region
        $region133: #{autoencoder_forward.1} parent=131 // pred_check
          %p7023 = pneg %p595
        $region134: #{autoencoder_forward.1} parent=131 // pred_check_branch
          %7025 = sbr.rel (%p7023) target = $region136
        $region135: #{autoencoder_forward.1} parent=131 // pred_region
          %p7026 = scmp.lt.s32.totalorder %s42, 1
          %s7027 = scalar_select %p7026, %s42, 1
          %s7028 = smul.addr %s7027, 4
          %s7029 = smul.addr %s7028, 8
          %s7030 = scalar_lea.vmem %s25, %s7029
        $region136: #{autoencoder_forward.1} parent=131 // pred_fallthru
          _
        // Predicated region
        $region137: #{autoencoder_forward.1} parent=131 // pred_check
          %p7031 = pneg %p621
        $region138: #{autoencoder_forward.1} parent=131 // pred_check_branch
          %7033 = sbr.rel (%p7031) target = $region140
        $region139: #{autoencoder_forward.1} parent=131 // pred_region
          %s7034 = sand.u32 %s606, 1
          %s7035 = scalar_lea.sflag [#allocation5], %s7034
          %s7036 = sand.u32 %s606, 1
          %s7037 = scalar_lea.vmem [#allocation4], %s7036
          %7039 = dma.done %s7035, 16
        $region140: #{autoencoder_forward.1} parent=131 // pred_fallthru
          _
      $region132: #{autoencoder_forward.1} parent=5 // pred_fallthru
        _
    $region6: #{autoencoder_forward.1} parent=1 // loop_footer
      %s40 = sadd.s32 1, %s36
    $region7: #{autoencoder_forward.1} parent=1 // loop_footer_branch
      %35 = sbr.rel target = $region3
    $region8: #{autoencoder_forward.1} parent=1 // loop_exit
      _
    %7040 = vsyncpa [#allocation5], 1
    %s7041 = scalar_lea.sflag [#allocation5], 1
    %7042 = vsyncpa %s7041, 1

</llo_original>
